<compile_context>
chip_gen: v7x
topology: tpu7x:2x2x1
jax: 0.10.0
libtpu: 0.0.40
codegen_flags: <defaults>
</compile_context>

<pallas_src>
import functools
import math

import numpy as np

import jax
import jax.numpy as jnp
from jax.experimental import pallas as pl
from jax.experimental.pallas import tpu as pltpu

LRELU_SLOPE = 0.1

# HBM storage dtype for activations & packed weights (f32 MXU accumulation in-kernel).
ACT_DTYPE = jnp.bfloat16


# ---------------------------------------------------------------------------
# Device-aware VMEM budgeting
# ---------------------------------------------------------------------------
_VMEM_CACHE = None


def _device_vmem():
    """(vmem_limit_bytes, per-call block budget) derived from the chip's VMEM."""
    global _VMEM_CACHE
    if _VMEM_CACHE is None:
        cap = 128 << 20
        try:
            info = pltpu.get_tpu_info()
            cap = int(getattr(info, "vmem_capacity_bytes", 0) or cap)
        except Exception:
            pass
        limit = int(min(cap * 3 // 4, 96 << 20))      # 96 MiB v5e/v6e, 48 MiB v7x
        budget = int(min(limit // 3, 24 << 20))       # 24 MiB v5e/v6e, 16 MiB v7x
        _VMEM_CACHE = (limit, budget)
    return _VMEM_CACHE


def _choose_tile(Lp, per_row, fixed, budget, single_batch):
    """Largest TL (multiple of 16, <=2048) fitting the budget; prefers divisors of Lp,
    keeps >=2 tiles when B==1 (v7x megacore), falls back to padding otherwise."""
    avail = max(budget - fixed, 256 * 1024)
    max_rows = min(2048, max(16, avail // max(per_row, 1)))
    max_rows = max(16, (max_rows // 16) * 16)
    if single_batch and Lp >= 256:
        cap = ((Lp + 1) // 2 + 15) // 16 * 16
        max_rows = min(max_rows, max(16, cap))
    if Lp <= max_rows:
        return Lp
    t = max_rows
    while t >= 16:
        if Lp % t == 0:
            return t
        t -= 16
    return max_rows          # wrapper pads Lp up to a multiple of this


# ---------------------------------------------------------------------------
# Halo construction (no gathers): neighbor-tile static slices
# ---------------------------------------------------------------------------
def _gather_halo(xp, TL, HLp, HR, n_tiles):
    # Rarely-used fallback (halo wider than a tile).
    B, Lpad, C = xp.shape
    starts = jnp.arange(n_tiles, dtype=jnp.int32) * TL
    offs = jnp.concatenate([jnp.arange(-HLp, 0, dtype=jnp.int32),
                            jnp.arange(TL, TL + HR, dtype=jnp.int32)])
    idx = starts[:, None] + offs[None, :]
    valid = (idx >= 0) & (idx < Lpad)
    flat = jnp.clip(idx, 0, Lpad - 1).reshape(-1)
    g = jnp.take(xp, flat, axis=1).reshape(B, n_tiles, HLp + HR, C)
    return jnp.where(valid[None, :, :, None], g, 0).astype(xp.dtype)


def _build_halo(xp, TL, HLp, HR, n_tiles):
    """Per-tile halo rows (B, n_tiles, HLp+HR, C) via reshape + static slices."""
    B, Lpad, C = xp.shape
    H = HLp + HR
    if n_tiles == 1:
        return jnp.zeros((B, 1, H, C), xp.dtype)
    if HLp > TL or HR > TL:
        return _gather_halo(xp, TL, HLp, HR, n_tiles)
    x4 = xp.reshape(B, n_tiles, TL, C)
    parts = []
    if HLp > 0:
        zl = jnp.zeros((B, 1, HLp, C), xp.dtype)
        parts.append(jnp.concatenate([zl, x4[:, :-1, TL - HLp:, :]], axis=1))
    if HR > 0:
        zr = jnp.zeros((B, 1, HR, C), xp.dtype)
        parts.append(jnp.concatenate([x4[:, 1:, :HR, :], zr], axis=1))
    return parts[0] if len(parts) == 1 else jnp.concatenate(parts, axis=2)


# ---------------------------------------------------------------------------
# The fused Pallas kernel: 1 or 2 chained convs + activations + residuals
# ---------------------------------------------------------------------------
def _chain_kernel(*refs, cfg):
    pos = 0
    x_ref = refs[pos]; pos += 1
    halo_ref = None
    if cfg["has_halo"]:
        halo_ref = refs[pos]; pos += 1
    wb = []
    for _ in cfg["layers"]:
        wb.append((refs[pos], refs[pos + 1]))
        pos += 2
    res_refs = refs[pos:pos + cfg["n_res"]]
    o_ref = refs[pos + cfg["n_res"]]

    cdtype = cfg["cdtype"]
    x = x_ref[0]                                   # (TL, Cin_p)
    TL = x.shape[0]
    if cfg["has_halo"]:
        h = halo_ref[0, 0]                         # (HLp + HR, Cin_p)
        HLp, HR = cfg["HLp"], cfg["HR"]
        parts = []
        if HLp > 0:
            parts.append(h[:HLp])
        parts.append(x)
        if HR > 0:
            parts.append(h[HLp:])
        cur = jnp.concatenate(parts, axis=0)
    else:
        cur = x

    n_layers = len(cfg["layers"])
    y = None
    for li, layer in enumerate(cfg["layers"]):
        w_ref, b_ref = wb[li]
        slope = layer["pre_slope"]
        if slope is not None:
            cf = cur.astype(jnp.float32)
            cur = jnp.where(cf >= 0.0, cf, cf * slope).astype(cdtype)
        n_out = layer["n_out"]
        cin_p = layer["cin_p"]
        starts = layer["starts"]
        if layer["stack"] and len(starts) > 1:
            # Stack the shifted views on the contraction axis -> one deep MXU dot.
            xc = jnp.concatenate([cur[s:s + n_out] for s in starts], axis=-1)
            acc = jnp.dot(xc, w_ref[...], preferred_element_type=jnp.float32)
        else:
            acc = None
            for ti, s in enumerate(starts):
                xs = cur[s:s + n_out]
                wk = w_ref[ti * cin_p:(ti + 1) * cin_p, :]
                if cin_p == 1:
                    t = xs.astype(jnp.float32) * wk.astype(jnp.float32)
                else:
                    t = jnp.dot(xs, wk, preferred_element_type=jnp.float32)
                acc = t if acc is None else acc + t
        acc = acc + b_ref[...]                     # (1, Cout_p) f32 bias
        if layer["mask_lead"] is not None:
            # Zero the intermediate rows that fall outside [0, L): this reproduces
            # the second conv's zero padding at the sequence boundaries.
            g = (pl.program_id(1) * TL - layer["mask_lead"]
                 + jax.lax.broadcasted_iota(jnp.int32, (n_out, 1), 0))
            acc = jnp.where((g >= 0) & (g < layer["lp_valid"]), acc, 0.0)
        if li < n_layers - 1:
            cur = acc.astype(cdtype)               # stays in VMEM, never hits HBM
        else:
            y = acc

    if cfg["add_x_res"]:
        y = y + x.astype(jnp.float32)              # resblock skip, taken from x block
    for r in res_refs:
        y = y + r[0].astype(jnp.float32)           # extra fused residual adds
    if cfg["out_scale"] != 1.0:
        y = y * cfg["out_scale"]
    if cfg["post_act"] == "tanh":
        y = jnp.tanh(y)
    o_ref[0] = y.astype(o_ref.dtype)


# ---------------------------------------------------------------------------
# Wrapper: run one conv (or a fused conv1->conv2 chain) over a tiled grid
# ---------------------------------------------------------------------------
def run_chain(specs, x, *, residuals=(), pre_slopes=None, post_act="none",
              out_scale=1.0, add_x_res=False):
    """x: (B, L, Cin) channel-last -> (B, L_out, Cout) channel-last."""
    specs = tuple(specs)
    nL = len(specs)
    if pre_slopes is None:
        pre_slopes = (None,) * nL
    s0, sl = specs[0], specs[-1]

    x = x.astype(ACT_DTYPE)
    B, L, Cin = x.shape
    assert Cin == s0["cin"] and L % s0["s_in"] == 0, (x.shape, s0["cin"], s0["s_in"])
    Lp = L // s0["s_in"]
    CinP, CoutT = s0["cin_p"], sl["cout_p"]
    if nL == 2:
        assert specs[1]["cin_p"] == specs[0]["cout_p"]
        assert specs[1]["s_in"] == specs[0]["s_out"]
    if add_x_res:
        assert CinP == CoutT and s0["s_in"] == sl["s_out"]

    offs0 = s0["offs"]
    d0min, d0max = min(offs0), max(offs0)
    if nL == 2:
        offs1 = specs[1]["offs"]
        d1min, d1max = min(offs1), max(offs1)
        E_L, E_R = max(-d1min, 0), max(d1max, 0)
    else:
        E_L = E_R = 0
    HL = max(E_L - d0min, 0)
    HR = max(E_R + d0max, 0)
    shift = (-HL) % 16 if HL > 0 else 0            # align the concat boundary (bf16)
    HLp = HL + shift

    esz = jnp.dtype(ACT_DTYPE).itemsize
    # Per-row VMEM estimate: double-buffered streams + f32 in-kernel temporaries.
    per_row = 2 * esz * CinP + 2 * esz * CoutT * (1 + len(residuals)) + 4 * CinP
    stack_extra = 0
    for sp in specs:
        per_row += 4 * sp["cout_p"] + esz * sp["cout_p"]
        if sp["stack"]:
            stack_extra = max(stack_extra, esz * sp["n_taps"] * sp["cin_p"])
    per_row += stack_extra
    fixed = sum(2 * int(sp["w"].size) * esz + 4 * int(sp["b"].size) for sp in specs)
    limit, budget = _device_vmem()
    TL = _choose_tile(Lp, per_row, fixed, budget, single_batch=(B == 1))

    n_tiles = -(-Lp // TL)
    Lp_pad = n_tiles * TL

    xp = x.reshape(B, Lp, CinP)
    resp = [r.astype(ACT_DTYPE).reshape(B, Lp, CoutT) for r in residuals]
    if Lp_pad != Lp:
        padw = ((0, 0), (0, Lp_pad - Lp), (0, 0))
        xp = jnp.pad(xp, padw)
        resp = [jnp.pad(r, padw) for r in resp]

    has_halo = (HLp + HR) > 0
    inputs = [xp]
    in_specs = [pl.BlockSpec((1, TL, CinP), lambda bi, li: (bi, li, 0))]
    if has_halo:
        halo = _build_halo(xp, TL, HLp, HR, n_tiles)
        inputs.append(halo)
        in_specs.append(
            pl.BlockSpec((1, 1, HLp + HR, CinP), lambda bi, li: (bi, li, 0, 0)))
    layers_cfg = []
    for li_, sp in enumerate(specs):
        w, b = sp["w"], sp["b"]
        inputs += [w, b]
        in_specs += [pl.BlockSpec(w.shape, lambda bi, li: (0, 0)),   # VMEM-resident
                     pl.BlockSpec(b.shape, lambda bi, li: (0, 0))]
        if li_ == 0:
            n_out = TL + E_L + E_R
            starts = tuple(HLp - E_L + d for d in sp["offs"])
        else:
            n_out = TL
            starts = tuple(E_L + d for d in sp["offs"])
        layers_cfg.append(dict(
            starts=starts, n_out=n_out, cin_p=sp["cin_p"], pre_slope=pre_slopes[li_],
            stack=sp["stack"],
            mask_lead=(E_L if (nL == 2 and li_ == 0) else None), lp_valid=Lp))
    # TODO(synk): sweep pipeline_mode=pl.Buffered(3) on the x/residual streams (and
    # Buffered(1) on the weight blocks) for the long-L, small-C mem-bound layers.
    for r in resp:
        inputs.append(r)
        in_specs.append(pl.BlockSpec((1, TL, CoutT), lambda bi, li: (bi, li, 0)))

    cfg = dict(has_halo=has_halo, HLp=HLp, HR=HR, layers=tuple(layers_cfg),
               n_res=len(resp), add_x_res=add_x_res, out_scale=float(out_scale),
               post_act=post_act, cdtype=ACT_DTYPE)

    flops = 2 * B * Lp_pad * sum(sp["n_taps"] * sp["cin_p"] * sp["cout_p"]
                                 for sp in specs)
    cost = pl.CostEstimate(
        flops=int(flops),
        transcendentals=int(B * Lp_pad * CoutT) if post_act == "tanh" else 0,
        bytes_accessed=int(esz * B * Lp_pad * (CinP + CoutT * (1 + len(resp)))
                           + sum(esz * int(sp["w"].size) for sp in specs)))

    out = pl.pallas_call(
        functools.partial(_chain_kernel, cfg=cfg),
        out_shape=jax.ShapeDtypeStruct((B, Lp_pad, CoutT), ACT_DTYPE),
        grid=(B, n_tiles),
        in_specs=in_specs,
        out_specs=pl.BlockSpec((1, TL, CoutT), lambda bi, li: (bi, li, 0)),
        compiler_params=pltpu.CompilerParams(
            dimension_semantics=("parallel", "parallel"),
            vmem_limit_bytes=limit),
        cost_estimate=cost,
    )(*inputs)

    if Lp_pad != Lp:
        out = out[:, :Lp, :]
    return out.reshape(B, Lp * sl["s_out"], sl["cout"])


# ---------------------------------------------------------------------------
# One-time weight packing: Conv1d / strided Conv1d / ConvTranspose1d -> lane-packed
# shifted-matmul tap matrices (all share one builder).
# ---------------------------------------------------------------------------
def get_padding(k, d=1):
    return (k * d - d) // 2


def prep_conv(W, b, *, stride=1, padding=0, dilation=1, pack_out=1, transposed=False):
    """Build a fused-kernel spec.

    Regular Conv1d  : W (Cout, Cin, K); output pack S_o = pack_out, input pack S_o*stride.
    ConvTranspose1d : W (Cin, Cout, K); output pack S_o = pack_out (multiple of stride),
                      input pack S_o // stride.  Phases sharing an offset are merged."""
    Wn = np.asarray(jax.device_get(W), np.float32)
    bn = np.asarray(jax.device_get(b), np.float32).reshape(-1)
    if transposed:
        Cin, Cout, K = Wn.shape
        assert pack_out % stride == 0
        S_o, S_i = pack_out, pack_out // stride
    else:
        Cout, Cin, K = Wn.shape
        S_o, S_i = pack_out, pack_out * stride

    entries = {}
    for r in range(S_o):
        for k in range(K):
            if transposed:
                num = r + padding - k
                if num % stride != 0:
                    continue
                rel = num // stride
                wk = Wn[:, :, k]                    # (Cin, Cout)
            else:
                rel = r * stride - padding + k * dilation
                wk = Wn[:, :, k].T                  # (Cin, Cout)
            off, c = rel // S_i, rel % S_i
            t = entries.setdefault(off, np.zeros((S_i * Cin, S_o * Cout), np.float32))
            t[c * Cin:(c + 1) * Cin, r * Cout:(r + 1) * Cout] += wk

    offs = tuple(sorted(entries))
    w = jnp.asarray(np.concatenate([entries[o] for o in offs], axis=0), ACT_DTYPE)
    bias = jnp.asarray(np.tile(bn, S_o).reshape(1, S_o * Cout), jnp.float32)
    cin_p, cout_p, nt = S_i * Cin, S_o * Cout, len(offs)
    stack = (nt > 1) and (cin_p % 128 == 0) and (nt * cin_p <= 4096)
    return dict(w=w, b=bias, offs=offs, cin=Cin, cout=Cout, s_in=S_i, s_out=S_o,
                cin_p=cin_p, cout_p=cout_p, n_taps=nt, stack=stack)


def _pick_pack(cout, divisor, cap_lanes=128):
    """Largest power-of-2 pack S dividing `divisor` with S*cout <= 128 lanes."""
    s = 1
    while divisor % (s * 2) == 0 and (s * 2) * cout <= cap_lanes:
        s *= 2
    return s


def prepare_params(raw, h):
    """Pre-pack PyTorch-layout weights into kernel-ready specs (done once)."""
    rates = list(h["upsample_rates"])
    ksizes = list(h["upsample_kernel_sizes"])
    upp = int(math.prod(rates))
    prep = {"upp": upp}
    prep["conv_pre"] = prep_conv(raw["conv_pre_w"], raw["conv_pre_b"], padding=3)
    prep["ups"], prep["noise"], prep["resblocks"] = [], [], []
    for i, (u, k) in enumerate(zip(rates, ksizes)):
        cum_in = int(math.prod(rates[:i]))
        cum_out = int(math.prod(rates[:i + 1]))
        cout = h["upsample_initial_channel"] // (2 ** (i + 1))
        S_lvl = _pick_pack(cout, cum_out)
        # Polyphase ConvTranspose1d; extra input packing keeps the store lane-dense
        # even when stride*cout < 128.  TODO(synk): odd (k-u) paddings unsupported.
        s_up_in = _pick_pack(cout * u, cum_in)
        prep["ups"].append(prep_conv(raw["ups_w"][i], raw["ups_b"][i], stride=u,
                                     padding=(k - u) // 2, transposed=True,
                                     pack_out=s_up_in * u))
        nw, nb, nstride, npad = raw["noise_convs"][i]
        # TODO(synk): odd stride_f0 (rates containing 3/5/7) changes torch's output
        # length for the K=2*stride noise conv; only stride==1 or even handled here.
        assert nstride == 1 or nstride % 2 == 0
        prep["noise"].append(prep_conv(nw, nb, stride=nstride, padding=npad,
                                       pack_out=S_lvl))
        level = []
        for j, (ks, dil) in enumerate(zip(h["resblock_kernel_sizes"],
                                          h["resblock_dilation_sizes"])):
            blk = []
            for di, d in enumerate(dil):
                w1, b1, w2, b2 = raw["resblocks"][i][j][di]
                blk.append((prep_conv(w1, b1, padding=get_padding(ks, d), dilation=d,
                                      pack_out=S_lvl),
                            prep_conv(w2, b2, padding=get_padding(ks, 1), dilation=1,
                                      pack_out=S_lvl)))
            level.append(blk)
        prep["resblocks"].append(level)
    prep["conv_post"] = prep_conv(raw["conv_post_w"], raw["conv_post_b"], padding=3,
                                  pack_out=_pick_pack(1, upp))
    dim = h["harmonic_num"] + 1
    Wlin = jnp.asarray(raw["source"]["l_linear_w"], jnp.float32).reshape(1, dim, 1)
    prep["source_linear"] = prep_conv(Wlin, raw["source"]["l_linear_b"], padding=0,
                                      pack_out=_pick_pack(1, upp))
    return prep


# ---------------------------------------------------------------------------
# NSF source module (SineGen) -- glue math in f32 JAX, linear+tanh in the kernel
# ---------------------------------------------------------------------------
def _upsample_linear_align_corners(x, upp):
    B, T, D = x.shape
    Lout = T * upp
    if T == 1:
        return jnp.repeat(x, Lout, axis=1)
    pos = jnp.arange(Lout, dtype=jnp.float32) * (T - 1) / (Lout - 1)
    i0 = jnp.floor(pos).astype(jnp.int32)
    i1 = jnp.minimum(i0 + 1, T - 1)
    frac = (pos - i0.astype(jnp.float32))[None, :, None]
    return x[:, i0, :] * (1.0 - frac) + x[:, i1, :] * frac


def sine_gen(f0, upp, key, sampling_rate, harmonic_num=8, sine_amp=0.1,
             noise_std=0.003, voiced_threshold=0.0):
    # TODO(synk): torch's rand_ini / randn use torch RNG; seeded with JAX PRNG here
    # (same semantics, not bit-identical).
    # TODO(synk): the phase cumsum is f32 and can drift on very long utterances.
    dim = harmonic_num + 1
    B, T = f0.shape
    k_ini, k_noise = jax.random.split(key)
    f0e = f0[..., None]                                          # (B, T, 1)
    fn = f0e * jnp.arange(1, dim + 1, dtype=jnp.float32)[None, None, :]
    rad_values = jnp.mod(fn / sampling_rate, 1.0)                # (B, T, dim)
    rand_ini = jax.random.uniform(k_ini, (B, dim))
    rand_ini = rand_ini.at[:, 0].set(0.0)
    rad_values = rad_values.at[:, 0, :].add(rand_ini)

    tmp_over_one = jnp.cumsum(rad_values, axis=1) * upp
    tmp_over_one = _upsample_linear_align_corners(tmp_over_one, upp)
    rad_up = jnp.repeat(rad_values, upp, axis=1)                 # nearest upsample
    tmp_over_one = jnp.mod(tmp_over_one, 1.0)
    diff = tmp_over_one[:, 1:, :] - tmp_over_one[:, :-1, :]
    cumsum_shift = jnp.concatenate(
        [jnp.zeros_like(diff[:, :1]), jnp.where(diff < 0, -1.0, 0.0)], axis=1)
    phase = jnp.cumsum(rad_up + cumsum_shift, axis=1) * 2.0 * jnp.pi
    sines = jnp.sin(phase)                                       # (B, T*upp, dim)

    uv = (f0e > voiced_threshold).astype(jnp.float32)
    uv_up = jnp.repeat(uv, upp, axis=1)
    noise_amp = uv_up * noise_std + (1.0 - uv_up) * sine_amp / 3.0
    noise = noise_amp * jax.random.normal(k_noise, sines.shape)
    return sines * sine_amp * uv_up + noise                      # (B, T*upp, dim)


def source_module(prep, f0, upp, key, h):
    sine_wavs = sine_gen(f0, upp, key, h["sampling_rate"], h["harmonic_num"])
    # lane-packed linear + tanh inside the fused kernel
    return run_chain((prep["source_linear"],), sine_wavs, post_act="tanh")


# ---------------------------------------------------------------------------
# Generator forward
# ---------------------------------------------------------------------------
def generator_forward(prep, h, mel, f0, noise_key):
    rates = h["upsample_rates"]
    num_kernels = len(h["resblock_kernel_sizes"])
    upp = prep["upp"]
    B, T_mel = f0.shape
    T_audio = T_mel * upp

    har = source_module(prep, f0, upp, noise_key, h)              # (B, T_audio, 1)
    x = run_chain((prep["conv_pre"],), mel)                       # (B, T_mel, c0)

    for i in range(len(rates)):
        # F.leaky_relu(x, 0.1) fused as the pre-activation of the polyphase upsample.
        x_up = run_chain((prep["ups"][i],), x, pre_slopes=(LRELU_SLOPE,))
        # noise conv on the packed harmonic source, x + x_source fused as residual.
        x = run_chain((prep["noise"][i],), har, residuals=(x_up,))

        xs_acc = None
        for j in range(num_kernels):
            xb = x
            units = prep["resblocks"][i][j]
            for di, pair in enumerate(units):
                if di < len(units) - 1:
                    # lrelu->conv1->lrelu->conv2 + skip, one fused pallas_call.
                    xb = run_chain(pair, xb, pre_slopes=(LRELU_SLOPE, LRELU_SLOPE),
                                   add_x_res=True)
                else:
                    res = () if xs_acc is None else (xs_acc,)
                    scale = 1.0 / num_kernels if j == num_kernels - 1 else 1.0
                    xs_acc = run_chain(pair, xb, pre_slopes=(LRELU_SLOPE, LRELU_SLOPE),
                                       residuals=res, add_x_res=True, out_scale=scale)
        x = xs_acc

    # F.leaky_relu(x) (slope 0.01) + conv_post + tanh, lane-packed output.
    y = run_chain((prep["conv_post"],), x, pre_slopes=(0.01,), post_act="tanh")
    return y.reshape(B, T_audio).astype(jnp.float32)


def nsf_hifigan_onnx_forward(prep, mel, f0, h, mel_base="e", noise_key=None):
    """mel: (B, T_mel, num_mels) channel-last (the torch module's transpose(1,2) is
    absorbed by the layout); f0: (B, T_mel)  ->  wav: (B, T_audio) float32."""
    if mel_base != "e":
        mel = mel * 2.30259
    if noise_key is None:
        noise_key = jax.random.PRNGKey(0)
    return generator_forward(prep, h, mel, f0, noise_key)


# ---------------------------------------------------------------------------
# Deterministic raw (PyTorch-layout) parameter init -- shapes from Generator.__init__
# ---------------------------------------------------------------------------
def _conv_init(key, cout, cin, k):
    return (0.01 * jax.random.normal(key, (cout, cin, k), jnp.float32),
            jnp.zeros((cout,), jnp.float32))


def init_params(key, h):
    rates = h["upsample_rates"]
    ksizes = h["upsample_kernel_sizes"]
    c0 = h["upsample_initial_channel"]
    num_mels = h["num_mels"]
    dim = h["harmonic_num"] + 1
    keys = iter(jax.random.split(key, 256))

    params = {}
    params["conv_pre_w"], params["conv_pre_b"] = _conv_init(next(keys), c0, num_mels, 7)

    ups_w, ups_b, noise_convs, resblocks = [], [], [], []
    for i, (u, k) in enumerate(zip(rates, ksizes)):
        cin = c0 // (2 ** i)
        cout = c0 // (2 ** (i + 1))
        # ConvTranspose1d weight layout: (Cin, Cout, K)
        ups_w.append(0.01 * jax.random.normal(next(keys), (cin, cout, k), jnp.float32))
        ups_b.append(jnp.zeros((cout,), jnp.float32))
        if i + 1 < len(rates):
            stride_f0 = int(math.prod(rates[i + 1:]))
            nw, nb = _conv_init(next(keys), cout, 1, stride_f0 * 2)
            noise_convs.append((nw, nb, stride_f0, stride_f0 // 2))
        else:
            nw, nb = _conv_init(next(keys), cout, 1, 1)
            noise_convs.append((nw, nb, 1, 0))
        per_level = []
        for ks, dil in zip(h["resblock_kernel_sizes"], h["resblock_dilation_sizes"]):
            block = []
            for _ in dil:
                w1, b1 = _conv_init(next(keys), cout, cout, ks)
                w2, b2 = _conv_init(next(keys), cout, cout, ks)
                block.append((w1, b1, w2, b2))
            per_level.append(block)
        resblocks.append(per_level)
    params["ups_w"], params["ups_b"] = ups_w, ups_b
    params["noise_convs"] = noise_convs
    params["resblocks"] = resblocks

    c_last = c0 // (2 ** len(rates))
    params["conv_post_w"], params["conv_post_b"] = _conv_init(next(keys), 1, c_last, 7)

    params["source"] = {
        "l_linear_w": 0.1 * jax.random.normal(next(keys), (1, dim), jnp.float32),
        "l_linear_b": jnp.zeros((1,), jnp.float32),
    }
    return params


# ---------------------------------------------------------------------------
if __name__ == "__main__":
    attrs = {
        "num_mels": 16,
        "upsample_initial_channel": 32,
        "upsample_rates": [4, 4],
        "upsample_kernel_sizes": [8, 8],
        "resblock_kernel_sizes": [3, 5],
        "resblock_dilation_sizes": [[1, 3], [1, 3]],
        "sampling_rate": 16000,
        "harmonic_num": 8,
    }

    root = jax.random.PRNGKey(0)
    k_params, k_mel, k_f0, k_noise = jax.random.split(root, 4)

    raw_params = init_params(k_params, attrs)
    prep = prepare_params(raw_params, attrs)        # one-time weight packing

    B, T_mel = 2, 8
    mel = jax.random.normal(k_mel, (B, T_mel, attrs["num_mels"]), jnp.float32)
    f0 = 100.0 + 300.0 * jax.random.uniform(k_f0, (B, T_mel), jnp.float32)

    fwd = jax.jit(lambda mel_, f0_, key_: nsf_hifigan_onnx_forward(
        prep, mel_, f0_, attrs, mel_base="e", noise_key=key_))

    wav = jax.block_until_ready(fwd(mel, f0, k_noise))

    T_audio = T_mel * int(math.prod(attrs["upsample_rates"]))
    assert wav.shape == (B, T_audio), wav.shape
    assert bool(jnp.all(jnp.isfinite(wav)))
    print("KERNEL_OK")
</pallas_src>

<mosaic_0001>
module attributes {stable_mosaic.version = 11 : i64} {
  func.func @_chain_kernel(%arg0: i32, %arg1: i32, %arg2: memref<1x8x144xbf16, #tpu.memory_space<vmem>>, %arg3: memref<144x16xbf16, #tpu.memory_space<vmem>>, %arg4: memref<1x16xf32, #tpu.memory_space<vmem>>, %arg5: memref<1x8x16xbf16, #tpu.memory_space<vmem>>) attributes {dimension_semantics = [#tpu.dimension_semantics<parallel>, #tpu.dimension_semantics<parallel>], iteration_bounds = array<i64: 2, 1>, scalar_prefetch = 0 : i64, scratch_operands = 0 : i64, tpu.core_type = #tpu.core_type<tc>, window_params = [{transform_indices = @transform_0, window_bounds = array<i64: 1, 8, 144>}, {pipeline_mode = #tpu.pipeline_mode<synchronous>, transform_indices = @transform_1, window_bounds = array<i64: 144, 16>}, {pipeline_mode = #tpu.pipeline_mode<synchronous>, transform_indices = @transform_2, window_bounds = array<i64: 1, 16>}, {transform_indices = @transform_3, window_bounds = array<i64: 1, 8, 16>}]} {
    %c0 = arith.constant 0 : index
    %c0_0 = arith.constant 0 : index
    %c0_1 = arith.constant 0 : index
    %0 = vector.load %arg2[%c0, %c0_0, %c0_1] : memref<1x8x144xbf16, #tpu.memory_space<vmem>>, vector<1x8x144xbf16>
    %1 = vector.shape_cast %0 : vector<1x8x144xbf16> to vector<8x144xbf16>
    %c0_2 = arith.constant 0 : index
    %c0_3 = arith.constant 0 : index
    %2 = vector.load %arg3[%c0_2, %c0_3] : memref<144x16xbf16, #tpu.memory_space<vmem>>, vector<144x16xbf16>
    %cst = arith.constant dense<0.000000e+00> : vector<8x16xf32>
    %3 = tpu.matmul %1, %2, %cst {dimension_numbers = #tpu.dot_dimension_numbers<[1], [0], [0], [1], [0, 0, 1, 1], [], []>} : vector<8x144xbf16>, vector<144x16xbf16>, vector<8x16xf32> -> vector<8x16xf32>
    %c0_4 = arith.constant 0 : index
    %c0_5 = arith.constant 0 : index
    %4 = vector.load %arg4[%c0_4, %c0_5] : memref<1x16xf32, #tpu.memory_space<vmem>>, vector<1x16xf32>
    %5 = vector.broadcast %4 : vector<1x16xf32> to vector<8x16xf32>
    %6 = arith.addf %3, %5 : vector<8x16xf32>
    %7 = math.tanh %6 : vector<8x16xf32>
    %8 = arith.truncf %7 : vector<8x16xf32> to vector<8x16xbf16>
    %c0_6 = arith.constant 0 : index
    %c0_7 = arith.constant 0 : index
    %c0_8 = arith.constant 0 : index
    %9 = vector.load %arg5[%c0_6, %c0_7, %c0_8] : memref<1x8x16xbf16, #tpu.memory_space<vmem>>, vector<1x8x16xbf16>
    %10 = vector.shape_cast %9 : vector<1x8x16xbf16> to vector<8x16xbf16>
    %11 = vector.shape_cast %8 : vector<8x16xbf16> to vector<1x8x16xbf16>
    tpu.vector_store %arg5[%c0_6, %c0_7, %c0_8], %11 {strides = array<i32>} : memref<1x8x16xbf16, #tpu.memory_space<vmem>>, vector<1x8x16xbf16>,
    return
  }
  func.func @transform_0(%arg0: i32, %arg1: i32) -> (i32, i32, i32) {
    %c0_i32 = arith.constant 0 : i32
    %c0_i32_0 = arith.constant 0 : i32
    return %arg0, %arg1, %c0_i32 : i32, i32, i32
  }
  func.func @transform_1(%arg0: i32, %arg1: i32) -> (i32, i32) {
    %c0_i32 = arith.constant 0 : i32
    %c0_i32_0 = arith.constant 0 : i32
    %c0_i32_1 = arith.constant 0 : i32
    return %c0_i32, %c0_i32_0 : i32, i32
  }
  func.func @transform_2(%arg0: i32, %arg1: i32) -> (i32, i32) {
    %c0_i32 = arith.constant 0 : i32
    %c0_i32_0 = arith.constant 0 : i32
    %c0_i32_1 = arith.constant 0 : i32
    return %c0_i32, %c0_i32_0 : i32, i32
  }
  func.func @transform_3(%arg0: i32, %arg1: i32) -> (i32, i32, i32) {
    %c0_i32 = arith.constant 0 : i32
    %c0_i32_0 = arith.constant 0 : i32
    return %arg0, %arg1, %c0_i32 : i32, i32, i32
  }
}

module attributes {stable_mosaic.version = 11 : i64} {
  func.func @_chain_kernel(%arg0: i32, %arg1: i32, %arg2: memref<1x8x32xbf16, #tpu.memory_space<vmem>>, %arg3: memref<1x1x17x32xbf16, #tpu.memory_space<vmem>>, %arg4: memref<96x64xbf16, #tpu.memory_space<vmem>>, %arg5: memref<1x64xf32, #tpu.memory_space<vmem>>, %arg6: memref<1x8x64xbf16, #tpu.memory_space<vmem>>) attributes {dimension_semantics = [#tpu.dimension_semantics<parallel>, #tpu.dimension_semantics<parallel>], iteration_bounds = array<i64: 2, 1>, scalar_prefetch = 0 : i64, scratch_operands = 0 : i64, tpu.core_type = #tpu.core_type<tc>, window_params = [{transform_indices = @transform_0, window_bounds = array<i64: 1, 8, 32>}, {transform_indices = @transform_1, window_bounds = array<i64: 1, 1, 17, 32>}, {pipeline_mode = #tpu.pipeline_mode<synchronous>, transform_indices = @transform_2, window_bounds = array<i64: 96, 64>}, {pipeline_mode = #tpu.pipeline_mode<synchronous>, transform_indices = @transform_3, window_bounds = array<i64: 1, 64>}, {transform_indices = @transform_4, window_bounds = array<i64: 1, 8, 64>}]} {
    %c0 = arith.constant 0 : index
    %c0_0 = arith.constant 0 : index
    %c0_1 = arith.constant 0 : index
    %0 = vector.load %arg2[%c0, %c0_0, %c0_1] : memref<1x8x32xbf16, #tpu.memory_space<vmem>>, vector<1x8x32xbf16>
    %1 = vector.shape_cast %0 : vector<1x8x32xbf16> to vector<8x32xbf16>
    %c0_2 = arith.constant 0 : index
    %c0_3 = arith.constant 0 : index
    %c0_4 = arith.constant 0 : index
    %c0_5 = arith.constant 0 : index
    %2 = vector.load %arg3[%c0_2, %c0_3, %c0_4, %c0_5] : memref<1x1x17x32xbf16, #tpu.memory_space<vmem>>, vector<1x1x17x32xbf16>
    %3 = vector.shape_cast %2 : vector<1x1x17x32xbf16> to vector<17x32xbf16>
    %4 = vector.extract_strided_slice %3 {offsets = [0, 0], sizes = [16, 32], strides = [1, 1]} : vector<17x32xbf16> to vector<16x32xbf16>
    %5 = vector.extract_strided_slice %3 {offsets = [16, 0], sizes = [1, 32], strides = [1, 1]} : vector<17x32xbf16> to vector<1x32xbf16>
    %6 = tpu.concatenate %4, %1, %5 in 0 : vector<16x32xbf16>, vector<8x32xbf16>, vector<1x32xbf16> -> vector<25x32xbf16>
    %7 = arith.extf %6 : vector<25x32xbf16> to vector<25x32xf32>
    %cst = arith.constant 0.000000e+00 : f32
    %8 = vector.broadcast %cst : f32 to vector<25x32xf32>
    %9 = arith.cmpf oge, %7, %8 : vector<25x32xf32>
    %cst_6 = arith.constant 1.000000e-01 : f32
    %10 = vector.broadcast %cst_6 : f32 to vector<25x32xf32>
    %11 = arith.mulf %7, %10 : vector<25x32xf32>
    %12 = arith.select %9, %7, %11 : vector<25x32xi1>, vector<25x32xf32>
    %13 = arith.truncf %12 : vector<25x32xf32> to vector<25x32xbf16>
    %14 = vector.extract_strided_slice %13 {offsets = [15, 0], sizes = [8, 32], strides = [1, 1]} : vector<25x32xbf16> to vector<8x32xbf16>
    %c0_7 = arith.constant 0 : index
    %c0_8 = arith.constant 0 : index
    %15 = vector.load %arg4[%c0_7, %c0_8] : memref<96x64xbf16, #tpu.memory_space<vmem>>, vector<32x64xbf16>
    %cst_9 = arith.constant dense<0.000000e+00> : vector<8x64xf32>
    %16 = tpu.matmul %14, %15, %cst_9 {dimension_numbers = #tpu.dot_dimension_numbers<[1], [0], [0], [1], [0, 0, 1, 1], [], []>} : vector<8x32xbf16>, vector<32x64xbf16>, vector<8x64xf32> -> vector<8x64xf32>
    %17 = vector.extract_strided_slice %13 {offsets = [16, 0], sizes = [8, 32], strides = [1, 1]} : vector<25x32xbf16> to vector<8x32xbf16>
    %c32 = arith.constant 32 : index
    %c0_10 = arith.constant 0 : index
    %18 = vector.load %arg4[%c32, %c0_10] : memref<96x64xbf16, #tpu.memory_space<vmem>>, vector<32x64xbf16>
    %cst_11 = arith.constant dense<0.000000e+00> : vector<8x64xf32>
    %19 = tpu.matmul %17, %18, %cst_11 {dimension_numbers = #tpu.dot_dimension_numbers<[1], [0], [0], [1], [0, 0, 1, 1], [], []>} : vector<8x32xbf16>, vector<32x64xbf16>, vector<8x64xf32> -> vector<8x64xf32>
    %20 = arith.addf %16, %19 : vector<8x64xf32>
    %21 = vector.extract_strided_slice %13 {offsets = [17, 0], sizes = [8, 32], strides = [1, 1]} : vector<25x32xbf16> to vector<8x32xbf16>
    %c64 = arith.constant 64 : index
    %c0_12 = arith.constant 0 : index
    %22 = vector.load %arg4[%c64, %c0_12] : memref<96x64xbf16, #tpu.memory_space<vmem>>, vector<32x64xbf16>
    %cst_13 = arith.constant dense<0.000000e+00> : vector<8x64xf32>
    %23 = tpu.matmul %21, %22, %cst_13 {dimension_numbers = #tpu.dot_dimension_numbers<[1], [0], [0], [1], [0, 0, 1, 1], [], []>} : vector<8x32xbf16>, vector<32x64xbf16>, vector<8x64xf32> -> vector<8x64xf32>
    %24 = arith.addf %20, %23 : vector<8x64xf32>
    %c0_14 = arith.constant 0 : index
    %c0_15 = arith.constant 0 : index
    %25 = vector.load %arg5[%c0_14, %c0_15] : memref<1x64xf32, #tpu.memory_space<vmem>>, vector<1x64xf32>
    %26 = vector.broadcast %25 : vector<1x64xf32> to vector<8x64xf32>
    %27 = arith.addf %24, %26 : vector<8x64xf32>
    %28 = arith.truncf %27 : vector<8x64xf32> to vector<8x64xbf16>
    %c0_16 = arith.constant 0 : index
    %c0_17 = arith.constant 0 : index
    %c0_18 = arith.constant 0 : index
    %29 = vector.load %arg6[%c0_16, %c0_17, %c0_18] : memref<1x8x64xbf16, #tpu.memory_space<vmem>>, vector<1x8x64xbf16>
    %30 = vector.shape_cast %29 : vector<1x8x64xbf16> to vector<8x64xbf16>
    %31 = vector.shape_cast %28 : vector<8x64xbf16> to vector<1x8x64xbf16>
    tpu.vector_store %arg6[%c0_16, %c0_17, %c0_18], %31 {strides = array<i32>} : memref<1x8x64xbf16, #tpu.memory_space<vmem>>, vector<1x8x64xbf16>,
    return
  }
  func.func @transform_0(%arg0: i32, %arg1: i32) -> (i32, i32, i32) {
    %c0_i32 = arith.constant 0 : i32
    %c0_i32_0 = arith.constant 0 : i32
    return %arg0, %arg1, %c0_i32 : i32, i32, i32
  }
  func.func @transform_1(%arg0: i32, %arg1: i32) -> (i32, i32, i32, i32) {
    %c0_i32 = arith.constant 0 : i32
    %c0_i32_0 = arith.constant 0 : i32
    %c0_i32_1 = arith.constant 0 : i32
    return %arg0, %arg1, %c0_i32, %c0_i32_0 : i32, i32, i32, i32
  }
  func.func @transform_2(%arg0: i32, %arg1: i32) -> (i32, i32) {
    %c0_i32 = arith.constant 0 : i32
    %c0_i32_0 = arith.constant 0 : i32
    %c0_i32_1 = arith.constant 0 : i32
    return %c0_i32, %c0_i32_0 : i32, i32
  }
  func.func @transform_3(%arg0: i32, %arg1: i32) -> (i32, i32) {
    %c0_i32 = arith.constant 0 : i32
    %c0_i32_0 = arith.constant 0 : i32
    %c0_i32_1 = arith.constant 0 : i32
    return %c0_i32, %c0_i32_0 : i32, i32
  }
  func.func @transform_4(%arg0: i32, %arg1: i32) -> (i32, i32, i32) {
    %c0_i32 = arith.constant 0 : i32
    %c0_i32_0 = arith.constant 0 : i32
    return %arg0, %arg1, %c0_i32 : i32, i32, i32
  }
}

module attributes {stable_mosaic.version = 11 : i64} {
  func.func @_chain_kernel(%arg0: i32, %arg1: i32, %arg2: memref<1x8x16xbf16, #tpu.memory_space<vmem>>, %arg3: memref<1x1x19x16xbf16, #tpu.memory_space<vmem>>, %arg4: memref<112x32xbf16, #tpu.memory_space<vmem>>, %arg5: memref<1x32xf32, #tpu.memory_space<vmem>>, %arg6: memref<1x8x32xbf16, #tpu.memory_space<vmem>>) attributes {dimension_semantics = [#tpu.dimension_semantics<parallel>, #tpu.dimension_semantics<parallel>], iteration_bounds = array<i64: 2, 1>, scalar_prefetch = 0 : i64, scratch_operands = 0 : i64, tpu.core_type = #tpu.core_type<tc>, window_params = [{transform_indices = @transform_0, window_bounds = array<i64: 1, 8, 16>}, {transform_indices = @transform_1, window_bounds = array<i64: 1, 1, 19, 16>}, {pipeline_mode = #tpu.pipeline_mode<synchronous>, transform_indices = @transform_2, window_bounds = array<i64: 112, 32>}, {pipeline_mode = #tpu.pipeline_mode<synchronous>, transform_indices = @transform_3, window_bounds = array<i64: 1, 32>}, {transform_indices = @transform_4, window_bounds = array<i64: 1, 8, 32>}]} {
    %c0 = arith.constant 0 : index
    %c0_0 = arith.constant 0 : index
    %c0_1 = arith.constant 0 : index
    %0 = vector.load %arg2[%c0, %c0_0, %c0_1] : memref<1x8x16xbf16, #tpu.memory_space<vmem>>, vector<1x8x16xbf16>
    %1 = vector.shape_cast %0 : vector<1x8x16xbf16> to vector<8x16xbf16>
    %c0_2 = arith.constant 0 : index
    %c0_3 = arith.constant 0 : index
    %c0_4 = arith.constant 0 : index
    %c0_5 = arith.constant 0 : index
    %2 = vector.load %arg3[%c0_2, %c0_3, %c0_4, %c0_5] : memref<1x1x19x16xbf16, #tpu.memory_space<vmem>>, vector<1x1x19x16xbf16>
    %3 = vector.shape_cast %2 : vector<1x1x19x16xbf16> to vector<19x16xbf16>
    %4 = vector.extract_strided_slice %3 {offsets = [0, 0], sizes = [16, 16], strides = [1, 1]} : vector<19x16xbf16> to vector<16x16xbf16>
    %5 = vector.extract_strided_slice %3 {offsets = [16, 0], sizes = [3, 16], strides = [1, 1]} : vector<19x16xbf16> to vector<3x16xbf16>
    %6 = tpu.concatenate %4, %1, %5 in 0 : vector<16x16xbf16>, vector<8x16xbf16>, vector<3x16xbf16> -> vector<27x16xbf16>
    %7 = vector.extract_strided_slice %6 {offsets = [13, 0], sizes = [8, 16], strides = [1, 1]} : vector<27x16xbf16> to vector<8x16xbf16>
    %c0_6 = arith.constant 0 : index
    %c0_7 = arith.constant 0 : index
    %8 = vector.load %arg4[%c0_6, %c0_7] : memref<112x32xbf16, #tpu.memory_space<vmem>>, vector<16x32xbf16>
    %cst = arith.constant dense<0.000000e+00> : vector<8x32xf32>
    %9 = tpu.matmul %7, %8, %cst {dimension_numbers = #tpu.dot_dimension_numbers<[1], [0], [0], [1], [0, 0, 1, 1], [], []>} : vector<8x16xbf16>, vector<16x32xbf16>, vector<8x32xf32> -> vector<8x32xf32>
    %10 = vector.extract_strided_slice %6 {offsets = [14, 0], sizes = [8, 16], strides = [1, 1]} : vector<27x16xbf16> to vector<8x16xbf16>
    %c16 = arith.constant 16 : index
    %c0_8 = arith.constant 0 : index
    %11 = vector.load %arg4[%c16, %c0_8] : memref<112x32xbf16, #tpu.memory_space<vmem>>, vector<16x32xbf16>
    %cst_9 = arith.constant dense<0.000000e+00> : vector<8x32xf32>
    %12 = tpu.matmul %10, %11, %cst_9 {dimension_numbers = #tpu.dot_dimension_numbers<[1], [0], [0], [1], [0, 0, 1, 1], [], []>} : vector<8x16xbf16>, vector<16x32xbf16>, vector<8x32xf32> -> vector<8x32xf32>
    %13 = arith.addf %9, %12 : vector<8x32xf32>
    %14 = vector.extract_strided_slice %6 {offsets = [15, 0], sizes = [8, 16], strides = [1, 1]} : vector<27x16xbf16> to vector<8x16xbf16>
    %c32 = arith.constant 32 : index
    %c0_10 = arith.constant 0 : index
    %15 = vector.load %arg4[%c32, %c0_10] : memref<112x32xbf16, #tpu.memory_space<vmem>>, vector<16x32xbf16>
    %cst_11 = arith.constant dense<0.000000e+00> : vector<8x32xf32>
    %16 = tpu.matmul %14, %15, %cst_11 {dimension_numbers = #tpu.dot_dimension_numbers<[1], [0], [0], [1], [0, 0, 1, 1], [], []>} : vector<8x16xbf16>, vector<16x32xbf16>, vector<8x32xf32> -> vector<8x32xf32>
    %17 = arith.addf %13, %16 : vector<8x32xf32>
    %18 = vector.extract_strided_slice %6 {offsets = [16, 0], sizes = [8, 16], strides = [1, 1]} : vector<27x16xbf16> to vector<8x16xbf16>
    %c48 = arith.constant 48 : index
    %c0_12 = arith.constant 0 : index
    %19 = vector.load %arg4[%c48, %c0_12] : memref<112x32xbf16, #tpu.memory_space<vmem>>, vector<16x32xbf16>
    %cst_13 = arith.constant dense<0.000000e+00> : vector<8x32xf32>
    %20 = tpu.matmul %18, %19, %cst_13 {dimension_numbers = #tpu.dot_dimension_numbers<[1], [0], [0], [1], [0, 0, 1, 1], [], []>} : vector<8x16xbf16>, vector<16x32xbf16>, vector<8x32xf32> -> vector<8x32xf32>
    %21 = arith.addf %17, %20 : vector<8x32xf32>
    %22 = vector.extract_strided_slice %6 {offsets = [17, 0], sizes = [8, 16], strides = [1, 1]} : vector<27x16xbf16> to vector<8x16xbf16>
    %c64 = arith.constant 64 : index
    %c0_14 = arith.constant 0 : index
    %23 = vector.load %arg4[%c64, %c0_14] : memref<112x32xbf16, #tpu.memory_space<vmem>>, vector<16x32xbf16>
    %cst_15 = arith.constant dense<0.000000e+00> : vector<8x32xf32>
    %24 = tpu.matmul %22, %23, %cst_15 {dimension_numbers = #tpu.dot_dimension_numbers<[1], [0], [0], [1], [0, 0, 1, 1], [], []>} : vector<8x16xbf16>, vector<16x32xbf16>, vector<8x32xf32> -> vector<8x32xf32>
    %25 = arith.addf %21, %24 : vector<8x32xf32>
    %26 = vector.extract_strided_slice %6 {offsets = [18, 0], sizes = [8, 16], strides = [1, 1]} : vector<27x16xbf16> to vector<8x16xbf16>
    %c80 = arith.constant 80 : index
    %c0_16 = arith.constant 0 : index
    %27 = vector.load %arg4[%c80, %c0_16] : memref<112x32xbf16, #tpu.memory_space<vmem>>, vector<16x32xbf16>
    %cst_17 = arith.constant dense<0.000000e+00> : vector<8x32xf32>
    %28 = tpu.matmul %26, %27, %cst_17 {dimension_numbers = #tpu.dot_dimension_numbers<[1], [0], [0], [1], [0, 0, 1, 1], [], []>} : vector<8x16xbf16>, vector<16x32xbf16>, vector<8x32xf32> -> vector<8x32xf32>
    %29 = arith.addf %25, %28 : vector<8x32xf32>
    %30 = vector.extract_strided_slice %6 {offsets = [19, 0], sizes = [8, 16], strides = [1, 1]} : vector<27x16xbf16> to vector<8x16xbf16>
    %c96 = arith.constant 96 : index
    %c0_18 = arith.constant 0 : index
    %31 = vector.load %arg4[%c96, %c0_18] : memref<112x32xbf16, #tpu.memory_space<vmem>>, vector<16x32xbf16>
    %cst_19 = arith.constant dense<0.000000e+00> : vector<8x32xf32>
    %32 = tpu.matmul %30, %31, %cst_19 {dimension_numbers = #tpu.dot_dimension_numbers<[1], [0], [0], [1], [0, 0, 1, 1], [], []>} : vector<8x16xbf16>, vector<16x32xbf16>, vector<8x32xf32> -> vector<8x32xf32>
    %33 = arith.addf %29, %32 : vector<8x32xf32>
    %c0_20 = arith.constant 0 : index
    %c0_21 = arith.constant 0 : index
    %34 = vector.load %arg5[%c0_20, %c0_21] : memref<1x32xf32, #tpu.memory_space<vmem>>, vector<1x32xf32>
    %35 = vector.broadcast %34 : vector<1x32xf32> to vector<8x32xf32>
    %36 = arith.addf %33, %35 : vector<8x32xf32>
    %37 = arith.truncf %36 : vector<8x32xf32> to vector<8x32xbf16>
    %c0_22 = arith.constant 0 : index
    %c0_23 = arith.constant 0 : index
    %c0_24 = arith.constant 0 : index
    %38 = vector.load %arg6[%c0_22, %c0_23, %c0_24] : memref<1x8x32xbf16, #tpu.memory_space<vmem>>, vector<1x8x32xbf16>
    %39 = vector.shape_cast %38 : vector<1x8x32xbf16> to vector<8x32xbf16>
    %40 = vector.shape_cast %37 : vector<8x32xbf16> to vector<1x8x32xbf16>
    tpu.vector_store %arg6[%c0_22, %c0_23, %c0_24], %40 {strides = array<i32>} : memref<1x8x32xbf16, #tpu.memory_space<vmem>>, vector<1x8x32xbf16>,
    return
  }
  func.func @transform_0(%arg0: i32, %arg1: i32) -> (i32, i32, i32) {
    %c0_i32 = arith.constant 0 : i32
    %c0_i32_0 = arith.constant 0 : i32
    return %arg0, %arg1, %c0_i32 : i32, i32, i32
  }
  func.func @transform_1(%arg0: i32, %arg1: i32) -> (i32, i32, i32, i32) {
    %c0_i32 = arith.constant 0 : i32
    %c0_i32_0 = arith.constant 0 : i32
    %c0_i32_1 = arith.constant 0 : i32
    return %arg0, %arg1, %c0_i32, %c0_i32_0 : i32, i32, i32, i32
  }
  func.func @transform_2(%arg0: i32, %arg1: i32) -> (i32, i32) {
    %c0_i32 = arith.constant 0 : i32
    %c0_i32_0 = arith.constant 0 : i32
    %c0_i32_1 = arith.constant 0 : i32
    return %c0_i32, %c0_i32_0 : i32, i32
  }
  func.func @transform_3(%arg0: i32, %arg1: i32) -> (i32, i32) {
    %c0_i32 = arith.constant 0 : i32
    %c0_i32_0 = arith.constant 0 : i32
    %c0_i32_1 = arith.constant 0 : i32
    return %c0_i32, %c0_i32_0 : i32, i32
  }
  func.func @transform_4(%arg0: i32, %arg1: i32) -> (i32, i32, i32) {
    %c0_i32 = arith.constant 0 : i32
    %c0_i32_0 = arith.constant 0 : i32
    return %arg0, %arg1, %c0_i32 : i32, i32, i32
  }
}

module attributes {stable_mosaic.version = 11 : i64} {
  func.func @_chain_kernel(%arg0: i32, %arg1: i32, %arg2: memref<1x8x16xbf16, #tpu.memory_space<vmem>>, %arg3: memref<1x1x17x16xbf16, #tpu.memory_space<vmem>>, %arg4: memref<48x64xbf16, #tpu.memory_space<vmem>>, %arg5: memref<1x64xf32, #tpu.memory_space<vmem>>, %arg6: memref<1x8x64xbf16, #tpu.memory_space<vmem>>, %arg7: memref<1x8x64xbf16, #tpu.memory_space<vmem>>) attributes {dimension_semantics = [#tpu.dimension_semantics<parallel>, #tpu.dimension_semantics<parallel>], iteration_bounds = array<i64: 2, 1>, scalar_prefetch = 0 : i64, scratch_operands = 0 : i64, tpu.core_type = #tpu.core_type<tc>, window_params = [{transform_indices = @transform_0, window_bounds = array<i64: 1, 8, 16>}, {transform_indices = @transform_1, window_bounds = array<i64: 1, 1, 17, 16>}, {pipeline_mode = #tpu.pipeline_mode<synchronous>, transform_indices = @transform_2, window_bounds = array<i64: 48, 64>}, {pipeline_mode = #tpu.pipeline_mode<synchronous>, transform_indices = @transform_3, window_bounds = array<i64: 1, 64>}, {transform_indices = @transform_4, window_bounds = array<i64: 1, 8, 64>}, {transform_indices = @transform_5, window_bounds = array<i64: 1, 8, 64>}]} {
    %c0 = arith.constant 0 : index
    %c0_0 = arith.constant 0 : index
    %c0_1 = arith.constant 0 : index
    %0 = vector.load %arg2[%c0, %c0_0, %c0_1] : memref<1x8x16xbf16, #tpu.memory_space<vmem>>, vector<1x8x16xbf16>
    %1 = vector.shape_cast %0 : vector<1x8x16xbf16> to vector<8x16xbf16>
    %c0_2 = arith.constant 0 : index
    %c0_3 = arith.constant 0 : index
    %c0_4 = arith.constant 0 : index
    %c0_5 = arith.constant 0 : index
    %2 = vector.load %arg3[%c0_2, %c0_3, %c0_4, %c0_5] : memref<1x1x17x16xbf16, #tpu.memory_space<vmem>>, vector<1x1x17x16xbf16>
    %3 = vector.shape_cast %2 : vector<1x1x17x16xbf16> to vector<17x16xbf16>
    %4 = vector.extract_strided_slice %3 {offsets = [0, 0], sizes = [16, 16], strides = [1, 1]} : vector<17x16xbf16> to vector<16x16xbf16>
    %5 = vector.extract_strided_slice %3 {offsets = [16, 0], sizes = [1, 16], strides = [1, 1]} : vector<17x16xbf16> to vector<1x16xbf16>
    %6 = tpu.concatenate %4, %1, %5 in 0 : vector<16x16xbf16>, vector<8x16xbf16>, vector<1x16xbf16> -> vector<25x16xbf16>
    %7 = vector.extract_strided_slice %6 {offsets = [15, 0], sizes = [8, 16], strides = [1, 1]} : vector<25x16xbf16> to vector<8x16xbf16>
    %c0_6 = arith.constant 0 : index
    %c0_7 = arith.constant 0 : index
    %8 = vector.load %arg4[%c0_6, %c0_7] : memref<48x64xbf16, #tpu.memory_space<vmem>>, vector<16x64xbf16>
    %cst = arith.constant dense<0.000000e+00> : vector<8x64xf32>
    %9 = tpu.matmul %7, %8, %cst {dimension_numbers = #tpu.dot_dimension_numbers<[1], [0], [0], [1], [0, 0, 1, 1], [], []>} : vector<8x16xbf16>, vector<16x64xbf16>, vector<8x64xf32> -> vector<8x64xf32>
    %10 = vector.extract_strided_slice %6 {offsets = [16, 0], sizes = [8, 16], strides = [1, 1]} : vector<25x16xbf16> to vector<8x16xbf16>
    %c16 = arith.constant 16 : index
    %c0_8 = arith.constant 0 : index
    %11 = vector.load %arg4[%c16, %c0_8] : memref<48x64xbf16, #tpu.memory_space<vmem>>, vector<16x64xbf16>
    %cst_9 = arith.constant dense<0.000000e+00> : vector<8x64xf32>
    %12 = tpu.matmul %10, %11, %cst_9 {dimension_numbers = #tpu.dot_dimension_numbers<[1], [0], [0], [1], [0, 0, 1, 1], [], []>} : vector<8x16xbf16>, vector<16x64xbf16>, vector<8x64xf32> -> vector<8x64xf32>
    %13 = arith.addf %9, %12 : vector<8x64xf32>
    %14 = vector.extract_strided_slice %6 {offsets = [17, 0], sizes = [8, 16], strides = [1, 1]} : vector<25x16xbf16> to vector<8x16xbf16>
    %c32 = arith.constant 32 : index
    %c0_10 = arith.constant 0 : index
    %15 = vector.load %arg4[%c32, %c0_10] : memref<48x64xbf16, #tpu.memory_space<vmem>>, vector<16x64xbf16>
    %cst_11 = arith.constant dense<0.000000e+00> : vector<8x64xf32>
    %16 = tpu.matmul %14, %15, %cst_11 {dimension_numbers = #tpu.dot_dimension_numbers<[1], [0], [0], [1], [0, 0, 1, 1], [], []>} : vector<8x16xbf16>, vector<16x64xbf16>, vector<8x64xf32> -> vector<8x64xf32>
    %17 = arith.addf %13, %16 : vector<8x64xf32>
    %c0_12 = arith.constant 0 : index
    %c0_13 = arith.constant 0 : index
    %18 = vector.load %arg5[%c0_12, %c0_13] : memref<1x64xf32, #tpu.memory_space<vmem>>, vector<1x64xf32>
    %19 = vector.broadcast %18 : vector<1x64xf32> to vector<8x64xf32>
    %20 = arith.addf %17, %19 : vector<8x64xf32>
    %c0_14 = arith.constant 0 : index
    %c0_15 = arith.constant 0 : index
    %c0_16 = arith.constant 0 : index
    %21 = vector.load %arg6[%c0_14, %c0_15, %c0_16] : memref<1x8x64xbf16, #tpu.memory_space<vmem>>, vector<1x8x64xbf16>
    %22 = vector.shape_cast %21 : vector<1x8x64xbf16> to vector<8x64xbf16>
    %23 = arith.extf %22 : vector<8x64xbf16> to vector<8x64xf32>
    %24 = arith.addf %20, %23 : vector<8x64xf32>
    %25 = arith.truncf %24 : vector<8x64xf32> to vector<8x64xbf16>
    %c0_17 = arith.constant 0 : index
    %c0_18 = arith.constant 0 : index
    %c0_19 = arith.constant 0 : index
    %26 = vector.load %arg7[%c0_17, %c0_18, %c0_19] : memref<1x8x64xbf16, #tpu.memory_space<vmem>>, vector<1x8x64xbf16>
    %27 = vector.shape_cast %26 : vector<1x8x64xbf16> to vector<8x64xbf16>
    %28 = vector.shape_cast %25 : vector<8x64xbf16> to vector<1x8x64xbf16>
    tpu.vector_store %arg7[%c0_17, %c0_18, %c0_19], %28 {strides = array<i32>} : memref<1x8x64xbf16, #tpu.memory_space<vmem>>, vector<1x8x64xbf16>,
    return
  }
  func.func @transform_0(%arg0: i32, %arg1: i32) -> (i32, i32, i32) {
    %c0_i32 = arith.constant 0 : i32
    %c0_i32_0 = arith.constant 0 : i32
    return %arg0, %arg1, %c0_i32 : i32, i32, i32
  }
  func.func @transform_1(%arg0: i32, %arg1: i32) -> (i32, i32, i32, i32) {
    %c0_i32 = arith.constant 0 : i32
    %c0_i32_0 = arith.constant 0 : i32
    %c0_i32_1 = arith.constant 0 : i32
    return %arg0, %arg1, %c0_i32, %c0_i32_0 : i32, i32, i32, i32
  }
  func.func @transform_2(%arg0: i32, %arg1: i32) -> (i32, i32) {
    %c0_i32 = arith.constant 0 : i32
    %c0_i32_0 = arith.constant 0 : i32
    %c0_i32_1 = arith.constant 0 : i32
    return %c0_i32, %c0_i32_0 : i32, i32
  }
  func.func @transform_3(%arg0: i32, %arg1: i32) -> (i32, i32) {
    %c0_i32 = arith.constant 0 : i32
    %c0_i32_0 = arith.constant 0 : i32
    %c0_i32_1 = arith.constant 0 : i32
    return %c0_i32, %c0_i32_0 : i32, i32
  }
  func.func @transform_4(%arg0: i32, %arg1: i32) -> (i32, i32, i32) {
    %c0_i32 = arith.constant 0 : i32
    %c0_i32_0 = arith.constant 0 : i32
    return %arg0, %arg1, %c0_i32 : i32, i32, i32
  }
  func.func @transform_5(%arg0: i32, %arg1: i32) -> (i32, i32, i32) {
    %c0_i32 = arith.constant 0 : i32
    %c0_i32_0 = arith.constant 0 : i32
    return %arg0, %arg1, %c0_i32 : i32, i32, i32
  }
}

module attributes {stable_mosaic.version = 11 : i64} {
  func.func @_chain_kernel(%arg0: i32, %arg1: i32, %arg2: memref<1x8x64xbf16, #tpu.memory_space<vmem>>, %arg3: memref<1x1x18x64xbf16, #tpu.memory_space<vmem>>, %arg4: memref<192x64xbf16, #tpu.memory_space<vmem>>, %arg5: memref<1x64xf32, #tpu.memory_space<vmem>>, %arg6: memref<192x64xbf16, #tpu.memory_space<vmem>>, %arg7: memref<1x64xf32, #tpu.memory_space<vmem>>, %arg8: memref<1x8x64xbf16, #tpu.memory_space<vmem>>) attributes {dimension_semantics = [#tpu.dimension_semantics<parallel>, #tpu.dimension_semantics<parallel>], iteration_bounds = array<i64: 2, 1>, scalar_prefetch = 0 : i64, scratch_operands = 0 : i64, tpu.core_type = #tpu.core_type<tc>, window_params = [{transform_indices = @transform_0, window_bounds = array<i64: 1, 8, 64>}, {transform_indices = @transform_1, window_bounds = array<i64: 1, 1, 18, 64>}, {pipeline_mode = #tpu.pipeline_mode<synchronous>, transform_indices = @transform_2, window_bounds = array<i64: 192, 64>}, {pipeline_mode = #tpu.pipeline_mode<synchronous>, transform_indices = @transform_3, window_bounds = array<i64: 1, 64>}, {pipeline_mode = #tpu.pipeline_mode<synchronous>, transform_indices = @transform_4, window_bounds = array<i64: 192, 64>}, {pipeline_mode = #tpu.pipeline_mode<synchronous>, transform_indices = @transform_5, window_bounds = array<i64: 1, 64>}, {transform_indices = @transform_6, window_bounds = array<i64: 1, 8, 64>}]} {
    %c0 = arith.constant 0 : index
    %c0_0 = arith.constant 0 : index
    %c0_1 = arith.constant 0 : index
    %0 = vector.load %arg2[%c0, %c0_0, %c0_1] : memref<1x8x64xbf16, #tpu.memory_space<vmem>>, vector<1x8x64xbf16>
    %1 = vector.shape_cast %0 : vector<1x8x64xbf16> to vector<8x64xbf16>
    %c0_2 = arith.constant 0 : index
    %c0_3 = arith.constant 0 : index
    %c0_4 = arith.constant 0 : index
    %c0_5 = arith.constant 0 : index
    %2 = vector.load %arg3[%c0_2, %c0_3, %c0_4, %c0_5] : memref<1x1x18x64xbf16, #tpu.memory_space<vmem>>, vector<1x1x18x64xbf16>
    %3 = vector.shape_cast %2 : vector<1x1x18x64xbf16> to vector<18x64xbf16>
    %4 = vector.extract_strided_slice %3 {offsets = [0, 0], sizes = [16, 64], strides = [1, 1]} : vector<18x64xbf16> to vector<16x64xbf16>
    %5 = vector.extract_strided_slice %3 {offsets = [16, 0], sizes = [2, 64], strides = [1, 1]} : vector<18x64xbf16> to vector<2x64xbf16>
    %6 = tpu.concatenate %4, %1, %5 in 0 : vector<16x64xbf16>, vector<8x64xbf16>, vector<2x64xbf16> -> vector<26x64xbf16>
    %7 = arith.extf %6 : vector<26x64xbf16> to vector<26x64xf32>
    %cst = arith.constant 0.000000e+00 : f32
    %8 = vector.broadcast %cst : f32 to vector<26x64xf32>
    %9 = arith.cmpf oge, %7, %8 : vector<26x64xf32>
    %cst_6 = arith.constant 1.000000e-01 : f32
    %10 = vector.broadcast %cst_6 : f32 to vector<26x64xf32>
    %11 = arith.mulf %7, %10 : vector<26x64xf32>
    %12 = arith.select %9, %7, %11 : vector<26x64xi1>, vector<26x64xf32>
    %13 = arith.truncf %12 : vector<26x64xf32> to vector<26x64xbf16>
    %14 = vector.extract_strided_slice %13 {offsets = [14, 0], sizes = [10, 64], strides = [1, 1]} : vector<26x64xbf16> to vector<10x64xbf16>
    %c0_7 = arith.constant 0 : index
    %c0_8 = arith.constant 0 : index
    %15 = vector.load %arg4[%c0_7, %c0_8] : memref<192x64xbf16, #tpu.memory_space<vmem>>, vector<64x64xbf16>
    %cst_9 = arith.constant dense<0.000000e+00> : vector<10x64xf32>
    %16 = tpu.matmul %14, %15, %cst_9 {dimension_numbers = #tpu.dot_dimension_numbers<[1], [0], [0], [1], [0, 0, 1, 1], [], []>} : vector<10x64xbf16>, vector<64x64xbf16>, vector<10x64xf32> -> vector<10x64xf32>
    %17 = vector.extract_strided_slice %13 {offsets = [15, 0], sizes = [10, 64], strides = [1, 1]} : vector<26x64xbf16> to vector<10x64xbf16>
    %c64 = arith.constant 64 : index
    %c0_10 = arith.constant 0 : index
    %18 = vector.load %arg4[%c64, %c0_10] : memref<192x64xbf16, #tpu.memory_space<vmem>>, vector<64x64xbf16>
    %cst_11 = arith.constant dense<0.000000e+00> : vector<10x64xf32>
    %19 = tpu.matmul %17, %18, %cst_11 {dimension_numbers = #tpu.dot_dimension_numbers<[1], [0], [0], [1], [0, 0, 1, 1], [], []>} : vector<10x64xbf16>, vector<64x64xbf16>, vector<10x64xf32> -> vector<10x64xf32>
    %20 = arith.addf %16, %19 : vector<10x64xf32>
    %21 = vector.extract_strided_slice %13 {offsets = [16, 0], sizes = [10, 64], strides = [1, 1]} : vector<26x64xbf16> to vector<10x64xbf16>
    %c128 = arith.constant 128 : index
    %c0_12 = arith.constant 0 : index
    %22 = vector.load %arg4[%c128, %c0_12] : memref<192x64xbf16, #tpu.memory_space<vmem>>, vector<64x64xbf16>
    %cst_13 = arith.constant dense<0.000000e+00> : vector<10x64xf32>
    %23 = tpu.matmul %21, %22, %cst_13 {dimension_numbers = #tpu.dot_dimension_numbers<[1], [0], [0], [1], [0, 0, 1, 1], [], []>} : vector<10x64xbf16>, vector<64x64xbf16>, vector<10x64xf32> -> vector<10x64xf32>
    %24 = arith.addf %20, %23 : vector<10x64xf32>
    %c0_14 = arith.constant 0 : index
    %c0_15 = arith.constant 0 : index
    %25 = vector.load %arg5[%c0_14, %c0_15] : memref<1x64xf32, #tpu.memory_space<vmem>>, vector<1x64xf32>
    %26 = vector.broadcast %25 : vector<1x64xf32> to vector<10x64xf32>
    %27 = arith.addf %24, %26 : vector<10x64xf32>
    %c8_i32 = arith.constant 8 : i32
    %28 = arith.muli %arg1, %c8_i32 : i32
    %c1_i32 = arith.constant 1 : i32
    %29 = arith.subi %28, %c1_i32 : i32
    %30 = tpu.iota {dimensions = array<i32: 0>} : vector<10x1xi32>
    %31 = vector.broadcast %29 : i32 to vector<10x1xi32>
    %32 = arith.addi %31, %30 : vector<10x1xi32>
    %c0_i32 = arith.constant 0 : i32
    %33 = vector.broadcast %c0_i32 : i32 to vector<10x1xi32>
    %34 = arith.cmpi sge, %32, %33 : vector<10x1xi32>
    %c8_i32_16 = arith.constant 8 : i32
    %35 = vector.broadcast %c8_i32_16 : i32 to vector<10x1xi32>
    %36 = arith.cmpi slt, %32, %35 : vector<10x1xi32>
    %37 = arith.andi %34, %36 : vector<10x1xi1>
    %cst_17 = arith.constant 0.000000e+00 : f32
    %38 = vector.shape_cast %37 : vector<10x1xi1> to vector<10x1xi1>
    %39 = vector.broadcast %38 : vector<10x1xi1> to vector<10x64xi1>
    %40 = vector.broadcast %cst_17 : f32 to vector<10x64xf32>
    %41 = arith.select %39, %27, %40 : vector<10x64xi1>, vector<10x64xf32>
    %42 = arith.truncf %41 : vector<10x64xf32> to vector<10x64xbf16>
    %43 = arith.extf %42 : vector<10x64xbf16> to vector<10x64xf32>
    %cst_18 = arith.constant 0.000000e+00 : f32
    %44 = vector.broadcast %cst_18 : f32 to vector<10x64xf32>
    %45 = arith.cmpf oge, %43, %44 : vector<10x64xf32>
    %cst_19 = arith.constant 1.000000e-01 : f32
    %46 = vector.broadcast %cst_19 : f32 to vector<10x64xf32>
    %47 = arith.mulf %43, %46 : vector<10x64xf32>
    %48 = arith.select %45, %43, %47 : vector<10x64xi1>, vector<10x64xf32>
    %49 = arith.truncf %48 : vector<10x64xf32> to vector<10x64xbf16>
    %50 = vector.extract_strided_slice %49 {offsets = [0, 0], sizes = [8, 64], strides = [1, 1]} : vector<10x64xbf16> to vector<8x64xbf16>
    %c0_20 = arith.constant 0 : index
    %c0_21 = arith.constant 0 : index
    %51 = vector.load %arg6[%c0_20, %c0_21] : memref<192x64xbf16, #tpu.memory_space<vmem>>, vector<64x64xbf16>
    %cst_22 = arith.constant dense<0.000000e+00> : vector<8x64xf32>
    %52 = tpu.matmul %50, %51, %cst_22 {dimension_numbers = #tpu.dot_dimension_numbers<[1], [0], [0], [1], [0, 0, 1, 1], [], []>} : vector<8x64xbf16>, vector<64x64xbf16>, vector<8x64xf32> -> vector<8x64xf32>
    %53 = vector.extract_strided_slice %49 {offsets = [1, 0], sizes = [8, 64], strides = [1, 1]} : vector<10x64xbf16> to vector<8x64xbf16>
    %c64_23 = arith.constant 64 : index
    %c0_24 = arith.constant 0 : index
    %54 = vector.load %arg6[%c64_23, %c0_24] : memref<192x64xbf16, #tpu.memory_space<vmem>>, vector<64x64xbf16>
    %cst_25 = arith.constant dense<0.000000e+00> : vector<8x64xf32>
    %55 = tpu.matmul %53, %54, %cst_25 {dimension_numbers = #tpu.dot_dimension_numbers<[1], [0], [0], [1], [0, 0, 1, 1], [], []>} : vector<8x64xbf16>, vector<64x64xbf16>, vector<8x64xf32> -> vector<8x64xf32>
    %56 = arith.addf %52, %55 : vector<8x64xf32>
    %57 = vector.extract_strided_slice %49 {offsets = [2, 0], sizes = [8, 64], strides = [1, 1]} : vector<10x64xbf16> to vector<8x64xbf16>
    %c128_26 = arith.constant 128 : index
    %c0_27 = arith.constant 0 : index
    %58 = vector.load %arg6[%c128_26, %c0_27] : memref<192x64xbf16, #tpu.memory_space<vmem>>, vector<64x64xbf16>
    %cst_28 = arith.constant dense<0.000000e+00> : vector<8x64xf32>
    %59 = tpu.matmul %57, %58, %cst_28 {dimension_numbers = #tpu.dot_dimension_numbers<[1], [0], [0], [1], [0, 0, 1, 1], [], []>} : vector<8x64xbf16>, vector<64x64xbf16>, vector<8x64xf32> -> vector<8x64xf32>
    %60 = arith.addf %56, %59 : vector<8x64xf32>
    %c0_29 = arith.constant 0 : index
    %c0_30 = arith.constant 0 : index
    %61 = vector.load %arg7[%c0_29, %c0_30] : memref<1x64xf32, #tpu.memory_space<vmem>>, vector<1x64xf32>
    %62 = vector.broadcast %61 : vector<1x64xf32> to vector<8x64xf32>
    %63 = arith.addf %60, %62 : vector<8x64xf32>
    %64 = arith.extf %1 : vector<8x64xbf16> to vector<8x64xf32>
    %65 = arith.addf %63, %64 : vector<8x64xf32>
    %66 = arith.truncf %65 : vector<8x64xf32> to vector<8x64xbf16>
    %c0_31 = arith.constant 0 : index
    %c0_32 = arith.constant 0 : index
    %c0_33 = arith.constant 0 : index
    %67 = vector.load %arg8[%c0_31, %c0_32, %c0_33] : memref<1x8x64xbf16, #tpu.memory_space<vmem>>, vector<1x8x64xbf16>
    %68 = vector.shape_cast %67 : vector<1x8x64xbf16> to vector<8x64xbf16>
    %69 = vector.shape_cast %66 : vector<8x64xbf16> to vector<1x8x64xbf16>
    tpu.vector_store %arg8[%c0_31, %c0_32, %c0_33], %69 {strides = array<i32>} : memref<1x8x64xbf16, #tpu.memory_space<vmem>>, vector<1x8x64xbf16>,
    return
  }
  func.func @transform_0(%arg0: i32, %arg1: i32) -> (i32, i32, i32) {
    %c0_i32 = arith.constant 0 : i32
    %c0_i32_0 = arith.constant 0 : i32
    return %arg0, %arg1, %c0_i32 : i32, i32, i32
  }
  func.func @transform_1(%arg0: i32, %arg1: i32) -> (i32, i32, i32, i32) {
    %c0_i32 = arith.constant 0 : i32
    %c0_i32_0 = arith.constant 0 : i32
    %c0_i32_1 = arith.constant 0 : i32
    return %arg0, %arg1, %c0_i32, %c0_i32_0 : i32, i32, i32, i32
  }
  func.func @transform_2(%arg0: i32, %arg1: i32) -> (i32, i32) {
    %c0_i32 = arith.constant 0 : i32
    %c0_i32_0 = arith.constant 0 : i32
    %c0_i32_1 = arith.constant 0 : i32
    return %c0_i32, %c0_i32_0 : i32, i32
  }
  func.func @transform_3(%arg0: i32, %arg1: i32) -> (i32, i32) {
    %c0_i32 = arith.constant 0 : i32
    %c0_i32_0 = arith.constant 0 : i32
    %c0_i32_1 = arith.constant 0 : i32
    return %c0_i32, %c0_i32_0 : i32, i32
  }
  func.func @transform_4(%arg0: i32, %arg1: i32) -> (i32, i32) {
    %c0_i32 = arith.constant 0 : i32
    %c0_i32_0 = arith.constant 0 : i32
    %c0_i32_1 = arith.constant 0 : i32
    return %c0_i32, %c0_i32_0 : i32, i32
  }
  func.func @transform_5(%arg0: i32, %arg1: i32) -> (i32, i32) {
    %c0_i32 = arith.constant 0 : i32
    %c0_i32_0 = arith.constant 0 : i32
    %c0_i32_1 = arith.constant 0 : i32
    return %c0_i32, %c0_i32_0 : i32, i32
  }
  func.func @transform_6(%arg0: i32, %arg1: i32) -> (i32, i32, i32) {
    %c0_i32 = arith.constant 0 : i32
    %c0_i32_0 = arith.constant 0 : i32
    return %arg0, %arg1, %c0_i32 : i32, i32, i32
  }
}

module attributes {stable_mosaic.version = 11 : i64} {
  func.func @_chain_kernel(%arg0: i32, %arg1: i32, %arg2: memref<1x8x64xbf16, #tpu.memory_space<vmem>>, %arg3: memref<1x1x19x64xbf16, #tpu.memory_space<vmem>>, %arg4: memref<320x64xbf16, #tpu.memory_space<vmem>>, %arg5: memref<1x64xf32, #tpu.memory_space<vmem>>, %arg6: memref<192x64xbf16, #tpu.memory_space<vmem>>, %arg7: memref<1x64xf32, #tpu.memory_space<vmem>>, %arg8: memref<1x8x64xbf16, #tpu.memory_space<vmem>>, %arg9: memref<1x8x64xbf16, #tpu.memory_space<vmem>>) attributes {dimension_semantics = [#tpu.dimension_semantics<parallel>, #tpu.dimension_semantics<parallel>], iteration_bounds = array<i64: 2, 1>, scalar_prefetch = 0 : i64, scratch_operands = 0 : i64, tpu.core_type = #tpu.core_type<tc>, window_params = [{transform_indices = @transform_0, window_bounds = array<i64: 1, 8, 64>}, {transform_indices = @transform_1, window_bounds = array<i64: 1, 1, 19, 64>}, {pipeline_mode = #tpu.pipeline_mode<synchronous>, transform_indices = @transform_2, window_bounds = array<i64: 320, 64>}, {pipeline_mode = #tpu.pipeline_mode<synchronous>, transform_indices = @transform_3, window_bounds = array<i64: 1, 64>}, {pipeline_mode = #tpu.pipeline_mode<synchronous>, transform_indices = @transform_4, window_bounds = array<i64: 192, 64>}, {pipeline_mode = #tpu.pipeline_mode<synchronous>, transform_indices = @transform_5, window_bounds = array<i64: 1, 64>}, {transform_indices = @transform_6, window_bounds = array<i64: 1, 8, 64>}, {transform_indices = @transform_7, window_bounds = array<i64: 1, 8, 64>}]} {
    %c0 = arith.constant 0 : index
    %c0_0 = arith.constant 0 : index
    %c0_1 = arith.constant 0 : index
    %0 = vector.load %arg2[%c0, %c0_0, %c0_1] : memref<1x8x64xbf16, #tpu.memory_space<vmem>>, vector<1x8x64xbf16>
    %1 = vector.shape_cast %0 : vector<1x8x64xbf16> to vector<8x64xbf16>
    %c0_2 = arith.constant 0 : index
    %c0_3 = arith.constant 0 : index
    %c0_4 = arith.constant 0 : index
    %c0_5 = arith.constant 0 : index
    %2 = vector.load %arg3[%c0_2, %c0_3, %c0_4, %c0_5] : memref<1x1x19x64xbf16, #tpu.memory_space<vmem>>, vector<1x1x19x64xbf16>
    %3 = vector.shape_cast %2 : vector<1x1x19x64xbf16> to vector<19x64xbf16>
    %4 = vector.extract_strided_slice %3 {offsets = [0, 0], sizes = [16, 64], strides = [1, 1]} : vector<19x64xbf16> to vector<16x64xbf16>
    %5 = vector.extract_strided_slice %3 {offsets = [16, 0], sizes = [3, 64], strides = [1, 1]} : vector<19x64xbf16> to vector<3x64xbf16>
    %6 = tpu.concatenate %4, %1, %5 in 0 : vector<16x64xbf16>, vector<8x64xbf16>, vector<3x64xbf16> -> vector<27x64xbf16>
    %7 = arith.extf %6 : vector<27x64xbf16> to vector<27x64xf32>
    %cst = arith.constant 0.000000e+00 : f32
    %8 = vector.broadcast %cst : f32 to vector<27x64xf32>
    %9 = arith.cmpf oge, %7, %8 : vector<27x64xf32>
    %cst_6 = arith.constant 1.000000e-01 : f32
    %10 = vector.broadcast %cst_6 : f32 to vector<27x64xf32>
    %11 = arith.mulf %7, %10 : vector<27x64xf32>
    %12 = arith.select %9, %7, %11 : vector<27x64xi1>, vector<27x64xf32>
    %13 = arith.truncf %12 : vector<27x64xf32> to vector<27x64xbf16>
    %14 = vector.extract_strided_slice %13 {offsets = [13, 0], sizes = [10, 64], strides = [1, 1]} : vector<27x64xbf16> to vector<10x64xbf16>
    %c0_7 = arith.constant 0 : index
    %c0_8 = arith.constant 0 : index
    %15 = vector.load %arg4[%c0_7, %c0_8] : memref<320x64xbf16, #tpu.memory_space<vmem>>, vector<64x64xbf16>
    %cst_9 = arith.constant dense<0.000000e+00> : vector<10x64xf32>
    %16 = tpu.matmul %14, %15, %cst_9 {dimension_numbers = #tpu.dot_dimension_numbers<[1], [0], [0], [1], [0, 0, 1, 1], [], []>} : vector<10x64xbf16>, vector<64x64xbf16>, vector<10x64xf32> -> vector<10x64xf32>
    %17 = vector.extract_strided_slice %13 {offsets = [14, 0], sizes = [10, 64], strides = [1, 1]} : vector<27x64xbf16> to vector<10x64xbf16>
    %c64 = arith.constant 64 : index
    %c0_10 = arith.constant 0 : index
    %18 = vector.load %arg4[%c64, %c0_10] : memref<320x64xbf16, #tpu.memory_space<vmem>>, vector<64x64xbf16>
    %cst_11 = arith.constant dense<0.000000e+00> : vector<10x64xf32>
    %19 = tpu.matmul %17, %18, %cst_11 {dimension_numbers = #tpu.dot_dimension_numbers<[1], [0], [0], [1], [0, 0, 1, 1], [], []>} : vector<10x64xbf16>, vector<64x64xbf16>, vector<10x64xf32> -> vector<10x64xf32>
    %20 = arith.addf %16, %19 : vector<10x64xf32>
    %21 = vector.extract_strided_slice %13 {offsets = [15, 0], sizes = [10, 64], strides = [1, 1]} : vector<27x64xbf16> to vector<10x64xbf16>
    %c128 = arith.constant 128 : index
    %c0_12 = arith.constant 0 : index
    %22 = vector.load %arg4[%c128, %c0_12] : memref<320x64xbf16, #tpu.memory_space<vmem>>, vector<64x64xbf16>
    %cst_13 = arith.constant dense<0.000000e+00> : vector<10x64xf32>
    %23 = tpu.matmul %21, %22, %cst_13 {dimension_numbers = #tpu.dot_dimension_numbers<[1], [0], [0], [1], [0, 0, 1, 1], [], []>} : vector<10x64xbf16>, vector<64x64xbf16>, vector<10x64xf32> -> vector<10x64xf32>
    %24 = arith.addf %20, %23 : vector<10x64xf32>
    %25 = vector.extract_strided_slice %13 {offsets = [16, 0], sizes = [10, 64], strides = [1, 1]} : vector<27x64xbf16> to vector<10x64xbf16>
    %c192 = arith.constant 192 : index
    %c0_14 = arith.constant 0 : index
    %26 = vector.load %arg4[%c192, %c0_14] : memref<320x64xbf16, #tpu.memory_space<vmem>>, vector<64x64xbf16>
    %cst_15 = arith.constant dense<0.000000e+00> : vector<10x64xf32>
    %27 = tpu.matmul %25, %26, %cst_15 {dimension_numbers = #tpu.dot_dimension_numbers<[1], [0], [0], [1], [0, 0, 1, 1], [], []>} : vector<10x64xbf16>, vector<64x64xbf16>, vector<10x64xf32> -> vector<10x64xf32>
    %28 = arith.addf %24, %27 : vector<10x64xf32>
    %29 = vector.extract_strided_slice %13 {offsets = [17, 0], sizes = [10, 64], strides = [1, 1]} : vector<27x64xbf16> to vector<10x64xbf16>
    %c256 = arith.constant 256 : index
    %c0_16 = arith.constant 0 : index
    %30 = vector.load %arg4[%c256, %c0_16] : memref<320x64xbf16, #tpu.memory_space<vmem>>, vector<64x64xbf16>
    %cst_17 = arith.constant dense<0.000000e+00> : vector<10x64xf32>
    %31 = tpu.matmul %29, %30, %cst_17 {dimension_numbers = #tpu.dot_dimension_numbers<[1], [0], [0], [1], [0, 0, 1, 1], [], []>} : vector<10x64xbf16>, vector<64x64xbf16>, vector<10x64xf32> -> vector<10x64xf32>
    %32 = arith.addf %28, %31 : vector<10x64xf32>
    %c0_18 = arith.constant 0 : index
    %c0_19 = arith.constant 0 : index
    %33 = vector.load %arg5[%c0_18, %c0_19] : memref<1x64xf32, #tpu.memory_space<vmem>>, vector<1x64xf32>
    %34 = vector.broadcast %33 : vector<1x64xf32> to vector<10x64xf32>
    %35 = arith.addf %32, %34 : vector<10x64xf32>
    %c8_i32 = arith.constant 8 : i32
    %36 = arith.muli %arg1, %c8_i32 : i32
    %c1_i32 = arith.constant 1 : i32
    %37 = arith.subi %36, %c1_i32 : i32
    %38 = tpu.iota {dimensions = array<i32: 0>} : vector<10x1xi32>
    %39 = vector.broadcast %37 : i32 to vector<10x1xi32>
    %40 = arith.addi %39, %38 : vector<10x1xi32>
    %c0_i32 = arith.constant 0 : i32
    %41 = vector.broadcast %c0_i32 : i32 to vector<10x1xi32>
    %42 = arith.cmpi sge, %40, %41 : vector<10x1xi32>
    %c8_i32_20 = arith.constant 8 : i32
    %43 = vector.broadcast %c8_i32_20 : i32 to vector<10x1xi32>
    %44 = arith.cmpi slt, %40, %43 : vector<10x1xi32>
    %45 = arith.andi %42, %44 : vector<10x1xi1>
    %cst_21 = arith.constant 0.000000e+00 : f32
    %46 = vector.shape_cast %45 : vector<10x1xi1> to vector<10x1xi1>
    %47 = vector.broadcast %46 : vector<10x1xi1> to vector<10x64xi1>
    %48 = vector.broadcast %cst_21 : f32 to vector<10x64xf32>
    %49 = arith.select %47, %35, %48 : vector<10x64xi1>, vector<10x64xf32>
    %50 = arith.truncf %49 : vector<10x64xf32> to vector<10x64xbf16>
    %51 = arith.extf %50 : vector<10x64xbf16> to vector<10x64xf32>
    %cst_22 = arith.constant 0.000000e+00 : f32
    %52 = vector.broadcast %cst_22 : f32 to vector<10x64xf32>
    %53 = arith.cmpf oge, %51, %52 : vector<10x64xf32>
    %cst_23 = arith.constant 1.000000e-01 : f32
    %54 = vector.broadcast %cst_23 : f32 to vector<10x64xf32>
    %55 = arith.mulf %51, %54 : vector<10x64xf32>
    %56 = arith.select %53, %51, %55 : vector<10x64xi1>, vector<10x64xf32>
    %57 = arith.truncf %56 : vector<10x64xf32> to vector<10x64xbf16>
    %58 = vector.extract_strided_slice %57 {offsets = [0, 0], sizes = [8, 64], strides = [1, 1]} : vector<10x64xbf16> to vector<8x64xbf16>
    %c0_24 = arith.constant 0 : index
    %c0_25 = arith.constant 0 : index
    %59 = vector.load %arg6[%c0_24, %c0_25] : memref<192x64xbf16, #tpu.memory_space<vmem>>, vector<64x64xbf16>
    %cst_26 = arith.constant dense<0.000000e+00> : vector<8x64xf32>
    %60 = tpu.matmul %58, %59, %cst_26 {dimension_numbers = #tpu.dot_dimension_numbers<[1], [0], [0], [1], [0, 0, 1, 1], [], []>} : vector<8x64xbf16>, vector<64x64xbf16>, vector<8x64xf32> -> vector<8x64xf32>
    %61 = vector.extract_strided_slice %57 {offsets = [1, 0], sizes = [8, 64], strides = [1, 1]} : vector<10x64xbf16> to vector<8x64xbf16>
    %c64_27 = arith.constant 64 : index
    %c0_28 = arith.constant 0 : index
    %62 = vector.load %arg6[%c64_27, %c0_28] : memref<192x64xbf16, #tpu.memory_space<vmem>>, vector<64x64xbf16>
    %cst_29 = arith.constant dense<0.000000e+00> : vector<8x64xf32>
    %63 = tpu.matmul %61, %62, %cst_29 {dimension_numbers = #tpu.dot_dimension_numbers<[1], [0], [0], [1], [0, 0, 1, 1], [], []>} : vector<8x64xbf16>, vector<64x64xbf16>, vector<8x64xf32> -> vector<8x64xf32>
    %64 = arith.addf %60, %63 : vector<8x64xf32>
    %65 = vector.extract_strided_slice %57 {offsets = [2, 0], sizes = [8, 64], strides = [1, 1]} : vector<10x64xbf16> to vector<8x64xbf16>
    %c128_30 = arith.constant 128 : index
    %c0_31 = arith.constant 0 : index
    %66 = vector.load %arg6[%c128_30, %c0_31] : memref<192x64xbf16, #tpu.memory_space<vmem>>, vector<64x64xbf16>
    %cst_32 = arith.constant dense<0.000000e+00> : vector<8x64xf32>
    %67 = tpu.matmul %65, %66, %cst_32 {dimension_numbers = #tpu.dot_dimension_numbers<[1], [0], [0], [1], [0, 0, 1, 1], [], []>} : vector<8x64xbf16>, vector<64x64xbf16>, vector<8x64xf32> -> vector<8x64xf32>
    %68 = arith.addf %64, %67 : vector<8x64xf32>
    %c0_33 = arith.constant 0 : index
    %c0_34 = arith.constant 0 : index
    %69 = vector.load %arg7[%c0_33, %c0_34] : memref<1x64xf32, #tpu.memory_space<vmem>>, vector<1x64xf32>
    %70 = vector.broadcast %69 : vector<1x64xf32> to vector<8x64xf32>
    %71 = arith.addf %68, %70 : vector<8x64xf32>
    %72 = arith.extf %1 : vector<8x64xbf16> to vector<8x64xf32>
    %73 = arith.addf %71, %72 : vector<8x64xf32>
    %c0_35 = arith.constant 0 : index
    %c0_36 = arith.constant 0 : index
    %c0_37 = arith.constant 0 : index
    %74 = vector.load %arg8[%c0_35, %c0_36, %c0_37] : memref<1x8x64xbf16, #tpu.memory_space<vmem>>, vector<1x8x64xbf16>
    %75 = vector.shape_cast %74 : vector<1x8x64xbf16> to vector<8x64xbf16>
    %76 = arith.extf %75 : vector<8x64xbf16> to vector<8x64xf32>
    %77 = arith.addf %73, %76 : vector<8x64xf32>
    %cst_38 = arith.constant 5.000000e-01 : f32
    %78 = vector.broadcast %cst_38 : f32 to vector<8x64xf32>
    %79 = arith.mulf %77, %78 : vector<8x64xf32>
    %80 = arith.truncf %79 : vector<8x64xf32> to vector<8x64xbf16>
    %c0_39 = arith.constant 0 : index
    %c0_40 = arith.constant 0 : index
    %c0_41 = arith.constant 0 : index
    %81 = vector.load %arg9[%c0_39, %c0_40, %c0_41] : memref<1x8x64xbf16, #tpu.memory_space<vmem>>, vector<1x8x64xbf16>
    %82 = vector.shape_cast %81 : vector<1x8x64xbf16> to vector<8x64xbf16>
    %83 = vector.shape_cast %80 : vector<8x64xbf16> to vector<1x8x64xbf16>
    tpu.vector_store %arg9[%c0_39, %c0_40, %c0_41], %83 {strides = array<i32>} : memref<1x8x64xbf16, #tpu.memory_space<vmem>>, vector<1x8x64xbf16>,
    return
  }
  func.func @transform_0(%arg0: i32, %arg1: i32) -> (i32, i32, i32) {
    %c0_i32 = arith.constant 0 : i32
    %c0_i32_0 = arith.constant 0 : i32
    return %arg0, %arg1, %c0_i32 : i32, i32, i32
  }
  func.func @transform_1(%arg0: i32, %arg1: i32) -> (i32, i32, i32, i32) {
    %c0_i32 = arith.constant 0 : i32
    %c0_i32_0 = arith.constant 0 : i32
    %c0_i32_1 = arith.constant 0 : i32
    return %arg0, %arg1, %c0_i32, %c0_i32_0 : i32, i32, i32, i32
  }
  func.func @transform_2(%arg0: i32, %arg1: i32) -> (i32, i32) {
    %c0_i32 = arith.constant 0 : i32
    %c0_i32_0 = arith.constant 0 : i32
    %c0_i32_1 = arith.constant 0 : i32
    return %c0_i32, %c0_i32_0 : i32, i32
  }
  func.func @transform_3(%arg0: i32, %arg1: i32) -> (i32, i32) {
    %c0_i32 = arith.constant 0 : i32
    %c0_i32_0 = arith.constant 0 : i32
    %c0_i32_1 = arith.constant 0 : i32
    return %c0_i32, %c0_i32_0 : i32, i32
  }
  func.func @transform_4(%arg0: i32, %arg1: i32) -> (i32, i32) {
    %c0_i32 = arith.constant 0 : i32
    %c0_i32_0 = arith.constant 0 : i32
    %c0_i32_1 = arith.constant 0 : i32
    return %c0_i32, %c0_i32_0 : i32, i32
  }
  func.func @transform_5(%arg0: i32, %arg1: i32) -> (i32, i32) {
    %c0_i32 = arith.constant 0 : i32
    %c0_i32_0 = arith.constant 0 : i32
    %c0_i32_1 = arith.constant 0 : i32
    return %c0_i32, %c0_i32_0 : i32, i32
  }
  func.func @transform_6(%arg0: i32, %arg1: i32) -> (i32, i32, i32) {
    %c0_i32 = arith.constant 0 : i32
    %c0_i32_0 = arith.constant 0 : i32
    return %arg0, %arg1, %c0_i32 : i32, i32, i32
  }
  func.func @transform_7(%arg0: i32, %arg1: i32) -> (i32, i32, i32) {
    %c0_i32 = arith.constant 0 : i32
    %c0_i32_0 = arith.constant 0 : i32
    return %arg0, %arg1, %c0_i32 : i32, i32, i32
  }
}

module attributes {stable_mosaic.version = 11 : i64} {
  func.func @_chain_kernel(%arg0: i32, %arg1: i32, %arg2: memref<1x8x64xbf16, #tpu.memory_space<vmem>>, %arg3: memref<1x1x17x64xbf16, #tpu.memory_space<vmem>>, %arg4: memref<192x128xbf16, #tpu.memory_space<vmem>>, %arg5: memref<1x128xf32, #tpu.memory_space<vmem>>, %arg6: memref<1x8x128xbf16, #tpu.memory_space<vmem>>) attributes {dimension_semantics = [#tpu.dimension_semantics<parallel>, #tpu.dimension_semantics<parallel>], iteration_bounds = array<i64: 2, 1>, scalar_prefetch = 0 : i64, scratch_operands = 0 : i64, tpu.core_type = #tpu.core_type<tc>, window_params = [{transform_indices = @transform_0, window_bounds = array<i64: 1, 8, 64>}, {transform_indices = @transform_1, window_bounds = array<i64: 1, 1, 17, 64>}, {pipeline_mode = #tpu.pipeline_mode<synchronous>, transform_indices = @transform_2, window_bounds = array<i64: 192, 128>}, {pipeline_mode = #tpu.pipeline_mode<synchronous>, transform_indices = @transform_3, window_bounds = array<i64: 1, 128>}, {transform_indices = @transform_4, window_bounds = array<i64: 1, 8, 128>}]} {
    %c0 = arith.constant 0 : index
    %c0_0 = arith.constant 0 : index
    %c0_1 = arith.constant 0 : index
    %0 = vector.load %arg2[%c0, %c0_0, %c0_1] : memref<1x8x64xbf16, #tpu.memory_space<vmem>>, vector<1x8x64xbf16>
    %1 = vector.shape_cast %0 : vector<1x8x64xbf16> to vector<8x64xbf16>
    %c0_2 = arith.constant 0 : index
    %c0_3 = arith.constant 0 : index
    %c0_4 = arith.constant 0 : index
    %c0_5 = arith.constant 0 : index
    %2 = vector.load %arg3[%c0_2, %c0_3, %c0_4, %c0_5] : memref<1x1x17x64xbf16, #tpu.memory_space<vmem>>, vector<1x1x17x64xbf16>
    %3 = vector.shape_cast %2 : vector<1x1x17x64xbf16> to vector<17x64xbf16>
    %4 = vector.extract_strided_slice %3 {offsets = [0, 0], sizes = [16, 64], strides = [1, 1]} : vector<17x64xbf16> to vector<16x64xbf16>
    %5 = vector.extract_strided_slice %3 {offsets = [16, 0], sizes = [1, 64], strides = [1, 1]} : vector<17x64xbf16> to vector<1x64xbf16>
    %6 = tpu.concatenate %4, %1, %5 in 0 : vector<16x64xbf16>, vector<8x64xbf16>, vector<1x64xbf16> -> vector<25x64xbf16>
    %7 = arith.extf %6 : vector<25x64xbf16> to vector<25x64xf32>
    %cst = arith.constant 0.000000e+00 : f32
    %8 = vector.broadcast %cst : f32 to vector<25x64xf32>
    %9 = arith.cmpf oge, %7, %8 : vector<25x64xf32>
    %cst_6 = arith.constant 1.000000e-01 : f32
    %10 = vector.broadcast %cst_6 : f32 to vector<25x64xf32>
    %11 = arith.mulf %7, %10 : vector<25x64xf32>
    %12 = arith.select %9, %7, %11 : vector<25x64xi1>, vector<25x64xf32>
    %13 = arith.truncf %12 : vector<25x64xf32> to vector<25x64xbf16>
    %14 = vector.extract_strided_slice %13 {offsets = [15, 0], sizes = [8, 64], strides = [1, 1]} : vector<25x64xbf16> to vector<8x64xbf16>
    %c0_7 = arith.constant 0 : index
    %c0_8 = arith.constant 0 : index
    %15 = vector.load %arg4[%c0_7, %c0_8] : memref<192x128xbf16, #tpu.memory_space<vmem>>, vector<64x128xbf16>
    %cst_9 = arith.constant dense<0.000000e+00> : vector<8x128xf32>
    %16 = tpu.matmul %14, %15, %cst_9 {dimension_numbers = #tpu.dot_dimension_numbers<[1], [0], [0], [1], [0, 0, 1, 1], [], []>} : vector<8x64xbf16>, vector<64x128xbf16>, vector<8x128xf32> -> vector<8x128xf32>
    %17 = vector.extract_strided_slice %13 {offsets = [16, 0], sizes = [8, 64], strides = [1, 1]} : vector<25x64xbf16> to vector<8x64xbf16>
    %c64 = arith.constant 64 : index
    %c0_10 = arith.constant 0 : index
    %18 = vector.load %arg4[%c64, %c0_10] : memref<192x128xbf16, #tpu.memory_space<vmem>>, vector<64x128xbf16>
    %cst_11 = arith.constant dense<0.000000e+00> : vector<8x128xf32>
    %19 = tpu.matmul %17, %18, %cst_11 {dimension_numbers = #tpu.dot_dimension_numbers<[1], [0], [0], [1], [0, 0, 1, 1], [], []>} : vector<8x64xbf16>, vector<64x128xbf16>, vector<8x128xf32> -> vector<8x128xf32>
    %20 = arith.addf %16, %19 : vector<8x128xf32>
    %21 = vector.extract_strided_slice %13 {offsets = [17, 0], sizes = [8, 64], strides = [1, 1]} : vector<25x64xbf16> to vector<8x64xbf16>
    %c128 = arith.constant 128 : index
    %c0_12 = arith.constant 0 : index
    %22 = vector.load %arg4[%c128, %c0_12] : memref<192x128xbf16, #tpu.memory_space<vmem>>, vector<64x128xbf16>
    %cst_13 = arith.constant dense<0.000000e+00> : vector<8x128xf32>
    %23 = tpu.matmul %21, %22, %cst_13 {dimension_numbers = #tpu.dot_dimension_numbers<[1], [0], [0], [1], [0, 0, 1, 1], [], []>} : vector<8x64xbf16>, vector<64x128xbf16>, vector<8x128xf32> -> vector<8x128xf32>
    %24 = arith.addf %20, %23 : vector<8x128xf32>
    %c0_14 = arith.constant 0 : index
    %c0_15 = arith.constant 0 : index
    %25 = vector.load %arg5[%c0_14, %c0_15] : memref<1x128xf32, #tpu.memory_space<vmem>>, vector<1x128xf32>
    %26 = vector.broadcast %25 : vector<1x128xf32> to vector<8x128xf32>
    %27 = arith.addf %24, %26 : vector<8x128xf32>
    %28 = arith.truncf %27 : vector<8x128xf32> to vector<8x128xbf16>
    %c0_16 = arith.constant 0 : index
    %c0_17 = arith.constant 0 : index
    %c0_18 = arith.constant 0 : index
    %29 = vector.load %arg6[%c0_16, %c0_17, %c0_18] : memref<1x8x128xbf16, #tpu.memory_space<vmem>>, vector<1x8x128xbf16>
    %30 = vector.shape_cast %29 : vector<1x8x128xbf16> to vector<8x128xbf16>
    %31 = vector.shape_cast %28 : vector<8x128xbf16> to vector<1x8x128xbf16>
    tpu.vector_store %arg6[%c0_16, %c0_17, %c0_18], %31 {strides = array<i32>} : memref<1x8x128xbf16, #tpu.memory_space<vmem>>, vector<1x8x128xbf16>,
    return
  }
  func.func @transform_0(%arg0: i32, %arg1: i32) -> (i32, i32, i32) {
    %c0_i32 = arith.constant 0 : i32
    %c0_i32_0 = arith.constant 0 : i32
    return %arg0, %arg1, %c0_i32 : i32, i32, i32
  }
  func.func @transform_1(%arg0: i32, %arg1: i32) -> (i32, i32, i32, i32) {
    %c0_i32 = arith.constant 0 : i32
    %c0_i32_0 = arith.constant 0 : i32
    %c0_i32_1 = arith.constant 0 : i32
    return %arg0, %arg1, %c0_i32, %c0_i32_0 : i32, i32, i32, i32
  }
  func.func @transform_2(%arg0: i32, %arg1: i32) -> (i32, i32) {
    %c0_i32 = arith.constant 0 : i32
    %c0_i32_0 = arith.constant 0 : i32
    %c0_i32_1 = arith.constant 0 : i32
    return %c0_i32, %c0_i32_0 : i32, i32
  }
  func.func @transform_3(%arg0: i32, %arg1: i32) -> (i32, i32) {
    %c0_i32 = arith.constant 0 : i32
    %c0_i32_0 = arith.constant 0 : i32
    %c0_i32_1 = arith.constant 0 : i32
    return %c0_i32, %c0_i32_0 : i32, i32
  }
  func.func @transform_4(%arg0: i32, %arg1: i32) -> (i32, i32, i32) {
    %c0_i32 = arith.constant 0 : i32
    %c0_i32_0 = arith.constant 0 : i32
    return %arg0, %arg1, %c0_i32 : i32, i32, i32
  }
}

module attributes {stable_mosaic.version = 11 : i64} {
  func.func @_chain_kernel(%arg0: i32, %arg1: i32, %arg2: memref<1x8x16xbf16, #tpu.memory_space<vmem>>, %arg3: memref<16x128xbf16, #tpu.memory_space<vmem>>, %arg4: memref<1x128xf32, #tpu.memory_space<vmem>>, %arg5: memref<1x8x128xbf16, #tpu.memory_space<vmem>>, %arg6: memref<1x8x128xbf16, #tpu.memory_space<vmem>>) attributes {dimension_semantics = [#tpu.dimension_semantics<parallel>, #tpu.dimension_semantics<parallel>], iteration_bounds = array<i64: 2, 1>, scalar_prefetch = 0 : i64, scratch_operands = 0 : i64, tpu.core_type = #tpu.core_type<tc>, window_params = [{transform_indices = @transform_0, window_bounds = array<i64: 1, 8, 16>}, {pipeline_mode = #tpu.pipeline_mode<synchronous>, transform_indices = @transform_1, window_bounds = array<i64: 16, 128>}, {pipeline_mode = #tpu.pipeline_mode<synchronous>, transform_indices = @transform_2, window_bounds = array<i64: 1, 128>}, {transform_indices = @transform_3, window_bounds = array<i64: 1, 8, 128>}, {transform_indices = @transform_4, window_bounds = array<i64: 1, 8, 128>}]} {
    %c0 = arith.constant 0 : index
    %c0_0 = arith.constant 0 : index
    %c0_1 = arith.constant 0 : index
    %0 = vector.load %arg2[%c0, %c0_0, %c0_1] : memref<1x8x16xbf16, #tpu.memory_space<vmem>>, vector<1x8x16xbf16>
    %1 = vector.shape_cast %0 : vector<1x8x16xbf16> to vector<8x16xbf16>
    %c0_2 = arith.constant 0 : index
    %c0_3 = arith.constant 0 : index
    %2 = vector.load %arg3[%c0_2, %c0_3] : memref<16x128xbf16, #tpu.memory_space<vmem>>, vector<16x128xbf16>
    %cst = arith.constant dense<0.000000e+00> : vector<8x128xf32>
    %3 = tpu.matmul %1, %2, %cst {dimension_numbers = #tpu.dot_dimension_numbers<[1], [0], [0], [1], [0, 0, 1, 1], [], []>} : vector<8x16xbf16>, vector<16x128xbf16>, vector<8x128xf32> -> vector<8x128xf32>
    %c0_4 = arith.constant 0 : index
    %c0_5 = arith.constant 0 : index
    %4 = vector.load %arg4[%c0_4, %c0_5] : memref<1x128xf32, #tpu.memory_space<vmem>>, vector<1x128xf32>
    %5 = vector.broadcast %4 : vector<1x128xf32> to vector<8x128xf32>
    %6 = arith.addf %3, %5 : vector<8x128xf32>
    %c0_6 = arith.constant 0 : index
    %c0_7 = arith.constant 0 : index
    %c0_8 = arith.constant 0 : index
    %7 = vector.load %arg5[%c0_6, %c0_7, %c0_8] : memref<1x8x128xbf16, #tpu.memory_space<vmem>>, vector<1x8x128xbf16>
    %8 = vector.shape_cast %7 : vector<1x8x128xbf16> to vector<8x128xbf16>
    %9 = arith.extf %8 : vector<8x128xbf16> to vector<8x128xf32>
    %10 = arith.addf %6, %9 : vector<8x128xf32>
    %11 = arith.truncf %10 : vector<8x128xf32> to vector<8x128xbf16>
    %c0_9 = arith.constant 0 : index
    %c0_10 = arith.constant 0 : index
    %c0_11 = arith.constant 0 : index
    %12 = vector.load %arg6[%c0_9, %c0_10, %c0_11] : memref<1x8x128xbf16, #tpu.memory_space<vmem>>, vector<1x8x128xbf16>
    %13 = vector.shape_cast %12 : vector<1x8x128xbf16> to vector<8x128xbf16>
    %14 = vector.shape_cast %11 : vector<8x128xbf16> to vector<1x8x128xbf16>
    tpu.vector_store %arg6[%c0_9, %c0_10, %c0_11], %14 {strides = array<i32>} : memref<1x8x128xbf16, #tpu.memory_space<vmem>>, vector<1x8x128xbf16>,
    return
  }
  func.func @transform_0(%arg0: i32, %arg1: i32) -> (i32, i32, i32) {
    %c0_i32 = arith.constant 0 : i32
    %c0_i32_0 = arith.constant 0 : i32
    return %arg0, %arg1, %c0_i32 : i32, i32, i32
  }
  func.func @transform_1(%arg0: i32, %arg1: i32) -> (i32, i32) {
    %c0_i32 = arith.constant 0 : i32
    %c0_i32_0 = arith.constant 0 : i32
    %c0_i32_1 = arith.constant 0 : i32
    return %c0_i32, %c0_i32_0 : i32, i32
  }
  func.func @transform_2(%arg0: i32, %arg1: i32) -> (i32, i32) {
    %c0_i32 = arith.constant 0 : i32
    %c0_i32_0 = arith.constant 0 : i32
    %c0_i32_1 = arith.constant 0 : i32
    return %c0_i32, %c0_i32_0 : i32, i32
  }
  func.func @transform_3(%arg0: i32, %arg1: i32) -> (i32, i32, i32) {
    %c0_i32 = arith.constant 0 : i32
    %c0_i32_0 = arith.constant 0 : i32
    return %arg0, %arg1, %c0_i32 : i32, i32, i32
  }
  func.func @transform_4(%arg0: i32, %arg1: i32) -> (i32, i32, i32) {
    %c0_i32 = arith.constant 0 : i32
    %c0_i32_0 = arith.constant 0 : i32
    return %arg0, %arg1, %c0_i32 : i32, i32, i32
  }
}

module attributes {stable_mosaic.version = 11 : i64} {
  func.func @_chain_kernel(%arg0: i32, %arg1: i32, %arg2: memref<1x8x128xbf16, #tpu.memory_space<vmem>>, %arg3: memref<1x1x18x128xbf16, #tpu.memory_space<vmem>>, %arg4: memref<384x128xbf16, #tpu.memory_space<vmem>>, %arg5: memref<1x128xf32, #tpu.memory_space<vmem>>, %arg6: memref<384x128xbf16, #tpu.memory_space<vmem>>, %arg7: memref<1x128xf32, #tpu.memory_space<vmem>>, %arg8: memref<1x8x128xbf16, #tpu.memory_space<vmem>>) attributes {dimension_semantics = [#tpu.dimension_semantics<parallel>, #tpu.dimension_semantics<parallel>], iteration_bounds = array<i64: 2, 1>, scalar_prefetch = 0 : i64, scratch_operands = 0 : i64, tpu.core_type = #tpu.core_type<tc>, window_params = [{transform_indices = @transform_0, window_bounds = array<i64: 1, 8, 128>}, {transform_indices = @transform_1, window_bounds = array<i64: 1, 1, 18, 128>}, {pipeline_mode = #tpu.pipeline_mode<synchronous>, transform_indices = @transform_2, window_bounds = array<i64: 384, 128>}, {pipeline_mode = #tpu.pipeline_mode<synchronous>, transform_indices = @transform_3, window_bounds = array<i64: 1, 128>}, {pipeline_mode = #tpu.pipeline_mode<synchronous>, transform_indices = @transform_4, window_bounds = array<i64: 384, 128>}, {pipeline_mode = #tpu.pipeline_mode<synchronous>, transform_indices = @transform_5, window_bounds = array<i64: 1, 128>}, {transform_indices = @transform_6, window_bounds = array<i64: 1, 8, 128>}]} {
    %c0 = arith.constant 0 : index
    %c0_0 = arith.constant 0 : index
    %c0_1 = arith.constant 0 : index
    %0 = vector.load %arg2[%c0, %c0_0, %c0_1] : memref<1x8x128xbf16, #tpu.memory_space<vmem>>, vector<1x8x128xbf16>
    %1 = vector.shape_cast %0 : vector<1x8x128xbf16> to vector<8x128xbf16>
    %c0_2 = arith.constant 0 : index
    %c0_3 = arith.constant 0 : index
    %c0_4 = arith.constant 0 : index
    %c0_5 = arith.constant 0 : index
    %2 = vector.load %arg3[%c0_2, %c0_3, %c0_4, %c0_5] : memref<1x1x18x128xbf16, #tpu.memory_space<vmem>>, vector<1x1x18x128xbf16>
    %3 = vector.shape_cast %2 : vector<1x1x18x128xbf16> to vector<18x128xbf16>
    %4 = vector.extract_strided_slice %3 {offsets = [0, 0], sizes = [16, 128], strides = [1, 1]} : vector<18x128xbf16> to vector<16x128xbf16>
    %5 = vector.extract_strided_slice %3 {offsets = [16, 0], sizes = [2, 128], strides = [1, 1]} : vector<18x128xbf16> to vector<2x128xbf16>
    %6 = tpu.concatenate %4, %1, %5 in 0 : vector<16x128xbf16>, vector<8x128xbf16>, vector<2x128xbf16> -> vector<26x128xbf16>
    %7 = arith.extf %6 : vector<26x128xbf16> to vector<26x128xf32>
    %cst = arith.constant 0.000000e+00 : f32
    %8 = vector.broadcast %cst : f32 to vector<26x128xf32>
    %9 = arith.cmpf oge, %7, %8 : vector<26x128xf32>
    %cst_6 = arith.constant 1.000000e-01 : f32
    %10 = vector.broadcast %cst_6 : f32 to vector<26x128xf32>
    %11 = arith.mulf %7, %10 : vector<26x128xf32>
    %12 = arith.select %9, %7, %11 : vector<26x128xi1>, vector<26x128xf32>
    %13 = arith.truncf %12 : vector<26x128xf32> to vector<26x128xbf16>
    %14 = vector.extract_strided_slice %13 {offsets = [14, 0], sizes = [10, 128], strides = [1, 1]} : vector<26x128xbf16> to vector<10x128xbf16>
    %15 = vector.extract_strided_slice %13 {offsets = [15, 0], sizes = [10, 128], strides = [1, 1]} : vector<26x128xbf16> to vector<10x128xbf16>
    %16 = vector.extract_strided_slice %13 {offsets = [16, 0], sizes = [10, 128], strides = [1, 1]} : vector<26x128xbf16> to vector<10x128xbf16>
    %17 = tpu.concatenate %14, %15, %16 in 1 : vector<10x128xbf16>, vector<10x128xbf16>, vector<10x128xbf16> -> vector<10x384xbf16>
    %c0_7 = arith.constant 0 : index
    %c0_8 = arith.constant 0 : index
    %18 = vector.load %arg4[%c0_7, %c0_8] : memref<384x128xbf16, #tpu.memory_space<vmem>>, vector<384x128xbf16>
    %cst_9 = arith.constant dense<0.000000e+00> : vector<10x128xf32>
    %19 = tpu.matmul %17, %18, %cst_9 {dimension_numbers = #tpu.dot_dimension_numbers<[1], [0], [0], [1], [0, 0, 1, 1], [], []>} : vector<10x384xbf16>, vector<384x128xbf16>, vector<10x128xf32> -> vector<10x128xf32>
    %c0_10 = arith.constant 0 : index
    %c0_11 = arith.constant 0 : index
    %20 = vector.load %arg5[%c0_10, %c0_11] : memref<1x128xf32, #tpu.memory_space<vmem>>, vector<1x128xf32>
    %21 = vector.broadcast %20 : vector<1x128xf32> to vector<10x128xf32>
    %22 = arith.addf %19, %21 : vector<10x128xf32>
    %c8_i32 = arith.constant 8 : i32
    %23 = arith.muli %arg1, %c8_i32 : i32
    %c1_i32 = arith.constant 1 : i32
    %24 = arith.subi %23, %c1_i32 : i32
    %25 = tpu.iota {dimensions = array<i32: 0>} : vector<10x1xi32>
    %26 = vector.broadcast %24 : i32 to vector<10x1xi32>
    %27 = arith.addi %26, %25 : vector<10x1xi32>
    %c0_i32 = arith.constant 0 : i32
    %28 = vector.broadcast %c0_i32 : i32 to vector<10x1xi32>
    %29 = arith.cmpi sge, %27, %28 : vector<10x1xi32>
    %c8_i32_12 = arith.constant 8 : i32
    %30 = vector.broadcast %c8_i32_12 : i32 to vector<10x1xi32>
    %31 = arith.cmpi slt, %27, %30 : vector<10x1xi32>
    %32 = arith.andi %29, %31 : vector<10x1xi1>
    %cst_13 = arith.constant 0.000000e+00 : f32
    %33 = vector.shape_cast %32 : vector<10x1xi1> to vector<10x1xi1>
    %34 = vector.broadcast %33 : vector<10x1xi1> to vector<10x128xi1>
    %35 = vector.broadcast %cst_13 : f32 to vector<10x128xf32>
    %36 = arith.select %34, %22, %35 : vector<10x128xi1>, vector<10x128xf32>
    %37 = arith.truncf %36 : vector<10x128xf32> to vector<10x128xbf16>
    %38 = arith.extf %37 : vector<10x128xbf16> to vector<10x128xf32>
    %cst_14 = arith.constant 0.000000e+00 : f32
    %39 = vector.broadcast %cst_14 : f32 to vector<10x128xf32>
    %40 = arith.cmpf oge, %38, %39 : vector<10x128xf32>
    %cst_15 = arith.constant 1.000000e-01 : f32
    %41 = vector.broadcast %cst_15 : f32 to vector<10x128xf32>
    %42 = arith.mulf %38, %41 : vector<10x128xf32>
    %43 = arith.select %40, %38, %42 : vector<10x128xi1>, vector<10x128xf32>
    %44 = arith.truncf %43 : vector<10x128xf32> to vector<10x128xbf16>
    %45 = vector.extract_strided_slice %44 {offsets = [0, 0], sizes = [8, 128], strides = [1, 1]} : vector<10x128xbf16> to vector<8x128xbf16>
    %46 = vector.extract_strided_slice %44 {offsets = [1, 0], sizes = [8, 128], strides = [1, 1]} : vector<10x128xbf16> to vector<8x128xbf16>
    %47 = vector.extract_strided_slice %44 {offsets = [2, 0], sizes = [8, 128], strides = [1, 1]} : vector<10x128xbf16> to vector<8x128xbf16>
    %48 = tpu.concatenate %45, %46, %47 in 1 : vector<8x128xbf16>, vector<8x128xbf16>, vector<8x128xbf16> -> vector<8x384xbf16>
    %c0_16 = arith.constant 0 : index
    %c0_17 = arith.constant 0 : index
    %49 = vector.load %arg6[%c0_16, %c0_17] : memref<384x128xbf16, #tpu.memory_space<vmem>>, vector<384x128xbf16>
    %cst_18 = arith.constant dense<0.000000e+00> : vector<8x128xf32>
    %50 = tpu.matmul %48, %49, %cst_18 {dimension_numbers = #tpu.dot_dimension_numbers<[1], [0], [0], [1], [0, 0, 1, 1], [], []>} : vector<8x384xbf16>, vector<384x128xbf16>, vector<8x128xf32> -> vector<8x128xf32>
    %c0_19 = arith.constant 0 : index
    %c0_20 = arith.constant 0 : index
    %51 = vector.load %arg7[%c0_19, %c0_20] : memref<1x128xf32, #tpu.memory_space<vmem>>, vector<1x128xf32>
    %52 = vector.broadcast %51 : vector<1x128xf32> to vector<8x128xf32>
    %53 = arith.addf %50, %52 : vector<8x128xf32>
    %54 = arith.extf %1 : vector<8x128xbf16> to vector<8x128xf32>
    %55 = arith.addf %53, %54 : vector<8x128xf32>
    %56 = arith.truncf %55 : vector<8x128xf32> to vector<8x128xbf16>
    %c0_21 = arith.constant 0 : index
    %c0_22 = arith.constant 0 : index
    %c0_23 = arith.constant 0 : index
    %57 = vector.load %arg8[%c0_21, %c0_22, %c0_23] : memref<1x8x128xbf16, #tpu.memory_space<vmem>>, vector<1x8x128xbf16>
    %58 = vector.shape_cast %57 : vector<1x8x128xbf16> to vector<8x128xbf16>
    %59 = vector.shape_cast %56 : vector<8x128xbf16> to vector<1x8x128xbf16>
    tpu.vector_store %arg8[%c0_21, %c0_22, %c0_23], %59 {strides = array<i32>} : memref<1x8x128xbf16, #tpu.memory_space<vmem>>, vector<1x8x128xbf16>,
    return
  }
  func.func @transform_0(%arg0: i32, %arg1: i32) -> (i32, i32, i32) {
    %c0_i32 = arith.constant 0 : i32
    %c0_i32_0 = arith.constant 0 : i32
    return %arg0, %arg1, %c0_i32 : i32, i32, i32
  }
  func.func @transform_1(%arg0: i32, %arg1: i32) -> (i32, i32, i32, i32) {
    %c0_i32 = arith.constant 0 : i32
    %c0_i32_0 = arith.constant 0 : i32
    %c0_i32_1 = arith.constant 0 : i32
    return %arg0, %arg1, %c0_i32, %c0_i32_0 : i32, i32, i32, i32
  }
  func.func @transform_2(%arg0: i32, %arg1: i32) -> (i32, i32) {
    %c0_i32 = arith.constant 0 : i32
    %c0_i32_0 = arith.constant 0 : i32
    %c0_i32_1 = arith.constant 0 : i32
    return %c0_i32, %c0_i32_0 : i32, i32
  }
  func.func @transform_3(%arg0: i32, %arg1: i32) -> (i32, i32) {
    %c0_i32 = arith.constant 0 : i32
    %c0_i32_0 = arith.constant 0 : i32
    %c0_i32_1 = arith.constant 0 : i32
    return %c0_i32, %c0_i32_0 : i32, i32
  }
  func.func @transform_4(%arg0: i32, %arg1: i32) -> (i32, i32) {
    %c0_i32 = arith.constant 0 : i32
    %c0_i32_0 = arith.constant 0 : i32
    %c0_i32_1 = arith.constant 0 : i32
    return %c0_i32, %c0_i32_0 : i32, i32
  }
  func.func @transform_5(%arg0: i32, %arg1: i32) -> (i32, i32) {
    %c0_i32 = arith.constant 0 : i32
    %c0_i32_0 = arith.constant 0 : i32
    %c0_i32_1 = arith.constant 0 : i32
    return %c0_i32, %c0_i32_0 : i32, i32
  }
  func.func @transform_6(%arg0: i32, %arg1: i32) -> (i32, i32, i32) {
    %c0_i32 = arith.constant 0 : i32
    %c0_i32_0 = arith.constant 0 : i32
    return %arg0, %arg1, %c0_i32 : i32, i32, i32
  }
}

module attributes {stable_mosaic.version = 11 : i64} {
  func.func @_chain_kernel(%arg0: i32, %arg1: i32, %arg2: memref<1x8x128xbf16, #tpu.memory_space<vmem>>, %arg3: memref<1x1x17x128xbf16, #tpu.memory_space<vmem>>, %arg4: memref<384x16xbf16, #tpu.memory_space<vmem>>, %arg5: memref<1x16xf32, #tpu.memory_space<vmem>>, %arg6: memref<1x8x16xbf16, #tpu.memory_space<vmem>>) attributes {dimension_semantics = [#tpu.dimension_semantics<parallel>, #tpu.dimension_semantics<parallel>], iteration_bounds = array<i64: 2, 1>, scalar_prefetch = 0 : i64, scratch_operands = 0 : i64, tpu.core_type = #tpu.core_type<tc>, window_params = [{transform_indices = @transform_0, window_bounds = array<i64: 1, 8, 128>}, {transform_indices = @transform_1, window_bounds = array<i64: 1, 1, 17, 128>}, {pipeline_mode = #tpu.pipeline_mode<synchronous>, transform_indices = @transform_2, window_bounds = array<i64: 384, 16>}, {pipeline_mode = #tpu.pipeline_mode<synchronous>, transform_indices = @transform_3, window_bounds = array<i64: 1, 16>}, {transform_indices = @transform_4, window_bounds = array<i64: 1, 8, 16>}]} {
    %c0 = arith.constant 0 : index
    %c0_0 = arith.constant 0 : index
    %c0_1 = arith.constant 0 : index
    %0 = vector.load %arg2[%c0, %c0_0, %c0_1] : memref<1x8x128xbf16, #tpu.memory_space<vmem>>, vector<1x8x128xbf16>
    %1 = vector.shape_cast %0 : vector<1x8x128xbf16> to vector<8x128xbf16>
    %c0_2 = arith.constant 0 : index
    %c0_3 = arith.constant 0 : index
    %c0_4 = arith.constant 0 : index
    %c0_5 = arith.constant 0 : index
    %2 = vector.load %arg3[%c0_2, %c0_3, %c0_4, %c0_5] : memref<1x1x17x128xbf16, #tpu.memory_space<vmem>>, vector<1x1x17x128xbf16>
    %3 = vector.shape_cast %2 : vector<1x1x17x128xbf16> to vector<17x128xbf16>
    %4 = vector.extract_strided_slice %3 {offsets = [0, 0], sizes = [16, 128], strides = [1, 1]} : vector<17x128xbf16> to vector<16x128xbf16>
    %5 = vector.extract_strided_slice %3 {offsets = [16, 0], sizes = [1, 128], strides = [1, 1]} : vector<17x128xbf16> to vector<1x128xbf16>
    %6 = tpu.concatenate %4, %1, %5 in 0 : vector<16x128xbf16>, vector<8x128xbf16>, vector<1x128xbf16> -> vector<25x128xbf16>
    %7 = arith.extf %6 : vector<25x128xbf16> to vector<25x128xf32>
    %cst = arith.constant 0.000000e+00 : f32
    %8 = vector.broadcast %cst : f32 to vector<25x128xf32>
    %9 = arith.cmpf oge, %7, %8 : vector<25x128xf32>
    %cst_6 = arith.constant 0.00999999977 : f32
    %10 = vector.broadcast %cst_6 : f32 to vector<25x128xf32>
    %11 = arith.mulf %7, %10 : vector<25x128xf32>
    %12 = arith.select %9, %7, %11 : vector<25x128xi1>, vector<25x128xf32>
    %13 = arith.truncf %12 : vector<25x128xf32> to vector<25x128xbf16>
    %14 = vector.extract_strided_slice %13 {offsets = [15, 0], sizes = [8, 128], strides = [1, 1]} : vector<25x128xbf16> to vector<8x128xbf16>
    %15 = vector.extract_strided_slice %13 {offsets = [16, 0], sizes = [8, 128], strides = [1, 1]} : vector<25x128xbf16> to vector<8x128xbf16>
    %16 = vector.extract_strided_slice %13 {offsets = [17, 0], sizes = [8, 128], strides = [1, 1]} : vector<25x128xbf16> to vector<8x128xbf16>
    %17 = tpu.concatenate %14, %15, %16 in 1 : vector<8x128xbf16>, vector<8x128xbf16>, vector<8x128xbf16> -> vector<8x384xbf16>
    %c0_7 = arith.constant 0 : index
    %c0_8 = arith.constant 0 : index
    %18 = vector.load %arg4[%c0_7, %c0_8] : memref<384x16xbf16, #tpu.memory_space<vmem>>, vector<384x16xbf16>
    %cst_9 = arith.constant dense<0.000000e+00> : vector<8x16xf32>
    %19 = tpu.matmul %17, %18, %cst_9 {dimension_numbers = #tpu.dot_dimension_numbers<[1], [0], [0], [1], [0, 0, 1, 1], [], []>} : vector<8x384xbf16>, vector<384x16xbf16>, vector<8x16xf32> -> vector<8x16xf32>
    %c0_10 = arith.constant 0 : index
    %c0_11 = arith.constant 0 : index
    %20 = vector.load %arg5[%c0_10, %c0_11] : memref<1x16xf32, #tpu.memory_space<vmem>>, vector<1x16xf32>
    %21 = vector.broadcast %20 : vector<1x16xf32> to vector<8x16xf32>
    %22 = arith.addf %19, %21 : vector<8x16xf32>
    %23 = math.tanh %22 : vector<8x16xf32>
    %24 = arith.truncf %23 : vector<8x16xf32> to vector<8x16xbf16>
    %c0_12 = arith.constant 0 : index
    %c0_13 = arith.constant 0 : index
    %c0_14 = arith.constant 0 : index
    %25 = vector.load %arg6[%c0_12, %c0_13, %c0_14] : memref<1x8x16xbf16, #tpu.memory_space<vmem>>, vector<1x8x16xbf16>
    %26 = vector.shape_cast %25 : vector<1x8x16xbf16> to vector<8x16xbf16>
    %27 = vector.shape_cast %24 : vector<8x16xbf16> to vector<1x8x16xbf16>
    tpu.vector_store %arg6[%c0_12, %c0_13, %c0_14], %27 {strides = array<i32>} : memref<1x8x16xbf16, #tpu.memory_space<vmem>>, vector<1x8x16xbf16>,
    return
  }
  func.func @transform_0(%arg0: i32, %arg1: i32) -> (i32, i32, i32) {
    %c0_i32 = arith.constant 0 : i32
    %c0_i32_0 = arith.constant 0 : i32
    return %arg0, %arg1, %c0_i32 : i32, i32, i32
  }
  func.func @transform_1(%arg0: i32, %arg1: i32) -> (i32, i32, i32, i32) {
    %c0_i32 = arith.constant 0 : i32
    %c0_i32_0 = arith.constant 0 : i32
    %c0_i32_1 = arith.constant 0 : i32
    return %arg0, %arg1, %c0_i32, %c0_i32_0 : i32, i32, i32, i32
  }
  func.func @transform_2(%arg0: i32, %arg1: i32) -> (i32, i32) {
    %c0_i32 = arith.constant 0 : i32
    %c0_i32_0 = arith.constant 0 : i32
    %c0_i32_1 = arith.constant 0 : i32
    return %c0_i32, %c0_i32_0 : i32, i32
  }
  func.func @transform_3(%arg0: i32, %arg1: i32) -> (i32, i32) {
    %c0_i32 = arith.constant 0 : i32
    %c0_i32_0 = arith.constant 0 : i32
    %c0_i32_1 = arith.constant 0 : i32
    return %c0_i32, %c0_i32_0 : i32, i32
  }
  func.func @transform_4(%arg0: i32, %arg1: i32) -> (i32, i32, i32) {
    %c0_i32 = arith.constant 0 : i32
    %c0_i32_0 = arith.constant 0 : i32
    return %arg0, %arg1, %c0_i32 : i32, i32, i32
  }
}

module attributes {stable_mosaic.version = 11 : i64} {
  func.func @_chain_kernel(%arg0: i32, %arg1: i32, %arg2: memref<1x8x128xbf16, #tpu.memory_space<vmem>>, %arg3: memref<1x1x18x128xbf16, #tpu.memory_space<vmem>>, %arg4: memref<384x128xbf16, #tpu.memory_space<vmem>>, %arg5: memref<1x128xf32, #tpu.memory_space<vmem>>, %arg6: memref<384x128xbf16, #tpu.memory_space<vmem>>, %arg7: memref<1x128xf32, #tpu.memory_space<vmem>>, %arg8: memref<1x8x128xbf16, #tpu.memory_space<vmem>>, %arg9: memref<1x8x128xbf16, #tpu.memory_space<vmem>>) attributes {dimension_semantics = [#tpu.dimension_semantics<parallel>, #tpu.dimension_semantics<parallel>], iteration_bounds = array<i64: 2, 1>, scalar_prefetch = 0 : i64, scratch_operands = 0 : i64, tpu.core_type = #tpu.core_type<tc>, window_params = [{transform_indices = @transform_0, window_bounds = array<i64: 1, 8, 128>}, {transform_indices = @transform_1, window_bounds = array<i64: 1, 1, 18, 128>}, {pipeline_mode = #tpu.pipeline_mode<synchronous>, transform_indices = @transform_2, window_bounds = array<i64: 384, 128>}, {pipeline_mode = #tpu.pipeline_mode<synchronous>, transform_indices = @transform_3, window_bounds = array<i64: 1, 128>}, {pipeline_mode = #tpu.pipeline_mode<synchronous>, transform_indices = @transform_4, window_bounds = array<i64: 384, 128>}, {pipeline_mode = #tpu.pipeline_mode<synchronous>, transform_indices = @transform_5, window_bounds = array<i64: 1, 128>}, {transform_indices = @transform_6, window_bounds = array<i64: 1, 8, 128>}, {transform_indices = @transform_7, window_bounds = array<i64: 1, 8, 128>}]} {
    %c0 = arith.constant 0 : index
    %c0_0 = arith.constant 0 : index
    %c0_1 = arith.constant 0 : index
    %0 = vector.load %arg2[%c0, %c0_0, %c0_1] : memref<1x8x128xbf16, #tpu.memory_space<vmem>>, vector<1x8x128xbf16>
    %1 = vector.shape_cast %0 : vector<1x8x128xbf16> to vector<8x128xbf16>
    %c0_2 = arith.constant 0 : index
    %c0_3 = arith.constant 0 : index
    %c0_4 = arith.constant 0 : index
    %c0_5 = arith.constant 0 : index
    %2 = vector.load %arg3[%c0_2, %c0_3, %c0_4, %c0_5] : memref<1x1x18x128xbf16, #tpu.memory_space<vmem>>, vector<1x1x18x128xbf16>
    %3 = vector.shape_cast %2 : vector<1x1x18x128xbf16> to vector<18x128xbf16>
    %4 = vector.extract_strided_slice %3 {offsets = [0, 0], sizes = [16, 128], strides = [1, 1]} : vector<18x128xbf16> to vector<16x128xbf16>
    %5 = vector.extract_strided_slice %3 {offsets = [16, 0], sizes = [2, 128], strides = [1, 1]} : vector<18x128xbf16> to vector<2x128xbf16>
    %6 = tpu.concatenate %4, %1, %5 in 0 : vector<16x128xbf16>, vector<8x128xbf16>, vector<2x128xbf16> -> vector<26x128xbf16>
    %7 = arith.extf %6 : vector<26x128xbf16> to vector<26x128xf32>
    %cst = arith.constant 0.000000e+00 : f32
    %8 = vector.broadcast %cst : f32 to vector<26x128xf32>
    %9 = arith.cmpf oge, %7, %8 : vector<26x128xf32>
    %cst_6 = arith.constant 1.000000e-01 : f32
    %10 = vector.broadcast %cst_6 : f32 to vector<26x128xf32>
    %11 = arith.mulf %7, %10 : vector<26x128xf32>
    %12 = arith.select %9, %7, %11 : vector<26x128xi1>, vector<26x128xf32>
    %13 = arith.truncf %12 : vector<26x128xf32> to vector<26x128xbf16>
    %14 = vector.extract_strided_slice %13 {offsets = [14, 0], sizes = [10, 128], strides = [1, 1]} : vector<26x128xbf16> to vector<10x128xbf16>
    %15 = vector.extract_strided_slice %13 {offsets = [15, 0], sizes = [10, 128], strides = [1, 1]} : vector<26x128xbf16> to vector<10x128xbf16>
    %16 = vector.extract_strided_slice %13 {offsets = [16, 0], sizes = [10, 128], strides = [1, 1]} : vector<26x128xbf16> to vector<10x128xbf16>
    %17 = tpu.concatenate %14, %15, %16 in 1 : vector<10x128xbf16>, vector<10x128xbf16>, vector<10x128xbf16> -> vector<10x384xbf16>
    %c0_7 = arith.constant 0 : index
    %c0_8 = arith.constant 0 : index
    %18 = vector.load %arg4[%c0_7, %c0_8] : memref<384x128xbf16, #tpu.memory_space<vmem>>, vector<384x128xbf16>
    %cst_9 = arith.constant dense<0.000000e+00> : vector<10x128xf32>
    %19 = tpu.matmul %17, %18, %cst_9 {dimension_numbers = #tpu.dot_dimension_numbers<[1], [0], [0], [1], [0, 0, 1, 1], [], []>} : vector<10x384xbf16>, vector<384x128xbf16>, vector<10x128xf32> -> vector<10x128xf32>
    %c0_10 = arith.constant 0 : index
    %c0_11 = arith.constant 0 : index
    %20 = vector.load %arg5[%c0_10, %c0_11] : memref<1x128xf32, #tpu.memory_space<vmem>>, vector<1x128xf32>
    %21 = vector.broadcast %20 : vector<1x128xf32> to vector<10x128xf32>
    %22 = arith.addf %19, %21 : vector<10x128xf32>
    %c8_i32 = arith.constant 8 : i32
    %23 = arith.muli %arg1, %c8_i32 : i32
    %c1_i32 = arith.constant 1 : i32
    %24 = arith.subi %23, %c1_i32 : i32
    %25 = tpu.iota {dimensions = array<i32: 0>} : vector<10x1xi32>
    %26 = vector.broadcast %24 : i32 to vector<10x1xi32>
    %27 = arith.addi %26, %25 : vector<10x1xi32>
    %c0_i32 = arith.constant 0 : i32
    %28 = vector.broadcast %c0_i32 : i32 to vector<10x1xi32>
    %29 = arith.cmpi sge, %27, %28 : vector<10x1xi32>
    %c8_i32_12 = arith.constant 8 : i32
    %30 = vector.broadcast %c8_i32_12 : i32 to vector<10x1xi32>
    %31 = arith.cmpi slt, %27, %30 : vector<10x1xi32>
    %32 = arith.andi %29, %31 : vector<10x1xi1>
    %cst_13 = arith.constant 0.000000e+00 : f32
    %33 = vector.shape_cast %32 : vector<10x1xi1> to vector<10x1xi1>
    %34 = vector.broadcast %33 : vector<10x1xi1> to vector<10x128xi1>
    %35 = vector.broadcast %cst_13 : f32 to vector<10x128xf32>
    %36 = arith.select %34, %22, %35 : vector<10x128xi1>, vector<10x128xf32>
    %37 = arith.truncf %36 : vector<10x128xf32> to vector<10x128xbf16>
    %38 = arith.extf %37 : vector<10x128xbf16> to vector<10x128xf32>
    %cst_14 = arith.constant 0.000000e+00 : f32
    %39 = vector.broadcast %cst_14 : f32 to vector<10x128xf32>
    %40 = arith.cmpf oge, %38, %39 : vector<10x128xf32>
    %cst_15 = arith.constant 1.000000e-01 : f32
    %41 = vector.broadcast %cst_15 : f32 to vector<10x128xf32>
    %42 = arith.mulf %38, %41 : vector<10x128xf32>
    %43 = arith.select %40, %38, %42 : vector<10x128xi1>, vector<10x128xf32>
    %44 = arith.truncf %43 : vector<10x128xf32> to vector<10x128xbf16>
    %45 = vector.extract_strided_slice %44 {offsets = [0, 0], sizes = [8, 128], strides = [1, 1]} : vector<10x128xbf16> to vector<8x128xbf16>
    %46 = vector.extract_strided_slice %44 {offsets = [1, 0], sizes = [8, 128], strides = [1, 1]} : vector<10x128xbf16> to vector<8x128xbf16>
    %47 = vector.extract_strided_slice %44 {offsets = [2, 0], sizes = [8, 128], strides = [1, 1]} : vector<10x128xbf16> to vector<8x128xbf16>
    %48 = tpu.concatenate %45, %46, %47 in 1 : vector<8x128xbf16>, vector<8x128xbf16>, vector<8x128xbf16> -> vector<8x384xbf16>
    %c0_16 = arith.constant 0 : index
    %c0_17 = arith.constant 0 : index
    %49 = vector.load %arg6[%c0_16, %c0_17] : memref<384x128xbf16, #tpu.memory_space<vmem>>, vector<384x128xbf16>
    %cst_18 = arith.constant dense<0.000000e+00> : vector<8x128xf32>
    %50 = tpu.matmul %48, %49, %cst_18 {dimension_numbers = #tpu.dot_dimension_numbers<[1], [0], [0], [1], [0, 0, 1, 1], [], []>} : vector<8x384xbf16>, vector<384x128xbf16>, vector<8x128xf32> -> vector<8x128xf32>
    %c0_19 = arith.constant 0 : index
    %c0_20 = arith.constant 0 : index
    %51 = vector.load %arg7[%c0_19, %c0_20] : memref<1x128xf32, #tpu.memory_space<vmem>>, vector<1x128xf32>
    %52 = vector.broadcast %51 : vector<1x128xf32> to vector<8x128xf32>
    %53 = arith.addf %50, %52 : vector<8x128xf32>
    %54 = arith.extf %1 : vector<8x128xbf16> to vector<8x128xf32>
    %55 = arith.addf %53, %54 : vector<8x128xf32>
    %c0_21 = arith.constant 0 : index
    %c0_22 = arith.constant 0 : index
    %c0_23 = arith.constant 0 : index
    %56 = vector.load %arg8[%c0_21, %c0_22, %c0_23] : memref<1x8x128xbf16, #tpu.memory_space<vmem>>, vector<1x8x128xbf16>
    %57 = vector.shape_cast %56 : vector<1x8x128xbf16> to vector<8x128xbf16>
    %58 = arith.extf %57 : vector<8x128xbf16> to vector<8x128xf32>
    %59 = arith.addf %55, %58 : vector<8x128xf32>
    %cst_24 = arith.constant 5.000000e-01 : f32
    %60 = vector.broadcast %cst_24 : f32 to vector<8x128xf32>
    %61 = arith.mulf %59, %60 : vector<8x128xf32>
    %62 = arith.truncf %61 : vector<8x128xf32> to vector<8x128xbf16>
    %c0_25 = arith.constant 0 : index
    %c0_26 = arith.constant 0 : index
    %c0_27 = arith.constant 0 : index
    %63 = vector.load %arg9[%c0_25, %c0_26, %c0_27] : memref<1x8x128xbf16, #tpu.memory_space<vmem>>, vector<1x8x128xbf16>
    %64 = vector.shape_cast %63 : vector<1x8x128xbf16> to vector<8x128xbf16>
    %65 = vector.shape_cast %62 : vector<8x128xbf16> to vector<1x8x128xbf16>
    tpu.vector_store %arg9[%c0_25, %c0_26, %c0_27], %65 {strides = array<i32>} : memref<1x8x128xbf16, #tpu.memory_space<vmem>>, vector<1x8x128xbf16>,
    return
  }
  func.func @transform_0(%arg0: i32, %arg1: i32) -> (i32, i32, i32) {
    %c0_i32 = arith.constant 0 : i32
    %c0_i32_0 = arith.constant 0 : i32
    return %arg0, %arg1, %c0_i32 : i32, i32, i32
  }
  func.func @transform_1(%arg0: i32, %arg1: i32) -> (i32, i32, i32, i32) {
    %c0_i32 = arith.constant 0 : i32
    %c0_i32_0 = arith.constant 0 : i32
    %c0_i32_1 = arith.constant 0 : i32
    return %arg0, %arg1, %c0_i32, %c0_i32_0 : i32, i32, i32, i32
  }
  func.func @transform_2(%arg0: i32, %arg1: i32) -> (i32, i32) {
    %c0_i32 = arith.constant 0 : i32
    %c0_i32_0 = arith.constant 0 : i32
    %c0_i32_1 = arith.constant 0 : i32
    return %c0_i32, %c0_i32_0 : i32, i32
  }
  func.func @transform_3(%arg0: i32, %arg1: i32) -> (i32, i32) {
    %c0_i32 = arith.constant 0 : i32
    %c0_i32_0 = arith.constant 0 : i32
    %c0_i32_1 = arith.constant 0 : i32
    return %c0_i32, %c0_i32_0 : i32, i32
  }
  func.func @transform_4(%arg0: i32, %arg1: i32) -> (i32, i32) {
    %c0_i32 = arith.constant 0 : i32
    %c0_i32_0 = arith.constant 0 : i32
    %c0_i32_1 = arith.constant 0 : i32
    return %c0_i32, %c0_i32_0 : i32, i32
  }
  func.func @transform_5(%arg0: i32, %arg1: i32) -> (i32, i32) {
    %c0_i32 = arith.constant 0 : i32
    %c0_i32_0 = arith.constant 0 : i32
    %c0_i32_1 = arith.constant 0 : i32
    return %c0_i32, %c0_i32_0 : i32, i32
  }
  func.func @transform_6(%arg0: i32, %arg1: i32) -> (i32, i32, i32) {
    %c0_i32 = arith.constant 0 : i32
    %c0_i32_0 = arith.constant 0 : i32
    return %arg0, %arg1, %c0_i32 : i32, i32, i32
  }
  func.func @transform_7(%arg0: i32, %arg1: i32) -> (i32, i32, i32) {
    %c0_i32 = arith.constant 0 : i32
    %c0_i32_0 = arith.constant 0 : i32
    return %arg0, %arg1, %c0_i32 : i32, i32, i32
  }
}

</mosaic_0001>

<llo_original>
// kernel: _lambda_.15
$region0: #{_lambda_.15}
  #allocation0 [shape = 'u32[]', space=smem, size = 0x4, offset = 0x4, fixed_abs, tag = 'smem constant byte address 0x4 - core index']
  #allocation1 [shape = 'u32[144,128]{1,0:T(1,128)}', space=vmem, size = 0x12000, scoped, tag = 'internal scratch']
  %s0 = inlined_call_operand.hbm [shape: bf16[2,8,144], index: 0, kind: input, shape index: {}]
  %s1 = inlined_call_operand.hbm [shape: bf16[144,16], index: 1, kind: input, shape index: {}]
  %s2 = inlined_call_operand.hbm [shape: f32[1,16], index: 2, kind: input, shape index: {}]
  %s3 = inlined_call_operand.hbm [shape: bf16[2,8,16], index: 3, kind: output, shape index: {}]
  %s4 = sld [smem:[#allocation0]]
  $region57: #{_lambda_.15} parent=0
    _
  %s6 = ssub.s32 1, %s4
  %s7 = scalar_select 0, %s6, %s4
  $region1: #{_lambda_.15} parent=0
    #allocation2 [shape = 'u8[8192]{0}', space=vmem, size = 0x2000, scoped, tag = 'input window, operand 0']
    #allocation3 [shape = 's32[2]{0}', space=sflag, size = 0x8, scoped, tag = 'scoped memory for _lambda_.15']
    #allocation4 [shape = 's32[2]{0}', space=sflag, size = 0x8, scoped, tag = 'scoped memory for _lambda_.15']
    #allocation5 [shape = 'u8[36864]{0}', space=vmem, size = 0x9000, scoped, tag = 'input window, operand 1, single buffered']
    #allocation6 [shape = 's32[1]{0}', space=sflag, size = 0x4, scoped, tag = 'scoped memory for _lambda_.15']
    #allocation7 [shape = 'u8[512]{0}', space=vmem, size = 0x400, scoped, tag = 'input window, operand 2, single buffered']
    #allocation8 [shape = 'u8[4096]{0}', space=vmem, size = 0x1000, scoped, tag = 'output window, operand 0']
    %8 = vsyncpa [#allocation3], 0
    %s9 = scalar_lea.sflag [#allocation3], 1
    %10 = vsyncpa %s9, 0
    %11 = vsyncpa [#allocation6], 0
    %12 = vsyncpa [#allocation4], 0
    %s13 = scalar_lea.sflag [#allocation4], 1
    %14 = vsyncpa %s13, 0
    loop: start=0, step=1, limit=4
    $region2: #{_lambda_.15} parent=1 // loop_pre_header
      _
    $region3: #{_lambda_.15} parent=1 // loop_header
      %s16 = sphi 0, %s20
      %p17 = scmp.ge.s32.totalorder %s16, 4
      %s23 = sphi 0, %s35
      %s24 = sphi 0, %s31
      %s25 = sphi 0, %s23
      %s26 = sphi 0, %s24
      %s27 = sphi 0, %s25
      %s28 = sphi 0, %s26
      %s40 = sphi 0, %s42
      %s43 = sphi 0, %s40
      %s44 = sphi 0, %s43
      %s60 = sphi 0, %s44
      %s64 = sphi 0, %s64
      %s66 = sphi 0, %s64
      %s67 = sphi 0, %s66
      %s81 = sphi 0, %s67
      %s85 = sphi 0, %s85
      %s87 = sphi 0, %s85
      %s88 = sphi 0, %s87
      %s102 = sphi 0, %s88
      %s110 = sphi 0, %s112
      %s113 = sphi 0, %s110
      %s114 = sphi 0, %s113
      %s130 = sphi 0, %s114
    $region4: #{_lambda_.15} parent=1 // loop_header_branch
      %19 = sbr.rel (%p17) target = $region8
    $region5: #{_lambda_.15} parent=1 // loop_body
      %s21 = ssub.s32 %s16, 1
      %s22 = ssub.s32 %s16, 2
      %s29 = sadd.s32 1, %s24
      %p30 = scmp.ge.s32.totalorder %s29, 1
      %s31 = scalar_select %p30, 0, %s29
      %s32 = sadd.s32 1, %s23
      %s33 = scalar_select %p30, %s32, %s23
      %p34 = scmp.ge.s32.totalorder %s33, 2
      %s35 = scalar_select %p34, 0, %s33
      %s36 = ssub.s32 %s23, %s35
      %s37 = ssub.s32 %s24, %s31
      %s38 = sor.u32 %s36, %s37
      %p39 = scmp.eq.s32.totalorder %s38, 0
      %s41 = sadd.s32 %s40, 1
      %s42 = scalar_select %p39, %s40, %s41
      %p45 = pneg %p39
      %p46 = scmp.eq.s32.totalorder %s16, 1
      %p47 = por %p45, %p46
      %p48 = scmp.ne.s32.totalorder %s40, %s43
      %p49 = scmp.eq.s32.totalorder %s16, 0
      %p50 = por %p48, %p49
      %p51 = scmp.ne.s32.totalorder %s40, %s43
      %p52 = scmp.eq.s32.totalorder %s21, 1
      %p53 = por %p51, %p52
      %p54 = scmp.ne.s32.totalorder %s43, %s44
      %p55 = scmp.eq.s32.totalorder %s21, 0
      %p56 = por %p54, %p55
      %p57 = scmp.ne.s32.totalorder %s43, %s44
      %p58 = scmp.eq.s32.totalorder %s22, 1
      %p59 = por %p57, %p58
      %p61 = scmp.ne.s32.totalorder %s44, %s60
      %p62 = scmp.eq.s32.totalorder %s22, 0
      %p63 = por %p61, %p62
      %s65 = sadd.s32 %s64, 1
      %p68 = scmp.eq.s32.totalorder %s16, 1
      %p69 = scmp.ne.s32.totalorder %s64, %s66
      %p70 = scmp.eq.s32.totalorder %s16, 0
      %p71 = por %p69, %p70
      %p72 = scmp.ne.s32.totalorder %s64, %s66
      %p73 = scmp.eq.s32.totalorder %s21, 1
      %p74 = por %p72, %p73
      %p75 = scmp.ne.s32.totalorder %s66, %s67
      %p76 = scmp.eq.s32.totalorder %s21, 0
      %p77 = por %p75, %p76
      %p78 = scmp.ne.s32.totalorder %s66, %s67
      %p79 = scmp.eq.s32.totalorder %s22, 1
      %p80 = por %p78, %p79
      %p82 = scmp.ne.s32.totalorder %s67, %s81
      %p83 = scmp.eq.s32.totalorder %s22, 0
      %p84 = por %p82, %p83
      %s86 = sadd.s32 %s85, 1
      %p89 = scmp.eq.s32.totalorder %s16, 1
      %p90 = scmp.ne.s32.totalorder %s85, %s87
      %p91 = scmp.eq.s32.totalorder %s16, 0
      %p92 = por %p90, %p91
      %p93 = scmp.ne.s32.totalorder %s85, %s87
      %p94 = scmp.eq.s32.totalorder %s21, 1
      %p95 = por %p93, %p94
      %p96 = scmp.ne.s32.totalorder %s87, %s88
      %p97 = scmp.eq.s32.totalorder %s21, 0
      %p98 = por %p96, %p97
      %p99 = scmp.ne.s32.totalorder %s87, %s88
      %p100 = scmp.eq.s32.totalorder %s22, 1
      %p101 = por %p99, %p100
      %p103 = scmp.ne.s32.totalorder %s88, %s102
      %p104 = scmp.eq.s32.totalorder %s22, 0
      %p105 = por %p103, %p104
      %s106 = ssub.s32 %s23, %s35
      %s107 = ssub.s32 %s24, %s31
      %s108 = sor.u32 %s106, %s107
      %p109 = scmp.eq.s32.totalorder %s108, 0
      %s111 = sadd.s32 %s110, 1
      %s112 = scalar_select %p109, %s110, %s111
      %p115 = pneg %p109
      %p116 = scmp.eq.s32.totalorder %s16, 1
      %p117 = por %p115, %p116
      %p118 = scmp.ne.s32.totalorder %s110, %s113
      %p119 = scmp.eq.s32.totalorder %s16, 0
      %p120 = por %p118, %p119
      %p121 = scmp.ne.s32.totalorder %s110, %s113
      %p122 = scmp.eq.s32.totalorder %s21, 1
      %p123 = por %p121, %p122
      %p124 = scmp.ne.s32.totalorder %s113, %s114
      %p125 = scmp.eq.s32.totalorder %s21, 0
      %p126 = por %p124, %p125
      %p127 = scmp.ne.s32.totalorder %s113, %s114
      %p128 = scmp.eq.s32.totalorder %s22, 1
      %p129 = por %p127, %p128
      %p131 = scmp.ne.s32.totalorder %s114, %s130
      %p132 = scmp.eq.s32.totalorder %s22, 0
      %p133 = por %p131, %p132
      %p134 = scmp.le.s32.totalorder 1, %s16
      %p135 = scmp.lt.s32.totalorder %s16, 3
      %p136 = pnand %p134, %p135
      %p137 = pneg %p136
      // Predicated region
      $region9: #{_lambda_.15} parent=5 // pred_check
        _
      $region10: #{_lambda_.15} parent=5 // pred_check_branch
        %139 = sbr.rel (%p136) target = $region12
      $region11: #{_lambda_.15} parent=5 // pred_region
        %s140 = ssub.s32 %s16, 1
        // Predicated region
        $region13: #{_lambda_.15} parent=11 // pred_check
          %p141 = pneg %p77
        $region14: #{_lambda_.15} parent=11 // pred_check_branch
          %143 = sbr.rel (%p141) target = $region16
        $region15: #{_lambda_.15} parent=11 // pred_region
          %s145 = ssub.s32 1152, 1152
          %146 = vsyncadd [#allocation6], %s145
          %s147 = sshll.u32 [#allocation5], 4
          %s148 = int_to_ptr.vmem [resolvable:$true] %s147
          %153 = dma.hbm_to_vmem [thread:$0]  %s1, 1152, %s148, [#allocation6], 64, 64, 4
        $region16: #{_lambda_.15} parent=11 // pred_fallthru
          _
        // Predicated region
        $region17: #{_lambda_.15} parent=11 // pred_check
          %p154 = pneg %p98
        $region18: #{_lambda_.15} parent=11 // pred_check_branch
          %156 = sbr.rel (%p154) target = $region20
        $region19: #{_lambda_.15} parent=11 // pred_region
          %s158 = ssub.s32 16, 16
          %159 = vsyncadd [#allocation6], %s158
          %s161 = sshll.u32 [#allocation7], 4
          %s162 = int_to_ptr.vmem [resolvable:$true] %s161
          %164 = dma.hbm_to_vmem [thread:$0]  %s2, 16, %s162, [#allocation6]
        $region20: #{_lambda_.15} parent=11 // pred_fallthru
          _
      $region12: #{_lambda_.15} parent=5 // pred_fallthru
        _
      %p165 = scmp.lt.s32.totalorder %s16, 2
      // Predicated region
      $region21: #{_lambda_.15} parent=5 // pred_check
        %p166 = pneg %p165
      $region22: #{_lambda_.15} parent=5 // pred_check_branch
        %168 = sbr.rel (%p166) target = $region24
      $region23: #{_lambda_.15} parent=5 // pred_region
        // Predicated region
        $region25: #{_lambda_.15} parent=23 // pred_check
          %p169 = pneg %p50
        $region26: #{_lambda_.15} parent=23 // pred_check_branch
          %171 = sbr.rel (%p169) target = $region28
        $region27: #{_lambda_.15} parent=23 // pred_region
          %s172 = sand.u32 %s40, 1
          %s173 = scalar_lea.sflag [#allocation3], %s172
          %s174 = sand.u32 %s40, 1
          %s175 = smul.addr %s174, 8
          %s176 = scalar_lea.vmem [#allocation2], %s175
          %s178 = ssub.s32 128, 128
          %179 = vsyncadd %s173, %s178
          %s180 = smul.addr %s24, 2
          %s181 = smul.addr %s23, 2
          %s182 = sadd.s32 %s180, %s181
          %s183 = smul.addr %s182, 64
          %s184 = scalar_lea.hbm %s0, %s183
          %s186 = sshll.u32 %s176, 4
          %s187 = int_to_ptr.vmem [resolvable:$true] %s186
          %189 = dma.hbm_to_vmem [thread:$0]  %s184, 128, %s187, %s173
        $region28: #{_lambda_.15} parent=23 // pred_fallthru
          _
      $region24: #{_lambda_.15} parent=5 // pred_fallthru
        _
      %p190 = scmp.le.s32.totalorder 1, %s16
      %p191 = scmp.lt.s32.totalorder %s16, 3
      %p192 = pnand %p190, %p191
      %p193 = pneg %p192
      // Predicated region
      $region29: #{_lambda_.15} parent=5 // pred_check
        _
      $region30: #{_lambda_.15} parent=5 // pred_check_branch
        %195 = sbr.rel (%p192) target = $region32
      $region31: #{_lambda_.15} parent=5 // pred_region
        %s196 = ssub.s32 %s16, 1
        %s197 = sand.u32 %s43, 1
        %s198 = scalar_lea.sflag [#allocation3], %s197
        %s199 = sand.u32 %s43, 1
        %s200 = smul.addr %s199, 8
        %s201 = scalar_lea.vmem [#allocation2], %s200
        // Predicated region
        $region33: #{_lambda_.15} parent=31 // pred_check
          %p202 = pneg %p56
        $region34: #{_lambda_.15} parent=31 // pred_check_branch
          %204 = sbr.rel (%p202) target = $region36
        $region35: #{_lambda_.15} parent=31 // pred_region
          %205 = dma.done %s198, 128
        $region36: #{_lambda_.15} parent=31 // pred_fallthru
          _
        // Predicated region
        $region37: #{_lambda_.15} parent=31 // pred_check
          %p206 = pneg %p77
        $region38: #{_lambda_.15} parent=31 // pred_check_branch
          %208 = sbr.rel (%p206) target = $region40
        $region39: #{_lambda_.15} parent=31 // pred_region
          %209 = dma.done [#allocation6], 1152
        $region40: #{_lambda_.15} parent=31 // pred_fallthru
          _
        // Predicated region
        $region41: #{_lambda_.15} parent=31 // pred_check
          %p210 = pneg %p98
        $region42: #{_lambda_.15} parent=31 // pred_check_branch
          %212 = sbr.rel (%p210) target = $region44
        $region43: #{_lambda_.15} parent=31 // pred_region
          %213 = dma.done [#allocation6], 16
        $region44: #{_lambda_.15} parent=31 // pred_fallthru
          _
        %s214 = sand.u32 %s43, 1
        %s215 = scalar_lea.sflag [#allocation3], %s214
        %s216 = sand.u32 %s43, 1
        %s217 = smul.addr %s216, 8
        %s218 = scalar_lea.vmem [#allocation2], %s217
        %p219 = pneg %p56
        %p220 = pneg %p53
        %p221 = pneg %p77
        %p222 = pneg %p74
        %p223 = pneg %p98
        %p224 = pneg %p95
        %p225 = pneg %p126
        %p226 = pneg %p123
        %s227 = sand.u32 %s113, 1
        %s228 = scalar_lea.sflag [#allocation4], %s227
        %s229 = sand.u32 %s113, 1
        %s230 = smul.addr %s229, 4
        %s231 = scalar_lea.vmem [#allocation8], %s230
        %v233 = vld [vmem:[%s201] sm:$0xff]
        %v234 = vld [vmem:[#allocation5] sm:$0xf]
        %v235 = vld [vmem:[#allocation5 + $0x4] sm:$0xf]
        %v236 = vld [vmem:[#allocation5 + $0x8] sm:$0xf]
        %v237 = vld [vmem:[#allocation5 + $0xc] sm:$0xf]
        %v238 = vld [vmem:[#allocation5 + $0x10] sm:$0xf]
        %v239 = vld [vmem:[#allocation5 + $0x14] sm:$0xf]
        %v240 = vld [vmem:[#allocation5 + $0x18] sm:$0xf]
        %v241 = vld [vmem:[#allocation5 + $0x1c] sm:$0xf]
        %v242 = vld [vmem:[#allocation5 + $0x20] sm:$0xf]
        %v243 = vld [vmem:[#allocation5 + $0x24] sm:$0xf]
        %v244 = vld [vmem:[#allocation5 + $0x28] sm:$0xf]
        %v245 = vld [vmem:[#allocation5 + $0x2c] sm:$0xf]
        %v246 = vld [vmem:[#allocation5 + $0x30] sm:$0xf]
        %v247 = vld [vmem:[#allocation5 + $0x34] sm:$0xf]
        %v248 = vld [vmem:[#allocation5 + $0x38] sm:$0xf]
        %v249 = vld [vmem:[#allocation5 + $0x3c] sm:$0xf]
        %v250 = vld [vmem:[#allocation5 + $0x40] sm:$0xf]
        %v251 = vld [vmem:[#allocation5 + $0x44] sm:$0xf]
        %v252 = vld [vmem:[#allocation7] sm:$0x1]
        %v254 = vlaneseq
        %v255 = vshrl.u32 %v254, 7
        %v256 = vsub.s32 0, %v255
        %v257 = vrot.slane %v252, %v256
        %v260 = vunpack.c.l.b16 %v233
        %v261 = vunpack.c.h.b16 %v233
        %v262 = vpack.c.b16 %v260, %v260
        %v263 = vpack.c.b16 %v261, %v261
        %v283 = vunpack.c.l.b16 %v234
        %v284 = vunpack.c.l.b16 %v235
        %v285 = vunpack.c.l.b16 %v236
        %v286 = vunpack.c.l.b16 %v237
        %v287 = vunpack.c.l.b16 %v238
        %v288 = vunpack.c.l.b16 %v239
        %v289 = vunpack.c.l.b16 %v240
        %v290 = vunpack.c.l.b16 %v241
        %v291 = vunpack.c.l.b16 %v242
        %v292 = vunpack.c.l.b16 %v243
        %v293 = vunpack.c.l.b16 %v244
        %v294 = vunpack.c.l.b16 %v245
        %v295 = vunpack.c.l.b16 %v246
        %v296 = vunpack.c.l.b16 %v247
        %v297 = vunpack.c.l.b16 %v248
        %v298 = vunpack.c.l.b16 %v249
        %v299 = vunpack.c.l.b16 %v250
        %v300 = vunpack.c.l.b16 %v251
        %v301 = vpack.c.b16 %v284, %v283
        %v302 = vpack.c.b16 %v286, %v285
        %v303 = vpack.c.b16 %v288, %v287
        %v304 = vpack.c.b16 %v290, %v289
        %v305 = vpack.c.b16 %v292, %v291
        %v306 = vpack.c.b16 %v294, %v293
        %v307 = vpack.c.b16 %v296, %v295
        %v308 = vpack.c.b16 %v298, %v297
        %v309 = vpack.c.b16 %v300, %v299
        %vm319 = vcmask 130048
        %v321 = vsel %vm319, %v263, 0
        %323 = vmatprep.subr.bf16.mxu0 0
        %324 = vmatpush1.bf16.msra.mxu0 %v301
        %325 = vmatprep.subr.bf16.mxu0 0
        %326 = vmatpush1.bf16.msra.mxu0 %v302
        %327 = vmatprep.subr.bf16.mxu0 0
        %328 = vmatpush1.bf16.msra.mxu0 %v303
        %329 = vmatprep.subr.bf16.mxu0 0
        %330 = vmatpush1.bf16.msra.mxu0 %v304
        %331 = vmatprep.subr.bf16.mxu0 0
        %332 = vmatpush1.bf16.msra.mxu0 %v305
        %333 = vmatprep.subr.bf16.mxu0 0
        %334 = vmatpush1.bf16.msra.mxu0 %v306
        %335 = vmatprep.subr.bf16.mxu0 0
        %336 = vmatpush1.bf16.msra.mxu0 %v307
        %337 = vmatprep.subr.bf16.mxu0 0
        %338 = vmatpush1.bf16.msra.mxu0 %v308
        %339 = vmatprep.subr.bf16.mxu0 0
        %340 = vmatpush1.bf16.msra.mxu0 %v309
        %341 = vmatprep.subr.bf16.mxu0 0
        %342 = vmatpush1.bf16.msra.mxu0 0
        %343 = vmatprep.subr.bf16.mxu0 0
        %344 = vmatpush1.bf16.msra.mxu0 0
        %345 = vmatprep.subr.bf16.mxu0 0
        %346 = vmatpush1.bf16.msra.mxu0 0
        %347 = vmatprep.subr.bf16.mxu0 0
        %348 = vmatpush1.bf16.msra.mxu0 0
        %349 = vmatprep.subr.bf16.mxu0 0
        %350 = vmatpush1.bf16.msra.mxu0 0
        %351 = vmatprep.subr.bf16.mxu0 0
        %352 = vmatpush1.bf16.msra.mxu0 0
        %353 = vmatprep.subr.bf16.mxu0 0
        %354 = vmatpush1.bf16.msra.mxu0 0
        %355 = vmatprep.mubr.bf16.mxu0 %v321
        %356 = vmatmul.mubr.bf16.gmra.mrb[0].mxu0 %v262
        %v357 = vpop.f32.mrb[0].mxu0
        %v358 = vadd.f32 %v257, %v357
        %v359 = vpop.f32.mrb[0].mxu0
        %v360 = vpop.f32.mrb[0].mxu0
        %v361 = vpop.f32.mrb[0].mxu0
        %362 = vdwg.mxu0
        %v363 = vtanh.pop %v358
        %v364 = vpack.c.bf16 %v363, %v363
        %vm365 = vcmask 125952
        %366 = vst.msk [vmem:[%s231] sm:$0xf] %vm365, %v364
        %s367 = sand.u32 %s113, 1
        %s368 = scalar_lea.sflag [#allocation4], %s367
        %s369 = sand.u32 %s113, 1
        %s370 = smul.addr %s369, 4
        %s371 = scalar_lea.vmem [#allocation8], %s370
        // Predicated region
        $region45: #{_lambda_.15} parent=31 // pred_check
          %p372 = pneg %p123
        $region46: #{_lambda_.15} parent=31 // pred_check_branch
          %374 = sbr.rel (%p372) target = $region48
        $region47: #{_lambda_.15} parent=31 // pred_region
          %s376 = ssub.s32 64, 64
          %377 = vsyncadd %s368, %s376
          %s378 = sadd.s32 %s26, %s25
          %s379 = smul.addr %s378, 64
          %s380 = scalar_lea.hbm %s3, %s379
          %s382 = sshll.u32 %s371, 4
          %s383 = int_to_ptr.vmem [resolvable:$true] %s382
          %385 = dma.vmem_to_hbm [thread:$0]  %s383, 64, %s380, %s368
        $region48: #{_lambda_.15} parent=31 // pred_fallthru
          _
      $region32: #{_lambda_.15} parent=5 // pred_fallthru
        _
      %p386 = scmp.le.s32.totalorder 2, %s16
      // Predicated region
      $region49: #{_lambda_.15} parent=5 // pred_check
        %p387 = pneg %p386
      $region50: #{_lambda_.15} parent=5 // pred_check_branch
        %389 = sbr.rel (%p387) target = $region52
      $region51: #{_lambda_.15} parent=5 // pred_region
        %s390 = ssub.s32 %s16, 2
        // Predicated region
        $region53: #{_lambda_.15} parent=51 // pred_check
          %p391 = pneg %p129
        $region54: #{_lambda_.15} parent=51 // pred_check_branch
          %393 = sbr.rel (%p391) target = $region56
        $region55: #{_lambda_.15} parent=51 // pred_region
          %s394 = sand.u32 %s114, 1
          %s395 = scalar_lea.sflag [#allocation4], %s394
          %s396 = sand.u32 %s114, 1
          %s397 = smul.addr %s396, 4
          %s398 = scalar_lea.vmem [#allocation8], %s397
          %399 = dma.done %s395, 64
        $region56: #{_lambda_.15} parent=51 // pred_fallthru
          _
      $region52: #{_lambda_.15} parent=5 // pred_fallthru
        _
    $region6: #{_lambda_.15} parent=1 // loop_footer
      %s20 = sadd.s32 1, %s16
    $region7: #{_lambda_.15} parent=1 // loop_footer_branch
      %15 = sbr.rel target = $region3
    $region8: #{_lambda_.15} parent=1 // loop_exit
      _
    %400 = vsyncpa [#allocation3], 1
    %s401 = scalar_lea.sflag [#allocation3], 1
    %402 = vsyncpa %s401, 1
    %403 = vsyncpa [#allocation6], 1
    %404 = vsyncpa [#allocation4], 1
    %s405 = scalar_lea.sflag [#allocation4], 1
    %406 = vsyncpa %s405, 1

// kernel: _lambda_.17
$region0: #{_lambda_.17}
  #allocation0 [shape = 'u32[]', space=smem, size = 0x4, offset = 0x4, fixed_abs, tag = 'smem constant byte address 0x4 - core index']
  #allocation1 [shape = 'u32[144,128]{1,0:T(1,128)}', space=vmem, size = 0x12000, scoped, tag = 'internal scratch']
  %s0 = inlined_call_operand.hbm [shape: bf16[2,8,32], index: 0, kind: input, shape index: {}]
  %s1 = inlined_call_operand.hbm [shape: bf16[2,1,17,32], index: 1, kind: input, shape index: {}]
  %s2 = inlined_call_operand.hbm [shape: bf16[96,64], index: 2, kind: input, shape index: {}]
  %s3 = inlined_call_operand.hbm [shape: f32[1,64], index: 3, kind: input, shape index: {}]
  %s4 = inlined_call_operand.hbm [shape: bf16[2,8,64], index: 4, kind: output, shape index: {}]
  %s5 = sld [smem:[#allocation0]]
  $region65: #{_lambda_.17} parent=0
    _
  %s7 = ssub.s32 1, %s5
  %s8 = scalar_select 0, %s7, %s5
  $region1: #{_lambda_.17} parent=0
    #allocation2 [shape = 'u8[4096]{0}', space=vmem, size = 0x1000, scoped, tag = 'input window, operand 0']
    #allocation3 [shape = 's32[2]{0}', space=sflag, size = 0x8, scoped, tag = 'scoped memory for _lambda_.17']
    #allocation4 [shape = 's32[2]{0}', space=sflag, size = 0x8, scoped, tag = 'scoped memory for _lambda_.17']
    #allocation5 [shape = 'u8[12288]{0}', space=vmem, size = 0x3000, scoped, tag = 'input window, operand 1']
    #allocation6 [shape = 's32[2]{0}', space=sflag, size = 0x8, scoped, tag = 'scoped memory for _lambda_.17']
    #allocation7 [shape = 'u8[24576]{0}', space=vmem, size = 0x6000, scoped, tag = 'input window, operand 2, single buffered']
    #allocation8 [shape = 'u8[512]{0}', space=vmem, size = 0x400, scoped, tag = 'input window, operand 3, single buffered']
    #allocation9 [shape = 's32[1]{0}', space=sflag, size = 0x4, scoped, tag = 'scoped memory for _lambda_.17']
    #allocation10 [shape = 'u8[4096]{0}', space=vmem, size = 0x1000, scoped, tag = 'output window, operand 0']
    %9 = vsyncpa [#allocation3], 0
    %s10 = scalar_lea.sflag [#allocation3], 1
    %11 = vsyncpa %s10, 0
    %12 = vsyncpa [#allocation6], 0
    %s13 = scalar_lea.sflag [#allocation6], 1
    %14 = vsyncpa %s13, 0
    %15 = vsyncpa [#allocation9], 0
    %16 = vsyncpa [#allocation4], 0
    %s17 = scalar_lea.sflag [#allocation4], 1
    %18 = vsyncpa %s17, 0
    loop: start=0, step=1, limit=4
    $region2: #{_lambda_.17} parent=1 // loop_pre_header
      _
    $region3: #{_lambda_.17} parent=1 // loop_header
      %s20 = sphi 0, %s24
      %p21 = scmp.ge.s32.totalorder %s20, 4
      %s27 = sphi 0, %s39
      %s28 = sphi 0, %s35
      %s29 = sphi 0, %s27
      %s30 = sphi 0, %s28
      %s31 = sphi 0, %s29
      %s32 = sphi 0, %s30
      %s44 = sphi 0, %s46
      %s47 = sphi 0, %s44
      %s48 = sphi 0, %s47
      %s64 = sphi 0, %s48
      %s72 = sphi 0, %s74
      %s75 = sphi 0, %s72
      %s76 = sphi 0, %s75
      %s92 = sphi 0, %s76
      %s96 = sphi 0, %s96
      %s98 = sphi 0, %s96
      %s99 = sphi 0, %s98
      %s113 = sphi 0, %s99
      %s117 = sphi 0, %s117
      %s119 = sphi 0, %s117
      %s120 = sphi 0, %s119
      %s134 = sphi 0, %s120
      %s142 = sphi 0, %s144
      %s145 = sphi 0, %s142
      %s146 = sphi 0, %s145
      %s162 = sphi 0, %s146
    $region4: #{_lambda_.17} parent=1 // loop_header_branch
      %23 = sbr.rel (%p21) target = $region8
    $region5: #{_lambda_.17} parent=1 // loop_body
      %s25 = ssub.s32 %s20, 1
      %s26 = ssub.s32 %s20, 2
      %s33 = sadd.s32 1, %s28
      %p34 = scmp.ge.s32.totalorder %s33, 1
      %s35 = scalar_select %p34, 0, %s33
      %s36 = sadd.s32 1, %s27
      %s37 = scalar_select %p34, %s36, %s27
      %p38 = scmp.ge.s32.totalorder %s37, 2
      %s39 = scalar_select %p38, 0, %s37
      %s40 = ssub.s32 %s27, %s39
      %s41 = ssub.s32 %s28, %s35
      %s42 = sor.u32 %s40, %s41
      %p43 = scmp.eq.s32.totalorder %s42, 0
      %s45 = sadd.s32 %s44, 1
      %s46 = scalar_select %p43, %s44, %s45
      %p49 = pneg %p43
      %p50 = scmp.eq.s32.totalorder %s20, 1
      %p51 = por %p49, %p50
      %p52 = scmp.ne.s32.totalorder %s44, %s47
      %p53 = scmp.eq.s32.totalorder %s20, 0
      %p54 = por %p52, %p53
      %p55 = scmp.ne.s32.totalorder %s44, %s47
      %p56 = scmp.eq.s32.totalorder %s25, 1
      %p57 = por %p55, %p56
      %p58 = scmp.ne.s32.totalorder %s47, %s48
      %p59 = scmp.eq.s32.totalorder %s25, 0
      %p60 = por %p58, %p59
      %p61 = scmp.ne.s32.totalorder %s47, %s48
      %p62 = scmp.eq.s32.totalorder %s26, 1
      %p63 = por %p61, %p62
      %p65 = scmp.ne.s32.totalorder %s48, %s64
      %p66 = scmp.eq.s32.totalorder %s26, 0
      %p67 = por %p65, %p66
      %s68 = ssub.s32 %s27, %s39
      %s69 = ssub.s32 %s28, %s35
      %s70 = sor.u32 %s68, %s69
      %p71 = scmp.eq.s32.totalorder %s70, 0
      %s73 = sadd.s32 %s72, 1
      %s74 = scalar_select %p71, %s72, %s73
      %p77 = pneg %p71
      %p78 = scmp.eq.s32.totalorder %s20, 1
      %p79 = por %p77, %p78
      %p80 = scmp.ne.s32.totalorder %s72, %s75
      %p81 = scmp.eq.s32.totalorder %s20, 0
      %p82 = por %p80, %p81
      %p83 = scmp.ne.s32.totalorder %s72, %s75
      %p84 = scmp.eq.s32.totalorder %s25, 1
      %p85 = por %p83, %p84
      %p86 = scmp.ne.s32.totalorder %s75, %s76
      %p87 = scmp.eq.s32.totalorder %s25, 0
      %p88 = por %p86, %p87
      %p89 = scmp.ne.s32.totalorder %s75, %s76
      %p90 = scmp.eq.s32.totalorder %s26, 1
      %p91 = por %p89, %p90
      %p93 = scmp.ne.s32.totalorder %s76, %s92
      %p94 = scmp.eq.s32.totalorder %s26, 0
      %p95 = por %p93, %p94
      %s97 = sadd.s32 %s96, 1
      %p100 = scmp.eq.s32.totalorder %s20, 1
      %p101 = scmp.ne.s32.totalorder %s96, %s98
      %p102 = scmp.eq.s32.totalorder %s20, 0
      %p103 = por %p101, %p102
      %p104 = scmp.ne.s32.totalorder %s96, %s98
      %p105 = scmp.eq.s32.totalorder %s25, 1
      %p106 = por %p104, %p105
      %p107 = scmp.ne.s32.totalorder %s98, %s99
      %p108 = scmp.eq.s32.totalorder %s25, 0
      %p109 = por %p107, %p108
      %p110 = scmp.ne.s32.totalorder %s98, %s99
      %p111 = scmp.eq.s32.totalorder %s26, 1
      %p112 = por %p110, %p111
      %p114 = scmp.ne.s32.totalorder %s99, %s113
      %p115 = scmp.eq.s32.totalorder %s26, 0
      %p116 = por %p114, %p115
      %s118 = sadd.s32 %s117, 1
      %p121 = scmp.eq.s32.totalorder %s20, 1
      %p122 = scmp.ne.s32.totalorder %s117, %s119
      %p123 = scmp.eq.s32.totalorder %s20, 0
      %p124 = por %p122, %p123
      %p125 = scmp.ne.s32.totalorder %s117, %s119
      %p126 = scmp.eq.s32.totalorder %s25, 1
      %p127 = por %p125, %p126
      %p128 = scmp.ne.s32.totalorder %s119, %s120
      %p129 = scmp.eq.s32.totalorder %s25, 0
      %p130 = por %p128, %p129
      %p131 = scmp.ne.s32.totalorder %s119, %s120
      %p132 = scmp.eq.s32.totalorder %s26, 1
      %p133 = por %p131, %p132
      %p135 = scmp.ne.s32.totalorder %s120, %s134
      %p136 = scmp.eq.s32.totalorder %s26, 0
      %p137 = por %p135, %p136
      %s138 = ssub.s32 %s27, %s39
      %s139 = ssub.s32 %s28, %s35
      %s140 = sor.u32 %s138, %s139
      %p141 = scmp.eq.s32.totalorder %s140, 0
      %s143 = sadd.s32 %s142, 1
      %s144 = scalar_select %p141, %s142, %s143
      %p147 = pneg %p141
      %p148 = scmp.eq.s32.totalorder %s20, 1
      %p149 = por %p147, %p148
      %p150 = scmp.ne.s32.totalorder %s142, %s145
      %p151 = scmp.eq.s32.totalorder %s20, 0
      %p152 = por %p150, %p151
      %p153 = scmp.ne.s32.totalorder %s142, %s145
      %p154 = scmp.eq.s32.totalorder %s25, 1
      %p155 = por %p153, %p154
      %p156 = scmp.ne.s32.totalorder %s145, %s146
      %p157 = scmp.eq.s32.totalorder %s25, 0
      %p158 = por %p156, %p157
      %p159 = scmp.ne.s32.totalorder %s145, %s146
      %p160 = scmp.eq.s32.totalorder %s26, 1
      %p161 = por %p159, %p160
      %p163 = scmp.ne.s32.totalorder %s146, %s162
      %p164 = scmp.eq.s32.totalorder %s26, 0
      %p165 = por %p163, %p164
      %p166 = scmp.le.s32.totalorder 1, %s20
      %p167 = scmp.lt.s32.totalorder %s20, 3
      %p168 = pnand %p166, %p167
      %p169 = pneg %p168
      // Predicated region
      $region9: #{_lambda_.17} parent=5 // pred_check
        _
      $region10: #{_lambda_.17} parent=5 // pred_check_branch
        %171 = sbr.rel (%p168) target = $region12
      $region11: #{_lambda_.17} parent=5 // pred_region
        %s172 = ssub.s32 %s20, 1
        // Predicated region
        $region13: #{_lambda_.17} parent=11 // pred_check
          %p173 = pneg %p109
        $region14: #{_lambda_.17} parent=11 // pred_check_branch
          %175 = sbr.rel (%p173) target = $region16
        $region15: #{_lambda_.17} parent=11 // pred_region
          %s177 = ssub.s32 768, 768
          %178 = vsyncadd [#allocation6], %s177
          %s179 = sshll.u32 [#allocation7], 4
          %s180 = int_to_ptr.vmem [resolvable:$true] %s179
          %185 = dma.hbm_to_vmem [thread:$0]  %s2, 768, %s180, [#allocation6], 64, 64, 4
        $region16: #{_lambda_.17} parent=11 // pred_fallthru
          _
        // Predicated region
        $region17: #{_lambda_.17} parent=11 // pred_check
          %p186 = pneg %p130
        $region18: #{_lambda_.17} parent=11 // pred_check_branch
          %188 = sbr.rel (%p186) target = $region20
        $region19: #{_lambda_.17} parent=11 // pred_region
          %s190 = ssub.s32 16, 16
          %191 = vsyncadd [#allocation9], %s190
          %s193 = sshll.u32 [#allocation8], 4
          %s194 = int_to_ptr.vmem [resolvable:$true] %s193
          %196 = dma.hbm_to_vmem [thread:$0]  %s3, 16, %s194, [#allocation9]
        $region20: #{_lambda_.17} parent=11 // pred_fallthru
          _
      $region12: #{_lambda_.17} parent=5 // pred_fallthru
        _
      %p197 = scmp.lt.s32.totalorder %s20, 2
      // Predicated region
      $region21: #{_lambda_.17} parent=5 // pred_check
        %p198 = pneg %p197
      $region22: #{_lambda_.17} parent=5 // pred_check_branch
        %200 = sbr.rel (%p198) target = $region24
      $region23: #{_lambda_.17} parent=5 // pred_region
        // Predicated region
        $region25: #{_lambda_.17} parent=23 // pred_check
          %p201 = pneg %p54
        $region26: #{_lambda_.17} parent=23 // pred_check_branch
          %203 = sbr.rel (%p201) target = $region28
        $region27: #{_lambda_.17} parent=23 // pred_region
          %s204 = sand.u32 %s44, 1
          %s205 = scalar_lea.sflag [#allocation3], %s204
          %s206 = sand.u32 %s44, 1
          %s207 = smul.addr %s206, 4
          %s208 = scalar_lea.vmem [#allocation2], %s207
          %s210 = ssub.s32 64, 64
          %211 = vsyncadd %s205, %s210
          %s212 = sadd.s32 %s28, %s27
          %s213 = smul.addr %s212, 64
          %s214 = scalar_lea.hbm %s0, %s213
          %s216 = sshll.u32 %s208, 4
          %s217 = int_to_ptr.vmem [resolvable:$true] %s216
          %219 = dma.hbm_to_vmem [thread:$0]  %s214, 64, %s217, %s205
        $region28: #{_lambda_.17} parent=23 // pred_fallthru
          _
        // Predicated region
        $region29: #{_lambda_.17} parent=23 // pred_check
          %p220 = pneg %p82
        $region30: #{_lambda_.17} parent=23 // pred_check_branch
          %222 = sbr.rel (%p220) target = $region32
        $region31: #{_lambda_.17} parent=23 // pred_region
          %s223 = sand.u32 %s20, 1
          %s224 = scalar_lea.sflag [#allocation6], %s223
          %s225 = sand.u32 %s72, 1
          %s226 = smul.addr %s225, 12
          %s227 = scalar_lea.vmem [#allocation5], %s226
          %s229 = ssub.s32 192, 192
          %230 = vsyncadd %s224, %s229
          %s231 = smul.addr %s28, 3
          %s232 = smul.addr %s27, 3
          %s233 = sadd.s32 %s231, %s232
          %s234 = smul.addr %s233, 64
          %s235 = scalar_lea.hbm %s1, %s234
          %s236 = sshll.u32 %s227, 4
          %s237 = int_to_ptr.vmem [resolvable:$true] %s236
          %242 = dma.hbm_to_vmem [thread:$0]  %s235, 192, %s237, %s224, 64, 64, 4
        $region32: #{_lambda_.17} parent=23 // pred_fallthru
          _
      $region24: #{_lambda_.17} parent=5 // pred_fallthru
        _
      %p243 = scmp.le.s32.totalorder 1, %s20
      %p244 = scmp.lt.s32.totalorder %s20, 3
      %p245 = pnand %p243, %p244
      %p246 = pneg %p245
      // Predicated region
      $region33: #{_lambda_.17} parent=5 // pred_check
        _
      $region34: #{_lambda_.17} parent=5 // pred_check_branch
        %248 = sbr.rel (%p245) target = $region36
      $region35: #{_lambda_.17} parent=5 // pred_region
        %s249 = ssub.s32 %s20, 1
        %s250 = sand.u32 %s47, 1
        %s251 = scalar_lea.sflag [#allocation3], %s250
        %s252 = sand.u32 %s47, 1
        %s253 = smul.addr %s252, 4
        %s254 = scalar_lea.vmem [#allocation2], %s253
        // Predicated region
        $region37: #{_lambda_.17} parent=35 // pred_check
          %p255 = pneg %p60
        $region38: #{_lambda_.17} parent=35 // pred_check_branch
          %257 = sbr.rel (%p255) target = $region40
        $region39: #{_lambda_.17} parent=35 // pred_region
          %258 = dma.done %s251, 64
        $region40: #{_lambda_.17} parent=35 // pred_fallthru
          _
        %s259 = sand.u32 %s25, 1
        %s260 = scalar_lea.sflag [#allocation6], %s259
        %s261 = sand.u32 %s75, 1
        %s262 = smul.addr %s261, 12
        %s263 = scalar_lea.vmem [#allocation5], %s262
        // Predicated region
        $region41: #{_lambda_.17} parent=35 // pred_check
          %p264 = pneg %p88
        $region42: #{_lambda_.17} parent=35 // pred_check_branch
          %266 = sbr.rel (%p264) target = $region44
        $region43: #{_lambda_.17} parent=35 // pred_region
          %267 = dma.done %s260, 192
        $region44: #{_lambda_.17} parent=35 // pred_fallthru
          _
        // Predicated region
        $region45: #{_lambda_.17} parent=35 // pred_check
          %p268 = pneg %p109
        $region46: #{_lambda_.17} parent=35 // pred_check_branch
          %270 = sbr.rel (%p268) target = $region48
        $region47: #{_lambda_.17} parent=35 // pred_region
          %271 = dma.done [#allocation6], 768
        $region48: #{_lambda_.17} parent=35 // pred_fallthru
          _
        // Predicated region
        $region49: #{_lambda_.17} parent=35 // pred_check
          %p272 = pneg %p130
        $region50: #{_lambda_.17} parent=35 // pred_check_branch
          %274 = sbr.rel (%p272) target = $region52
        $region51: #{_lambda_.17} parent=35 // pred_region
          %275 = dma.done [#allocation9], 16
        $region52: #{_lambda_.17} parent=35 // pred_fallthru
          _
        %s276 = sand.u32 %s47, 1
        %s277 = scalar_lea.sflag [#allocation3], %s276
        %s278 = sand.u32 %s47, 1
        %s279 = smul.addr %s278, 4
        %s280 = scalar_lea.vmem [#allocation2], %s279
        %p281 = pneg %p60
        %p282 = pneg %p57
        %s283 = sand.u32 %s25, 1
        %s284 = scalar_lea.sflag [#allocation6], %s283
        %s285 = sand.u32 %s75, 1
        %s286 = smul.addr %s285, 12
        %s287 = scalar_lea.vmem [#allocation5], %s286
        %p288 = pneg %p88
        %p289 = pneg %p85
        %p290 = pneg %p109
        %p291 = pneg %p106
        %p292 = pneg %p130
        %p293 = pneg %p127
        %p294 = pneg %p158
        %p295 = pneg %p155
        %s296 = sand.u32 %s145, 1
        %s297 = scalar_lea.sflag [#allocation4], %s296
        %s298 = sand.u32 %s145, 1
        %s299 = smul.addr %s298, 4
        %s300 = scalar_lea.vmem [#allocation10], %s299
        %v302 = vld [vmem:[%s254] sm:$0xf]
        %v303 = vld [vmem:[%s263] sm:$0xf]
        %v304 = vld [vmem:[%s263 + $0x4] sm:$0xf]
        %v305 = vld [vmem:[%s263 + $0x8] sm:$0x1]
        %v308 = vunpack.c.l.b16 %v303
        %v309 = vunpack.c.l.b16 %v304
        %v310 = vpack.c.b16 %v309, %v308
        %v313 = vunpack.c.l.b16 %v305
        %v314 = vpack.c.b16 %v313, %v313
        %vm315 = vcmask 1043456
        %v318 = vsel %vm315, %v302, %v314
        %v320 = vunpack.c.l.bf16 %v310
        %v321 = vunpack.c.h.bf16 %v310
        %v322 = vunpack.c.l.bf16 %v318
        %v323 = vunpack.c.h.bf16 %v318
        %vm324 = vcmp.ge.f32.partialorder %v320, 0.0
        %vm325 = vcmp.ge.f32.partialorder %v321, 0.0
        %vm326 = vcmp.ge.f32.partialorder %v322, 0.0
        %vm327 = vcmp.ge.f32.partialorder %v323, 0.0
        %v328 = vmul.f32 %v320, 0.1
        %v329 = vmul.f32 %v321, 0.1
        %v330 = vmul.f32 %v322, 0.1
        %v331 = vmul.f32 %v323, 0.1
        %v332 = vsel %vm324, %v320, %v328
        %v333 = vsel %vm325, %v321, %v329
        %v334 = vsel %vm326, %v322, %v330
        %v335 = vsel %vm327, %v323, %v331
        %v336 = vpack.c.bf16 %v333, %v332
        %v337 = vpack.c.bf16 %v335, %v334
        %v338 = vld [vmem:[#allocation7] sm:$0xf]
        %v339 = vld [vmem:[#allocation7 + $0x4] sm:$0xf]
        %v340 = vld [vmem:[#allocation7 + $0x8] sm:$0xf]
        %v341 = vld [vmem:[#allocation7 + $0xc] sm:$0xf]
        %v342 = vld [vmem:[#allocation7 + $0x10] sm:$0xf]
        %v343 = vld [vmem:[#allocation7 + $0x14] sm:$0xf]
        %v344 = vld [vmem:[#allocation7 + $0x18] sm:$0xf]
        %v345 = vld [vmem:[#allocation7 + $0x1c] sm:$0xf]
        %v350 = vunpack.c.l.b16 %v342
        %v351 = vunpack.c.l.b16 %v343
        %v352 = vunpack.c.l.b16 %v344
        %v353 = vunpack.c.l.b16 %v345
        %v354 = vpack.c.b16 %v351, %v350
        %v355 = vpack.c.b16 %v353, %v352
        %vm358 = vcmask 261120
        %v360 = vsel %vm358, %v337, 0
        %362 = vmatprep.subr.bf16.mxu0 0
        %363 = vmatpush1.bf16.msra.mxu0 %v354
        %364 = vmatprep.subr.bf16.mxu0 0
        %365 = vmatpush1.bf16.msra.mxu0 %v355
        %366 = vmatprep.subr.bf16.mxu0 0
        %367 = vmatpush1.bf16.msra.mxu0 0
        %368 = vmatprep.subr.bf16.mxu0 0
        %369 = vmatpush1.bf16.msra.mxu0 0
        %370 = vmatprep.subr.bf16.mxu0 0
        %371 = vmatpush1.bf16.msra.mxu0 0
        %372 = vmatprep.subr.bf16.mxu0 0
        %373 = vmatpush1.bf16.msra.mxu0 0
        %374 = vmatprep.subr.bf16.mxu0 0
        %375 = vmatpush1.bf16.msra.mxu0 0
        %376 = vmatprep.subr.bf16.mxu0 0
        %377 = vmatpush1.bf16.msra.mxu0 0
        %378 = vmatprep.subr.bf16.mxu0 0
        %379 = vmatpush1.bf16.msra.mxu0 0
        %380 = vmatprep.subr.bf16.mxu0 0
        %381 = vmatpush1.bf16.msra.mxu0 0
        %382 = vmatprep.subr.bf16.mxu0 0
        %383 = vmatpush1.bf16.msra.mxu0 0
        %384 = vmatprep.subr.bf16.mxu0 0
        %385 = vmatpush1.bf16.msra.mxu0 0
        %386 = vmatprep.subr.bf16.mxu0 0
        %387 = vmatpush1.bf16.msra.mxu0 0
        %388 = vmatprep.subr.bf16.mxu0 0
        %389 = vmatpush1.bf16.msra.mxu0 0
        %390 = vmatprep.subr.bf16.mxu0 0
        %391 = vmatpush1.bf16.msra.mxu0 0
        %392 = vmatprep.subr.bf16.mxu0 0
        %393 = vmatpush1.bf16.msra.mxu0 0
        %394 = vmatprep.mubr.bf16.mxu0 0
        %395 = vmatmul.mubr.bf16.gmra.mrb[0].mxu0 %v360
        %v396 = vpop.f32.mrb[0].mxu0
        %v397 = vadd.f32 0.0, %v396
        %v398 = vpop.f32.mrb[0].mxu0
        %v399 = vpop.f32.mrb[0].mxu0
        %v400 = vpop.f32.mrb[0].mxu0
        %401 = vdwg.mxu0
        %vm402 = vsmask.f32 256
        %v404 = vshrl.u32 %v336, 16
        %v406 = vrot.slane %v404, 7
        %v407 = vshrl.u32 %v337, 16
        %v409 = vrot.slane %v407, 7
        %v410 = vshll.u32 %v337, 16
        %v412 = vor.u32 %v409, %v410
        %v413 = vsel %vm402, %v406, %v412
        %v418 = vunpack.c.l.b16 %v338
        %v419 = vunpack.c.l.b16 %v339
        %v420 = vunpack.c.l.b16 %v340
        %v421 = vunpack.c.l.b16 %v341
        %v422 = vpack.c.b16 %v419, %v418
        %v423 = vpack.c.b16 %v421, %v420
        %v427 = vsel %vm358, %v413, 0
        %429 = vmatprep.subr.bf16.mxu0 0
        %430 = vmatpush1.bf16.msra.mxu0 %v422
        %431 = vmatprep.subr.bf16.mxu0 0
        %432 = vmatpush1.bf16.msra.mxu0 %v423
        %433 = vmatprep.subr.bf16.mxu0 0
        %434 = vmatpush1.bf16.msra.mxu0 0
        %435 = vmatprep.subr.bf16.mxu0 0
        %436 = vmatpush1.bf16.msra.mxu0 0
        %437 = vmatprep.subr.bf16.mxu0 0
        %438 = vmatpush1.bf16.msra.mxu0 0
        %439 = vmatprep.subr.bf16.mxu0 0
        %440 = vmatpush1.bf16.msra.mxu0 0
        %441 = vmatprep.subr.bf16.mxu0 0
        %442 = vmatpush1.bf16.msra.mxu0 0
        %443 = vmatprep.subr.bf16.mxu0 0
        %444 = vmatpush1.bf16.msra.mxu0 0
        %445 = vmatprep.subr.bf16.mxu0 0
        %446 = vmatpush1.bf16.msra.mxu0 0
        %447 = vmatprep.subr.bf16.mxu0 0
        %448 = vmatpush1.bf16.msra.mxu0 0
        %449 = vmatprep.subr.bf16.mxu0 0
        %450 = vmatpush1.bf16.msra.mxu0 0
        %451 = vmatprep.subr.bf16.mxu0 0
        %452 = vmatpush1.bf16.msra.mxu0 0
        %453 = vmatprep.subr.bf16.mxu0 0
        %454 = vmatpush1.bf16.msra.mxu0 0
        %455 = vmatprep.subr.bf16.mxu0 0
        %456 = vmatpush1.bf16.msra.mxu0 0
        %457 = vmatprep.subr.bf16.mxu0 0
        %458 = vmatpush1.bf16.msra.mxu0 0
        %459 = vmatprep.subr.bf16.mxu0 0
        %460 = vmatpush1.bf16.msra.mxu0 0
        %461 = vmatprep.mubr.bf16.mxu0 0
        %462 = vmatmul.mubr.bf16.gmra.mrb[0].mxu0 %v427
        %v463 = vpop.f32.mrb[0].mxu0
        %v464 = vadd.f32 %v397, %v463
        %v465 = vpop.f32.mrb[0].mxu0
        %v466 = vpop.f32.mrb[0].mxu0
        %v467 = vpop.f32.mrb[0].mxu0
        %468 = vdwg.mxu0
        %v469 = vld [vmem:[#allocation7 + $0x20] sm:$0xf]
        %v470 = vld [vmem:[#allocation7 + $0x24] sm:$0xf]
        %v471 = vld [vmem:[#allocation7 + $0x28] sm:$0xf]
        %v472 = vld [vmem:[#allocation7 + $0x2c] sm:$0xf]
        %v473 = vrot.slane %v410, 1
        %v474 = vor.u32 %v407, %v473
        %v479 = vunpack.c.l.b16 %v469
        %v480 = vunpack.c.l.b16 %v470
        %v481 = vunpack.c.l.b16 %v471
        %v482 = vunpack.c.l.b16 %v472
        %v483 = vpack.c.b16 %v480, %v479
        %v484 = vpack.c.b16 %v482, %v481
        %v488 = vsel %vm358, %v474, 0
        %490 = vmatprep.subr.bf16.mxu0 0
        %491 = vmatpush1.bf16.msra.mxu0 %v483
        %492 = vmatprep.subr.bf16.mxu0 0
        %493 = vmatpush1.bf16.msra.mxu0 %v484
        %494 = vmatprep.subr.bf16.mxu0 0
        %495 = vmatpush1.bf16.msra.mxu0 0
        %496 = vmatprep.subr.bf16.mxu0 0
        %497 = vmatpush1.bf16.msra.mxu0 0
        %498 = vmatprep.subr.bf16.mxu0 0
        %499 = vmatpush1.bf16.msra.mxu0 0
        %500 = vmatprep.subr.bf16.mxu0 0
        %501 = vmatpush1.bf16.msra.mxu0 0
        %502 = vmatprep.subr.bf16.mxu0 0
        %503 = vmatpush1.bf16.msra.mxu0 0
        %504 = vmatprep.subr.bf16.mxu0 0
        %505 = vmatpush1.bf16.msra.mxu0 0
        %506 = vmatprep.subr.bf16.mxu0 0
        %507 = vmatpush1.bf16.msra.mxu0 0
        %508 = vmatprep.subr.bf16.mxu0 0
        %509 = vmatpush1.bf16.msra.mxu0 0
        %510 = vmatprep.subr.bf16.mxu0 0
        %511 = vmatpush1.bf16.msra.mxu0 0
        %512 = vmatprep.subr.bf16.mxu0 0
        %513 = vmatpush1.bf16.msra.mxu0 0
        %514 = vmatprep.subr.bf16.mxu0 0
        %515 = vmatpush1.bf16.msra.mxu0 0
        %516 = vmatprep.subr.bf16.mxu0 0
        %517 = vmatpush1.bf16.msra.mxu0 0
        %518 = vmatprep.subr.bf16.mxu0 0
        %519 = vmatpush1.bf16.msra.mxu0 0
        %520 = vmatprep.subr.bf16.mxu0 0
        %521 = vmatpush1.bf16.msra.mxu0 0
        %522 = vmatprep.mubr.bf16.mxu0 0
        %523 = vmatmul.mubr.bf16.gmra.mrb[0].mxu0 %v488
        %v524 = vpop.f32.mrb[0].mxu0
        %v525 = vadd.f32 0.0, %v524
        %v526 = vpop.f32.mrb[0].mxu0
        %v527 = vpop.f32.mrb[0].mxu0
        %v528 = vpop.f32.mrb[0].mxu0
        %529 = vdwg.mxu0
        %v530 = vadd.f32 %v464, %v525
        %v531 = vld [vmem:[#allocation8] sm:$0x1]
        %v533 = vlaneseq
        %v534 = vshrl.u32 %v533, 7
        %v535 = vsub.s32 0, %v534
        %v536 = vrot.slane %v531, %v535
        %v538 = vadd.f32 %v530, %v536
        %v539 = vpack.c.bf16 %v538, %v538
        %vm540 = vcmask 519168
        %541 = vst.msk [vmem:[%s300] sm:$0xf] %vm540, %v539
        %s542 = sand.u32 %s145, 1
        %s543 = scalar_lea.sflag [#allocation4], %s542
        %s544 = sand.u32 %s145, 1
        %s545 = smul.addr %s544, 4
        %s546 = scalar_lea.vmem [#allocation10], %s545
        // Predicated region
        $region53: #{_lambda_.17} parent=35 // pred_check
          %p547 = pneg %p155
        $region54: #{_lambda_.17} parent=35 // pred_check_branch
          %549 = sbr.rel (%p547) target = $region56
        $region55: #{_lambda_.17} parent=35 // pred_region
          %s551 = ssub.s32 64, 64
          %552 = vsyncadd %s543, %s551
          %s553 = sadd.s32 %s30, %s29
          %s554 = smul.addr %s553, 64
          %s555 = scalar_lea.hbm %s4, %s554
          %s557 = sshll.u32 %s546, 4
          %s558 = int_to_ptr.vmem [resolvable:$true] %s557
          %560 = dma.vmem_to_hbm [thread:$0]  %s558, 64, %s555, %s543
        $region56: #{_lambda_.17} parent=35 // pred_fallthru
          _
      $region36: #{_lambda_.17} parent=5 // pred_fallthru
        _
      %p561 = scmp.le.s32.totalorder 2, %s20
      // Predicated region
      $region57: #{_lambda_.17} parent=5 // pred_check
        %p562 = pneg %p561
      $region58: #{_lambda_.17} parent=5 // pred_check_branch
        %564 = sbr.rel (%p562) target = $region60
      $region59: #{_lambda_.17} parent=5 // pred_region
        %s565 = ssub.s32 %s20, 2
        // Predicated region
        $region61: #{_lambda_.17} parent=59 // pred_check
          %p566 = pneg %p161
        $region62: #{_lambda_.17} parent=59 // pred_check_branch
          %568 = sbr.rel (%p566) target = $region64
        $region63: #{_lambda_.17} parent=59 // pred_region
          %s569 = sand.u32 %s146, 1
          %s570 = scalar_lea.sflag [#allocation4], %s569
          %s571 = sand.u32 %s146, 1
          %s572 = smul.addr %s571, 4
          %s573 = scalar_lea.vmem [#allocation10], %s572
          %574 = dma.done %s570, 64
        $region64: #{_lambda_.17} parent=59 // pred_fallthru
          _
      $region60: #{_lambda_.17} parent=5 // pred_fallthru
        _
    $region6: #{_lambda_.17} parent=1 // loop_footer
      %s24 = sadd.s32 1, %s20
    $region7: #{_lambda_.17} parent=1 // loop_footer_branch
      %19 = sbr.rel target = $region3
    $region8: #{_lambda_.17} parent=1 // loop_exit
      _
    %575 = vsyncpa [#allocation3], 1
    %s576 = scalar_lea.sflag [#allocation3], 1
    %577 = vsyncpa %s576, 1
    %578 = vsyncpa [#allocation6], 1
    %s579 = scalar_lea.sflag [#allocation6], 1
    %580 = vsyncpa %s579, 1
    %581 = vsyncpa [#allocation9], 1
    %582 = vsyncpa [#allocation4], 1
    %s583 = scalar_lea.sflag [#allocation4], 1
    %584 = vsyncpa %s583, 1

// kernel: _lambda_.18
$region0: #{_lambda_.18}
  #allocation0 [shape = 'u32[]', space=smem, size = 0x4, offset = 0x4, fixed_abs, tag = 'smem constant byte address 0x4 - core index']
  #allocation1 [shape = 'u32[144,128]{1,0:T(1,128)}', space=vmem, size = 0x12000, scoped, tag = 'internal scratch']
  %s0 = inlined_call_operand.hbm [shape: bf16[2,8,16], index: 0, kind: input, shape index: {}]
  %s1 = inlined_call_operand.hbm [shape: bf16[2,1,17,16], index: 1, kind: input, shape index: {}]
  %s2 = inlined_call_operand.hbm [shape: bf16[48,64], index: 2, kind: input, shape index: {}]
  %s3 = inlined_call_operand.hbm [shape: f32[1,64], index: 3, kind: input, shape index: {}]
  %s4 = inlined_call_operand.hbm [shape: bf16[2,8,64], index: 4, kind: input, shape index: {}]
  %s5 = inlined_call_operand.hbm [shape: bf16[2,8,64], index: 5, kind: output, shape index: {}]
  %s6 = sld [smem:[#allocation0]]
  $region73: #{_lambda_.18} parent=0
    _
  %s8 = ssub.s32 1, %s6
  %s9 = scalar_select 0, %s8, %s6
  $region1: #{_lambda_.18} parent=0
    #allocation2 [shape = 'u8[4096]{0}', space=vmem, size = 0x1000, scoped, tag = 'input window, operand 0']
    #allocation3 [shape = 's32[2]{0}', space=sflag, size = 0x8, scoped, tag = 'scoped memory for _lambda_.18']
    #allocation4 [shape = 's32[2]{0}', space=sflag, size = 0x8, scoped, tag = 'scoped memory for _lambda_.18']
    #allocation5 [shape = 'u8[12288]{0}', space=vmem, size = 0x3000, scoped, tag = 'input window, operand 1']
    #allocation6 [shape = 's32[2]{0}', space=sflag, size = 0x8, scoped, tag = 'scoped memory for _lambda_.18']
    #allocation7 [shape = 'u8[12288]{0}', space=vmem, size = 0x3000, scoped, tag = 'input window, operand 2, single buffered']
    #allocation8 [shape = 'u8[512]{0}', space=vmem, size = 0x400, scoped, tag = 'input window, operand 3, single buffered']
    #allocation9 [shape = 's32[1]{0}', space=sflag, size = 0x4, scoped, tag = 'scoped memory for _lambda_.18']
    #allocation10 [shape = 'u8[4096]{0}', space=vmem, size = 0x1000, scoped, tag = 'input window, operand 4']
    #allocation11 [shape = 'u8[4096]{0}', space=vmem, size = 0x1000, scoped, tag = 'output window, operand 0']
    %10 = vsyncpa [#allocation3], 0
    %s11 = scalar_lea.sflag [#allocation3], 1
    %12 = vsyncpa %s11, 0
    %13 = vsyncpa [#allocation6], 0
    %s14 = scalar_lea.sflag [#allocation6], 1
    %15 = vsyncpa %s14, 0
    %16 = vsyncpa [#allocation9], 0
    %17 = vsyncpa [#allocation4], 0
    %s18 = scalar_lea.sflag [#allocation4], 1
    %19 = vsyncpa %s18, 0
    loop: start=0, step=1, limit=4
    $region2: #{_lambda_.18} parent=1 // loop_pre_header
      _
    $region3: #{_lambda_.18} parent=1 // loop_header
      %s21 = sphi 0, %s25
      %p22 = scmp.ge.s32.totalorder %s21, 4
      %s28 = sphi 0, %s40
      %s29 = sphi 0, %s36
      %s30 = sphi 0, %s28
      %s31 = sphi 0, %s29
      %s32 = sphi 0, %s30
      %s33 = sphi 0, %s31
      %s45 = sphi 0, %s47
      %s48 = sphi 0, %s45
      %s49 = sphi 0, %s48
      %s65 = sphi 0, %s49
      %s73 = sphi 0, %s75
      %s76 = sphi 0, %s73
      %s77 = sphi 0, %s76
      %s93 = sphi 0, %s77
      %s97 = sphi 0, %s97
      %s99 = sphi 0, %s97
      %s100 = sphi 0, %s99
      %s114 = sphi 0, %s100
      %s118 = sphi 0, %s118
      %s120 = sphi 0, %s118
      %s121 = sphi 0, %s120
      %s135 = sphi 0, %s121
      %s143 = sphi 0, %s145
      %s146 = sphi 0, %s143
      %s147 = sphi 0, %s146
      %s163 = sphi 0, %s147
      %s171 = sphi 0, %s173
      %s174 = sphi 0, %s171
      %s175 = sphi 0, %s174
      %s191 = sphi 0, %s175
    $region4: #{_lambda_.18} parent=1 // loop_header_branch
      %24 = sbr.rel (%p22) target = $region8
    $region5: #{_lambda_.18} parent=1 // loop_body
      %s26 = ssub.s32 %s21, 1
      %s27 = ssub.s32 %s21, 2
      %s34 = sadd.s32 1, %s29
      %p35 = scmp.ge.s32.totalorder %s34, 1
      %s36 = scalar_select %p35, 0, %s34
      %s37 = sadd.s32 1, %s28
      %s38 = scalar_select %p35, %s37, %s28
      %p39 = scmp.ge.s32.totalorder %s38, 2
      %s40 = scalar_select %p39, 0, %s38
      %s41 = ssub.s32 %s28, %s40
      %s42 = ssub.s32 %s29, %s36
      %s43 = sor.u32 %s41, %s42
      %p44 = scmp.eq.s32.totalorder %s43, 0
      %s46 = sadd.s32 %s45, 1
      %s47 = scalar_select %p44, %s45, %s46
      %p50 = pneg %p44
      %p51 = scmp.eq.s32.totalorder %s21, 1
      %p52 = por %p50, %p51
      %p53 = scmp.ne.s32.totalorder %s45, %s48
      %p54 = scmp.eq.s32.totalorder %s21, 0
      %p55 = por %p53, %p54
      %p56 = scmp.ne.s32.totalorder %s45, %s48
      %p57 = scmp.eq.s32.totalorder %s26, 1
      %p58 = por %p56, %p57
      %p59 = scmp.ne.s32.totalorder %s48, %s49
      %p60 = scmp.eq.s32.totalorder %s26, 0
      %p61 = por %p59, %p60
      %p62 = scmp.ne.s32.totalorder %s48, %s49
      %p63 = scmp.eq.s32.totalorder %s27, 1
      %p64 = por %p62, %p63
      %p66 = scmp.ne.s32.totalorder %s49, %s65
      %p67 = scmp.eq.s32.totalorder %s27, 0
      %p68 = por %p66, %p67
      %s69 = ssub.s32 %s28, %s40
      %s70 = ssub.s32 %s29, %s36
      %s71 = sor.u32 %s69, %s70
      %p72 = scmp.eq.s32.totalorder %s71, 0
      %s74 = sadd.s32 %s73, 1
      %s75 = scalar_select %p72, %s73, %s74
      %p78 = pneg %p72
      %p79 = scmp.eq.s32.totalorder %s21, 1
      %p80 = por %p78, %p79
      %p81 = scmp.ne.s32.totalorder %s73, %s76
      %p82 = scmp.eq.s32.totalorder %s21, 0
      %p83 = por %p81, %p82
      %p84 = scmp.ne.s32.totalorder %s73, %s76
      %p85 = scmp.eq.s32.totalorder %s26, 1
      %p86 = por %p84, %p85
      %p87 = scmp.ne.s32.totalorder %s76, %s77
      %p88 = scmp.eq.s32.totalorder %s26, 0
      %p89 = por %p87, %p88
      %p90 = scmp.ne.s32.totalorder %s76, %s77
      %p91 = scmp.eq.s32.totalorder %s27, 1
      %p92 = por %p90, %p91
      %p94 = scmp.ne.s32.totalorder %s77, %s93
      %p95 = scmp.eq.s32.totalorder %s27, 0
      %p96 = por %p94, %p95
      %s98 = sadd.s32 %s97, 1
      %p101 = scmp.eq.s32.totalorder %s21, 1
      %p102 = scmp.ne.s32.totalorder %s97, %s99
      %p103 = scmp.eq.s32.totalorder %s21, 0
      %p104 = por %p102, %p103
      %p105 = scmp.ne.s32.totalorder %s97, %s99
      %p106 = scmp.eq.s32.totalorder %s26, 1
      %p107 = por %p105, %p106
      %p108 = scmp.ne.s32.totalorder %s99, %s100
      %p109 = scmp.eq.s32.totalorder %s26, 0
      %p110 = por %p108, %p109
      %p111 = scmp.ne.s32.totalorder %s99, %s100
      %p112 = scmp.eq.s32.totalorder %s27, 1
      %p113 = por %p111, %p112
      %p115 = scmp.ne.s32.totalorder %s100, %s114
      %p116 = scmp.eq.s32.totalorder %s27, 0
      %p117 = por %p115, %p116
      %s119 = sadd.s32 %s118, 1
      %p122 = scmp.eq.s32.totalorder %s21, 1
      %p123 = scmp.ne.s32.totalorder %s118, %s120
      %p124 = scmp.eq.s32.totalorder %s21, 0
      %p125 = por %p123, %p124
      %p126 = scmp.ne.s32.totalorder %s118, %s120
      %p127 = scmp.eq.s32.totalorder %s26, 1
      %p128 = por %p126, %p127
      %p129 = scmp.ne.s32.totalorder %s120, %s121
      %p130 = scmp.eq.s32.totalorder %s26, 0
      %p131 = por %p129, %p130
      %p132 = scmp.ne.s32.totalorder %s120, %s121
      %p133 = scmp.eq.s32.totalorder %s27, 1
      %p134 = por %p132, %p133
      %p136 = scmp.ne.s32.totalorder %s121, %s135
      %p137 = scmp.eq.s32.totalorder %s27, 0
      %p138 = por %p136, %p137
      %s139 = ssub.s32 %s28, %s40
      %s140 = ssub.s32 %s29, %s36
      %s141 = sor.u32 %s139, %s140
      %p142 = scmp.eq.s32.totalorder %s141, 0
      %s144 = sadd.s32 %s143, 1
      %s145 = scalar_select %p142, %s143, %s144
      %p148 = pneg %p142
      %p149 = scmp.eq.s32.totalorder %s21, 1
      %p150 = por %p148, %p149
      %p151 = scmp.ne.s32.totalorder %s143, %s146
      %p152 = scmp.eq.s32.totalorder %s21, 0
      %p153 = por %p151, %p152
      %p154 = scmp.ne.s32.totalorder %s143, %s146
      %p155 = scmp.eq.s32.totalorder %s26, 1
      %p156 = por %p154, %p155
      %p157 = scmp.ne.s32.totalorder %s146, %s147
      %p158 = scmp.eq.s32.totalorder %s26, 0
      %p159 = por %p157, %p158
      %p160 = scmp.ne.s32.totalorder %s146, %s147
      %p161 = scmp.eq.s32.totalorder %s27, 1
      %p162 = por %p160, %p161
      %p164 = scmp.ne.s32.totalorder %s147, %s163
      %p165 = scmp.eq.s32.totalorder %s27, 0
      %p166 = por %p164, %p165
      %s167 = ssub.s32 %s28, %s40
      %s168 = ssub.s32 %s29, %s36
      %s169 = sor.u32 %s167, %s168
      %p170 = scmp.eq.s32.totalorder %s169, 0
      %s172 = sadd.s32 %s171, 1
      %s173 = scalar_select %p170, %s171, %s172
      %p176 = pneg %p170
      %p177 = scmp.eq.s32.totalorder %s21, 1
      %p178 = por %p176, %p177
      %p179 = scmp.ne.s32.totalorder %s171, %s174
      %p180 = scmp.eq.s32.totalorder %s21, 0
      %p181 = por %p179, %p180
      %p182 = scmp.ne.s32.totalorder %s171, %s174
      %p183 = scmp.eq.s32.totalorder %s26, 1
      %p184 = por %p182, %p183
      %p185 = scmp.ne.s32.totalorder %s174, %s175
      %p186 = scmp.eq.s32.totalorder %s26, 0
      %p187 = por %p185, %p186
      %p188 = scmp.ne.s32.totalorder %s174, %s175
      %p189 = scmp.eq.s32.totalorder %s27, 1
      %p190 = por %p188, %p189
      %p192 = scmp.ne.s32.totalorder %s175, %s191
      %p193 = scmp.eq.s32.totalorder %s27, 0
      %p194 = por %p192, %p193
      %p195 = scmp.le.s32.totalorder 1, %s21
      %p196 = scmp.lt.s32.totalorder %s21, 3
      %p197 = pnand %p195, %p196
      %p198 = pneg %p197
      // Predicated region
      $region9: #{_lambda_.18} parent=5 // pred_check
        _
      $region10: #{_lambda_.18} parent=5 // pred_check_branch
        %200 = sbr.rel (%p197) target = $region12
      $region11: #{_lambda_.18} parent=5 // pred_region
        %s201 = ssub.s32 %s21, 1
        // Predicated region
        $region13: #{_lambda_.18} parent=11 // pred_check
          %p202 = pneg %p110
        $region14: #{_lambda_.18} parent=11 // pred_check_branch
          %204 = sbr.rel (%p202) target = $region16
        $region15: #{_lambda_.18} parent=11 // pred_region
          %s206 = ssub.s32 384, 384
          %207 = vsyncadd [#allocation6], %s206
          %s208 = sshll.u32 [#allocation7], 4
          %s209 = int_to_ptr.vmem [resolvable:$true] %s208
          %214 = dma.hbm_to_vmem [thread:$0]  %s2, 384, %s209, [#allocation6], 64, 64, 4
        $region16: #{_lambda_.18} parent=11 // pred_fallthru
          _
        // Predicated region
        $region17: #{_lambda_.18} parent=11 // pred_check
          %p215 = pneg %p131
        $region18: #{_lambda_.18} parent=11 // pred_check_branch
          %217 = sbr.rel (%p215) target = $region20
        $region19: #{_lambda_.18} parent=11 // pred_region
          %s219 = ssub.s32 16, 16
          %220 = vsyncadd [#allocation9], %s219
          %s222 = sshll.u32 [#allocation8], 4
          %s223 = int_to_ptr.vmem [resolvable:$true] %s222
          %225 = dma.hbm_to_vmem [thread:$0]  %s3, 16, %s223, [#allocation9]
        $region20: #{_lambda_.18} parent=11 // pred_fallthru
          _
      $region12: #{_lambda_.18} parent=5 // pred_fallthru
        _
      %p226 = scmp.lt.s32.totalorder %s21, 2
      // Predicated region
      $region21: #{_lambda_.18} parent=5 // pred_check
        %p227 = pneg %p226
      $region22: #{_lambda_.18} parent=5 // pred_check_branch
        %229 = sbr.rel (%p227) target = $region24
      $region23: #{_lambda_.18} parent=5 // pred_region
        // Predicated region
        $region25: #{_lambda_.18} parent=23 // pred_check
          %p230 = pneg %p55
        $region26: #{_lambda_.18} parent=23 // pred_check_branch
          %232 = sbr.rel (%p230) target = $region28
        $region27: #{_lambda_.18} parent=23 // pred_region
          %s233 = sand.u32 %s21, 1
          %s234 = scalar_lea.sflag [#allocation3], %s233
          %s235 = sand.u32 %s45, 1
          %s236 = smul.addr %s235, 4
          %s237 = scalar_lea.vmem [#allocation2], %s236
          %s239 = ssub.s32 64, 64
          %240 = vsyncadd %s234, %s239
          %s241 = sadd.s32 %s29, %s28
          %s242 = smul.addr %s241, 64
          %s243 = scalar_lea.hbm %s0, %s242
          %s245 = sshll.u32 %s237, 4
          %s246 = int_to_ptr.vmem [resolvable:$true] %s245
          %248 = dma.hbm_to_vmem [thread:$0]  %s243, 64, %s246, %s234
        $region28: #{_lambda_.18} parent=23 // pred_fallthru
          _
        // Predicated region
        $region29: #{_lambda_.18} parent=23 // pred_check
          %p249 = pneg %p83
        $region30: #{_lambda_.18} parent=23 // pred_check_branch
          %251 = sbr.rel (%p249) target = $region32
        $region31: #{_lambda_.18} parent=23 // pred_region
          %s252 = sand.u32 %s21, 1
          %s253 = scalar_lea.sflag [#allocation6], %s252
          %s254 = sand.u32 %s73, 1
          %s255 = smul.addr %s254, 12
          %s256 = scalar_lea.vmem [#allocation5], %s255
          %s258 = ssub.s32 192, 192
          %259 = vsyncadd %s253, %s258
          %s260 = smul.addr %s29, 3
          %s261 = smul.addr %s28, 3
          %s262 = sadd.s32 %s260, %s261
          %s263 = smul.addr %s262, 64
          %s264 = scalar_lea.hbm %s1, %s263
          %s265 = sshll.u32 %s256, 4
          %s266 = int_to_ptr.vmem [resolvable:$true] %s265
          %271 = dma.hbm_to_vmem [thread:$0]  %s264, 192, %s266, %s253, 64, 64, 4
        $region32: #{_lambda_.18} parent=23 // pred_fallthru
          _
        // Predicated region
        $region33: #{_lambda_.18} parent=23 // pred_check
          %p272 = pneg %p153
        $region34: #{_lambda_.18} parent=23 // pred_check_branch
          %274 = sbr.rel (%p272) target = $region36
        $region35: #{_lambda_.18} parent=23 // pred_region
          %s275 = sand.u32 %s21, 1
          %s276 = scalar_lea.sflag [#allocation3], %s275
          %s277 = sand.u32 %s143, 1
          %s278 = smul.addr %s277, 4
          %s279 = scalar_lea.vmem [#allocation10], %s278
          %s281 = ssub.s32 64, 64
          %282 = vsyncadd %s276, %s281
          %s283 = sadd.s32 %s29, %s28
          %s284 = smul.addr %s283, 64
          %s285 = scalar_lea.hbm %s4, %s284
          %s287 = sshll.u32 %s279, 4
          %s288 = int_to_ptr.vmem [resolvable:$true] %s287
          %290 = dma.hbm_to_vmem [thread:$0]  %s285, 64, %s288, %s276
        $region36: #{_lambda_.18} parent=23 // pred_fallthru
          _
      $region24: #{_lambda_.18} parent=5 // pred_fallthru
        _
      %p291 = scmp.le.s32.totalorder 1, %s21
      %p292 = scmp.lt.s32.totalorder %s21, 3
      %p293 = pnand %p291, %p292
      %p294 = pneg %p293
      // Predicated region
      $region37: #{_lambda_.18} parent=5 // pred_check
        _
      $region38: #{_lambda_.18} parent=5 // pred_check_branch
        %296 = sbr.rel (%p293) target = $region40
      $region39: #{_lambda_.18} parent=5 // pred_region
        %s297 = ssub.s32 %s21, 1
        %s298 = sand.u32 %s26, 1
        %s299 = scalar_lea.sflag [#allocation3], %s298
        %s300 = sand.u32 %s48, 1
        %s301 = smul.addr %s300, 4
        %s302 = scalar_lea.vmem [#allocation2], %s301
        // Predicated region
        $region41: #{_lambda_.18} parent=39 // pred_check
          %p303 = pneg %p61
        $region42: #{_lambda_.18} parent=39 // pred_check_branch
          %305 = sbr.rel (%p303) target = $region44
        $region43: #{_lambda_.18} parent=39 // pred_region
          %306 = dma.done %s299, 64
        $region44: #{_lambda_.18} parent=39 // pred_fallthru
          _
        %s307 = sand.u32 %s26, 1
        %s308 = scalar_lea.sflag [#allocation6], %s307
        %s309 = sand.u32 %s76, 1
        %s310 = smul.addr %s309, 12
        %s311 = scalar_lea.vmem [#allocation5], %s310
        // Predicated region
        $region45: #{_lambda_.18} parent=39 // pred_check
          %p312 = pneg %p89
        $region46: #{_lambda_.18} parent=39 // pred_check_branch
          %314 = sbr.rel (%p312) target = $region48
        $region47: #{_lambda_.18} parent=39 // pred_region
          %315 = dma.done %s308, 192
        $region48: #{_lambda_.18} parent=39 // pred_fallthru
          _
        // Predicated region
        $region49: #{_lambda_.18} parent=39 // pred_check
          %p316 = pneg %p110
        $region50: #{_lambda_.18} parent=39 // pred_check_branch
          %318 = sbr.rel (%p316) target = $region52
        $region51: #{_lambda_.18} parent=39 // pred_region
          %319 = dma.done [#allocation6], 384
        $region52: #{_lambda_.18} parent=39 // pred_fallthru
          _
        // Predicated region
        $region53: #{_lambda_.18} parent=39 // pred_check
          %p320 = pneg %p131
        $region54: #{_lambda_.18} parent=39 // pred_check_branch
          %322 = sbr.rel (%p320) target = $region56
        $region55: #{_lambda_.18} parent=39 // pred_region
          %323 = dma.done [#allocation9], 16
        $region56: #{_lambda_.18} parent=39 // pred_fallthru
          _
        %s324 = sand.u32 %s26, 1
        %s325 = scalar_lea.sflag [#allocation3], %s324
        %s326 = sand.u32 %s146, 1
        %s327 = smul.addr %s326, 4
        %s328 = scalar_lea.vmem [#allocation10], %s327
        // Predicated region
        $region57: #{_lambda_.18} parent=39 // pred_check
          %p329 = pneg %p159
        $region58: #{_lambda_.18} parent=39 // pred_check_branch
          %331 = sbr.rel (%p329) target = $region60
        $region59: #{_lambda_.18} parent=39 // pred_region
          %332 = dma.done %s325, 64
        $region60: #{_lambda_.18} parent=39 // pred_fallthru
          _
        %s333 = sand.u32 %s26, 1
        %s334 = scalar_lea.sflag [#allocation3], %s333
        %s335 = sand.u32 %s48, 1
        %s336 = smul.addr %s335, 4
        %s337 = scalar_lea.vmem [#allocation2], %s336
        %p338 = pneg %p61
        %p339 = pneg %p58
        %s340 = sand.u32 %s26, 1
        %s341 = scalar_lea.sflag [#allocation6], %s340
        %s342 = sand.u32 %s76, 1
        %s343 = smul.addr %s342, 12
        %s344 = scalar_lea.vmem [#allocation5], %s343
        %p345 = pneg %p89
        %p346 = pneg %p86
        %p347 = pneg %p110
        %p348 = pneg %p107
        %p349 = pneg %p131
        %p350 = pneg %p128
        %s351 = sand.u32 %s26, 1
        %s352 = scalar_lea.sflag [#allocation3], %s351
        %s353 = sand.u32 %s146, 1
        %s354 = smul.addr %s353, 4
        %s355 = scalar_lea.vmem [#allocation10], %s354
        %p356 = pneg %p159
        %p357 = pneg %p156
        %p358 = pneg %p187
        %p359 = pneg %p184
        %s360 = sand.u32 %s174, 1
        %s361 = scalar_lea.sflag [#allocation4], %s360
        %s362 = sand.u32 %s174, 1
        %s363 = smul.addr %s362, 4
        %s364 = scalar_lea.vmem [#allocation11], %s363
        %v366 = vld [vmem:[%s302] sm:$0xf]
        %v367 = vld [vmem:[%s311] sm:$0xf]
        %v368 = vld [vmem:[%s311 + $0x4] sm:$0xf]
        %v369 = vld [vmem:[%s311 + $0x8] sm:$0x1]
        %v372 = vunpack.c.l.b16 %v367
        %v373 = vunpack.c.l.b16 %v368
        %v374 = vpack.c.b16 %v373, %v372
        %v376 = vunpack.c.l.b16 %v369
        %v377 = vpack.c.b16 %v376, %v376
        %vm378 = vcmask 1043456
        %v381 = vsel %vm378, %v366, %v377
        %v382 = vld [vmem:[#allocation7] sm:$0xf]
        %v383 = vld [vmem:[#allocation7 + $0x4] sm:$0xf]
        %v384 = vld [vmem:[#allocation7 + $0x8] sm:$0xf]
        %v385 = vld [vmem:[#allocation7 + $0xc] sm:$0xf]
        %v388 = vunpack.c.l.b16 %v384
        %v389 = vunpack.c.l.b16 %v385
        %v390 = vpack.c.b16 %v389, %v388
        %vm392 = vcmask 130048
        %v393 = vsel %vm392, %v381, 0
        %395 = vmatprep.subr.bf16.mxu0 0
        %396 = vmatpush1.bf16.msra.mxu0 %v390
        %397 = vmatprep.subr.bf16.mxu0 0
        %398 = vmatpush1.bf16.msra.mxu0 0
        %399 = vmatprep.subr.bf16.mxu0 0
        %400 = vmatpush1.bf16.msra.mxu0 0
        %401 = vmatprep.subr.bf16.mxu0 0
        %402 = vmatpush1.bf16.msra.mxu0 0
        %403 = vmatprep.subr.bf16.mxu0 0
        %404 = vmatpush1.bf16.msra.mxu0 0
        %405 = vmatprep.subr.bf16.mxu0 0
        %406 = vmatpush1.bf16.msra.mxu0 0
        %407 = vmatprep.subr.bf16.mxu0 0
        %408 = vmatpush1.bf16.msra.mxu0 0
        %409 = vmatprep.subr.bf16.mxu0 0
        %410 = vmatpush1.bf16.msra.mxu0 0
        %411 = vmatprep.subr.bf16.mxu0 0
        %412 = vmatpush1.bf16.msra.mxu0 0
        %413 = vmatprep.subr.bf16.mxu0 0
        %414 = vmatpush1.bf16.msra.mxu0 0
        %415 = vmatprep.subr.bf16.mxu0 0
        %416 = vmatpush1.bf16.msra.mxu0 0
        %417 = vmatprep.subr.bf16.mxu0 0
        %418 = vmatpush1.bf16.msra.mxu0 0
        %419 = vmatprep.subr.bf16.mxu0 0
        %420 = vmatpush1.bf16.msra.mxu0 0
        %421 = vmatprep.subr.bf16.mxu0 0
        %422 = vmatpush1.bf16.msra.mxu0 0
        %423 = vmatprep.subr.bf16.mxu0 0
        %424 = vmatpush1.bf16.msra.mxu0 0
        %425 = vmatprep.subr.bf16.mxu0 0
        %426 = vmatpush1.bf16.msra.mxu0 0
        %427 = vmatprep.mubr.bf16.mxu0 0
        %428 = vmatmul.mubr.bf16.gmra.mrb[0].mxu0 %v393
        %v429 = vpop.f32.mrb[0].mxu0
        %v430 = vadd.f32 0.0, %v429
        %v431 = vpop.f32.mrb[0].mxu0
        %v432 = vpop.f32.mrb[0].mxu0
        %v433 = vpop.f32.mrb[0].mxu0
        %434 = vdwg.mxu0
        %vm435 = vsmask.f32 256
        %v437 = vshrl.u32 %v374, 16
        %v439 = vrot.slane %v437, 7
        %v440 = vshrl.u32 %v381, 16
        %v442 = vrot.slane %v440, 7
        %v443 = vshll.u32 %v381, 16
        %v445 = vor.u32 %v442, %v443
        %v446 = vsel %vm435, %v439, %v445
        %v449 = vunpack.c.l.b16 %v382
        %v450 = vunpack.c.l.b16 %v383
        %v451 = vpack.c.b16 %v450, %v449
        %v454 = vsel %vm392, %v446, 0
        %456 = vmatprep.subr.bf16.mxu0 0
        %457 = vmatpush1.bf16.msra.mxu0 %v451
        %458 = vmatprep.subr.bf16.mxu0 0
        %459 = vmatpush1.bf16.msra.mxu0 0
        %460 = vmatprep.subr.bf16.mxu0 0
        %461 = vmatpush1.bf16.msra.mxu0 0
        %462 = vmatprep.subr.bf16.mxu0 0
        %463 = vmatpush1.bf16.msra.mxu0 0
        %464 = vmatprep.subr.bf16.mxu0 0
        %465 = vmatpush1.bf16.msra.mxu0 0
        %466 = vmatprep.subr.bf16.mxu0 0
        %467 = vmatpush1.bf16.msra.mxu0 0
        %468 = vmatprep.subr.bf16.mxu0 0
        %469 = vmatpush1.bf16.msra.mxu0 0
        %470 = vmatprep.subr.bf16.mxu0 0
        %471 = vmatpush1.bf16.msra.mxu0 0
        %472 = vmatprep.subr.bf16.mxu0 0
        %473 = vmatpush1.bf16.msra.mxu0 0
        %474 = vmatprep.subr.bf16.mxu0 0
        %475 = vmatpush1.bf16.msra.mxu0 0
        %476 = vmatprep.subr.bf16.mxu0 0
        %477 = vmatpush1.bf16.msra.mxu0 0
        %478 = vmatprep.subr.bf16.mxu0 0
        %479 = vmatpush1.bf16.msra.mxu0 0
        %480 = vmatprep.subr.bf16.mxu0 0
        %481 = vmatpush1.bf16.msra.mxu0 0
        %482 = vmatprep.subr.bf16.mxu0 0
        %483 = vmatpush1.bf16.msra.mxu0 0
        %484 = vmatprep.subr.bf16.mxu0 0
        %485 = vmatpush1.bf16.msra.mxu0 0
        %486 = vmatprep.subr.bf16.mxu0 0
        %487 = vmatpush1.bf16.msra.mxu0 0
        %488 = vmatprep.mubr.bf16.mxu0 0
        %489 = vmatmul.mubr.bf16.gmra.mrb[0].mxu0 %v454
        %v490 = vpop.f32.mrb[0].mxu0
        %v491 = vadd.f32 %v430, %v490
        %v492 = vpop.f32.mrb[0].mxu0
        %v493 = vpop.f32.mrb[0].mxu0
        %v494 = vpop.f32.mrb[0].mxu0
        %495 = vdwg.mxu0
        %v496 = vld [vmem:[#allocation7 + $0x10] sm:$0xf]
        %v497 = vld [vmem:[#allocation7 + $0x14] sm:$0xf]
        %v498 = vrot.slane %v443, 1
        %v499 = vor.u32 %v440, %v498
        %v502 = vunpack.c.l.b16 %v496
        %v503 = vunpack.c.l.b16 %v497
        %v504 = vpack.c.b16 %v503, %v502
        %v507 = vsel %vm392, %v499, 0
        %509 = vmatprep.subr.bf16.mxu0 0
        %510 = vmatpush1.bf16.msra.mxu0 %v504
        %511 = vmatprep.subr.bf16.mxu0 0
        %512 = vmatpush1.bf16.msra.mxu0 0
        %513 = vmatprep.subr.bf16.mxu0 0
        %514 = vmatpush1.bf16.msra.mxu0 0
        %515 = vmatprep.subr.bf16.mxu0 0
        %516 = vmatpush1.bf16.msra.mxu0 0
        %517 = vmatprep.subr.bf16.mxu0 0
        %518 = vmatpush1.bf16.msra.mxu0 0
        %519 = vmatprep.subr.bf16.mxu0 0
        %520 = vmatpush1.bf16.msra.mxu0 0
        %521 = vmatprep.subr.bf16.mxu0 0
        %522 = vmatpush1.bf16.msra.mxu0 0
        %523 = vmatprep.subr.bf16.mxu0 0
        %524 = vmatpush1.bf16.msra.mxu0 0
        %525 = vmatprep.subr.bf16.mxu0 0
        %526 = vmatpush1.bf16.msra.mxu0 0
        %527 = vmatprep.subr.bf16.mxu0 0
        %528 = vmatpush1.bf16.msra.mxu0 0
        %529 = vmatprep.subr.bf16.mxu0 0
        %530 = vmatpush1.bf16.msra.mxu0 0
        %531 = vmatprep.subr.bf16.mxu0 0
        %532 = vmatpush1.bf16.msra.mxu0 0
        %533 = vmatprep.subr.bf16.mxu0 0
        %534 = vmatpush1.bf16.msra.mxu0 0
        %535 = vmatprep.subr.bf16.mxu0 0
        %536 = vmatpush1.bf16.msra.mxu0 0
        %537 = vmatprep.subr.bf16.mxu0 0
        %538 = vmatpush1.bf16.msra.mxu0 0
        %539 = vmatprep.subr.bf16.mxu0 0
        %540 = vmatpush1.bf16.msra.mxu0 0
        %541 = vmatprep.mubr.bf16.mxu0 0
        %542 = vmatmul.mubr.bf16.gmra.mrb[0].mxu0 %v507
        %v543 = vpop.f32.mrb[0].mxu0
        %v544 = vadd.f32 0.0, %v543
        %v545 = vpop.f32.mrb[0].mxu0
        %v546 = vpop.f32.mrb[0].mxu0
        %v547 = vpop.f32.mrb[0].mxu0
        %548 = vdwg.mxu0
        %v549 = vadd.f32 %v491, %v544
        %v550 = vld [vmem:[#allocation8] sm:$0x1]
        %v552 = vlaneseq
        %v553 = vshrl.u32 %v552, 7
        %v554 = vsub.s32 0, %v553
        %v555 = vrot.slane %v550, %v554
        %v557 = vadd.f32 %v549, %v555
        %v558 = vld [vmem:[%s328] sm:$0xf]
        %v559 = vunpack.c.l.bf16 %v558
        %v560 = vadd.f32 %v557, %v559
        %v561 = vpack.c.bf16 %v560, %v560
        %vm562 = vcmask 519168
        %563 = vst.msk [vmem:[%s364] sm:$0xf] %vm562, %v561
        %s564 = sand.u32 %s174, 1
        %s565 = scalar_lea.sflag [#allocation4], %s564
        %s566 = sand.u32 %s174, 1
        %s567 = smul.addr %s566, 4
        %s568 = scalar_lea.vmem [#allocation11], %s567
        // Predicated region
        $region61: #{_lambda_.18} parent=39 // pred_check
          %p569 = pneg %p184
        $region62: #{_lambda_.18} parent=39 // pred_check_branch
          %571 = sbr.rel (%p569) target = $region64
        $region63: #{_lambda_.18} parent=39 // pred_region
          %s573 = ssub.s32 64, 64
          %574 = vsyncadd %s565, %s573
          %s575 = sadd.s32 %s31, %s30
          %s576 = smul.addr %s575, 64
          %s577 = scalar_lea.hbm %s5, %s576
          %s579 = sshll.u32 %s568, 4
          %s580 = int_to_ptr.vmem [resolvable:$true] %s579
          %582 = dma.vmem_to_hbm [thread:$0]  %s580, 64, %s577, %s565
        $region64: #{_lambda_.18} parent=39 // pred_fallthru
          _
      $region40: #{_lambda_.18} parent=5 // pred_fallthru
        _
      %p583 = scmp.le.s32.totalorder 2, %s21
      // Predicated region
      $region65: #{_lambda_.18} parent=5 // pred_check
        %p584 = pneg %p583
      $region66: #{_lambda_.18} parent=5 // pred_check_branch
        %586 = sbr.rel (%p584) target = $region68
      $region67: #{_lambda_.18} parent=5 // pred_region
        %s587 = ssub.s32 %s21, 2
        // Predicated region
        $region69: #{_lambda_.18} parent=67 // pred_check
          %p588 = pneg %p190
        $region70: #{_lambda_.18} parent=67 // pred_check_branch
          %590 = sbr.rel (%p588) target = $region72
        $region71: #{_lambda_.18} parent=67 // pred_region
          %s591 = sand.u32 %s175, 1
          %s592 = scalar_lea.sflag [#allocation4], %s591
          %s593 = sand.u32 %s175, 1
          %s594 = smul.addr %s593, 4
          %s595 = scalar_lea.vmem [#allocation11], %s594
          %596 = dma.done %s592, 64
        $region72: #{_lambda_.18} parent=67 // pred_fallthru
          _
      $region68: #{_lambda_.18} parent=5 // pred_fallthru
        _
    $region6: #{_lambda_.18} parent=1 // loop_footer
      %s25 = sadd.s32 1, %s21
    $region7: #{_lambda_.18} parent=1 // loop_footer_branch
      %20 = sbr.rel target = $region3
    $region8: #{_lambda_.18} parent=1 // loop_exit
      _
    %597 = vsyncpa [#allocation3], 1
    %s598 = scalar_lea.sflag [#allocation3], 1
    %599 = vsyncpa %s598, 1
    %600 = vsyncpa [#allocation6], 1
    %s601 = scalar_lea.sflag [#allocation6], 1
    %602 = vsyncpa %s601, 1
    %603 = vsyncpa [#allocation9], 1
    %604 = vsyncpa [#allocation4], 1
    %s605 = scalar_lea.sflag [#allocation4], 1
    %606 = vsyncpa %s605, 1

// kernel: _lambda_.16
$region0: #{_lambda_.16}
  #allocation0 [shape = 'u32[]', space=smem, size = 0x4, offset = 0x4, fixed_abs, tag = 'smem constant byte address 0x4 - core index']
  #allocation1 [shape = 'u32[144,128]{1,0:T(1,128)}', space=vmem, size = 0x12000, scoped, tag = 'internal scratch']
  %s0 = inlined_call_operand.hbm [shape: bf16[2,8,16], index: 0, kind: input, shape index: {}]
  %s1 = inlined_call_operand.hbm [shape: bf16[2,1,19,16], index: 1, kind: input, shape index: {}]
  %s2 = inlined_call_operand.hbm [shape: bf16[112,32], index: 2, kind: input, shape index: {}]
  %s3 = inlined_call_operand.hbm [shape: f32[1,32], index: 3, kind: input, shape index: {}]
  %s4 = inlined_call_operand.hbm [shape: bf16[2,8,32], index: 4, kind: output, shape index: {}]
  %s5 = sld [smem:[#allocation0]]
  $region65: #{_lambda_.16} parent=0
    _
  %s7 = ssub.s32 1, %s5
  %s8 = scalar_select 0, %s7, %s5
  $region1: #{_lambda_.16} parent=0
    #allocation2 [shape = 'u8[4096]{0}', space=vmem, size = 0x1000, scoped, tag = 'input window, operand 0']
    #allocation3 [shape = 's32[2]{0}', space=sflag, size = 0x8, scoped, tag = 'scoped memory for _lambda_.16']
    #allocation4 [shape = 's32[2]{0}', space=sflag, size = 0x8, scoped, tag = 'scoped memory for _lambda_.16']
    #allocation5 [shape = 'u8[12288]{0}', space=vmem, size = 0x3000, scoped, tag = 'input window, operand 1']
    #allocation6 [shape = 's32[2]{0}', space=sflag, size = 0x8, scoped, tag = 'scoped memory for _lambda_.16']
    #allocation7 [shape = 'u8[28672]{0}', space=vmem, size = 0x7000, scoped, tag = 'input window, operand 2, single buffered']
    #allocation8 [shape = 'u8[512]{0}', space=vmem, size = 0x400, scoped, tag = 'input window, operand 3, single buffered']
    #allocation9 [shape = 's32[1]{0}', space=sflag, size = 0x4, scoped, tag = 'scoped memory for _lambda_.16']
    #allocation10 [shape = 'u8[4096]{0}', space=vmem, size = 0x1000, scoped, tag = 'output window, operand 0']
    %9 = vsyncpa [#allocation3], 0
    %s10 = scalar_lea.sflag [#allocation3], 1
    %11 = vsyncpa %s10, 0
    %12 = vsyncpa [#allocation6], 0
    %s13 = scalar_lea.sflag [#allocation6], 1
    %14 = vsyncpa %s13, 0
    %15 = vsyncpa [#allocation9], 0
    %16 = vsyncpa [#allocation4], 0
    %s17 = scalar_lea.sflag [#allocation4], 1
    %18 = vsyncpa %s17, 0
    loop: start=0, step=1, limit=4
    $region2: #{_lambda_.16} parent=1 // loop_pre_header
      _
    $region3: #{_lambda_.16} parent=1 // loop_header
      %s20 = sphi 0, %s24
      %p21 = scmp.ge.s32.totalorder %s20, 4
      %s27 = sphi 0, %s39
      %s28 = sphi 0, %s35
      %s29 = sphi 0, %s27
      %s30 = sphi 0, %s28
      %s31 = sphi 0, %s29
      %s32 = sphi 0, %s30
      %s44 = sphi 0, %s46
      %s47 = sphi 0, %s44
      %s48 = sphi 0, %s47
      %s64 = sphi 0, %s48
      %s72 = sphi 0, %s74
      %s75 = sphi 0, %s72
      %s76 = sphi 0, %s75
      %s92 = sphi 0, %s76
      %s96 = sphi 0, %s96
      %s98 = sphi 0, %s96
      %s99 = sphi 0, %s98
      %s113 = sphi 0, %s99
      %s117 = sphi 0, %s117
      %s119 = sphi 0, %s117
      %s120 = sphi 0, %s119
      %s134 = sphi 0, %s120
      %s142 = sphi 0, %s144
      %s145 = sphi 0, %s142
      %s146 = sphi 0, %s145
      %s162 = sphi 0, %s146
    $region4: #{_lambda_.16} parent=1 // loop_header_branch
      %23 = sbr.rel (%p21) target = $region8
    $region5: #{_lambda_.16} parent=1 // loop_body
      %s25 = ssub.s32 %s20, 1
      %s26 = ssub.s32 %s20, 2
      %s33 = sadd.s32 1, %s28
      %p34 = scmp.ge.s32.totalorder %s33, 1
      %s35 = scalar_select %p34, 0, %s33
      %s36 = sadd.s32 1, %s27
      %s37 = scalar_select %p34, %s36, %s27
      %p38 = scmp.ge.s32.totalorder %s37, 2
      %s39 = scalar_select %p38, 0, %s37
      %s40 = ssub.s32 %s27, %s39
      %s41 = ssub.s32 %s28, %s35
      %s42 = sor.u32 %s40, %s41
      %p43 = scmp.eq.s32.totalorder %s42, 0
      %s45 = sadd.s32 %s44, 1
      %s46 = scalar_select %p43, %s44, %s45
      %p49 = pneg %p43
      %p50 = scmp.eq.s32.totalorder %s20, 1
      %p51 = por %p49, %p50
      %p52 = scmp.ne.s32.totalorder %s44, %s47
      %p53 = scmp.eq.s32.totalorder %s20, 0
      %p54 = por %p52, %p53
      %p55 = scmp.ne.s32.totalorder %s44, %s47
      %p56 = scmp.eq.s32.totalorder %s25, 1
      %p57 = por %p55, %p56
      %p58 = scmp.ne.s32.totalorder %s47, %s48
      %p59 = scmp.eq.s32.totalorder %s25, 0
      %p60 = por %p58, %p59
      %p61 = scmp.ne.s32.totalorder %s47, %s48
      %p62 = scmp.eq.s32.totalorder %s26, 1
      %p63 = por %p61, %p62
      %p65 = scmp.ne.s32.totalorder %s48, %s64
      %p66 = scmp.eq.s32.totalorder %s26, 0
      %p67 = por %p65, %p66
      %s68 = ssub.s32 %s27, %s39
      %s69 = ssub.s32 %s28, %s35
      %s70 = sor.u32 %s68, %s69
      %p71 = scmp.eq.s32.totalorder %s70, 0
      %s73 = sadd.s32 %s72, 1
      %s74 = scalar_select %p71, %s72, %s73
      %p77 = pneg %p71
      %p78 = scmp.eq.s32.totalorder %s20, 1
      %p79 = por %p77, %p78
      %p80 = scmp.ne.s32.totalorder %s72, %s75
      %p81 = scmp.eq.s32.totalorder %s20, 0
      %p82 = por %p80, %p81
      %p83 = scmp.ne.s32.totalorder %s72, %s75
      %p84 = scmp.eq.s32.totalorder %s25, 1
      %p85 = por %p83, %p84
      %p86 = scmp.ne.s32.totalorder %s75, %s76
      %p87 = scmp.eq.s32.totalorder %s25, 0
      %p88 = por %p86, %p87
      %p89 = scmp.ne.s32.totalorder %s75, %s76
      %p90 = scmp.eq.s32.totalorder %s26, 1
      %p91 = por %p89, %p90
      %p93 = scmp.ne.s32.totalorder %s76, %s92
      %p94 = scmp.eq.s32.totalorder %s26, 0
      %p95 = por %p93, %p94
      %s97 = sadd.s32 %s96, 1
      %p100 = scmp.eq.s32.totalorder %s20, 1
      %p101 = scmp.ne.s32.totalorder %s96, %s98
      %p102 = scmp.eq.s32.totalorder %s20, 0
      %p103 = por %p101, %p102
      %p104 = scmp.ne.s32.totalorder %s96, %s98
      %p105 = scmp.eq.s32.totalorder %s25, 1
      %p106 = por %p104, %p105
      %p107 = scmp.ne.s32.totalorder %s98, %s99
      %p108 = scmp.eq.s32.totalorder %s25, 0
      %p109 = por %p107, %p108
      %p110 = scmp.ne.s32.totalorder %s98, %s99
      %p111 = scmp.eq.s32.totalorder %s26, 1
      %p112 = por %p110, %p111
      %p114 = scmp.ne.s32.totalorder %s99, %s113
      %p115 = scmp.eq.s32.totalorder %s26, 0
      %p116 = por %p114, %p115
      %s118 = sadd.s32 %s117, 1
      %p121 = scmp.eq.s32.totalorder %s20, 1
      %p122 = scmp.ne.s32.totalorder %s117, %s119
      %p123 = scmp.eq.s32.totalorder %s20, 0
      %p124 = por %p122, %p123
      %p125 = scmp.ne.s32.totalorder %s117, %s119
      %p126 = scmp.eq.s32.totalorder %s25, 1
      %p127 = por %p125, %p126
      %p128 = scmp.ne.s32.totalorder %s119, %s120
      %p129 = scmp.eq.s32.totalorder %s25, 0
      %p130 = por %p128, %p129
      %p131 = scmp.ne.s32.totalorder %s119, %s120
      %p132 = scmp.eq.s32.totalorder %s26, 1
      %p133 = por %p131, %p132
      %p135 = scmp.ne.s32.totalorder %s120, %s134
      %p136 = scmp.eq.s32.totalorder %s26, 0
      %p137 = por %p135, %p136
      %s138 = ssub.s32 %s27, %s39
      %s139 = ssub.s32 %s28, %s35
      %s140 = sor.u32 %s138, %s139
      %p141 = scmp.eq.s32.totalorder %s140, 0
      %s143 = sadd.s32 %s142, 1
      %s144 = scalar_select %p141, %s142, %s143
      %p147 = pneg %p141
      %p148 = scmp.eq.s32.totalorder %s20, 1
      %p149 = por %p147, %p148
      %p150 = scmp.ne.s32.totalorder %s142, %s145
      %p151 = scmp.eq.s32.totalorder %s20, 0
      %p152 = por %p150, %p151
      %p153 = scmp.ne.s32.totalorder %s142, %s145
      %p154 = scmp.eq.s32.totalorder %s25, 1
      %p155 = por %p153, %p154
      %p156 = scmp.ne.s32.totalorder %s145, %s146
      %p157 = scmp.eq.s32.totalorder %s25, 0
      %p158 = por %p156, %p157
      %p159 = scmp.ne.s32.totalorder %s145, %s146
      %p160 = scmp.eq.s32.totalorder %s26, 1
      %p161 = por %p159, %p160
      %p163 = scmp.ne.s32.totalorder %s146, %s162
      %p164 = scmp.eq.s32.totalorder %s26, 0
      %p165 = por %p163, %p164
      %p166 = scmp.le.s32.totalorder 1, %s20
      %p167 = scmp.lt.s32.totalorder %s20, 3
      %p168 = pnand %p166, %p167
      %p169 = pneg %p168
      // Predicated region
      $region9: #{_lambda_.16} parent=5 // pred_check
        _
      $region10: #{_lambda_.16} parent=5 // pred_check_branch
        %171 = sbr.rel (%p168) target = $region12
      $region11: #{_lambda_.16} parent=5 // pred_region
        %s172 = ssub.s32 %s20, 1
        // Predicated region
        $region13: #{_lambda_.16} parent=11 // pred_check
          %p173 = pneg %p109
        $region14: #{_lambda_.16} parent=11 // pred_check_branch
          %175 = sbr.rel (%p173) target = $region16
        $region15: #{_lambda_.16} parent=11 // pred_region
          %s177 = ssub.s32 896, 896
          %178 = vsyncadd [#allocation6], %s177
          %s179 = sshll.u32 [#allocation7], 4
          %s180 = int_to_ptr.vmem [resolvable:$true] %s179
          %185 = dma.hbm_to_vmem [thread:$0]  %s2, 896, %s180, [#allocation6], 64, 64, 4
        $region16: #{_lambda_.16} parent=11 // pred_fallthru
          _
        // Predicated region
        $region17: #{_lambda_.16} parent=11 // pred_check
          %p186 = pneg %p130
        $region18: #{_lambda_.16} parent=11 // pred_check_branch
          %188 = sbr.rel (%p186) target = $region20
        $region19: #{_lambda_.16} parent=11 // pred_region
          %s190 = ssub.s32 16, 16
          %191 = vsyncadd [#allocation9], %s190
          %s193 = sshll.u32 [#allocation8], 4
          %s194 = int_to_ptr.vmem [resolvable:$true] %s193
          %196 = dma.hbm_to_vmem [thread:$0]  %s3, 16, %s194, [#allocation9]
        $region20: #{_lambda_.16} parent=11 // pred_fallthru
          _
      $region12: #{_lambda_.16} parent=5 // pred_fallthru
        _
      %p197 = scmp.lt.s32.totalorder %s20, 2
      // Predicated region
      $region21: #{_lambda_.16} parent=5 // pred_check
        %p198 = pneg %p197
      $region22: #{_lambda_.16} parent=5 // pred_check_branch
        %200 = sbr.rel (%p198) target = $region24
      $region23: #{_lambda_.16} parent=5 // pred_region
        // Predicated region
        $region25: #{_lambda_.16} parent=23 // pred_check
          %p201 = pneg %p54
        $region26: #{_lambda_.16} parent=23 // pred_check_branch
          %203 = sbr.rel (%p201) target = $region28
        $region27: #{_lambda_.16} parent=23 // pred_region
          %s204 = sand.u32 %s44, 1
          %s205 = scalar_lea.sflag [#allocation3], %s204
          %s206 = sand.u32 %s44, 1
          %s207 = smul.addr %s206, 4
          %s208 = scalar_lea.vmem [#allocation2], %s207
          %s210 = ssub.s32 64, 64
          %211 = vsyncadd %s205, %s210
          %s212 = sadd.s32 %s28, %s27
          %s213 = smul.addr %s212, 64
          %s214 = scalar_lea.hbm %s0, %s213
          %s216 = sshll.u32 %s208, 4
          %s217 = int_to_ptr.vmem [resolvable:$true] %s216
          %219 = dma.hbm_to_vmem [thread:$0]  %s214, 64, %s217, %s205
        $region28: #{_lambda_.16} parent=23 // pred_fallthru
          _
        // Predicated region
        $region29: #{_lambda_.16} parent=23 // pred_check
          %p220 = pneg %p82
        $region30: #{_lambda_.16} parent=23 // pred_check_branch
          %222 = sbr.rel (%p220) target = $region32
        $region31: #{_lambda_.16} parent=23 // pred_region
          %s223 = sand.u32 %s20, 1
          %s224 = scalar_lea.sflag [#allocation6], %s223
          %s225 = sand.u32 %s72, 1
          %s226 = smul.addr %s225, 12
          %s227 = scalar_lea.vmem [#allocation5], %s226
          %s229 = ssub.s32 192, 192
          %230 = vsyncadd %s224, %s229
          %s231 = smul.addr %s28, 3
          %s232 = smul.addr %s27, 3
          %s233 = sadd.s32 %s231, %s232
          %s234 = smul.addr %s233, 64
          %s235 = scalar_lea.hbm %s1, %s234
          %s236 = sshll.u32 %s227, 4
          %s237 = int_to_ptr.vmem [resolvable:$true] %s236
          %242 = dma.hbm_to_vmem [thread:$0]  %s235, 192, %s237, %s224, 64, 64, 4
        $region32: #{_lambda_.16} parent=23 // pred_fallthru
          _
      $region24: #{_lambda_.16} parent=5 // pred_fallthru
        _
      %p243 = scmp.le.s32.totalorder 1, %s20
      %p244 = scmp.lt.s32.totalorder %s20, 3
      %p245 = pnand %p243, %p244
      %p246 = pneg %p245
      // Predicated region
      $region33: #{_lambda_.16} parent=5 // pred_check
        _
      $region34: #{_lambda_.16} parent=5 // pred_check_branch
        %248 = sbr.rel (%p245) target = $region36
      $region35: #{_lambda_.16} parent=5 // pred_region
        %s249 = ssub.s32 %s20, 1
        %s250 = sand.u32 %s47, 1
        %s251 = scalar_lea.sflag [#allocation3], %s250
        %s252 = sand.u32 %s47, 1
        %s253 = smul.addr %s252, 4
        %s254 = scalar_lea.vmem [#allocation2], %s253
        // Predicated region
        $region37: #{_lambda_.16} parent=35 // pred_check
          %p255 = pneg %p60
        $region38: #{_lambda_.16} parent=35 // pred_check_branch
          %257 = sbr.rel (%p255) target = $region40
        $region39: #{_lambda_.16} parent=35 // pred_region
          %258 = dma.done %s251, 64
        $region40: #{_lambda_.16} parent=35 // pred_fallthru
          _
        %s259 = sand.u32 %s25, 1
        %s260 = scalar_lea.sflag [#allocation6], %s259
        %s261 = sand.u32 %s75, 1
        %s262 = smul.addr %s261, 12
        %s263 = scalar_lea.vmem [#allocation5], %s262
        // Predicated region
        $region41: #{_lambda_.16} parent=35 // pred_check
          %p264 = pneg %p88
        $region42: #{_lambda_.16} parent=35 // pred_check_branch
          %266 = sbr.rel (%p264) target = $region44
        $region43: #{_lambda_.16} parent=35 // pred_region
          %267 = dma.done %s260, 192
        $region44: #{_lambda_.16} parent=35 // pred_fallthru
          _
        // Predicated region
        $region45: #{_lambda_.16} parent=35 // pred_check
          %p268 = pneg %p109
        $region46: #{_lambda_.16} parent=35 // pred_check_branch
          %270 = sbr.rel (%p268) target = $region48
        $region47: #{_lambda_.16} parent=35 // pred_region
          %271 = dma.done [#allocation6], 896
        $region48: #{_lambda_.16} parent=35 // pred_fallthru
          _
        // Predicated region
        $region49: #{_lambda_.16} parent=35 // pred_check
          %p272 = pneg %p130
        $region50: #{_lambda_.16} parent=35 // pred_check_branch
          %274 = sbr.rel (%p272) target = $region52
        $region51: #{_lambda_.16} parent=35 // pred_region
          %275 = dma.done [#allocation9], 16
        $region52: #{_lambda_.16} parent=35 // pred_fallthru
          _
        %s276 = sand.u32 %s47, 1
        %s277 = scalar_lea.sflag [#allocation3], %s276
        %s278 = sand.u32 %s47, 1
        %s279 = smul.addr %s278, 4
        %s280 = scalar_lea.vmem [#allocation2], %s279
        %p281 = pneg %p60
        %p282 = pneg %p57
        %s283 = sand.u32 %s25, 1
        %s284 = scalar_lea.sflag [#allocation6], %s283
        %s285 = sand.u32 %s75, 1
        %s286 = smul.addr %s285, 12
        %s287 = scalar_lea.vmem [#allocation5], %s286
        %p288 = pneg %p88
        %p289 = pneg %p85
        %p290 = pneg %p109
        %p291 = pneg %p106
        %p292 = pneg %p130
        %p293 = pneg %p127
        %p294 = pneg %p158
        %p295 = pneg %p155
        %s296 = sand.u32 %s145, 1
        %s297 = scalar_lea.sflag [#allocation4], %s296
        %s298 = sand.u32 %s145, 1
        %s299 = smul.addr %s298, 4
        %s300 = scalar_lea.vmem [#allocation10], %s299
        %v302 = vld [vmem:[%s254] sm:$0xf]
        %v303 = vld [vmem:[%s263] sm:$0xf]
        %v304 = vld [vmem:[%s263 + $0x4] sm:$0xf]
        %v305 = vld [vmem:[%s263 + $0x8] sm:$0x3]
        %v308 = vunpack.c.l.b16 %v303
        %v309 = vunpack.c.l.b16 %v304
        %v310 = vpack.c.b16 %v309, %v308
        %v312 = vunpack.c.l.b16 %v305
        %v313 = vpack.c.b16 %v312, %v312
        %vm314 = vcmask 1043456
        %v317 = vsel %vm314, %v302, %v313
        %v318 = vld [vmem:[#allocation7] sm:$0xf]
        %v319 = vld [vmem:[#allocation7 + $0x4] sm:$0xf]
        %v320 = vld [vmem:[#allocation7 + $0x8] sm:$0xf]
        %v321 = vld [vmem:[#allocation7 + $0xc] sm:$0xf]
        %vm323 = vcmask 1040384
        %v324 = vrot.slane %v310, 7
        %v325 = vrot.slane %v317, 7
        %v326 = vsel %vm323, %v324, %v325
        %v329 = vunpack.c.l.b16 %v320
        %v330 = vunpack.c.l.b16 %v321
        %v331 = vpack.c.b16 %v330, %v329
        %vm333 = vcmask 130048
        %v335 = vsel %vm333, %v326, 0
        %337 = vmatprep.subr.bf16.mxu0 0
        %338 = vmatpush1.bf16.msra.mxu0 %v331
        %339 = vmatprep.subr.bf16.mxu0 0
        %340 = vmatpush1.bf16.msra.mxu0 0
        %341 = vmatprep.subr.bf16.mxu0 0
        %342 = vmatpush1.bf16.msra.mxu0 0
        %343 = vmatprep.subr.bf16.mxu0 0
        %344 = vmatpush1.bf16.msra.mxu0 0
        %345 = vmatprep.subr.bf16.mxu0 0
        %346 = vmatpush1.bf16.msra.mxu0 0
        %347 = vmatprep.subr.bf16.mxu0 0
        %348 = vmatpush1.bf16.msra.mxu0 0
        %349 = vmatprep.subr.bf16.mxu0 0
        %350 = vmatpush1.bf16.msra.mxu0 0
        %351 = vmatprep.subr.bf16.mxu0 0
        %352 = vmatpush1.bf16.msra.mxu0 0
        %353 = vmatprep.subr.bf16.mxu0 0
        %354 = vmatpush1.bf16.msra.mxu0 0
        %355 = vmatprep.subr.bf16.mxu0 0
        %356 = vmatpush1.bf16.msra.mxu0 0
        %357 = vmatprep.subr.bf16.mxu0 0
        %358 = vmatpush1.bf16.msra.mxu0 0
        %359 = vmatprep.subr.bf16.mxu0 0
        %360 = vmatpush1.bf16.msra.mxu0 0
        %361 = vmatprep.subr.bf16.mxu0 0
        %362 = vmatpush1.bf16.msra.mxu0 0
        %363 = vmatprep.subr.bf16.mxu0 0
        %364 = vmatpush1.bf16.msra.mxu0 0
        %365 = vmatprep.subr.bf16.mxu0 0
        %366 = vmatpush1.bf16.msra.mxu0 0
        %367 = vmatprep.subr.bf16.mxu0 0
        %368 = vmatpush1.bf16.msra.mxu0 0
        %369 = vmatprep.mubr.bf16.mxu0 0
        %370 = vmatmul.mubr.bf16.gmra.mrb[0].mxu0 %v335
        %v371 = vpop.f32.mrb[0].mxu0
        %v372 = vadd.f32 0.0, %v371
        %v373 = vpop.f32.mrb[0].mxu0
        %v374 = vpop.f32.mrb[0].mxu0
        %v375 = vpop.f32.mrb[0].mxu0
        %376 = vdwg.mxu0
        %vm377 = vsmask.f32 1280
        %v379 = vshrl.u32 %v310, 16
        %v381 = vrot.slane %v379, 6
        %v382 = vshll.u32 %v310, 16
        %v384 = vrot.slane %v382, 7
        %v385 = vor.u32 %v381, %v384
        %v386 = vshrl.u32 %v317, 16
        %v388 = vrot.slane %v386, 6
        %v389 = vshll.u32 %v317, 16
        %v391 = vrot.slane %v389, 7
        %v392 = vor.u32 %v388, %v391
        %v393 = vsel %vm377, %v385, %v392
        %v396 = vunpack.c.l.b16 %v318
        %v397 = vunpack.c.l.b16 %v319
        %v398 = vpack.c.b16 %v397, %v396
        %v401 = vsel %vm333, %v393, 0
        %403 = vmatprep.subr.bf16.mxu0 0
        %404 = vmatpush1.bf16.msra.mxu0 %v398
        %405 = vmatprep.subr.bf16.mxu0 0
        %406 = vmatpush1.bf16.msra.mxu0 0
        %407 = vmatprep.subr.bf16.mxu0 0
        %408 = vmatpush1.bf16.msra.mxu0 0
        %409 = vmatprep.subr.bf16.mxu0 0
        %410 = vmatpush1.bf16.msra.mxu0 0
        %411 = vmatprep.subr.bf16.mxu0 0
        %412 = vmatpush1.bf16.msra.mxu0 0
        %413 = vmatprep.subr.bf16.mxu0 0
        %414 = vmatpush1.bf16.msra.mxu0 0
        %415 = vmatprep.subr.bf16.mxu0 0
        %416 = vmatpush1.bf16.msra.mxu0 0
        %417 = vmatprep.subr.bf16.mxu0 0
        %418 = vmatpush1.bf16.msra.mxu0 0
        %419 = vmatprep.subr.bf16.mxu0 0
        %420 = vmatpush1.bf16.msra.mxu0 0
        %421 = vmatprep.subr.bf16.mxu0 0
        %422 = vmatpush1.bf16.msra.mxu0 0
        %423 = vmatprep.subr.bf16.mxu0 0
        %424 = vmatpush1.bf16.msra.mxu0 0
        %425 = vmatprep.subr.bf16.mxu0 0
        %426 = vmatpush1.bf16.msra.mxu0 0
        %427 = vmatprep.subr.bf16.mxu0 0
        %428 = vmatpush1.bf16.msra.mxu0 0
        %429 = vmatprep.subr.bf16.mxu0 0
        %430 = vmatpush1.bf16.msra.mxu0 0
        %431 = vmatprep.subr.bf16.mxu0 0
        %432 = vmatpush1.bf16.msra.mxu0 0
        %433 = vmatprep.subr.bf16.mxu0 0
        %434 = vmatpush1.bf16.msra.mxu0 0
        %435 = vmatprep.mubr.bf16.mxu0 0
        %436 = vmatmul.mubr.bf16.gmra.mrb[0].mxu0 %v401
        %v437 = vpop.f32.mrb[0].mxu0
        %v438 = vadd.f32 %v372, %v437
        %v439 = vpop.f32.mrb[0].mxu0
        %v440 = vpop.f32.mrb[0].mxu0
        %v441 = vpop.f32.mrb[0].mxu0
        %442 = vdwg.mxu0
        %v443 = vld [vmem:[#allocation7 + $0x10] sm:$0xf]
        %v444 = vld [vmem:[#allocation7 + $0x14] sm:$0xf]
        %vm445 = vsmask.f32 256
        %v446 = vrot.slane %v379, 7
        %v447 = vrot.slane %v386, 7
        %v448 = vor.u32 %v447, %v389
        %v449 = vsel %vm445, %v446, %v448
        %v452 = vunpack.c.l.b16 %v443
        %v453 = vunpack.c.l.b16 %v444
        %v454 = vpack.c.b16 %v453, %v452
        %v457 = vsel %vm333, %v449, 0
        %459 = vmatprep.subr.bf16.mxu0 0
        %460 = vmatpush1.bf16.msra.mxu0 %v454
        %461 = vmatprep.subr.bf16.mxu0 0
        %462 = vmatpush1.bf16.msra.mxu0 0
        %463 = vmatprep.subr.bf16.mxu0 0
        %464 = vmatpush1.bf16.msra.mxu0 0
        %465 = vmatprep.subr.bf16.mxu0 0
        %466 = vmatpush1.bf16.msra.mxu0 0
        %467 = vmatprep.subr.bf16.mxu0 0
        %468 = vmatpush1.bf16.msra.mxu0 0
        %469 = vmatprep.subr.bf16.mxu0 0
        %470 = vmatpush1.bf16.msra.mxu0 0
        %471 = vmatprep.subr.bf16.mxu0 0
        %472 = vmatpush1.bf16.msra.mxu0 0
        %473 = vmatprep.subr.bf16.mxu0 0
        %474 = vmatpush1.bf16.msra.mxu0 0
        %475 = vmatprep.subr.bf16.mxu0 0
        %476 = vmatpush1.bf16.msra.mxu0 0
        %477 = vmatprep.subr.bf16.mxu0 0
        %478 = vmatpush1.bf16.msra.mxu0 0
        %479 = vmatprep.subr.bf16.mxu0 0
        %480 = vmatpush1.bf16.msra.mxu0 0
        %481 = vmatprep.subr.bf16.mxu0 0
        %482 = vmatpush1.bf16.msra.mxu0 0
        %483 = vmatprep.subr.bf16.mxu0 0
        %484 = vmatpush1.bf16.msra.mxu0 0
        %485 = vmatprep.subr.bf16.mxu0 0
        %486 = vmatpush1.bf16.msra.mxu0 0
        %487 = vmatprep.subr.bf16.mxu0 0
        %488 = vmatpush1.bf16.msra.mxu0 0
        %489 = vmatprep.subr.bf16.mxu0 0
        %490 = vmatpush1.bf16.msra.mxu0 0
        %491 = vmatprep.mubr.bf16.mxu0 0
        %492 = vmatmul.mubr.bf16.gmra.mrb[0].mxu0 %v457
        %v493 = vpop.f32.mrb[0].mxu0
        %v494 = vadd.f32 0.0, %v493
        %v495 = vpop.f32.mrb[0].mxu0
        %v496 = vpop.f32.mrb[0].mxu0
        %v497 = vpop.f32.mrb[0].mxu0
        %498 = vdwg.mxu0
        %v499 = vadd.f32 %v438, %v494
        %v500 = vld [vmem:[#allocation7 + $0x18] sm:$0xf]
        %v501 = vld [vmem:[#allocation7 + $0x1c] sm:$0xf]
        %v504 = vunpack.c.l.b16 %v500
        %v505 = vunpack.c.l.b16 %v501
        %v506 = vpack.c.b16 %v505, %v504
        %v508 = vsel %vm333, %v317, 0
        %510 = vmatprep.subr.bf16.mxu0 0
        %511 = vmatpush1.bf16.msra.mxu0 %v506
        %512 = vmatprep.subr.bf16.mxu0 0
        %513 = vmatpush1.bf16.msra.mxu0 0
        %514 = vmatprep.subr.bf16.mxu0 0
        %515 = vmatpush1.bf16.msra.mxu0 0
        %516 = vmatprep.subr.bf16.mxu0 0
        %517 = vmatpush1.bf16.msra.mxu0 0
        %518 = vmatprep.subr.bf16.mxu0 0
        %519 = vmatpush1.bf16.msra.mxu0 0
        %520 = vmatprep.subr.bf16.mxu0 0
        %521 = vmatpush1.bf16.msra.mxu0 0
        %522 = vmatprep.subr.bf16.mxu0 0
        %523 = vmatpush1.bf16.msra.mxu0 0
        %524 = vmatprep.subr.bf16.mxu0 0
        %525 = vmatpush1.bf16.msra.mxu0 0
        %526 = vmatprep.subr.bf16.mxu0 0
        %527 = vmatpush1.bf16.msra.mxu0 0
        %528 = vmatprep.subr.bf16.mxu0 0
        %529 = vmatpush1.bf16.msra.mxu0 0
        %530 = vmatprep.subr.bf16.mxu0 0
        %531 = vmatpush1.bf16.msra.mxu0 0
        %532 = vmatprep.subr.bf16.mxu0 0
        %533 = vmatpush1.bf16.msra.mxu0 0
        %534 = vmatprep.subr.bf16.mxu0 0
        %535 = vmatpush1.bf16.msra.mxu0 0
        %536 = vmatprep.subr.bf16.mxu0 0
        %537 = vmatpush1.bf16.msra.mxu0 0
        %538 = vmatprep.subr.bf16.mxu0 0
        %539 = vmatpush1.bf16.msra.mxu0 0
        %540 = vmatprep.subr.bf16.mxu0 0
        %541 = vmatpush1.bf16.msra.mxu0 0
        %542 = vmatprep.mubr.bf16.mxu0 0
        %543 = vmatmul.mubr.bf16.gmra.mrb[0].mxu0 %v508
        %v544 = vpop.f32.mrb[0].mxu0
        %v545 = vadd.f32 0.0, %v544
        %v546 = vpop.f32.mrb[0].mxu0
        %v547 = vpop.f32.mrb[0].mxu0
        %v548 = vpop.f32.mrb[0].mxu0
        %549 = vdwg.mxu0
        %v550 = vadd.f32 %v499, %v545
        %v551 = vld [vmem:[#allocation7 + $0x20] sm:$0xf]
        %v552 = vld [vmem:[#allocation7 + $0x24] sm:$0xf]
        %v553 = vrot.slane %v389, 1
        %v554 = vor.u32 %v386, %v553
        %v557 = vunpack.c.l.b16 %v551
        %v558 = vunpack.c.l.b16 %v552
        %v559 = vpack.c.b16 %v558, %v557
        %v562 = vsel %vm333, %v554, 0
        %564 = vmatprep.subr.bf16.mxu0 0
        %565 = vmatpush1.bf16.msra.mxu0 %v559
        %566 = vmatprep.subr.bf16.mxu0 0
        %567 = vmatpush1.bf16.msra.mxu0 0
        %568 = vmatprep.subr.bf16.mxu0 0
        %569 = vmatpush1.bf16.msra.mxu0 0
        %570 = vmatprep.subr.bf16.mxu0 0
        %571 = vmatpush1.bf16.msra.mxu0 0
        %572 = vmatprep.subr.bf16.mxu0 0
        %573 = vmatpush1.bf16.msra.mxu0 0
        %574 = vmatprep.subr.bf16.mxu0 0
        %575 = vmatpush1.bf16.msra.mxu0 0
        %576 = vmatprep.subr.bf16.mxu0 0
        %577 = vmatpush1.bf16.msra.mxu0 0
        %578 = vmatprep.subr.bf16.mxu0 0
        %579 = vmatpush1.bf16.msra.mxu0 0
        %580 = vmatprep.subr.bf16.mxu0 0
        %581 = vmatpush1.bf16.msra.mxu0 0
        %582 = vmatprep.subr.bf16.mxu0 0
        %583 = vmatpush1.bf16.msra.mxu0 0
        %584 = vmatprep.subr.bf16.mxu0 0
        %585 = vmatpush1.bf16.msra.mxu0 0
        %586 = vmatprep.subr.bf16.mxu0 0
        %587 = vmatpush1.bf16.msra.mxu0 0
        %588 = vmatprep.subr.bf16.mxu0 0
        %589 = vmatpush1.bf16.msra.mxu0 0
        %590 = vmatprep.subr.bf16.mxu0 0
        %591 = vmatpush1.bf16.msra.mxu0 0
        %592 = vmatprep.subr.bf16.mxu0 0
        %593 = vmatpush1.bf16.msra.mxu0 0
        %594 = vmatprep.subr.bf16.mxu0 0
        %595 = vmatpush1.bf16.msra.mxu0 0
        %596 = vmatprep.mubr.bf16.mxu0 0
        %597 = vmatmul.mubr.bf16.gmra.mrb[0].mxu0 %v562
        %v598 = vpop.f32.mrb[0].mxu0
        %v599 = vadd.f32 0.0, %v598
        %v600 = vpop.f32.mrb[0].mxu0
        %v601 = vpop.f32.mrb[0].mxu0
        %v602 = vpop.f32.mrb[0].mxu0
        %603 = vdwg.mxu0
        %v604 = vadd.f32 %v550, %v599
        %v605 = vld [vmem:[#allocation7 + $0x28] sm:$0xf]
        %v606 = vld [vmem:[#allocation7 + $0x2c] sm:$0xf]
        %v607 = vrot.slane %v317, 1
        %v610 = vunpack.c.l.b16 %v605
        %v611 = vunpack.c.l.b16 %v606
        %v612 = vpack.c.b16 %v611, %v610
        %v615 = vsel %vm333, %v607, 0
        %617 = vmatprep.subr.bf16.mxu0 0
        %618 = vmatpush1.bf16.msra.mxu0 %v612
        %619 = vmatprep.subr.bf16.mxu0 0
        %620 = vmatpush1.bf16.msra.mxu0 0
        %621 = vmatprep.subr.bf16.mxu0 0
        %622 = vmatpush1.bf16.msra.mxu0 0
        %623 = vmatprep.subr.bf16.mxu0 0
        %624 = vmatpush1.bf16.msra.mxu0 0
        %625 = vmatprep.subr.bf16.mxu0 0
        %626 = vmatpush1.bf16.msra.mxu0 0
        %627 = vmatprep.subr.bf16.mxu0 0
        %628 = vmatpush1.bf16.msra.mxu0 0
        %629 = vmatprep.subr.bf16.mxu0 0
        %630 = vmatpush1.bf16.msra.mxu0 0
        %631 = vmatprep.subr.bf16.mxu0 0
        %632 = vmatpush1.bf16.msra.mxu0 0
        %633 = vmatprep.subr.bf16.mxu0 0
        %634 = vmatpush1.bf16.msra.mxu0 0
        %635 = vmatprep.subr.bf16.mxu0 0
        %636 = vmatpush1.bf16.msra.mxu0 0
        %637 = vmatprep.subr.bf16.mxu0 0
        %638 = vmatpush1.bf16.msra.mxu0 0
        %639 = vmatprep.subr.bf16.mxu0 0
        %640 = vmatpush1.bf16.msra.mxu0 0
        %641 = vmatprep.subr.bf16.mxu0 0
        %642 = vmatpush1.bf16.msra.mxu0 0
        %643 = vmatprep.subr.bf16.mxu0 0
        %644 = vmatpush1.bf16.msra.mxu0 0
        %645 = vmatprep.subr.bf16.mxu0 0
        %646 = vmatpush1.bf16.msra.mxu0 0
        %647 = vmatprep.subr.bf16.mxu0 0
        %648 = vmatpush1.bf16.msra.mxu0 0
        %649 = vmatprep.mubr.bf16.mxu0 0
        %650 = vmatmul.mubr.bf16.gmra.mrb[0].mxu0 %v615
        %v651 = vpop.f32.mrb[0].mxu0
        %v652 = vadd.f32 0.0, %v651
        %v653 = vpop.f32.mrb[0].mxu0
        %v654 = vpop.f32.mrb[0].mxu0
        %v655 = vpop.f32.mrb[0].mxu0
        %656 = vdwg.mxu0
        %v657 = vadd.f32 %v604, %v652
        %v658 = vld [vmem:[#allocation7 + $0x30] sm:$0xf]
        %v659 = vld [vmem:[#allocation7 + $0x34] sm:$0xf]
        %v660 = vrot.slane %v386, 1
        %v661 = vrot.slane %v389, 2
        %v662 = vor.u32 %v660, %v661
        %v665 = vunpack.c.l.b16 %v658
        %v666 = vunpack.c.l.b16 %v659
        %v667 = vpack.c.b16 %v666, %v665
        %v670 = vsel %vm333, %v662, 0
        %672 = vmatprep.subr.bf16.mxu0 0
        %673 = vmatpush1.bf16.msra.mxu0 %v667
        %674 = vmatprep.subr.bf16.mxu0 0
        %675 = vmatpush1.bf16.msra.mxu0 0
        %676 = vmatprep.subr.bf16.mxu0 0
        %677 = vmatpush1.bf16.msra.mxu0 0
        %678 = vmatprep.subr.bf16.mxu0 0
        %679 = vmatpush1.bf16.msra.mxu0 0
        %680 = vmatprep.subr.bf16.mxu0 0
        %681 = vmatpush1.bf16.msra.mxu0 0
        %682 = vmatprep.subr.bf16.mxu0 0
        %683 = vmatpush1.bf16.msra.mxu0 0
        %684 = vmatprep.subr.bf16.mxu0 0
        %685 = vmatpush1.bf16.msra.mxu0 0
        %686 = vmatprep.subr.bf16.mxu0 0
        %687 = vmatpush1.bf16.msra.mxu0 0
        %688 = vmatprep.subr.bf16.mxu0 0
        %689 = vmatpush1.bf16.msra.mxu0 0
        %690 = vmatprep.subr.bf16.mxu0 0
        %691 = vmatpush1.bf16.msra.mxu0 0
        %692 = vmatprep.subr.bf16.mxu0 0
        %693 = vmatpush1.bf16.msra.mxu0 0
        %694 = vmatprep.subr.bf16.mxu0 0
        %695 = vmatpush1.bf16.msra.mxu0 0
        %696 = vmatprep.subr.bf16.mxu0 0
        %697 = vmatpush1.bf16.msra.mxu0 0
        %698 = vmatprep.subr.bf16.mxu0 0
        %699 = vmatpush1.bf16.msra.mxu0 0
        %700 = vmatprep.subr.bf16.mxu0 0
        %701 = vmatpush1.bf16.msra.mxu0 0
        %702 = vmatprep.subr.bf16.mxu0 0
        %703 = vmatpush1.bf16.msra.mxu0 0
        %704 = vmatprep.mubr.bf16.mxu0 0
        %705 = vmatmul.mubr.bf16.gmra.mrb[0].mxu0 %v670
        %v706 = vpop.f32.mrb[0].mxu0
        %v707 = vadd.f32 0.0, %v706
        %v708 = vpop.f32.mrb[0].mxu0
        %v709 = vpop.f32.mrb[0].mxu0
        %v710 = vpop.f32.mrb[0].mxu0
        %711 = vdwg.mxu0
        %v712 = vadd.f32 %v657, %v707
        %v713 = vld [vmem:[#allocation8] sm:$0x1]
        %v715 = vlaneseq
        %v716 = vshrl.u32 %v715, 7
        %v717 = vsub.s32 0, %v716
        %v718 = vrot.slane %v713, %v717
        %v720 = vadd.f32 %v712, %v718
        %v721 = vpack.c.bf16 %v720, %v720
        %vm722 = vcmask 257024
        %723 = vst.msk [vmem:[%s300] sm:$0xf] %vm722, %v721
        %s724 = sand.u32 %s145, 1
        %s725 = scalar_lea.sflag [#allocation4], %s724
        %s726 = sand.u32 %s145, 1
        %s727 = smul.addr %s726, 4
        %s728 = scalar_lea.vmem [#allocation10], %s727
        // Predicated region
        $region53: #{_lambda_.16} parent=35 // pred_check
          %p729 = pneg %p155
        $region54: #{_lambda_.16} parent=35 // pred_check_branch
          %731 = sbr.rel (%p729) target = $region56
        $region55: #{_lambda_.16} parent=35 // pred_region
          %s733 = ssub.s32 64, 64
          %734 = vsyncadd %s725, %s733
          %s735 = sadd.s32 %s30, %s29
          %s736 = smul.addr %s735, 64
          %s737 = scalar_lea.hbm %s4, %s736
          %s739 = sshll.u32 %s728, 4
          %s740 = int_to_ptr.vmem [resolvable:$true] %s739
          %742 = dma.vmem_to_hbm [thread:$0]  %s740, 64, %s737, %s725
        $region56: #{_lambda_.16} parent=35 // pred_fallthru
          _
      $region36: #{_lambda_.16} parent=5 // pred_fallthru
        _
      %p743 = scmp.le.s32.totalorder 2, %s20
      // Predicated region
      $region57: #{_lambda_.16} parent=5 // pred_check
        %p744 = pneg %p743
      $region58: #{_lambda_.16} parent=5 // pred_check_branch
        %746 = sbr.rel (%p744) target = $region60
      $region59: #{_lambda_.16} parent=5 // pred_region
        %s747 = ssub.s32 %s20, 2
        // Predicated region
        $region61: #{_lambda_.16} parent=59 // pred_check
          %p748 = pneg %p161
        $region62: #{_lambda_.16} parent=59 // pred_check_branch
          %750 = sbr.rel (%p748) target = $region64
        $region63: #{_lambda_.16} parent=59 // pred_region
          %s751 = sand.u32 %s146, 1
          %s752 = scalar_lea.sflag [#allocation4], %s751
          %s753 = sand.u32 %s146, 1
          %s754 = smul.addr %s753, 4
          %s755 = scalar_lea.vmem [#allocation10], %s754
          %756 = dma.done %s752, 64
        $region64: #{_lambda_.16} parent=59 // pred_fallthru
          _
      $region60: #{_lambda_.16} parent=5 // pred_fallthru
        _
    $region6: #{_lambda_.16} parent=1 // loop_footer
      %s24 = sadd.s32 1, %s20
    $region7: #{_lambda_.16} parent=1 // loop_footer_branch
      %19 = sbr.rel target = $region3
    $region8: #{_lambda_.16} parent=1 // loop_exit
      _
    %757 = vsyncpa [#allocation3], 1
    %s758 = scalar_lea.sflag [#allocation3], 1
    %759 = vsyncpa %s758, 1
    %760 = vsyncpa [#allocation6], 1
    %s761 = scalar_lea.sflag [#allocation6], 1
    %762 = vsyncpa %s761, 1
    %763 = vsyncpa [#allocation9], 1
    %764 = vsyncpa [#allocation4], 1
    %s765 = scalar_lea.sflag [#allocation4], 1
    %766 = vsyncpa %s765, 1

// kernel: _lambda_.20
$region0: #{_lambda_.20}
  #allocation0 [shape = 'u32[]', space=smem, size = 0x4, offset = 0x4, fixed_abs, tag = 'smem constant byte address 0x4 - core index']
  #allocation1 [shape = 'u32[144,128]{1,0:T(1,128)}', space=vmem, size = 0x12000, scoped, tag = 'internal scratch']
  %s0 = inlined_call_operand.hbm [shape: bf16[2,8,64], index: 0, kind: input, shape index: {}]
  %s1 = inlined_call_operand.hbm [shape: bf16[2,1,18,64], index: 1, kind: input, shape index: {}]
  %s2 = inlined_call_operand.hbm [shape: bf16[192,64], index: 2, kind: input, shape index: {}]
  %s3 = inlined_call_operand.hbm [shape: f32[1,64], index: 3, kind: input, shape index: {}, may-alias: {3,5}]
  %s4 = inlined_call_operand.hbm [shape: bf16[192,64], index: 4, kind: input, shape index: {}]
  %s5 = inlined_call_operand.hbm [shape: f32[1,64], index: 5, kind: input, shape index: {}, may-alias: {3,5}]
  %s6 = inlined_call_operand.hbm [shape: bf16[2,8,64], index: 6, kind: output, shape index: {}]
  %s7 = sld [smem:[#allocation0]]
  $region81: #{_lambda_.20} parent=0
    _
  %s9 = ssub.s32 1, %s7
  %s10 = scalar_select 0, %s9, %s7
  $region1: #{_lambda_.20} parent=0
    #allocation2 [shape = 'u8[4096]{0}', space=vmem, size = 0x1000, scoped, tag = 'input window, operand 0']
    #allocation3 [shape = 's32[2]{0}', space=sflag, size = 0x8, scoped, tag = 'scoped memory for _lambda_.20']
    #allocation4 [shape = 's32[2]{0}', space=sflag, size = 0x8, scoped, tag = 'scoped memory for _lambda_.20']
    #allocation5 [shape = 'u8[12288]{0}', space=vmem, size = 0x3000, scoped, tag = 'input window, operand 1']
    #allocation6 [shape = 's32[2]{0}', space=sflag, size = 0x8, scoped, tag = 'scoped memory for _lambda_.20']
    #allocation7 [shape = 'u8[49152]{0}', space=vmem, size = 0xc000, scoped, tag = 'input window, operand 2, single buffered']
    #allocation8 [shape = 'u8[512]{0}', space=vmem, size = 0x400, scoped, tag = 'input window, operand 3, single buffered']
    #allocation9 [shape = 's32[1]{0}', space=sflag, size = 0x4, scoped, tag = 'scoped memory for _lambda_.20']
    #allocation10 [shape = 'u8[49152]{0}', space=vmem, size = 0xc000, scoped, tag = 'input window, operand 4, single buffered']
    #allocation11 [shape = 'u8[512]{0}', space=vmem, size = 0x400, scoped, tag = 'input window, operand 5, single buffered']
    #allocation12 [shape = 's32[1]{0}', space=sflag, size = 0x4, scoped, tag = 'scoped memory for _lambda_.20']
    #allocation13 [shape = 'u8[4096]{0}', space=vmem, size = 0x1000, scoped, tag = 'output window, operand 0']
    %11 = vsyncpa [#allocation3], 0
    %s12 = scalar_lea.sflag [#allocation3], 1
    %13 = vsyncpa %s12, 0
    %14 = vsyncpa [#allocation6], 0
    %s15 = scalar_lea.sflag [#allocation6], 1
    %16 = vsyncpa %s15, 0
    %17 = vsyncpa [#allocation9], 0
    %18 = vsyncpa [#allocation12], 0
    %19 = vsyncpa [#allocation4], 0
    %s20 = scalar_lea.sflag [#allocation4], 1
    %21 = vsyncpa %s20, 0
    loop: start=0, step=1, limit=4
    $region2: #{_lambda_.20} parent=1 // loop_pre_header
      _
    $region3: #{_lambda_.20} parent=1 // loop_header
      %s23 = sphi 0, %s27
      %p24 = scmp.ge.s32.totalorder %s23, 4
      %s30 = sphi 0, %s42
      %s31 = sphi 0, %s38
      %s32 = sphi 0, %s30
      %s33 = sphi 0, %s31
      %s34 = sphi 0, %s32
      %s35 = sphi 0, %s33
      %s47 = sphi 0, %s49
      %s50 = sphi 0, %s47
      %s51 = sphi 0, %s50
      %s67 = sphi 0, %s51
      %s75 = sphi 0, %s77
      %s78 = sphi 0, %s75
      %s79 = sphi 0, %s78
      %s95 = sphi 0, %s79
      %s99 = sphi 0, %s99
      %s101 = sphi 0, %s99
      %s102 = sphi 0, %s101
      %s116 = sphi 0, %s102
      %s120 = sphi 0, %s120
      %s122 = sphi 0, %s120
      %s123 = sphi 0, %s122
      %s137 = sphi 0, %s123
      %s141 = sphi 0, %s141
      %s143 = sphi 0, %s141
      %s144 = sphi 0, %s143
      %s158 = sphi 0, %s144
      %s162 = sphi 0, %s162
      %s164 = sphi 0, %s162
      %s165 = sphi 0, %s164
      %s179 = sphi 0, %s165
      %s187 = sphi 0, %s189
      %s190 = sphi 0, %s187
      %s191 = sphi 0, %s190
      %s207 = sphi 0, %s191
    $region4: #{_lambda_.20} parent=1 // loop_header_branch
      %26 = sbr.rel (%p24) target = $region8
    $region5: #{_lambda_.20} parent=1 // loop_body
      %s28 = ssub.s32 %s23, 1
      %s29 = ssub.s32 %s23, 2
      %s36 = sadd.s32 1, %s31
      %p37 = scmp.ge.s32.totalorder %s36, 1
      %s38 = scalar_select %p37, 0, %s36
      %s39 = sadd.s32 1, %s30
      %s40 = scalar_select %p37, %s39, %s30
      %p41 = scmp.ge.s32.totalorder %s40, 2
      %s42 = scalar_select %p41, 0, %s40
      %s43 = ssub.s32 %s30, %s42
      %s44 = ssub.s32 %s31, %s38
      %s45 = sor.u32 %s43, %s44
      %p46 = scmp.eq.s32.totalorder %s45, 0
      %s48 = sadd.s32 %s47, 1
      %s49 = scalar_select %p46, %s47, %s48
      %p52 = pneg %p46
      %p53 = scmp.eq.s32.totalorder %s23, 1
      %p54 = por %p52, %p53
      %p55 = scmp.ne.s32.totalorder %s47, %s50
      %p56 = scmp.eq.s32.totalorder %s23, 0
      %p57 = por %p55, %p56
      %p58 = scmp.ne.s32.totalorder %s47, %s50
      %p59 = scmp.eq.s32.totalorder %s28, 1
      %p60 = por %p58, %p59
      %p61 = scmp.ne.s32.totalorder %s50, %s51
      %p62 = scmp.eq.s32.totalorder %s28, 0
      %p63 = por %p61, %p62
      %p64 = scmp.ne.s32.totalorder %s50, %s51
      %p65 = scmp.eq.s32.totalorder %s29, 1
      %p66 = por %p64, %p65
      %p68 = scmp.ne.s32.totalorder %s51, %s67
      %p69 = scmp.eq.s32.totalorder %s29, 0
      %p70 = por %p68, %p69
      %s71 = ssub.s32 %s30, %s42
      %s72 = ssub.s32 %s31, %s38
      %s73 = sor.u32 %s71, %s72
      %p74 = scmp.eq.s32.totalorder %s73, 0
      %s76 = sadd.s32 %s75, 1
      %s77 = scalar_select %p74, %s75, %s76
      %p80 = pneg %p74
      %p81 = scmp.eq.s32.totalorder %s23, 1
      %p82 = por %p80, %p81
      %p83 = scmp.ne.s32.totalorder %s75, %s78
      %p84 = scmp.eq.s32.totalorder %s23, 0
      %p85 = por %p83, %p84
      %p86 = scmp.ne.s32.totalorder %s75, %s78
      %p87 = scmp.eq.s32.totalorder %s28, 1
      %p88 = por %p86, %p87
      %p89 = scmp.ne.s32.totalorder %s78, %s79
      %p90 = scmp.eq.s32.totalorder %s28, 0
      %p91 = por %p89, %p90
      %p92 = scmp.ne.s32.totalorder %s78, %s79
      %p93 = scmp.eq.s32.totalorder %s29, 1
      %p94 = por %p92, %p93
      %p96 = scmp.ne.s32.totalorder %s79, %s95
      %p97 = scmp.eq.s32.totalorder %s29, 0
      %p98 = por %p96, %p97
      %s100 = sadd.s32 %s99, 1
      %p103 = scmp.eq.s32.totalorder %s23, 1
      %p104 = scmp.ne.s32.totalorder %s99, %s101
      %p105 = scmp.eq.s32.totalorder %s23, 0
      %p106 = por %p104, %p105
      %p107 = scmp.ne.s32.totalorder %s99, %s101
      %p108 = scmp.eq.s32.totalorder %s28, 1
      %p109 = por %p107, %p108
      %p110 = scmp.ne.s32.totalorder %s101, %s102
      %p111 = scmp.eq.s32.totalorder %s28, 0
      %p112 = por %p110, %p111
      %p113 = scmp.ne.s32.totalorder %s101, %s102
      %p114 = scmp.eq.s32.totalorder %s29, 1
      %p115 = por %p113, %p114
      %p117 = scmp.ne.s32.totalorder %s102, %s116
      %p118 = scmp.eq.s32.totalorder %s29, 0
      %p119 = por %p117, %p118
      %s121 = sadd.s32 %s120, 1
      %p124 = scmp.eq.s32.totalorder %s23, 1
      %p125 = scmp.ne.s32.totalorder %s120, %s122
      %p126 = scmp.eq.s32.totalorder %s23, 0
      %p127 = por %p125, %p126
      %p128 = scmp.ne.s32.totalorder %s120, %s122
      %p129 = scmp.eq.s32.totalorder %s28, 1
      %p130 = por %p128, %p129
      %p131 = scmp.ne.s32.totalorder %s122, %s123
      %p132 = scmp.eq.s32.totalorder %s28, 0
      %p133 = por %p131, %p132
      %p134 = scmp.ne.s32.totalorder %s122, %s123
      %p135 = scmp.eq.s32.totalorder %s29, 1
      %p136 = por %p134, %p135
      %p138 = scmp.ne.s32.totalorder %s123, %s137
      %p139 = scmp.eq.s32.totalorder %s29, 0
      %p140 = por %p138, %p139
      %s142 = sadd.s32 %s141, 1
      %p145 = scmp.eq.s32.totalorder %s23, 1
      %p146 = scmp.ne.s32.totalorder %s141, %s143
      %p147 = scmp.eq.s32.totalorder %s23, 0
      %p148 = por %p146, %p147
      %p149 = scmp.ne.s32.totalorder %s141, %s143
      %p150 = scmp.eq.s32.totalorder %s28, 1
      %p151 = por %p149, %p150
      %p152 = scmp.ne.s32.totalorder %s143, %s144
      %p153 = scmp.eq.s32.totalorder %s28, 0
      %p154 = por %p152, %p153
      %p155 = scmp.ne.s32.totalorder %s143, %s144
      %p156 = scmp.eq.s32.totalorder %s29, 1
      %p157 = por %p155, %p156
      %p159 = scmp.ne.s32.totalorder %s144, %s158
      %p160 = scmp.eq.s32.totalorder %s29, 0
      %p161 = por %p159, %p160
      %s163 = sadd.s32 %s162, 1
      %p166 = scmp.eq.s32.totalorder %s23, 1
      %p167 = scmp.ne.s32.totalorder %s162, %s164
      %p168 = scmp.eq.s32.totalorder %s23, 0
      %p169 = por %p167, %p168
      %p170 = scmp.ne.s32.totalorder %s162, %s164
      %p171 = scmp.eq.s32.totalorder %s28, 1
      %p172 = por %p170, %p171
      %p173 = scmp.ne.s32.totalorder %s164, %s165
      %p174 = scmp.eq.s32.totalorder %s28, 0
      %p175 = por %p173, %p174
      %p176 = scmp.ne.s32.totalorder %s164, %s165
      %p177 = scmp.eq.s32.totalorder %s29, 1
      %p178 = por %p176, %p177
      %p180 = scmp.ne.s32.totalorder %s165, %s179
      %p181 = scmp.eq.s32.totalorder %s29, 0
      %p182 = por %p180, %p181
      %s183 = ssub.s32 %s30, %s42
      %s184 = ssub.s32 %s31, %s38
      %s185 = sor.u32 %s183, %s184
      %p186 = scmp.eq.s32.totalorder %s185, 0
      %s188 = sadd.s32 %s187, 1
      %s189 = scalar_select %p186, %s187, %s188
      %p192 = pneg %p186
      %p193 = scmp.eq.s32.totalorder %s23, 1
      %p194 = por %p192, %p193
      %p195 = scmp.ne.s32.totalorder %s187, %s190
      %p196 = scmp.eq.s32.totalorder %s23, 0
      %p197 = por %p195, %p196
      %p198 = scmp.ne.s32.totalorder %s187, %s190
      %p199 = scmp.eq.s32.totalorder %s28, 1
      %p200 = por %p198, %p199
      %p201 = scmp.ne.s32.totalorder %s190, %s191
      %p202 = scmp.eq.s32.totalorder %s28, 0
      %p203 = por %p201, %p202
      %p204 = scmp.ne.s32.totalorder %s190, %s191
      %p205 = scmp.eq.s32.totalorder %s29, 1
      %p206 = por %p204, %p205
      %p208 = scmp.ne.s32.totalorder %s191, %s207
      %p209 = scmp.eq.s32.totalorder %s29, 0
      %p210 = por %p208, %p209
      %p211 = scmp.le.s32.totalorder 1, %s23
      %p212 = scmp.lt.s32.totalorder %s23, 3
      %p213 = pnand %p211, %p212
      %p214 = pneg %p213
      // Predicated region
      $region9: #{_lambda_.20} parent=5 // pred_check
        _
      $region10: #{_lambda_.20} parent=5 // pred_check_branch
        %216 = sbr.rel (%p213) target = $region12
      $region11: #{_lambda_.20} parent=5 // pred_region
        %s217 = ssub.s32 %s23, 1
        // Predicated region
        $region13: #{_lambda_.20} parent=11 // pred_check
          %p218 = pneg %p112
        $region14: #{_lambda_.20} parent=11 // pred_check_branch
          %220 = sbr.rel (%p218) target = $region16
        $region15: #{_lambda_.20} parent=11 // pred_region
          %s222 = ssub.s32 1536, 1536
          %223 = vsyncadd [#allocation6], %s222
          %s224 = sshll.u32 [#allocation7], 4
          %s225 = int_to_ptr.vmem [resolvable:$true] %s224
          %230 = dma.hbm_to_vmem [thread:$0]  %s2, 1536, %s225, [#allocation6], 64, 64, 4
        $region16: #{_lambda_.20} parent=11 // pred_fallthru
          _
        // Predicated region
        $region17: #{_lambda_.20} parent=11 // pred_check
          %p231 = pneg %p133
        $region18: #{_lambda_.20} parent=11 // pred_check_branch
          %233 = sbr.rel (%p231) target = $region20
        $region19: #{_lambda_.20} parent=11 // pred_region
          %s235 = ssub.s32 16, 16
          %236 = vsyncadd [#allocation9], %s235
          %s238 = sshll.u32 [#allocation8], 4
          %s239 = int_to_ptr.vmem [resolvable:$true] %s238
          %241 = dma.hbm_to_vmem [thread:$0]  %s3, 16, %s239, [#allocation9]
        $region20: #{_lambda_.20} parent=11 // pred_fallthru
          _
        // Predicated region
        $region21: #{_lambda_.20} parent=11 // pred_check
          %p242 = pneg %p154
        $region22: #{_lambda_.20} parent=11 // pred_check_branch
          %244 = sbr.rel (%p242) target = $region24
        $region23: #{_lambda_.20} parent=11 // pred_region
          %s246 = ssub.s32 1536, 1536
          %247 = vsyncadd [#allocation9], %s246
          %s248 = sshll.u32 [#allocation10], 4
          %s249 = int_to_ptr.vmem [resolvable:$true] %s248
          %254 = dma.hbm_to_vmem [thread:$0]  %s4, 1536, %s249, [#allocation9], 64, 64, 4
        $region24: #{_lambda_.20} parent=11 // pred_fallthru
          _
        // Predicated region
        $region25: #{_lambda_.20} parent=11 // pred_check
          %p255 = pneg %p175
        $region26: #{_lambda_.20} parent=11 // pred_check_branch
          %257 = sbr.rel (%p255) target = $region28
        $region27: #{_lambda_.20} parent=11 // pred_region
          %s259 = ssub.s32 16, 16
          %260 = vsyncadd [#allocation12], %s259
          %s262 = sshll.u32 [#allocation11], 4
          %s263 = int_to_ptr.vmem [resolvable:$true] %s262
          %265 = dma.hbm_to_vmem [thread:$0]  %s5, 16, %s263, [#allocation12]
        $region28: #{_lambda_.20} parent=11 // pred_fallthru
          _
      $region12: #{_lambda_.20} parent=5 // pred_fallthru
        _
      %p266 = scmp.lt.s32.totalorder %s23, 2
      // Predicated region
      $region29: #{_lambda_.20} parent=5 // pred_check
        %p267 = pneg %p266
      $region30: #{_lambda_.20} parent=5 // pred_check_branch
        %269 = sbr.rel (%p267) target = $region32
      $region31: #{_lambda_.20} parent=5 // pred_region
        // Predicated region
        $region33: #{_lambda_.20} parent=31 // pred_check
          %p270 = pneg %p57
        $region34: #{_lambda_.20} parent=31 // pred_check_branch
          %272 = sbr.rel (%p270) target = $region36
        $region35: #{_lambda_.20} parent=31 // pred_region
          %s273 = sand.u32 %s47, 1
          %s274 = scalar_lea.sflag [#allocation3], %s273
          %s275 = sand.u32 %s47, 1
          %s276 = smul.addr %s275, 4
          %s277 = scalar_lea.vmem [#allocation2], %s276
          %s279 = ssub.s32 64, 64
          %280 = vsyncadd %s274, %s279
          %s281 = sadd.s32 %s31, %s30
          %s282 = smul.addr %s281, 64
          %s283 = scalar_lea.hbm %s0, %s282
          %s285 = sshll.u32 %s277, 4
          %s286 = int_to_ptr.vmem [resolvable:$true] %s285
          %288 = dma.hbm_to_vmem [thread:$0]  %s283, 64, %s286, %s274
        $region36: #{_lambda_.20} parent=31 // pred_fallthru
          _
        // Predicated region
        $region37: #{_lambda_.20} parent=31 // pred_check
          %p289 = pneg %p85
        $region38: #{_lambda_.20} parent=31 // pred_check_branch
          %291 = sbr.rel (%p289) target = $region40
        $region39: #{_lambda_.20} parent=31 // pred_region
          %s292 = sand.u32 %s23, 1
          %s293 = scalar_lea.sflag [#allocation6], %s292
          %s294 = sand.u32 %s75, 1
          %s295 = smul.addr %s294, 12
          %s296 = scalar_lea.vmem [#allocation5], %s295
          %s298 = ssub.s32 192, 192
          %299 = vsyncadd %s293, %s298
          %s300 = smul.addr %s31, 3
          %s301 = smul.addr %s30, 3
          %s302 = sadd.s32 %s300, %s301
          %s303 = smul.addr %s302, 64
          %s304 = scalar_lea.hbm %s1, %s303
          %s305 = sshll.u32 %s296, 4
          %s306 = int_to_ptr.vmem [resolvable:$true] %s305
          %311 = dma.hbm_to_vmem [thread:$0]  %s304, 192, %s306, %s293, 64, 64, 4
        $region40: #{_lambda_.20} parent=31 // pred_fallthru
          _
      $region32: #{_lambda_.20} parent=5 // pred_fallthru
        _
      %p312 = scmp.le.s32.totalorder 1, %s23
      %p313 = scmp.lt.s32.totalorder %s23, 3
      %p314 = pnand %p312, %p313
      %p315 = pneg %p314
      // Predicated region
      $region41: #{_lambda_.20} parent=5 // pred_check
        _
      $region42: #{_lambda_.20} parent=5 // pred_check_branch
        %317 = sbr.rel (%p314) target = $region44
      $region43: #{_lambda_.20} parent=5 // pred_region
        %s318 = ssub.s32 %s23, 1
        %s319 = sand.u32 %s50, 1
        %s320 = scalar_lea.sflag [#allocation3], %s319
        %s321 = sand.u32 %s50, 1
        %s322 = smul.addr %s321, 4
        %s323 = scalar_lea.vmem [#allocation2], %s322
        // Predicated region
        $region45: #{_lambda_.20} parent=43 // pred_check
          %p324 = pneg %p63
        $region46: #{_lambda_.20} parent=43 // pred_check_branch
          %326 = sbr.rel (%p324) target = $region48
        $region47: #{_lambda_.20} parent=43 // pred_region
          %327 = dma.done %s320, 64
        $region48: #{_lambda_.20} parent=43 // pred_fallthru
          _
        %s328 = sand.u32 %s28, 1
        %s329 = scalar_lea.sflag [#allocation6], %s328
        %s330 = sand.u32 %s78, 1
        %s331 = smul.addr %s330, 12
        %s332 = scalar_lea.vmem [#allocation5], %s331
        // Predicated region
        $region49: #{_lambda_.20} parent=43 // pred_check
          %p333 = pneg %p91
        $region50: #{_lambda_.20} parent=43 // pred_check_branch
          %335 = sbr.rel (%p333) target = $region52
        $region51: #{_lambda_.20} parent=43 // pred_region
          %336 = dma.done %s329, 192
        $region52: #{_lambda_.20} parent=43 // pred_fallthru
          _
        // Predicated region
        $region53: #{_lambda_.20} parent=43 // pred_check
          %p337 = pneg %p112
        $region54: #{_lambda_.20} parent=43 // pred_check_branch
          %339 = sbr.rel (%p337) target = $region56
        $region55: #{_lambda_.20} parent=43 // pred_region
          %340 = dma.done [#allocation6], 1536
        $region56: #{_lambda_.20} parent=43 // pred_fallthru
          _
        // Predicated region
        $region57: #{_lambda_.20} parent=43 // pred_check
          %p341 = pneg %p133
        $region58: #{_lambda_.20} parent=43 // pred_check_branch
          %343 = sbr.rel (%p341) target = $region60
        $region59: #{_lambda_.20} parent=43 // pred_region
          %344 = dma.done [#allocation9], 16
        $region60: #{_lambda_.20} parent=43 // pred_fallthru
          _
        // Predicated region
        $region61: #{_lambda_.20} parent=43 // pred_check
          %p345 = pneg %p154
        $region62: #{_lambda_.20} parent=43 // pred_check_branch
          %347 = sbr.rel (%p345) target = $region64
        $region63: #{_lambda_.20} parent=43 // pred_region
          %348 = dma.done [#allocation9], 1536
        $region64: #{_lambda_.20} parent=43 // pred_fallthru
          _
        // Predicated region
        $region65: #{_lambda_.20} parent=43 // pred_check
          %p349 = pneg %p175
        $region66: #{_lambda_.20} parent=43 // pred_check_branch
          %351 = sbr.rel (%p349) target = $region68
        $region67: #{_lambda_.20} parent=43 // pred_region
          %352 = dma.done [#allocation12], 16
        $region68: #{_lambda_.20} parent=43 // pred_fallthru
          _
        %s353 = sand.u32 %s50, 1
        %s354 = scalar_lea.sflag [#allocation3], %s353
        %s355 = sand.u32 %s50, 1
        %s356 = smul.addr %s355, 4
        %s357 = scalar_lea.vmem [#allocation2], %s356
        %p358 = pneg %p63
        %p359 = pneg %p60
        %s360 = sand.u32 %s28, 1
        %s361 = scalar_lea.sflag [#allocation6], %s360
        %s362 = sand.u32 %s78, 1
        %s363 = smul.addr %s362, 12
        %s364 = scalar_lea.vmem [#allocation5], %s363
        %p365 = pneg %p91
        %p366 = pneg %p88
        %p367 = pneg %p112
        %p368 = pneg %p109
        %p369 = pneg %p133
        %p370 = pneg %p130
        %p371 = pneg %p154
        %p372 = pneg %p151
        %p373 = pneg %p175
        %p374 = pneg %p172
        %p375 = pneg %p203
        %p376 = pneg %p200
        %s377 = sand.u32 %s190, 1
        %s378 = scalar_lea.sflag [#allocation4], %s377
        %s379 = sand.u32 %s190, 1
        %s380 = smul.addr %s379, 4
        %s381 = scalar_lea.vmem [#allocation13], %s380
        %v383 = vld [vmem:[%s323] sm:$0xf]
        %v384 = vld [vmem:[%s332] sm:$0xf]
        %v385 = vld [vmem:[%s332 + $0x4] sm:$0xf]
        %v386 = vld [vmem:[%s332 + $0x8] sm:$0x1]
        %v389 = vunpack.c.l.b16 %v384
        %v390 = vunpack.c.l.b16 %v385
        %v391 = vpack.c.b16 %v390, %v389
        %v394 = vunpack.c.l.b16 %v386
        %v395 = vpack.c.b16 %v394, %v394
        %vm396 = vcmask 1043456
        %v399 = vsel %vm396, %v383, %v395
        %v401 = vunpack.c.l.bf16 %v391
        %v402 = vunpack.c.h.bf16 %v391
        %v403 = vunpack.c.l.bf16 %v399
        %v404 = vunpack.c.h.bf16 %v399
        %vm405 = vcmp.ge.f32.partialorder %v401, 0.0
        %vm406 = vcmp.ge.f32.partialorder %v402, 0.0
        %vm407 = vcmp.ge.f32.partialorder %v403, 0.0
        %vm408 = vcmp.ge.f32.partialorder %v404, 0.0
        %v409 = vmul.f32 %v401, 0.1
        %v410 = vmul.f32 %v402, 0.1
        %v411 = vmul.f32 %v403, 0.1
        %v412 = vmul.f32 %v404, 0.1
        %v413 = vsel %vm405, %v401, %v409
        %v414 = vsel %vm406, %v402, %v410
        %v415 = vsel %vm407, %v403, %v411
        %v416 = vsel %vm408, %v404, %v412
        %v417 = vpack.c.bf16 %v414, %v413
        %v418 = vpack.c.bf16 %v416, %v415
        %v419 = vld [vmem:[#allocation7] sm:$0xf]
        %v420 = vld [vmem:[#allocation7 + $0x4] sm:$0xf]
        %v421 = vld [vmem:[#allocation7 + $0x8] sm:$0xf]
        %v422 = vld [vmem:[#allocation7 + $0xc] sm:$0xf]
        %v423 = vld [vmem:[#allocation7 + $0x10] sm:$0xf]
        %v424 = vld [vmem:[#allocation7 + $0x14] sm:$0xf]
        %v425 = vld [vmem:[#allocation7 + $0x18] sm:$0xf]
        %v426 = vld [vmem:[#allocation7 + $0x1c] sm:$0xf]
        %v427 = vld [vmem:[#allocation7 + $0x20] sm:$0xf]
        %v428 = vld [vmem:[#allocation7 + $0x24] sm:$0xf]
        %v429 = vld [vmem:[#allocation7 + $0x28] sm:$0xf]
        %v430 = vld [vmem:[#allocation7 + $0x2c] sm:$0xf]
        %v431 = vld [vmem:[#allocation7 + $0x30] sm:$0xf]
        %v432 = vld [vmem:[#allocation7 + $0x34] sm:$0xf]
        %v433 = vld [vmem:[#allocation7 + $0x38] sm:$0xf]
        %v434 = vld [vmem:[#allocation7 + $0x3c] sm:$0xf]
        %vm435 = vsmask.f32 256
        %v437 = vshrl.u32 %v417, 16
        %v439 = vrot.slane %v437, 7
        %v441 = vshrl.u32 %v418, 16
        %v443 = vrot.slane %v441, 7
        %v444 = vshll.u32 %v418, 16
        %v446 = vor.u32 %v443, %v444
        %v447 = vsel %vm435, %v439, %v446
        %v456 = vunpack.c.l.b16 %v427
        %v457 = vunpack.c.l.b16 %v428
        %v458 = vunpack.c.l.b16 %v429
        %v459 = vunpack.c.l.b16 %v430
        %v460 = vunpack.c.l.b16 %v431
        %v461 = vunpack.c.l.b16 %v432
        %v462 = vunpack.c.l.b16 %v433
        %v463 = vunpack.c.l.b16 %v434
        %v464 = vpack.c.b16 %v457, %v456
        %v465 = vpack.c.b16 %v459, %v458
        %v466 = vpack.c.b16 %v461, %v460
        %v467 = vpack.c.b16 %v463, %v462
        %vm472 = vcmask 523264
        %v474 = vsel %vm472, %v447, 0
        %476 = vmatprep.subr.bf16.mxu0 0
        %477 = vmatpush1.bf16.msra.mxu0 %v464
        %478 = vmatprep.subr.bf16.mxu0 0
        %479 = vmatpush1.bf16.msra.mxu0 %v465
        %480 = vmatprep.subr.bf16.mxu0 0
        %481 = vmatpush1.bf16.msra.mxu0 %v466
        %482 = vmatprep.subr.bf16.mxu0 0
        %483 = vmatpush1.bf16.msra.mxu0 %v467
        %484 = vmatprep.subr.bf16.mxu0 0
        %485 = vmatpush1.bf16.msra.mxu0 0
        %486 = vmatprep.subr.bf16.mxu0 0
        %487 = vmatpush1.bf16.msra.mxu0 0
        %488 = vmatprep.subr.bf16.mxu0 0
        %489 = vmatpush1.bf16.msra.mxu0 0
        %490 = vmatprep.subr.bf16.mxu0 0
        %491 = vmatpush1.bf16.msra.mxu0 0
        %492 = vmatprep.subr.bf16.mxu0 0
        %493 = vmatpush1.bf16.msra.mxu0 0
        %494 = vmatprep.subr.bf16.mxu0 0
        %495 = vmatpush1.bf16.msra.mxu0 0
        %496 = vmatprep.subr.bf16.mxu0 0
        %497 = vmatpush1.bf16.msra.mxu0 0
        %498 = vmatprep.subr.bf16.mxu0 0
        %499 = vmatpush1.bf16.msra.mxu0 0
        %500 = vmatprep.subr.bf16.mxu0 0
        %501 = vmatpush1.bf16.msra.mxu0 0
        %502 = vmatprep.subr.bf16.mxu0 0
        %503 = vmatpush1.bf16.msra.mxu0 0
        %504 = vmatprep.subr.bf16.mxu0 0
        %505 = vmatpush1.bf16.msra.mxu0 0
        %506 = vmatprep.subr.bf16.mxu0 0
        %507 = vmatpush1.bf16.msra.mxu0 0
        %508 = vmatprep.mubr.bf16.mxu0 0
        %509 = vmatmul.mubr.bf16.gmra.mrb[0].mxu0 %v474
        %v510 = vpop.f32.mrb[0].mxu0
        %v511 = vadd.f32 0.0, %v510
        %v512 = vpop.f32.mrb[0].mxu0
        %v513 = vpop.f32.mrb[0].mxu0
        %v514 = vadd.f32 0.0, %v513
        %v515 = vpop.f32.mrb[0].mxu0
        %516 = vdwg.mxu0
        %vm519 = vcmask 1040384
        %v520 = vrot.slane %v417, 7
        %v521 = vrot.slane %v418, 7
        %v522 = vsel %vm519, %v520, %v521
        %v531 = vunpack.c.l.b16 %v419
        %v532 = vunpack.c.l.b16 %v420
        %v533 = vunpack.c.l.b16 %v421
        %v534 = vunpack.c.l.b16 %v422
        %v535 = vunpack.c.l.b16 %v423
        %v536 = vunpack.c.l.b16 %v424
        %v537 = vunpack.c.l.b16 %v425
        %v538 = vunpack.c.l.b16 %v426
        %v539 = vpack.c.b16 %v532, %v531
        %v540 = vpack.c.b16 %v534, %v533
        %v541 = vpack.c.b16 %v536, %v535
        %v542 = vpack.c.b16 %v538, %v537
        %v548 = vsel %vm472, %v522, 0
        %550 = vmatprep.subr.bf16.mxu0 0
        %551 = vmatpush1.bf16.msra.mxu0 %v539
        %552 = vmatprep.subr.bf16.mxu0 0
        %553 = vmatpush1.bf16.msra.mxu0 %v540
        %554 = vmatprep.subr.bf16.mxu0 0
        %555 = vmatpush1.bf16.msra.mxu0 %v541
        %556 = vmatprep.subr.bf16.mxu0 0
        %557 = vmatpush1.bf16.msra.mxu0 %v542
        %558 = vmatprep.subr.bf16.mxu0 0
        %559 = vmatpush1.bf16.msra.mxu0 0
        %560 = vmatprep.subr.bf16.mxu0 0
        %561 = vmatpush1.bf16.msra.mxu0 0
        %562 = vmatprep.subr.bf16.mxu0 0
        %563 = vmatpush1.bf16.msra.mxu0 0
        %564 = vmatprep.subr.bf16.mxu0 0
        %565 = vmatpush1.bf16.msra.mxu0 0
        %566 = vmatprep.subr.bf16.mxu0 0
        %567 = vmatpush1.bf16.msra.mxu0 0
        %568 = vmatprep.subr.bf16.mxu0 0
        %569 = vmatpush1.bf16.msra.mxu0 0
        %570 = vmatprep.subr.bf16.mxu0 0
        %571 = vmatpush1.bf16.msra.mxu0 0
        %572 = vmatprep.subr.bf16.mxu0 0
        %573 = vmatpush1.bf16.msra.mxu0 0
        %574 = vmatprep.subr.bf16.mxu0 0
        %575 = vmatpush1.bf16.msra.mxu0 0
        %576 = vmatprep.subr.bf16.mxu0 0
        %577 = vmatpush1.bf16.msra.mxu0 0
        %578 = vmatprep.subr.bf16.mxu0 0
        %579 = vmatpush1.bf16.msra.mxu0 0
        %580 = vmatprep.subr.bf16.mxu0 0
        %581 = vmatpush1.bf16.msra.mxu0 0
        %582 = vmatprep.mubr.bf16.mxu0 0
        %583 = vmatmul.mubr.bf16.gmra.mrb[0].mxu0 %v548
        %v584 = vpop.f32.mrb[0].mxu0
        %v585 = vadd.f32 %v511, %v584
        %v586 = vpop.f32.mrb[0].mxu0
        %v587 = vpop.f32.mrb[0].mxu0
        %v588 = vadd.f32 %v514, %v587
        %v589 = vpop.f32.mrb[0].mxu0
        %590 = vdwg.mxu0
        %v591 = vld [vmem:[#allocation7 + $0x40] sm:$0xf]
        %v592 = vld [vmem:[#allocation7 + $0x44] sm:$0xf]
        %v593 = vld [vmem:[#allocation7 + $0x48] sm:$0xf]
        %v594 = vld [vmem:[#allocation7 + $0x4c] sm:$0xf]
        %v595 = vld [vmem:[#allocation7 + $0x50] sm:$0xf]
        %v596 = vld [vmem:[#allocation7 + $0x54] sm:$0xf]
        %v597 = vld [vmem:[#allocation7 + $0x58] sm:$0xf]
        %v598 = vld [vmem:[#allocation7 + $0x5c] sm:$0xf]
        %v607 = vunpack.c.l.b16 %v591
        %v608 = vunpack.c.l.b16 %v592
        %v609 = vunpack.c.l.b16 %v593
        %v610 = vunpack.c.l.b16 %v594
        %v611 = vunpack.c.l.b16 %v595
        %v612 = vunpack.c.l.b16 %v596
        %v613 = vunpack.c.l.b16 %v597
        %v614 = vunpack.c.l.b16 %v598
        %v615 = vpack.c.b16 %v608, %v607
        %v616 = vpack.c.b16 %v610, %v609
        %v617 = vpack.c.b16 %v612, %v611
        %v618 = vpack.c.b16 %v614, %v613
        %v623 = vsel %vm472, %v418, 0
        %625 = vmatprep.subr.bf16.mxu0 0
        %626 = vmatpush1.bf16.msra.mxu0 %v615
        %627 = vmatprep.subr.bf16.mxu0 0
        %628 = vmatpush1.bf16.msra.mxu0 %v616
        %629 = vmatprep.subr.bf16.mxu0 0
        %630 = vmatpush1.bf16.msra.mxu0 %v617
        %631 = vmatprep.subr.bf16.mxu0 0
        %632 = vmatpush1.bf16.msra.mxu0 %v618
        %633 = vmatprep.subr.bf16.mxu0 0
        %634 = vmatpush1.bf16.msra.mxu0 0
        %635 = vmatprep.subr.bf16.mxu0 0
        %636 = vmatpush1.bf16.msra.mxu0 0
        %637 = vmatprep.subr.bf16.mxu0 0
        %638 = vmatpush1.bf16.msra.mxu0 0
        %639 = vmatprep.subr.bf16.mxu0 0
        %640 = vmatpush1.bf16.msra.mxu0 0
        %641 = vmatprep.subr.bf16.mxu0 0
        %642 = vmatpush1.bf16.msra.mxu0 0
        %643 = vmatprep.subr.bf16.mxu0 0
        %644 = vmatpush1.bf16.msra.mxu0 0
        %645 = vmatprep.subr.bf16.mxu0 0
        %646 = vmatpush1.bf16.msra.mxu0 0
        %647 = vmatprep.subr.bf16.mxu0 0
        %648 = vmatpush1.bf16.msra.mxu0 0
        %649 = vmatprep.subr.bf16.mxu0 0
        %650 = vmatpush1.bf16.msra.mxu0 0
        %651 = vmatprep.subr.bf16.mxu0 0
        %652 = vmatpush1.bf16.msra.mxu0 0
        %653 = vmatprep.subr.bf16.mxu0 0
        %654 = vmatpush1.bf16.msra.mxu0 0
        %655 = vmatprep.subr.bf16.mxu0 0
        %656 = vmatpush1.bf16.msra.mxu0 0
        %657 = vmatprep.mubr.bf16.mxu0 0
        %658 = vmatmul.mubr.bf16.gmra.mrb[0].mxu0 %v623
        %v659 = vpop.f32.mrb[0].mxu0
        %v660 = vadd.f32 0.0, %v659
        %v661 = vpop.f32.mrb[0].mxu0
        %v662 = vpop.f32.mrb[0].mxu0
        %v663 = vadd.f32 0.0, %v662
        %v664 = vpop.f32.mrb[0].mxu0
        %665 = vdwg.mxu0
        %v666 = vadd.f32 %v585, %v660
        %v667 = vadd.f32 %v588, %v663
        %v668 = vld [vmem:[#allocation8] sm:$0x1]
        %v670 = vlaneseq
        %v671 = vshrl.u32 %v670, 7
        %v672 = vsub.s32 0, %v671
        %v673 = vrot.slane %v668, %v672
        %v675 = vadd.f32 %v666, %v673
        %v676 = vadd.f32 %v667, %v673
        %s677 = smul.u32 %s33, 8
        %s678 = ssub.s32 %s677, 1
        %v679 = vlaneseq
        %v680 = vshrl.u32 %v679, 7
        %v681 = vadd.s32 %v680, 8
        %v682 = vstv %s678
        %v683 = vadd.s32 %v682, %v680
        %v684 = vadd.s32 %v682, %v681
        %vm685 = vcmp.ge.s32.totalorder %v683, 0
        %vm686 = vcmp.ge.s32.totalorder %v684, 0
        %vm687 = vcmp.lt.s32.totalorder %v683, 8
        %vm688 = vcmp.lt.s32.totalorder %v684, 8
        %vm689 = vmand %vm685, %vm687
        %vm690 = vmand %vm686, %vm688
        %v691 = vsel %vm689, 1, 0
        %v692 = vsel %vm690, 1, 0
        %vm693 = vcmp.eq.s32.totalorder %v691, 1
        %vm694 = vcmp.eq.s32.totalorder %v692, 1
        %v695 = vsel %vm693, %v675, 0.0
        %v696 = vsel %vm694, %v676, 0.0
        %v697 = vpack.c.bf16 %v696, %v695
        %v698 = vunpack.c.l.bf16 %v697
        %v699 = vunpack.c.h.bf16 %v697
        %vm700 = vcmp.ge.f32.partialorder %v698, 0.0
        %vm701 = vcmp.ge.f32.partialorder %v699, 0.0
        %v702 = vmul.f32 %v698, 0.1
        %v703 = vmul.f32 %v699, 0.1
        %v704 = vsel %vm700, %v698, %v702
        %v705 = vsel %vm701, %v699, %v703
        %v706 = vpack.c.bf16 %v705, %v704
        %v707 = vld [vmem:[#allocation10] sm:$0xf]
        %v708 = vld [vmem:[#allocation10 + $0x4] sm:$0xf]
        %v709 = vld [vmem:[#allocation10 + $0x8] sm:$0xf]
        %v710 = vld [vmem:[#allocation10 + $0xc] sm:$0xf]
        %v711 = vld [vmem:[#allocation10 + $0x10] sm:$0xf]
        %v712 = vld [vmem:[#allocation10 + $0x14] sm:$0xf]
        %v713 = vld [vmem:[#allocation10 + $0x18] sm:$0xf]
        %v714 = vld [vmem:[#allocation10 + $0x1c] sm:$0xf]
        %v715 = vld [vmem:[#allocation10 + $0x20] sm:$0xf]
        %v716 = vld [vmem:[#allocation10 + $0x24] sm:$0xf]
        %v717 = vld [vmem:[#allocation10 + $0x28] sm:$0xf]
        %v718 = vld [vmem:[#allocation10 + $0x2c] sm:$0xf]
        %v719 = vld [vmem:[#allocation10 + $0x30] sm:$0xf]
        %v720 = vld [vmem:[#allocation10 + $0x34] sm:$0xf]
        %v721 = vld [vmem:[#allocation10 + $0x38] sm:$0xf]
        %v722 = vld [vmem:[#allocation10 + $0x3c] sm:$0xf]
        %v724 = vshrl.u32 %v706, 16
        %v726 = vshll.u32 %v706, 16
        %v728 = vrot.slane %v726, 1
        %v729 = vor.u32 %v724, %v728
        %v738 = vunpack.c.l.b16 %v715
        %v739 = vunpack.c.l.b16 %v716
        %v740 = vunpack.c.l.b16 %v717
        %v741 = vunpack.c.l.b16 %v718
        %v742 = vunpack.c.l.b16 %v719
        %v743 = vunpack.c.l.b16 %v720
        %v744 = vunpack.c.l.b16 %v721
        %v745 = vunpack.c.l.b16 %v722
        %v746 = vpack.c.b16 %v739, %v738
        %v747 = vpack.c.b16 %v741, %v740
        %v748 = vpack.c.b16 %v743, %v742
        %v749 = vpack.c.b16 %v745, %v744
        %v755 = vsel %vm472, %v729, 0
        %757 = vmatprep.subr.bf16.mxu0 0
        %758 = vmatpush1.bf16.msra.mxu0 %v746
        %759 = vmatprep.subr.bf16.mxu0 0
        %760 = vmatpush1.bf16.msra.mxu0 %v747
        %761 = vmatprep.subr.bf16.mxu0 0
        %762 = vmatpush1.bf16.msra.mxu0 %v748
        %763 = vmatprep.subr.bf16.mxu0 0
        %764 = vmatpush1.bf16.msra.mxu0 %v749
        %765 = vmatprep.subr.bf16.mxu0 0
        %766 = vmatpush1.bf16.msra.mxu0 0
        %767 = vmatprep.subr.bf16.mxu0 0
        %768 = vmatpush1.bf16.msra.mxu0 0
        %769 = vmatprep.subr.bf16.mxu0 0
        %770 = vmatpush1.bf16.msra.mxu0 0
        %771 = vmatprep.subr.bf16.mxu0 0
        %772 = vmatpush1.bf16.msra.mxu0 0
        %773 = vmatprep.subr.bf16.mxu0 0
        %774 = vmatpush1.bf16.msra.mxu0 0
        %775 = vmatprep.subr.bf16.mxu0 0
        %776 = vmatpush1.bf16.msra.mxu0 0
        %777 = vmatprep.subr.bf16.mxu0 0
        %778 = vmatpush1.bf16.msra.mxu0 0
        %779 = vmatprep.subr.bf16.mxu0 0
        %780 = vmatpush1.bf16.msra.mxu0 0
        %781 = vmatprep.subr.bf16.mxu0 0
        %782 = vmatpush1.bf16.msra.mxu0 0
        %783 = vmatprep.subr.bf16.mxu0 0
        %784 = vmatpush1.bf16.msra.mxu0 0
        %785 = vmatprep.subr.bf16.mxu0 0
        %786 = vmatpush1.bf16.msra.mxu0 0
        %787 = vmatprep.subr.bf16.mxu0 0
        %788 = vmatpush1.bf16.msra.mxu0 0
        %789 = vmatprep.mubr.bf16.mxu0 0
        %790 = vmatmul.mubr.bf16.gmra.mrb[0].mxu0 %v755
        %v791 = vpop.f32.mrb[0].mxu0
        %v792 = vadd.f32 0.0, %v791
        %v793 = vpop.f32.mrb[0].mxu0
        %v794 = vpop.f32.mrb[0].mxu0
        %v795 = vpop.f32.mrb[0].mxu0
        %796 = vdwg.mxu0
        %v805 = vunpack.c.l.b16 %v707
        %v806 = vunpack.c.l.b16 %v708
        %v807 = vunpack.c.l.b16 %v709
        %v808 = vunpack.c.l.b16 %v710
        %v809 = vunpack.c.l.b16 %v711
        %v810 = vunpack.c.l.b16 %v712
        %v811 = vunpack.c.l.b16 %v713
        %v812 = vunpack.c.l.b16 %v714
        %v813 = vpack.c.b16 %v806, %v805
        %v814 = vpack.c.b16 %v808, %v807
        %v815 = vpack.c.b16 %v810, %v809
        %v816 = vpack.c.b16 %v812, %v811
        %v821 = vsel %vm472, %v706, 0
        %823 = vmatprep.subr.bf16.mxu0 0
        %824 = vmatpush1.bf16.msra.mxu0 %v813
        %825 = vmatprep.subr.bf16.mxu0 0
        %826 = vmatpush1.bf16.msra.mxu0 %v814
        %827 = vmatprep.subr.bf16.mxu0 0
        %828 = vmatpush1.bf16.msra.mxu0 %v815
        %829 = vmatprep.subr.bf16.mxu0 0
        %830 = vmatpush1.bf16.msra.mxu0 %v816
        %831 = vmatprep.subr.bf16.mxu0 0
        %832 = vmatpush1.bf16.msra.mxu0 0
        %833 = vmatprep.subr.bf16.mxu0 0
        %834 = vmatpush1.bf16.msra.mxu0 0
        %835 = vmatprep.subr.bf16.mxu0 0
        %836 = vmatpush1.bf16.msra.mxu0 0
        %837 = vmatprep.subr.bf16.mxu0 0
        %838 = vmatpush1.bf16.msra.mxu0 0
        %839 = vmatprep.subr.bf16.mxu0 0
        %840 = vmatpush1.bf16.msra.mxu0 0
        %841 = vmatprep.subr.bf16.mxu0 0
        %842 = vmatpush1.bf16.msra.mxu0 0
        %843 = vmatprep.subr.bf16.mxu0 0
        %844 = vmatpush1.bf16.msra.mxu0 0
        %845 = vmatprep.subr.bf16.mxu0 0
        %846 = vmatpush1.bf16.msra.mxu0 0
        %847 = vmatprep.subr.bf16.mxu0 0
        %848 = vmatpush1.bf16.msra.mxu0 0
        %849 = vmatprep.subr.bf16.mxu0 0
        %850 = vmatpush1.bf16.msra.mxu0 0
        %851 = vmatprep.subr.bf16.mxu0 0
        %852 = vmatpush1.bf16.msra.mxu0 0
        %853 = vmatprep.subr.bf16.mxu0 0
        %854 = vmatpush1.bf16.msra.mxu0 0
        %855 = vmatprep.mubr.bf16.mxu0 0
        %856 = vmatmul.mubr.bf16.gmra.mrb[0].mxu0 %v821
        %v857 = vpop.f32.mrb[0].mxu0
        %v858 = vadd.f32 %v792, %v857
        %v859 = vpop.f32.mrb[0].mxu0
        %v860 = vpop.f32.mrb[0].mxu0
        %v861 = vpop.f32.mrb[0].mxu0
        %862 = vdwg.mxu0
        %v863 = vld [vmem:[#allocation10 + $0x40] sm:$0xf]
        %v864 = vld [vmem:[#allocation10 + $0x44] sm:$0xf]
        %v865 = vld [vmem:[#allocation10 + $0x48] sm:$0xf]
        %v866 = vld [vmem:[#allocation10 + $0x4c] sm:$0xf]
        %v867 = vld [vmem:[#allocation10 + $0x50] sm:$0xf]
        %v868 = vld [vmem:[#allocation10 + $0x54] sm:$0xf]
        %v869 = vld [vmem:[#allocation10 + $0x58] sm:$0xf]
        %v870 = vld [vmem:[#allocation10 + $0x5c] sm:$0xf]
        %v872 = vrot.slane %v706, 1
        %v881 = vunpack.c.l.b16 %v863
        %v882 = vunpack.c.l.b16 %v864
        %v883 = vunpack.c.l.b16 %v865
        %v884 = vunpack.c.l.b16 %v866
        %v885 = vunpack.c.l.b16 %v867
        %v886 = vunpack.c.l.b16 %v868
        %v887 = vunpack.c.l.b16 %v869
        %v888 = vunpack.c.l.b16 %v870
        %v889 = vpack.c.b16 %v882, %v881
        %v890 = vpack.c.b16 %v884, %v883
        %v891 = vpack.c.b16 %v886, %v885
        %v892 = vpack.c.b16 %v888, %v887
        %v898 = vsel %vm472, %v872, 0
        %900 = vmatprep.subr.bf16.mxu0 0
        %901 = vmatpush1.bf16.msra.mxu0 %v889
        %902 = vmatprep.subr.bf16.mxu0 0
        %903 = vmatpush1.bf16.msra.mxu0 %v890
        %904 = vmatprep.subr.bf16.mxu0 0
        %905 = vmatpush1.bf16.msra.mxu0 %v891
        %906 = vmatprep.subr.bf16.mxu0 0
        %907 = vmatpush1.bf16.msra.mxu0 %v892
        %908 = vmatprep.subr.bf16.mxu0 0
        %909 = vmatpush1.bf16.msra.mxu0 0
        %910 = vmatprep.subr.bf16.mxu0 0
        %911 = vmatpush1.bf16.msra.mxu0 0
        %912 = vmatprep.subr.bf16.mxu0 0
        %913 = vmatpush1.bf16.msra.mxu0 0
        %914 = vmatprep.subr.bf16.mxu0 0
        %915 = vmatpush1.bf16.msra.mxu0 0
        %916 = vmatprep.subr.bf16.mxu0 0
        %917 = vmatpush1.bf16.msra.mxu0 0
        %918 = vmatprep.subr.bf16.mxu0 0
        %919 = vmatpush1.bf16.msra.mxu0 0
        %920 = vmatprep.subr.bf16.mxu0 0
        %921 = vmatpush1.bf16.msra.mxu0 0
        %922 = vmatprep.subr.bf16.mxu0 0
        %923 = vmatpush1.bf16.msra.mxu0 0
        %924 = vmatprep.subr.bf16.mxu0 0
        %925 = vmatpush1.bf16.msra.mxu0 0
        %926 = vmatprep.subr.bf16.mxu0 0
        %927 = vmatpush1.bf16.msra.mxu0 0
        %928 = vmatprep.subr.bf16.mxu0 0
        %929 = vmatpush1.bf16.msra.mxu0 0
        %930 = vmatprep.subr.bf16.mxu0 0
        %931 = vmatpush1.bf16.msra.mxu0 0
        %932 = vmatprep.mubr.bf16.mxu0 0
        %933 = vmatmul.mubr.bf16.gmra.mrb[0].mxu0 %v898
        %v934 = vpop.f32.mrb[0].mxu0
        %v935 = vadd.f32 0.0, %v934
        %v936 = vpop.f32.mrb[0].mxu0
        %v937 = vpop.f32.mrb[0].mxu0
        %v938 = vpop.f32.mrb[0].mxu0
        %939 = vdwg.mxu0
        %v940 = vadd.f32 %v858, %v935
        %v941 = vld [vmem:[#allocation11] sm:$0x1]
        %v943 = vlaneseq
        %v944 = vshrl.u32 %v943, 7
        %v945 = vsub.s32 0, %v944
        %v946 = vrot.slane %v941, %v945
        %v948 = vadd.f32 %v940, %v946
        %v949 = vunpack.c.l.bf16 %v383
        %v950 = vadd.f32 %v948, %v949
        %v951 = vpack.c.bf16 %v950, %v950
        %vm952 = vcmask 519168
        %953 = vst.msk [vmem:[%s381] sm:$0xf] %vm952, %v951
        %s954 = sand.u32 %s190, 1
        %s955 = scalar_lea.sflag [#allocation4], %s954
        %s956 = sand.u32 %s190, 1
        %s957 = smul.addr %s956, 4
        %s958 = scalar_lea.vmem [#allocation13], %s957
        // Predicated region
        $region69: #{_lambda_.20} parent=43 // pred_check
          %p959 = pneg %p200
        $region70: #{_lambda_.20} parent=43 // pred_check_branch
          %961 = sbr.rel (%p959) target = $region72
        $region71: #{_lambda_.20} parent=43 // pred_region
          %s963 = ssub.s32 64, 64
          %964 = vsyncadd %s955, %s963
          %s965 = sadd.s32 %s33, %s32
          %s966 = smul.addr %s965, 64
          %s967 = scalar_lea.hbm %s6, %s966
          %s969 = sshll.u32 %s958, 4
          %s970 = int_to_ptr.vmem [resolvable:$true] %s969
          %972 = dma.vmem_to_hbm [thread:$0]  %s970, 64, %s967, %s955
        $region72: #{_lambda_.20} parent=43 // pred_fallthru
          _
      $region44: #{_lambda_.20} parent=5 // pred_fallthru
        _
      %p973 = scmp.le.s32.totalorder 2, %s23
      // Predicated region
      $region73: #{_lambda_.20} parent=5 // pred_check
        %p974 = pneg %p973
      $region74: #{_lambda_.20} parent=5 // pred_check_branch
        %976 = sbr.rel (%p974) target = $region76
      $region75: #{_lambda_.20} parent=5 // pred_region
        %s977 = ssub.s32 %s23, 2
        // Predicated region
        $region77: #{_lambda_.20} parent=75 // pred_check
          %p978 = pneg %p206
        $region78: #{_lambda_.20} parent=75 // pred_check_branch
          %980 = sbr.rel (%p978) target = $region80
        $region79: #{_lambda_.20} parent=75 // pred_region
          %s981 = sand.u32 %s191, 1
          %s982 = scalar_lea.sflag [#allocation4], %s981
          %s983 = sand.u32 %s191, 1
          %s984 = smul.addr %s983, 4
          %s985 = scalar_lea.vmem [#allocation13], %s984
          %986 = dma.done %s982, 64
        $region80: #{_lambda_.20} parent=75 // pred_fallthru
          _
      $region76: #{_lambda_.20} parent=5 // pred_fallthru
        _
    $region6: #{_lambda_.20} parent=1 // loop_footer
      %s27 = sadd.s32 1, %s23
    $region7: #{_lambda_.20} parent=1 // loop_footer_branch
      %22 = sbr.rel target = $region3
    $region8: #{_lambda_.20} parent=1 // loop_exit
      _
    %987 = vsyncpa [#allocation3], 1
    %s988 = scalar_lea.sflag [#allocation3], 1
    %989 = vsyncpa %s988, 1
    %990 = vsyncpa [#allocation6], 1
    %s991 = scalar_lea.sflag [#allocation6], 1
    %992 = vsyncpa %s991, 1
    %993 = vsyncpa [#allocation9], 1
    %994 = vsyncpa [#allocation12], 1
    %995 = vsyncpa [#allocation4], 1
    %s996 = scalar_lea.sflag [#allocation4], 1
    %997 = vsyncpa %s996, 1

// kernel: _lambda_.23
$region0: #{_lambda_.23}
  #allocation0 [shape = 'u32[]', space=smem, size = 0x4, offset = 0x4, fixed_abs, tag = 'smem constant byte address 0x4 - core index']
  #allocation1 [shape = 'u32[144,128]{1,0:T(1,128)}', space=vmem, size = 0x12000, scoped, tag = 'internal scratch']
  %s0 = inlined_call_operand.hbm [shape: bf16[2,8,64], index: 0, kind: input, shape index: {}]
  %s1 = inlined_call_operand.hbm [shape: bf16[2,1,17,64], index: 1, kind: input, shape index: {}]
  %s2 = inlined_call_operand.hbm [shape: bf16[192,128], index: 2, kind: input, shape index: {}]
  %s3 = inlined_call_operand.hbm [shape: f32[1,128], index: 3, kind: input, shape index: {}]
  %s4 = inlined_call_operand.hbm [shape: bf16[2,8,128], index: 4, kind: output, shape index: {}]
  %s5 = sld [smem:[#allocation0]]
  $region65: #{_lambda_.23} parent=0
    _
  %s7 = ssub.s32 1, %s5
  %s8 = scalar_select 0, %s7, %s5
  $region1: #{_lambda_.23} parent=0
    #allocation2 [shape = 'u8[4096]{0}', space=vmem, size = 0x1000, scoped, tag = 'input window, operand 0']
    #allocation3 [shape = 's32[2]{0}', space=sflag, size = 0x8, scoped, tag = 'scoped memory for _lambda_.23']
    #allocation4 [shape = 's32[2]{0}', space=sflag, size = 0x8, scoped, tag = 'scoped memory for _lambda_.23']
    #allocation5 [shape = 'u8[12288]{0}', space=vmem, size = 0x3000, scoped, tag = 'input window, operand 1']
    #allocation6 [shape = 's32[2]{0}', space=sflag, size = 0x8, scoped, tag = 'scoped memory for _lambda_.23']
    #allocation7 [shape = 'u8[49152]{0}', space=vmem, size = 0xc000, scoped, tag = 'input window, operand 2, single buffered']
    #allocation8 [shape = 'u8[512]{0}', space=vmem, size = 0x400, scoped, tag = 'input window, operand 3, single buffered']
    #allocation9 [shape = 's32[1]{0}', space=sflag, size = 0x4, scoped, tag = 'scoped memory for _lambda_.23']
    #allocation10 [shape = 'u8[4096]{0}', space=vmem, size = 0x1000, scoped, tag = 'output window, operand 0']
    %9 = vsyncpa [#allocation3], 0
    %s10 = scalar_lea.sflag [#allocation3], 1
    %11 = vsyncpa %s10, 0
    %12 = vsyncpa [#allocation6], 0
    %s13 = scalar_lea.sflag [#allocation6], 1
    %14 = vsyncpa %s13, 0
    %15 = vsyncpa [#allocation9], 0
    %16 = vsyncpa [#allocation4], 0
    %s17 = scalar_lea.sflag [#allocation4], 1
    %18 = vsyncpa %s17, 0
    loop: start=0, step=1, limit=4
    $region2: #{_lambda_.23} parent=1 // loop_pre_header
      _
    $region3: #{_lambda_.23} parent=1 // loop_header
      %s20 = sphi 0, %s24
      %p21 = scmp.ge.s32.totalorder %s20, 4
      %s27 = sphi 0, %s39
      %s28 = sphi 0, %s35
      %s29 = sphi 0, %s27
      %s30 = sphi 0, %s28
      %s31 = sphi 0, %s29
      %s32 = sphi 0, %s30
      %s44 = sphi 0, %s46
      %s47 = sphi 0, %s44
      %s48 = sphi 0, %s47
      %s64 = sphi 0, %s48
      %s72 = sphi 0, %s74
      %s75 = sphi 0, %s72
      %s76 = sphi 0, %s75
      %s92 = sphi 0, %s76
      %s96 = sphi 0, %s96
      %s98 = sphi 0, %s96
      %s99 = sphi 0, %s98
      %s113 = sphi 0, %s99
      %s117 = sphi 0, %s117
      %s119 = sphi 0, %s117
      %s120 = sphi 0, %s119
      %s134 = sphi 0, %s120
      %s142 = sphi 0, %s144
      %s145 = sphi 0, %s142
      %s146 = sphi 0, %s145
      %s162 = sphi 0, %s146
    $region4: #{_lambda_.23} parent=1 // loop_header_branch
      %23 = sbr.rel (%p21) target = $region8
    $region5: #{_lambda_.23} parent=1 // loop_body
      %s25 = ssub.s32 %s20, 1
      %s26 = ssub.s32 %s20, 2
      %s33 = sadd.s32 1, %s28
      %p34 = scmp.ge.s32.totalorder %s33, 1
      %s35 = scalar_select %p34, 0, %s33
      %s36 = sadd.s32 1, %s27
      %s37 = scalar_select %p34, %s36, %s27
      %p38 = scmp.ge.s32.totalorder %s37, 2
      %s39 = scalar_select %p38, 0, %s37
      %s40 = ssub.s32 %s27, %s39
      %s41 = ssub.s32 %s28, %s35
      %s42 = sor.u32 %s40, %s41
      %p43 = scmp.eq.s32.totalorder %s42, 0
      %s45 = sadd.s32 %s44, 1
      %s46 = scalar_select %p43, %s44, %s45
      %p49 = pneg %p43
      %p50 = scmp.eq.s32.totalorder %s20, 1
      %p51 = por %p49, %p50
      %p52 = scmp.ne.s32.totalorder %s44, %s47
      %p53 = scmp.eq.s32.totalorder %s20, 0
      %p54 = por %p52, %p53
      %p55 = scmp.ne.s32.totalorder %s44, %s47
      %p56 = scmp.eq.s32.totalorder %s25, 1
      %p57 = por %p55, %p56
      %p58 = scmp.ne.s32.totalorder %s47, %s48
      %p59 = scmp.eq.s32.totalorder %s25, 0
      %p60 = por %p58, %p59
      %p61 = scmp.ne.s32.totalorder %s47, %s48
      %p62 = scmp.eq.s32.totalorder %s26, 1
      %p63 = por %p61, %p62
      %p65 = scmp.ne.s32.totalorder %s48, %s64
      %p66 = scmp.eq.s32.totalorder %s26, 0
      %p67 = por %p65, %p66
      %s68 = ssub.s32 %s27, %s39
      %s69 = ssub.s32 %s28, %s35
      %s70 = sor.u32 %s68, %s69
      %p71 = scmp.eq.s32.totalorder %s70, 0
      %s73 = sadd.s32 %s72, 1
      %s74 = scalar_select %p71, %s72, %s73
      %p77 = pneg %p71
      %p78 = scmp.eq.s32.totalorder %s20, 1
      %p79 = por %p77, %p78
      %p80 = scmp.ne.s32.totalorder %s72, %s75
      %p81 = scmp.eq.s32.totalorder %s20, 0
      %p82 = por %p80, %p81
      %p83 = scmp.ne.s32.totalorder %s72, %s75
      %p84 = scmp.eq.s32.totalorder %s25, 1
      %p85 = por %p83, %p84
      %p86 = scmp.ne.s32.totalorder %s75, %s76
      %p87 = scmp.eq.s32.totalorder %s25, 0
      %p88 = por %p86, %p87
      %p89 = scmp.ne.s32.totalorder %s75, %s76
      %p90 = scmp.eq.s32.totalorder %s26, 1
      %p91 = por %p89, %p90
      %p93 = scmp.ne.s32.totalorder %s76, %s92
      %p94 = scmp.eq.s32.totalorder %s26, 0
      %p95 = por %p93, %p94
      %s97 = sadd.s32 %s96, 1
      %p100 = scmp.eq.s32.totalorder %s20, 1
      %p101 = scmp.ne.s32.totalorder %s96, %s98
      %p102 = scmp.eq.s32.totalorder %s20, 0
      %p103 = por %p101, %p102
      %p104 = scmp.ne.s32.totalorder %s96, %s98
      %p105 = scmp.eq.s32.totalorder %s25, 1
      %p106 = por %p104, %p105
      %p107 = scmp.ne.s32.totalorder %s98, %s99
      %p108 = scmp.eq.s32.totalorder %s25, 0
      %p109 = por %p107, %p108
      %p110 = scmp.ne.s32.totalorder %s98, %s99
      %p111 = scmp.eq.s32.totalorder %s26, 1
      %p112 = por %p110, %p111
      %p114 = scmp.ne.s32.totalorder %s99, %s113
      %p115 = scmp.eq.s32.totalorder %s26, 0
      %p116 = por %p114, %p115
      %s118 = sadd.s32 %s117, 1
      %p121 = scmp.eq.s32.totalorder %s20, 1
      %p122 = scmp.ne.s32.totalorder %s117, %s119
      %p123 = scmp.eq.s32.totalorder %s20, 0
      %p124 = por %p122, %p123
      %p125 = scmp.ne.s32.totalorder %s117, %s119
      %p126 = scmp.eq.s32.totalorder %s25, 1
      %p127 = por %p125, %p126
      %p128 = scmp.ne.s32.totalorder %s119, %s120
      %p129 = scmp.eq.s32.totalorder %s25, 0
      %p130 = por %p128, %p129
      %p131 = scmp.ne.s32.totalorder %s119, %s120
      %p132 = scmp.eq.s32.totalorder %s26, 1
      %p133 = por %p131, %p132
      %p135 = scmp.ne.s32.totalorder %s120, %s134
      %p136 = scmp.eq.s32.totalorder %s26, 0
      %p137 = por %p135, %p136
      %s138 = ssub.s32 %s27, %s39
      %s139 = ssub.s32 %s28, %s35
      %s140 = sor.u32 %s138, %s139
      %p141 = scmp.eq.s32.totalorder %s140, 0
      %s143 = sadd.s32 %s142, 1
      %s144 = scalar_select %p141, %s142, %s143
      %p147 = pneg %p141
      %p148 = scmp.eq.s32.totalorder %s20, 1
      %p149 = por %p147, %p148
      %p150 = scmp.ne.s32.totalorder %s142, %s145
      %p151 = scmp.eq.s32.totalorder %s20, 0
      %p152 = por %p150, %p151
      %p153 = scmp.ne.s32.totalorder %s142, %s145
      %p154 = scmp.eq.s32.totalorder %s25, 1
      %p155 = por %p153, %p154
      %p156 = scmp.ne.s32.totalorder %s145, %s146
      %p157 = scmp.eq.s32.totalorder %s25, 0
      %p158 = por %p156, %p157
      %p159 = scmp.ne.s32.totalorder %s145, %s146
      %p160 = scmp.eq.s32.totalorder %s26, 1
      %p161 = por %p159, %p160
      %p163 = scmp.ne.s32.totalorder %s146, %s162
      %p164 = scmp.eq.s32.totalorder %s26, 0
      %p165 = por %p163, %p164
      %p166 = scmp.le.s32.totalorder 1, %s20
      %p167 = scmp.lt.s32.totalorder %s20, 3
      %p168 = pnand %p166, %p167
      %p169 = pneg %p168
      // Predicated region
      $region9: #{_lambda_.23} parent=5 // pred_check
        _
      $region10: #{_lambda_.23} parent=5 // pred_check_branch
        %171 = sbr.rel (%p168) target = $region12
      $region11: #{_lambda_.23} parent=5 // pred_region
        %s172 = ssub.s32 %s20, 1
        // Predicated region
        $region13: #{_lambda_.23} parent=11 // pred_check
          %p173 = pneg %p109
        $region14: #{_lambda_.23} parent=11 // pred_check_branch
          %175 = sbr.rel (%p173) target = $region16
        $region15: #{_lambda_.23} parent=11 // pred_region
          %s177 = ssub.s32 1536, 1536
          %178 = vsyncadd [#allocation6], %s177
          %s179 = sshll.u32 [#allocation7], 4
          %s180 = int_to_ptr.vmem [resolvable:$true] %s179
          %185 = dma.hbm_to_vmem [thread:$0]  %s2, 1536, %s180, [#allocation6], 64, 64, 4
        $region16: #{_lambda_.23} parent=11 // pred_fallthru
          _
        // Predicated region
        $region17: #{_lambda_.23} parent=11 // pred_check
          %p186 = pneg %p130
        $region18: #{_lambda_.23} parent=11 // pred_check_branch
          %188 = sbr.rel (%p186) target = $region20
        $region19: #{_lambda_.23} parent=11 // pred_region
          %s190 = ssub.s32 16, 16
          %191 = vsyncadd [#allocation9], %s190
          %s193 = sshll.u32 [#allocation8], 4
          %s194 = int_to_ptr.vmem [resolvable:$true] %s193
          %196 = dma.hbm_to_vmem [thread:$0]  %s3, 16, %s194, [#allocation9]
        $region20: #{_lambda_.23} parent=11 // pred_fallthru
          _
      $region12: #{_lambda_.23} parent=5 // pred_fallthru
        _
      %p197 = scmp.lt.s32.totalorder %s20, 2
      // Predicated region
      $region21: #{_lambda_.23} parent=5 // pred_check
        %p198 = pneg %p197
      $region22: #{_lambda_.23} parent=5 // pred_check_branch
        %200 = sbr.rel (%p198) target = $region24
      $region23: #{_lambda_.23} parent=5 // pred_region
        // Predicated region
        $region25: #{_lambda_.23} parent=23 // pred_check
          %p201 = pneg %p54
        $region26: #{_lambda_.23} parent=23 // pred_check_branch
          %203 = sbr.rel (%p201) target = $region28
        $region27: #{_lambda_.23} parent=23 // pred_region
          %s204 = sand.u32 %s44, 1
          %s205 = scalar_lea.sflag [#allocation3], %s204
          %s206 = sand.u32 %s44, 1
          %s207 = smul.addr %s206, 4
          %s208 = scalar_lea.vmem [#allocation2], %s207
          %s210 = ssub.s32 64, 64
          %211 = vsyncadd %s205, %s210
          %s212 = sadd.s32 %s28, %s27
          %s213 = smul.addr %s212, 64
          %s214 = scalar_lea.hbm %s0, %s213
          %s216 = sshll.u32 %s208, 4
          %s217 = int_to_ptr.vmem [resolvable:$true] %s216
          %219 = dma.hbm_to_vmem [thread:$0]  %s214, 64, %s217, %s205
        $region28: #{_lambda_.23} parent=23 // pred_fallthru
          _
        // Predicated region
        $region29: #{_lambda_.23} parent=23 // pred_check
          %p220 = pneg %p82
        $region30: #{_lambda_.23} parent=23 // pred_check_branch
          %222 = sbr.rel (%p220) target = $region32
        $region31: #{_lambda_.23} parent=23 // pred_region
          %s223 = sand.u32 %s20, 1
          %s224 = scalar_lea.sflag [#allocation6], %s223
          %s225 = sand.u32 %s72, 1
          %s226 = smul.addr %s225, 12
          %s227 = scalar_lea.vmem [#allocation5], %s226
          %s229 = ssub.s32 192, 192
          %230 = vsyncadd %s224, %s229
          %s231 = smul.addr %s28, 3
          %s232 = smul.addr %s27, 3
          %s233 = sadd.s32 %s231, %s232
          %s234 = smul.addr %s233, 64
          %s235 = scalar_lea.hbm %s1, %s234
          %s236 = sshll.u32 %s227, 4
          %s237 = int_to_ptr.vmem [resolvable:$true] %s236
          %242 = dma.hbm_to_vmem [thread:$0]  %s235, 192, %s237, %s224, 64, 64, 4
        $region32: #{_lambda_.23} parent=23 // pred_fallthru
          _
      $region24: #{_lambda_.23} parent=5 // pred_fallthru
        _
      %p243 = scmp.le.s32.totalorder 1, %s20
      %p244 = scmp.lt.s32.totalorder %s20, 3
      %p245 = pnand %p243, %p244
      %p246 = pneg %p245
      // Predicated region
      $region33: #{_lambda_.23} parent=5 // pred_check
        _
      $region34: #{_lambda_.23} parent=5 // pred_check_branch
        %248 = sbr.rel (%p245) target = $region36
      $region35: #{_lambda_.23} parent=5 // pred_region
        %s249 = ssub.s32 %s20, 1
        %s250 = sand.u32 %s47, 1
        %s251 = scalar_lea.sflag [#allocation3], %s250
        %s252 = sand.u32 %s47, 1
        %s253 = smul.addr %s252, 4
        %s254 = scalar_lea.vmem [#allocation2], %s253
        // Predicated region
        $region37: #{_lambda_.23} parent=35 // pred_check
          %p255 = pneg %p60
        $region38: #{_lambda_.23} parent=35 // pred_check_branch
          %257 = sbr.rel (%p255) target = $region40
        $region39: #{_lambda_.23} parent=35 // pred_region
          %258 = dma.done %s251, 64
        $region40: #{_lambda_.23} parent=35 // pred_fallthru
          _
        %s259 = sand.u32 %s25, 1
        %s260 = scalar_lea.sflag [#allocation6], %s259
        %s261 = sand.u32 %s75, 1
        %s262 = smul.addr %s261, 12
        %s263 = scalar_lea.vmem [#allocation5], %s262
        // Predicated region
        $region41: #{_lambda_.23} parent=35 // pred_check
          %p264 = pneg %p88
        $region42: #{_lambda_.23} parent=35 // pred_check_branch
          %266 = sbr.rel (%p264) target = $region44
        $region43: #{_lambda_.23} parent=35 // pred_region
          %267 = dma.done %s260, 192
        $region44: #{_lambda_.23} parent=35 // pred_fallthru
          _
        // Predicated region
        $region45: #{_lambda_.23} parent=35 // pred_check
          %p268 = pneg %p109
        $region46: #{_lambda_.23} parent=35 // pred_check_branch
          %270 = sbr.rel (%p268) target = $region48
        $region47: #{_lambda_.23} parent=35 // pred_region
          %271 = dma.done [#allocation6], 1536
        $region48: #{_lambda_.23} parent=35 // pred_fallthru
          _
        // Predicated region
        $region49: #{_lambda_.23} parent=35 // pred_check
          %p272 = pneg %p130
        $region50: #{_lambda_.23} parent=35 // pred_check_branch
          %274 = sbr.rel (%p272) target = $region52
        $region51: #{_lambda_.23} parent=35 // pred_region
          %275 = dma.done [#allocation9], 16
        $region52: #{_lambda_.23} parent=35 // pred_fallthru
          _
        %s276 = sand.u32 %s47, 1
        %s277 = scalar_lea.sflag [#allocation3], %s276
        %s278 = sand.u32 %s47, 1
        %s279 = smul.addr %s278, 4
        %s280 = scalar_lea.vmem [#allocation2], %s279
        %p281 = pneg %p60
        %p282 = pneg %p57
        %s283 = sand.u32 %s25, 1
        %s284 = scalar_lea.sflag [#allocation6], %s283
        %s285 = sand.u32 %s75, 1
        %s286 = smul.addr %s285, 12
        %s287 = scalar_lea.vmem [#allocation5], %s286
        %p288 = pneg %p88
        %p289 = pneg %p85
        %p290 = pneg %p109
        %p291 = pneg %p106
        %p292 = pneg %p130
        %p293 = pneg %p127
        %p294 = pneg %p158
        %p295 = pneg %p155
        %s296 = sand.u32 %s145, 1
        %s297 = scalar_lea.sflag [#allocation4], %s296
        %s298 = sand.u32 %s145, 1
        %s299 = smul.addr %s298, 4
        %s300 = scalar_lea.vmem [#allocation10], %s299
        %v302 = vld [vmem:[%s254] sm:$0xf]
        %v303 = vld [vmem:[%s263] sm:$0xf]
        %v304 = vld [vmem:[%s263 + $0x4] sm:$0xf]
        %v305 = vld [vmem:[%s263 + $0x8] sm:$0x1]
        %v308 = vunpack.c.l.b16 %v303
        %v309 = vunpack.c.l.b16 %v304
        %v310 = vpack.c.b16 %v309, %v308
        %v313 = vunpack.c.l.b16 %v305
        %v314 = vpack.c.b16 %v313, %v313
        %vm315 = vcmask 1043456
        %v318 = vsel %vm315, %v302, %v314
        %v320 = vunpack.c.l.bf16 %v310
        %v321 = vunpack.c.h.bf16 %v310
        %v322 = vunpack.c.l.bf16 %v318
        %v323 = vunpack.c.h.bf16 %v318
        %vm324 = vcmp.ge.f32.partialorder %v320, 0.0
        %vm325 = vcmp.ge.f32.partialorder %v321, 0.0
        %vm326 = vcmp.ge.f32.partialorder %v322, 0.0
        %vm327 = vcmp.ge.f32.partialorder %v323, 0.0
        %v328 = vmul.f32 %v320, 0.1
        %v329 = vmul.f32 %v321, 0.1
        %v330 = vmul.f32 %v322, 0.1
        %v331 = vmul.f32 %v323, 0.1
        %v332 = vsel %vm324, %v320, %v328
        %v333 = vsel %vm325, %v321, %v329
        %v334 = vsel %vm326, %v322, %v330
        %v335 = vsel %vm327, %v323, %v331
        %v336 = vpack.c.bf16 %v333, %v332
        %v337 = vpack.c.bf16 %v335, %v334
        %v338 = vld [vmem:[#allocation7] sm:$0xf]
        %v339 = vld [vmem:[#allocation7 + $0x4] sm:$0xf]
        %v340 = vld [vmem:[#allocation7 + $0x8] sm:$0xf]
        %v341 = vld [vmem:[#allocation7 + $0xc] sm:$0xf]
        %v342 = vld [vmem:[#allocation7 + $0x10] sm:$0xf]
        %v343 = vld [vmem:[#allocation7 + $0x14] sm:$0xf]
        %v344 = vld [vmem:[#allocation7 + $0x18] sm:$0xf]
        %v345 = vld [vmem:[#allocation7 + $0x1c] sm:$0xf]
        %v346 = vld [vmem:[#allocation7 + $0x20] sm:$0xf]
        %v347 = vld [vmem:[#allocation7 + $0x24] sm:$0xf]
        %v348 = vld [vmem:[#allocation7 + $0x28] sm:$0xf]
        %v349 = vld [vmem:[#allocation7 + $0x2c] sm:$0xf]
        %v350 = vld [vmem:[#allocation7 + $0x30] sm:$0xf]
        %v351 = vld [vmem:[#allocation7 + $0x34] sm:$0xf]
        %v352 = vld [vmem:[#allocation7 + $0x38] sm:$0xf]
        %v353 = vld [vmem:[#allocation7 + $0x3c] sm:$0xf]
        %v362 = vunpack.c.l.b16 %v346
        %v363 = vunpack.c.l.b16 %v347
        %v364 = vunpack.c.l.b16 %v348
        %v365 = vunpack.c.l.b16 %v349
        %v366 = vunpack.c.l.b16 %v350
        %v367 = vunpack.c.l.b16 %v351
        %v368 = vunpack.c.l.b16 %v352
        %v369 = vunpack.c.l.b16 %v353
        %v370 = vpack.c.b16 %v363, %v362
        %v371 = vpack.c.b16 %v365, %v364
        %v372 = vpack.c.b16 %v367, %v366
        %v373 = vpack.c.b16 %v369, %v368
        %vm378 = vcmask 523264
        %v380 = vsel %vm378, %v337, 0
        %382 = vmatprep.subr.bf16.mxu0 0
        %383 = vmatpush1.bf16.msra.mxu0 %v370
        %384 = vmatprep.subr.bf16.mxu0 0
        %385 = vmatpush1.bf16.msra.mxu0 %v371
        %386 = vmatprep.subr.bf16.mxu0 0
        %387 = vmatpush1.bf16.msra.mxu0 %v372
        %388 = vmatprep.subr.bf16.mxu0 0
        %389 = vmatpush1.bf16.msra.mxu0 %v373
        %390 = vmatprep.subr.bf16.mxu0 0
        %391 = vmatpush1.bf16.msra.mxu0 0
        %392 = vmatprep.subr.bf16.mxu0 0
        %393 = vmatpush1.bf16.msra.mxu0 0
        %394 = vmatprep.subr.bf16.mxu0 0
        %395 = vmatpush1.bf16.msra.mxu0 0
        %396 = vmatprep.subr.bf16.mxu0 0
        %397 = vmatpush1.bf16.msra.mxu0 0
        %398 = vmatprep.subr.bf16.mxu0 0
        %399 = vmatpush1.bf16.msra.mxu0 0
        %400 = vmatprep.subr.bf16.mxu0 0
        %401 = vmatpush1.bf16.msra.mxu0 0
        %402 = vmatprep.subr.bf16.mxu0 0
        %403 = vmatpush1.bf16.msra.mxu0 0
        %404 = vmatprep.subr.bf16.mxu0 0
        %405 = vmatpush1.bf16.msra.mxu0 0
        %406 = vmatprep.subr.bf16.mxu0 0
        %407 = vmatpush1.bf16.msra.mxu0 0
        %408 = vmatprep.subr.bf16.mxu0 0
        %409 = vmatpush1.bf16.msra.mxu0 0
        %410 = vmatprep.subr.bf16.mxu0 0
        %411 = vmatpush1.bf16.msra.mxu0 0
        %412 = vmatprep.subr.bf16.mxu0 0
        %413 = vmatpush1.bf16.msra.mxu0 0
        %414 = vmatprep.mubr.bf16.mxu0 0
        %415 = vmatmul.mubr.bf16.gmra.mrb[0].mxu0 %v380
        %v416 = vpop.f32.mrb[0].mxu0
        %v417 = vadd.f32 0.0, %v416
        %v418 = vpop.f32.mrb[0].mxu0
        %v419 = vpop.f32.mrb[0].mxu0
        %v420 = vpop.f32.mrb[0].mxu0
        %421 = vdwg.mxu0
        %vm422 = vsmask.f32 256
        %v424 = vshrl.u32 %v336, 16
        %v426 = vrot.slane %v424, 7
        %v427 = vshrl.u32 %v337, 16
        %v429 = vrot.slane %v427, 7
        %v430 = vshll.u32 %v337, 16
        %v432 = vor.u32 %v429, %v430
        %v433 = vsel %vm422, %v426, %v432
        %v442 = vunpack.c.l.b16 %v338
        %v443 = vunpack.c.l.b16 %v339
        %v444 = vunpack.c.l.b16 %v340
        %v445 = vunpack.c.l.b16 %v341
        %v446 = vunpack.c.l.b16 %v342
        %v447 = vunpack.c.l.b16 %v343
        %v448 = vunpack.c.l.b16 %v344
        %v449 = vunpack.c.l.b16 %v345
        %v450 = vpack.c.b16 %v443, %v442
        %v451 = vpack.c.b16 %v445, %v444
        %v452 = vpack.c.b16 %v447, %v446
        %v453 = vpack.c.b16 %v449, %v448
        %v459 = vsel %vm378, %v433, 0
        %461 = vmatprep.subr.bf16.mxu0 0
        %462 = vmatpush1.bf16.msra.mxu0 %v450
        %463 = vmatprep.subr.bf16.mxu0 0
        %464 = vmatpush1.bf16.msra.mxu0 %v451
        %465 = vmatprep.subr.bf16.mxu0 0
        %466 = vmatpush1.bf16.msra.mxu0 %v452
        %467 = vmatprep.subr.bf16.mxu0 0
        %468 = vmatpush1.bf16.msra.mxu0 %v453
        %469 = vmatprep.subr.bf16.mxu0 0
        %470 = vmatpush1.bf16.msra.mxu0 0
        %471 = vmatprep.subr.bf16.mxu0 0
        %472 = vmatpush1.bf16.msra.mxu0 0
        %473 = vmatprep.subr.bf16.mxu0 0
        %474 = vmatpush1.bf16.msra.mxu0 0
        %475 = vmatprep.subr.bf16.mxu0 0
        %476 = vmatpush1.bf16.msra.mxu0 0
        %477 = vmatprep.subr.bf16.mxu0 0
        %478 = vmatpush1.bf16.msra.mxu0 0
        %479 = vmatprep.subr.bf16.mxu0 0
        %480 = vmatpush1.bf16.msra.mxu0 0
        %481 = vmatprep.subr.bf16.mxu0 0
        %482 = vmatpush1.bf16.msra.mxu0 0
        %483 = vmatprep.subr.bf16.mxu0 0
        %484 = vmatpush1.bf16.msra.mxu0 0
        %485 = vmatprep.subr.bf16.mxu0 0
        %486 = vmatpush1.bf16.msra.mxu0 0
        %487 = vmatprep.subr.bf16.mxu0 0
        %488 = vmatpush1.bf16.msra.mxu0 0
        %489 = vmatprep.subr.bf16.mxu0 0
        %490 = vmatpush1.bf16.msra.mxu0 0
        %491 = vmatprep.subr.bf16.mxu0 0
        %492 = vmatpush1.bf16.msra.mxu0 0
        %493 = vmatprep.mubr.bf16.mxu0 0
        %494 = vmatmul.mubr.bf16.gmra.mrb[0].mxu0 %v459
        %v495 = vpop.f32.mrb[0].mxu0
        %v496 = vadd.f32 %v417, %v495
        %v497 = vpop.f32.mrb[0].mxu0
        %v498 = vpop.f32.mrb[0].mxu0
        %v499 = vpop.f32.mrb[0].mxu0
        %500 = vdwg.mxu0
        %v501 = vld [vmem:[#allocation7 + $0x40] sm:$0xf]
        %v502 = vld [vmem:[#allocation7 + $0x44] sm:$0xf]
        %v503 = vld [vmem:[#allocation7 + $0x48] sm:$0xf]
        %v504 = vld [vmem:[#allocation7 + $0x4c] sm:$0xf]
        %v505 = vld [vmem:[#allocation7 + $0x50] sm:$0xf]
        %v506 = vld [vmem:[#allocation7 + $0x54] sm:$0xf]
        %v507 = vld [vmem:[#allocation7 + $0x58] sm:$0xf]
        %v508 = vld [vmem:[#allocation7 + $0x5c] sm:$0xf]
        %v509 = vrot.slane %v430, 1
        %v510 = vor.u32 %v427, %v509
        %v519 = vunpack.c.l.b16 %v501
        %v520 = vunpack.c.l.b16 %v502
        %v521 = vunpack.c.l.b16 %v503
        %v522 = vunpack.c.l.b16 %v504
        %v523 = vunpack.c.l.b16 %v505
        %v524 = vunpack.c.l.b16 %v506
        %v525 = vunpack.c.l.b16 %v507
        %v526 = vunpack.c.l.b16 %v508
        %v527 = vpack.c.b16 %v520, %v519
        %v528 = vpack.c.b16 %v522, %v521
        %v529 = vpack.c.b16 %v524, %v523
        %v530 = vpack.c.b16 %v526, %v525
        %v536 = vsel %vm378, %v510, 0
        %538 = vmatprep.subr.bf16.mxu0 0
        %539 = vmatpush1.bf16.msra.mxu0 %v527
        %540 = vmatprep.subr.bf16.mxu0 0
        %541 = vmatpush1.bf16.msra.mxu0 %v528
        %542 = vmatprep.subr.bf16.mxu0 0
        %543 = vmatpush1.bf16.msra.mxu0 %v529
        %544 = vmatprep.subr.bf16.mxu0 0
        %545 = vmatpush1.bf16.msra.mxu0 %v530
        %546 = vmatprep.subr.bf16.mxu0 0
        %547 = vmatpush1.bf16.msra.mxu0 0
        %548 = vmatprep.subr.bf16.mxu0 0
        %549 = vmatpush1.bf16.msra.mxu0 0
        %550 = vmatprep.subr.bf16.mxu0 0
        %551 = vmatpush1.bf16.msra.mxu0 0
        %552 = vmatprep.subr.bf16.mxu0 0
        %553 = vmatpush1.bf16.msra.mxu0 0
        %554 = vmatprep.subr.bf16.mxu0 0
        %555 = vmatpush1.bf16.msra.mxu0 0
        %556 = vmatprep.subr.bf16.mxu0 0
        %557 = vmatpush1.bf16.msra.mxu0 0
        %558 = vmatprep.subr.bf16.mxu0 0
        %559 = vmatpush1.bf16.msra.mxu0 0
        %560 = vmatprep.subr.bf16.mxu0 0
        %561 = vmatpush1.bf16.msra.mxu0 0
        %562 = vmatprep.subr.bf16.mxu0 0
        %563 = vmatpush1.bf16.msra.mxu0 0
        %564 = vmatprep.subr.bf16.mxu0 0
        %565 = vmatpush1.bf16.msra.mxu0 0
        %566 = vmatprep.subr.bf16.mxu0 0
        %567 = vmatpush1.bf16.msra.mxu0 0
        %568 = vmatprep.subr.bf16.mxu0 0
        %569 = vmatpush1.bf16.msra.mxu0 0
        %570 = vmatprep.mubr.bf16.mxu0 0
        %571 = vmatmul.mubr.bf16.gmra.mrb[0].mxu0 %v536
        %v572 = vpop.f32.mrb[0].mxu0
        %v573 = vadd.f32 0.0, %v572
        %v574 = vpop.f32.mrb[0].mxu0
        %v575 = vpop.f32.mrb[0].mxu0
        %v576 = vpop.f32.mrb[0].mxu0
        %577 = vdwg.mxu0
        %v578 = vadd.f32 %v496, %v573
        %v579 = vld [vmem:[#allocation8] sm:$0x1]
        %v581 = vlaneseq
        %v582 = vshrl.u32 %v581, 7
        %v583 = vsub.s32 0, %v582
        %v584 = vrot.slane %v579, %v583
        %v586 = vadd.f32 %v578, %v584
        %v587 = vpack.c.bf16 %v586, %v586
        %588 = vst [vmem:[%s300] sm:$0xf] %v587
        %s589 = sand.u32 %s145, 1
        %s590 = scalar_lea.sflag [#allocation4], %s589
        %s591 = sand.u32 %s145, 1
        %s592 = smul.addr %s591, 4
        %s593 = scalar_lea.vmem [#allocation10], %s592
        // Predicated region
        $region53: #{_lambda_.23} parent=35 // pred_check
          %p594 = pneg %p155
        $region54: #{_lambda_.23} parent=35 // pred_check_branch
          %596 = sbr.rel (%p594) target = $region56
        $region55: #{_lambda_.23} parent=35 // pred_region
          %s598 = ssub.s32 64, 64
          %599 = vsyncadd %s590, %s598
          %s600 = sadd.s32 %s30, %s29
          %s601 = smul.addr %s600, 64
          %s602 = scalar_lea.hbm %s4, %s601
          %s604 = sshll.u32 %s593, 4
          %s605 = int_to_ptr.vmem [resolvable:$true] %s604
          %607 = dma.vmem_to_hbm [thread:$0]  %s605, 64, %s602, %s590
        $region56: #{_lambda_.23} parent=35 // pred_fallthru
          _
      $region36: #{_lambda_.23} parent=5 // pred_fallthru
        _
      %p608 = scmp.le.s32.totalorder 2, %s20
      // Predicated region
      $region57: #{_lambda_.23} parent=5 // pred_check
        %p609 = pneg %p608
      $region58: #{_lambda_.23} parent=5 // pred_check_branch
        %611 = sbr.rel (%p609) target = $region60
      $region59: #{_lambda_.23} parent=5 // pred_region
        %s612 = ssub.s32 %s20, 2
        // Predicated region
        $region61: #{_lambda_.23} parent=59 // pred_check
          %p613 = pneg %p161
        $region62: #{_lambda_.23} parent=59 // pred_check_branch
          %615 = sbr.rel (%p613) target = $region64
        $region63: #{_lambda_.23} parent=59 // pred_region
          %s616 = sand.u32 %s146, 1
          %s617 = scalar_lea.sflag [#allocation4], %s616
          %s618 = sand.u32 %s146, 1
          %s619 = smul.addr %s618, 4
          %s620 = scalar_lea.vmem [#allocation10], %s619
          %621 = dma.done %s617, 64
        $region64: #{_lambda_.23} parent=59 // pred_fallthru
          _
      $region60: #{_lambda_.23} parent=5 // pred_fallthru
        _
    $region6: #{_lambda_.23} parent=1 // loop_footer
      %s24 = sadd.s32 1, %s20
    $region7: #{_lambda_.23} parent=1 // loop_footer_branch
      %19 = sbr.rel target = $region3
    $region8: #{_lambda_.23} parent=1 // loop_exit
      _
    %622 = vsyncpa [#allocation3], 1
    %s623 = scalar_lea.sflag [#allocation3], 1
    %624 = vsyncpa %s623, 1
    %625 = vsyncpa [#allocation6], 1
    %s626 = scalar_lea.sflag [#allocation6], 1
    %627 = vsyncpa %s626, 1
    %628 = vsyncpa [#allocation9], 1
    %629 = vsyncpa [#allocation4], 1
    %s630 = scalar_lea.sflag [#allocation4], 1
    %631 = vsyncpa %s630, 1

// kernel: _lambda_.22
$region0: #{_lambda_.22}
  #allocation0 [shape = 'u32[]', space=smem, size = 0x4, offset = 0x4, fixed_abs, tag = 'smem constant byte address 0x4 - core index']
  #allocation1 [shape = 'u32[144,128]{1,0:T(1,128)}', space=vmem, size = 0x12000, scoped, tag = 'internal scratch']
  %s0 = inlined_call_operand.hbm [shape: bf16[2,8,64], index: 0, kind: input, shape index: {}]
  %s1 = inlined_call_operand.hbm [shape: bf16[2,1,19,64], index: 1, kind: input, shape index: {}]
  %s2 = inlined_call_operand.hbm [shape: bf16[320,64], index: 2, kind: input, shape index: {}]
  %s3 = inlined_call_operand.hbm [shape: f32[1,64], index: 3, kind: input, shape index: {}, may-alias: {3,5}]
  %s4 = inlined_call_operand.hbm [shape: bf16[192,64], index: 4, kind: input, shape index: {}]
  %s5 = inlined_call_operand.hbm [shape: f32[1,64], index: 5, kind: input, shape index: {}, may-alias: {3,5}]
  %s6 = inlined_call_operand.hbm [shape: bf16[2,8,64], index: 6, kind: input, shape index: {}]
  %s7 = inlined_call_operand.hbm [shape: bf16[2,8,64], index: 7, kind: output, shape index: {}]
  %s8 = sld [smem:[#allocation0]]
  $region89: #{_lambda_.22} parent=0
    _
  %s10 = ssub.s32 1, %s8
  %s11 = scalar_select 0, %s10, %s8
  $region1: #{_lambda_.22} parent=0
    #allocation2 [shape = 'u8[4096]{0}', space=vmem, size = 0x1000, scoped, tag = 'input window, operand 0']
    #allocation3 [shape = 's32[2]{0}', space=sflag, size = 0x8, scoped, tag = 'scoped memory for _lambda_.22']
    #allocation4 [shape = 's32[2]{0}', space=sflag, size = 0x8, scoped, tag = 'scoped memory for _lambda_.22']
    #allocation5 [shape = 'u8[12288]{0}', space=vmem, size = 0x3000, scoped, tag = 'input window, operand 1']
    #allocation6 [shape = 's32[2]{0}', space=sflag, size = 0x8, scoped, tag = 'scoped memory for _lambda_.22']
    #allocation7 [shape = 'u8[81920]{0}', space=vmem, size = 0x14000, scoped, tag = 'input window, operand 2, single buffered']
    #allocation8 [shape = 'u8[512]{0}', space=vmem, size = 0x400, scoped, tag = 'input window, operand 3, single buffered']
    #allocation9 [shape = 's32[1]{0}', space=sflag, size = 0x4, scoped, tag = 'scoped memory for _lambda_.22']
    #allocation10 [shape = 'u8[49152]{0}', space=vmem, size = 0xc000, scoped, tag = 'input window, operand 4, single buffered']
    #allocation11 [shape = 'u8[512]{0}', space=vmem, size = 0x400, scoped, tag = 'input window, operand 5, single buffered']
    #allocation12 [shape = 's32[1]{0}', space=sflag, size = 0x4, scoped, tag = 'scoped memory for _lambda_.22']
    #allocation13 [shape = 'u8[4096]{0}', space=vmem, size = 0x1000, scoped, tag = 'input window, operand 6']
    #allocation14 [shape = 'u8[4096]{0}', space=vmem, size = 0x1000, scoped, tag = 'output window, operand 0']
    %12 = vsyncpa [#allocation3], 0
    %s13 = scalar_lea.sflag [#allocation3], 1
    %14 = vsyncpa %s13, 0
    %15 = vsyncpa [#allocation6], 0
    %s16 = scalar_lea.sflag [#allocation6], 1
    %17 = vsyncpa %s16, 0
    %18 = vsyncpa [#allocation9], 0
    %19 = vsyncpa [#allocation12], 0
    %20 = vsyncpa [#allocation4], 0
    %s21 = scalar_lea.sflag [#allocation4], 1
    %22 = vsyncpa %s21, 0
    loop: start=0, step=1, limit=4
    $region2: #{_lambda_.22} parent=1 // loop_pre_header
      _
    $region3: #{_lambda_.22} parent=1 // loop_header
      %s24 = sphi 0, %s28
      %p25 = scmp.ge.s32.totalorder %s24, 4
      %s31 = sphi 0, %s43
      %s32 = sphi 0, %s39
      %s33 = sphi 0, %s31
      %s34 = sphi 0, %s32
      %s35 = sphi 0, %s33
      %s36 = sphi 0, %s34
      %s48 = sphi 0, %s50
      %s51 = sphi 0, %s48
      %s52 = sphi 0, %s51
      %s68 = sphi 0, %s52
      %s76 = sphi 0, %s78
      %s79 = sphi 0, %s76
      %s80 = sphi 0, %s79
      %s96 = sphi 0, %s80
      %s100 = sphi 0, %s100
      %s102 = sphi 0, %s100
      %s103 = sphi 0, %s102
      %s117 = sphi 0, %s103
      %s121 = sphi 0, %s121
      %s123 = sphi 0, %s121
      %s124 = sphi 0, %s123
      %s138 = sphi 0, %s124
      %s142 = sphi 0, %s142
      %s144 = sphi 0, %s142
      %s145 = sphi 0, %s144
      %s159 = sphi 0, %s145
      %s163 = sphi 0, %s163
      %s165 = sphi 0, %s163
      %s166 = sphi 0, %s165
      %s180 = sphi 0, %s166
      %s188 = sphi 0, %s190
      %s191 = sphi 0, %s188
      %s192 = sphi 0, %s191
      %s208 = sphi 0, %s192
      %s216 = sphi 0, %s218
      %s219 = sphi 0, %s216
      %s220 = sphi 0, %s219
      %s236 = sphi 0, %s220
    $region4: #{_lambda_.22} parent=1 // loop_header_branch
      %27 = sbr.rel (%p25) target = $region8
    $region5: #{_lambda_.22} parent=1 // loop_body
      %s29 = ssub.s32 %s24, 1
      %s30 = ssub.s32 %s24, 2
      %s37 = sadd.s32 1, %s32
      %p38 = scmp.ge.s32.totalorder %s37, 1
      %s39 = scalar_select %p38, 0, %s37
      %s40 = sadd.s32 1, %s31
      %s41 = scalar_select %p38, %s40, %s31
      %p42 = scmp.ge.s32.totalorder %s41, 2
      %s43 = scalar_select %p42, 0, %s41
      %s44 = ssub.s32 %s31, %s43
      %s45 = ssub.s32 %s32, %s39
      %s46 = sor.u32 %s44, %s45
      %p47 = scmp.eq.s32.totalorder %s46, 0
      %s49 = sadd.s32 %s48, 1
      %s50 = scalar_select %p47, %s48, %s49
      %p53 = pneg %p47
      %p54 = scmp.eq.s32.totalorder %s24, 1
      %p55 = por %p53, %p54
      %p56 = scmp.ne.s32.totalorder %s48, %s51
      %p57 = scmp.eq.s32.totalorder %s24, 0
      %p58 = por %p56, %p57
      %p59 = scmp.ne.s32.totalorder %s48, %s51
      %p60 = scmp.eq.s32.totalorder %s29, 1
      %p61 = por %p59, %p60
      %p62 = scmp.ne.s32.totalorder %s51, %s52
      %p63 = scmp.eq.s32.totalorder %s29, 0
      %p64 = por %p62, %p63
      %p65 = scmp.ne.s32.totalorder %s51, %s52
      %p66 = scmp.eq.s32.totalorder %s30, 1
      %p67 = por %p65, %p66
      %p69 = scmp.ne.s32.totalorder %s52, %s68
      %p70 = scmp.eq.s32.totalorder %s30, 0
      %p71 = por %p69, %p70
      %s72 = ssub.s32 %s31, %s43
      %s73 = ssub.s32 %s32, %s39
      %s74 = sor.u32 %s72, %s73
      %p75 = scmp.eq.s32.totalorder %s74, 0
      %s77 = sadd.s32 %s76, 1
      %s78 = scalar_select %p75, %s76, %s77
      %p81 = pneg %p75
      %p82 = scmp.eq.s32.totalorder %s24, 1
      %p83 = por %p81, %p82
      %p84 = scmp.ne.s32.totalorder %s76, %s79
      %p85 = scmp.eq.s32.totalorder %s24, 0
      %p86 = por %p84, %p85
      %p87 = scmp.ne.s32.totalorder %s76, %s79
      %p88 = scmp.eq.s32.totalorder %s29, 1
      %p89 = por %p87, %p88
      %p90 = scmp.ne.s32.totalorder %s79, %s80
      %p91 = scmp.eq.s32.totalorder %s29, 0
      %p92 = por %p90, %p91
      %p93 = scmp.ne.s32.totalorder %s79, %s80
      %p94 = scmp.eq.s32.totalorder %s30, 1
      %p95 = por %p93, %p94
      %p97 = scmp.ne.s32.totalorder %s80, %s96
      %p98 = scmp.eq.s32.totalorder %s30, 0
      %p99 = por %p97, %p98
      %s101 = sadd.s32 %s100, 1
      %p104 = scmp.eq.s32.totalorder %s24, 1
      %p105 = scmp.ne.s32.totalorder %s100, %s102
      %p106 = scmp.eq.s32.totalorder %s24, 0
      %p107 = por %p105, %p106
      %p108 = scmp.ne.s32.totalorder %s100, %s102
      %p109 = scmp.eq.s32.totalorder %s29, 1
      %p110 = por %p108, %p109
      %p111 = scmp.ne.s32.totalorder %s102, %s103
      %p112 = scmp.eq.s32.totalorder %s29, 0
      %p113 = por %p111, %p112
      %p114 = scmp.ne.s32.totalorder %s102, %s103
      %p115 = scmp.eq.s32.totalorder %s30, 1
      %p116 = por %p114, %p115
      %p118 = scmp.ne.s32.totalorder %s103, %s117
      %p119 = scmp.eq.s32.totalorder %s30, 0
      %p120 = por %p118, %p119
      %s122 = sadd.s32 %s121, 1
      %p125 = scmp.eq.s32.totalorder %s24, 1
      %p126 = scmp.ne.s32.totalorder %s121, %s123
      %p127 = scmp.eq.s32.totalorder %s24, 0
      %p128 = por %p126, %p127
      %p129 = scmp.ne.s32.totalorder %s121, %s123
      %p130 = scmp.eq.s32.totalorder %s29, 1
      %p131 = por %p129, %p130
      %p132 = scmp.ne.s32.totalorder %s123, %s124
      %p133 = scmp.eq.s32.totalorder %s29, 0
      %p134 = por %p132, %p133
      %p135 = scmp.ne.s32.totalorder %s123, %s124
      %p136 = scmp.eq.s32.totalorder %s30, 1
      %p137 = por %p135, %p136
      %p139 = scmp.ne.s32.totalorder %s124, %s138
      %p140 = scmp.eq.s32.totalorder %s30, 0
      %p141 = por %p139, %p140
      %s143 = sadd.s32 %s142, 1
      %p146 = scmp.eq.s32.totalorder %s24, 1
      %p147 = scmp.ne.s32.totalorder %s142, %s144
      %p148 = scmp.eq.s32.totalorder %s24, 0
      %p149 = por %p147, %p148
      %p150 = scmp.ne.s32.totalorder %s142, %s144
      %p151 = scmp.eq.s32.totalorder %s29, 1
      %p152 = por %p150, %p151
      %p153 = scmp.ne.s32.totalorder %s144, %s145
      %p154 = scmp.eq.s32.totalorder %s29, 0
      %p155 = por %p153, %p154
      %p156 = scmp.ne.s32.totalorder %s144, %s145
      %p157 = scmp.eq.s32.totalorder %s30, 1
      %p158 = por %p156, %p157
      %p160 = scmp.ne.s32.totalorder %s145, %s159
      %p161 = scmp.eq.s32.totalorder %s30, 0
      %p162 = por %p160, %p161
      %s164 = sadd.s32 %s163, 1
      %p167 = scmp.eq.s32.totalorder %s24, 1
      %p168 = scmp.ne.s32.totalorder %s163, %s165
      %p169 = scmp.eq.s32.totalorder %s24, 0
      %p170 = por %p168, %p169
      %p171 = scmp.ne.s32.totalorder %s163, %s165
      %p172 = scmp.eq.s32.totalorder %s29, 1
      %p173 = por %p171, %p172
      %p174 = scmp.ne.s32.totalorder %s165, %s166
      %p175 = scmp.eq.s32.totalorder %s29, 0
      %p176 = por %p174, %p175
      %p177 = scmp.ne.s32.totalorder %s165, %s166
      %p178 = scmp.eq.s32.totalorder %s30, 1
      %p179 = por %p177, %p178
      %p181 = scmp.ne.s32.totalorder %s166, %s180
      %p182 = scmp.eq.s32.totalorder %s30, 0
      %p183 = por %p181, %p182
      %s184 = ssub.s32 %s31, %s43
      %s185 = ssub.s32 %s32, %s39
      %s186 = sor.u32 %s184, %s185
      %p187 = scmp.eq.s32.totalorder %s186, 0
      %s189 = sadd.s32 %s188, 1
      %s190 = scalar_select %p187, %s188, %s189
      %p193 = pneg %p187
      %p194 = scmp.eq.s32.totalorder %s24, 1
      %p195 = por %p193, %p194
      %p196 = scmp.ne.s32.totalorder %s188, %s191
      %p197 = scmp.eq.s32.totalorder %s24, 0
      %p198 = por %p196, %p197
      %p199 = scmp.ne.s32.totalorder %s188, %s191
      %p200 = scmp.eq.s32.totalorder %s29, 1
      %p201 = por %p199, %p200
      %p202 = scmp.ne.s32.totalorder %s191, %s192
      %p203 = scmp.eq.s32.totalorder %s29, 0
      %p204 = por %p202, %p203
      %p205 = scmp.ne.s32.totalorder %s191, %s192
      %p206 = scmp.eq.s32.totalorder %s30, 1
      %p207 = por %p205, %p206
      %p209 = scmp.ne.s32.totalorder %s192, %s208
      %p210 = scmp.eq.s32.totalorder %s30, 0
      %p211 = por %p209, %p210
      %s212 = ssub.s32 %s31, %s43
      %s213 = ssub.s32 %s32, %s39
      %s214 = sor.u32 %s212, %s213
      %p215 = scmp.eq.s32.totalorder %s214, 0
      %s217 = sadd.s32 %s216, 1
      %s218 = scalar_select %p215, %s216, %s217
      %p221 = pneg %p215
      %p222 = scmp.eq.s32.totalorder %s24, 1
      %p223 = por %p221, %p222
      %p224 = scmp.ne.s32.totalorder %s216, %s219
      %p225 = scmp.eq.s32.totalorder %s24, 0
      %p226 = por %p224, %p225
      %p227 = scmp.ne.s32.totalorder %s216, %s219
      %p228 = scmp.eq.s32.totalorder %s29, 1
      %p229 = por %p227, %p228
      %p230 = scmp.ne.s32.totalorder %s219, %s220
      %p231 = scmp.eq.s32.totalorder %s29, 0
      %p232 = por %p230, %p231
      %p233 = scmp.ne.s32.totalorder %s219, %s220
      %p234 = scmp.eq.s32.totalorder %s30, 1
      %p235 = por %p233, %p234
      %p237 = scmp.ne.s32.totalorder %s220, %s236
      %p238 = scmp.eq.s32.totalorder %s30, 0
      %p239 = por %p237, %p238
      %p240 = scmp.le.s32.totalorder 1, %s24
      %p241 = scmp.lt.s32.totalorder %s24, 3
      %p242 = pnand %p240, %p241
      %p243 = pneg %p242
      // Predicated region
      $region9: #{_lambda_.22} parent=5 // pred_check
        _
      $region10: #{_lambda_.22} parent=5 // pred_check_branch
        %245 = sbr.rel (%p242) target = $region12
      $region11: #{_lambda_.22} parent=5 // pred_region
        %s246 = ssub.s32 %s24, 1
        // Predicated region
        $region13: #{_lambda_.22} parent=11 // pred_check
          %p247 = pneg %p113
        $region14: #{_lambda_.22} parent=11 // pred_check_branch
          %249 = sbr.rel (%p247) target = $region16
        $region15: #{_lambda_.22} parent=11 // pred_region
          %s251 = ssub.s32 2560, 2560
          %252 = vsyncadd [#allocation6], %s251
          %s253 = sshll.u32 [#allocation7], 4
          %s254 = int_to_ptr.vmem [resolvable:$true] %s253
          %259 = dma.hbm_to_vmem [thread:$0]  %s2, 2560, %s254, [#allocation6], 64, 64, 4
        $region16: #{_lambda_.22} parent=11 // pred_fallthru
          _
        // Predicated region
        $region17: #{_lambda_.22} parent=11 // pred_check
          %p260 = pneg %p134
        $region18: #{_lambda_.22} parent=11 // pred_check_branch
          %262 = sbr.rel (%p260) target = $region20
        $region19: #{_lambda_.22} parent=11 // pred_region
          %s264 = ssub.s32 16, 16
          %265 = vsyncadd [#allocation9], %s264
          %s267 = sshll.u32 [#allocation8], 4
          %s268 = int_to_ptr.vmem [resolvable:$true] %s267
          %270 = dma.hbm_to_vmem [thread:$0]  %s3, 16, %s268, [#allocation9]
        $region20: #{_lambda_.22} parent=11 // pred_fallthru
          _
        // Predicated region
        $region21: #{_lambda_.22} parent=11 // pred_check
          %p271 = pneg %p155
        $region22: #{_lambda_.22} parent=11 // pred_check_branch
          %273 = sbr.rel (%p271) target = $region24
        $region23: #{_lambda_.22} parent=11 // pred_region
          %s275 = ssub.s32 1536, 1536
          %276 = vsyncadd [#allocation9], %s275
          %s277 = sshll.u32 [#allocation10], 4
          %s278 = int_to_ptr.vmem [resolvable:$true] %s277
          %283 = dma.hbm_to_vmem [thread:$0]  %s4, 1536, %s278, [#allocation9], 64, 64, 4
        $region24: #{_lambda_.22} parent=11 // pred_fallthru
          _
        // Predicated region
        $region25: #{_lambda_.22} parent=11 // pred_check
          %p284 = pneg %p176
        $region26: #{_lambda_.22} parent=11 // pred_check_branch
          %286 = sbr.rel (%p284) target = $region28
        $region27: #{_lambda_.22} parent=11 // pred_region
          %s288 = ssub.s32 16, 16
          %289 = vsyncadd [#allocation12], %s288
          %s291 = sshll.u32 [#allocation11], 4
          %s292 = int_to_ptr.vmem [resolvable:$true] %s291
          %294 = dma.hbm_to_vmem [thread:$0]  %s5, 16, %s292, [#allocation12]
        $region28: #{_lambda_.22} parent=11 // pred_fallthru
          _
      $region12: #{_lambda_.22} parent=5 // pred_fallthru
        _
      %p295 = scmp.lt.s32.totalorder %s24, 2
      // Predicated region
      $region29: #{_lambda_.22} parent=5 // pred_check
        %p296 = pneg %p295
      $region30: #{_lambda_.22} parent=5 // pred_check_branch
        %298 = sbr.rel (%p296) target = $region32
      $region31: #{_lambda_.22} parent=5 // pred_region
        // Predicated region
        $region33: #{_lambda_.22} parent=31 // pred_check
          %p299 = pneg %p58
        $region34: #{_lambda_.22} parent=31 // pred_check_branch
          %301 = sbr.rel (%p299) target = $region36
        $region35: #{_lambda_.22} parent=31 // pred_region
          %s302 = sand.u32 %s24, 1
          %s303 = scalar_lea.sflag [#allocation3], %s302
          %s304 = sand.u32 %s48, 1
          %s305 = smul.addr %s304, 4
          %s306 = scalar_lea.vmem [#allocation2], %s305
          %s308 = ssub.s32 64, 64
          %309 = vsyncadd %s303, %s308
          %s310 = sadd.s32 %s32, %s31
          %s311 = smul.addr %s310, 64
          %s312 = scalar_lea.hbm %s0, %s311
          %s314 = sshll.u32 %s306, 4
          %s315 = int_to_ptr.vmem [resolvable:$true] %s314
          %317 = dma.hbm_to_vmem [thread:$0]  %s312, 64, %s315, %s303
        $region36: #{_lambda_.22} parent=31 // pred_fallthru
          _
        // Predicated region
        $region37: #{_lambda_.22} parent=31 // pred_check
          %p318 = pneg %p86
        $region38: #{_lambda_.22} parent=31 // pred_check_branch
          %320 = sbr.rel (%p318) target = $region40
        $region39: #{_lambda_.22} parent=31 // pred_region
          %s321 = sand.u32 %s24, 1
          %s322 = scalar_lea.sflag [#allocation6], %s321
          %s323 = sand.u32 %s76, 1
          %s324 = smul.addr %s323, 12
          %s325 = scalar_lea.vmem [#allocation5], %s324
          %s327 = ssub.s32 192, 192
          %328 = vsyncadd %s322, %s327
          %s329 = smul.addr %s32, 3
          %s330 = smul.addr %s31, 3
          %s331 = sadd.s32 %s329, %s330
          %s332 = smul.addr %s331, 64
          %s333 = scalar_lea.hbm %s1, %s332
          %s334 = sshll.u32 %s325, 4
          %s335 = int_to_ptr.vmem [resolvable:$true] %s334
          %340 = dma.hbm_to_vmem [thread:$0]  %s333, 192, %s335, %s322, 64, 64, 4
        $region40: #{_lambda_.22} parent=31 // pred_fallthru
          _
        // Predicated region
        $region41: #{_lambda_.22} parent=31 // pred_check
          %p341 = pneg %p198
        $region42: #{_lambda_.22} parent=31 // pred_check_branch
          %343 = sbr.rel (%p341) target = $region44
        $region43: #{_lambda_.22} parent=31 // pred_region
          %s344 = sand.u32 %s24, 1
          %s345 = scalar_lea.sflag [#allocation3], %s344
          %s346 = sand.u32 %s188, 1
          %s347 = smul.addr %s346, 4
          %s348 = scalar_lea.vmem [#allocation13], %s347
          %s350 = ssub.s32 64, 64
          %351 = vsyncadd %s345, %s350
          %s352 = sadd.s32 %s32, %s31
          %s353 = smul.addr %s352, 64
          %s354 = scalar_lea.hbm %s6, %s353
          %s356 = sshll.u32 %s348, 4
          %s357 = int_to_ptr.vmem [resolvable:$true] %s356
          %359 = dma.hbm_to_vmem [thread:$0]  %s354, 64, %s357, %s345
        $region44: #{_lambda_.22} parent=31 // pred_fallthru
          _
      $region32: #{_lambda_.22} parent=5 // pred_fallthru
        _
      %p360 = scmp.le.s32.totalorder 1, %s24
      %p361 = scmp.lt.s32.totalorder %s24, 3
      %p362 = pnand %p360, %p361
      %p363 = pneg %p362
      // Predicated region
      $region45: #{_lambda_.22} parent=5 // pred_check
        _
      $region46: #{_lambda_.22} parent=5 // pred_check_branch
        %365 = sbr.rel (%p362) target = $region48
      $region47: #{_lambda_.22} parent=5 // pred_region
        %s366 = ssub.s32 %s24, 1
        %s367 = sand.u32 %s29, 1
        %s368 = scalar_lea.sflag [#allocation3], %s367
        %s369 = sand.u32 %s51, 1
        %s370 = smul.addr %s369, 4
        %s371 = scalar_lea.vmem [#allocation2], %s370
        // Predicated region
        $region49: #{_lambda_.22} parent=47 // pred_check
          %p372 = pneg %p64
        $region50: #{_lambda_.22} parent=47 // pred_check_branch
          %374 = sbr.rel (%p372) target = $region52
        $region51: #{_lambda_.22} parent=47 // pred_region
          %375 = dma.done %s368, 64
        $region52: #{_lambda_.22} parent=47 // pred_fallthru
          _
        %s376 = sand.u32 %s29, 1
        %s377 = scalar_lea.sflag [#allocation6], %s376
        %s378 = sand.u32 %s79, 1
        %s379 = smul.addr %s378, 12
        %s380 = scalar_lea.vmem [#allocation5], %s379
        // Predicated region
        $region53: #{_lambda_.22} parent=47 // pred_check
          %p381 = pneg %p92
        $region54: #{_lambda_.22} parent=47 // pred_check_branch
          %383 = sbr.rel (%p381) target = $region56
        $region55: #{_lambda_.22} parent=47 // pred_region
          %384 = dma.done %s377, 192
        $region56: #{_lambda_.22} parent=47 // pred_fallthru
          _
        // Predicated region
        $region57: #{_lambda_.22} parent=47 // pred_check
          %p385 = pneg %p113
        $region58: #{_lambda_.22} parent=47 // pred_check_branch
          %387 = sbr.rel (%p385) target = $region60
        $region59: #{_lambda_.22} parent=47 // pred_region
          %388 = dma.done [#allocation6], 2560
        $region60: #{_lambda_.22} parent=47 // pred_fallthru
          _
        // Predicated region
        $region61: #{_lambda_.22} parent=47 // pred_check
          %p389 = pneg %p134
        $region62: #{_lambda_.22} parent=47 // pred_check_branch
          %391 = sbr.rel (%p389) target = $region64
        $region63: #{_lambda_.22} parent=47 // pred_region
          %392 = dma.done [#allocation9], 16
        $region64: #{_lambda_.22} parent=47 // pred_fallthru
          _
        // Predicated region
        $region65: #{_lambda_.22} parent=47 // pred_check
          %p393 = pneg %p155
        $region66: #{_lambda_.22} parent=47 // pred_check_branch
          %395 = sbr.rel (%p393) target = $region68
        $region67: #{_lambda_.22} parent=47 // pred_region
          %396 = dma.done [#allocation9], 1536
        $region68: #{_lambda_.22} parent=47 // pred_fallthru
          _
        // Predicated region
        $region69: #{_lambda_.22} parent=47 // pred_check
          %p397 = pneg %p176
        $region70: #{_lambda_.22} parent=47 // pred_check_branch
          %399 = sbr.rel (%p397) target = $region72
        $region71: #{_lambda_.22} parent=47 // pred_region
          %400 = dma.done [#allocation12], 16
        $region72: #{_lambda_.22} parent=47 // pred_fallthru
          _
        %s401 = sand.u32 %s29, 1
        %s402 = scalar_lea.sflag [#allocation3], %s401
        %s403 = sand.u32 %s191, 1
        %s404 = smul.addr %s403, 4
        %s405 = scalar_lea.vmem [#allocation13], %s404
        // Predicated region
        $region73: #{_lambda_.22} parent=47 // pred_check
          %p406 = pneg %p204
        $region74: #{_lambda_.22} parent=47 // pred_check_branch
          %408 = sbr.rel (%p406) target = $region76
        $region75: #{_lambda_.22} parent=47 // pred_region
          %409 = dma.done %s402, 64
        $region76: #{_lambda_.22} parent=47 // pred_fallthru
          _
        %s410 = sand.u32 %s29, 1
        %s411 = scalar_lea.sflag [#allocation3], %s410
        %s412 = sand.u32 %s51, 1
        %s413 = smul.addr %s412, 4
        %s414 = scalar_lea.vmem [#allocation2], %s413
        %p415 = pneg %p64
        %p416 = pneg %p61
        %s417 = sand.u32 %s29, 1
        %s418 = scalar_lea.sflag [#allocation6], %s417
        %s419 = sand.u32 %s79, 1
        %s420 = smul.addr %s419, 12
        %s421 = scalar_lea.vmem [#allocation5], %s420
        %p422 = pneg %p92
        %p423 = pneg %p89
        %p424 = pneg %p113
        %p425 = pneg %p110
        %p426 = pneg %p134
        %p427 = pneg %p131
        %p428 = pneg %p155
        %p429 = pneg %p152
        %p430 = pneg %p176
        %p431 = pneg %p173
        %s432 = sand.u32 %s29, 1
        %s433 = scalar_lea.sflag [#allocation3], %s432
        %s434 = sand.u32 %s191, 1
        %s435 = smul.addr %s434, 4
        %s436 = scalar_lea.vmem [#allocation13], %s435
        %p437 = pneg %p204
        %p438 = pneg %p201
        %p439 = pneg %p232
        %p440 = pneg %p229
        %s441 = sand.u32 %s219, 1
        %s442 = scalar_lea.sflag [#allocation4], %s441
        %s443 = sand.u32 %s219, 1
        %s444 = smul.addr %s443, 4
        %s445 = scalar_lea.vmem [#allocation14], %s444
        %v447 = vld [vmem:[%s371] sm:$0xf]
        %v448 = vld [vmem:[%s380] sm:$0xf]
        %v449 = vld [vmem:[%s380 + $0x4] sm:$0xf]
        %v450 = vld [vmem:[%s380 + $0x8] sm:$0x3]
        %v453 = vunpack.c.l.b16 %v448
        %v454 = vunpack.c.l.b16 %v449
        %v455 = vpack.c.b16 %v454, %v453
        %v458 = vunpack.c.l.b16 %v450
        %v459 = vpack.c.b16 %v458, %v458
        %vm460 = vcmask 1043456
        %v463 = vsel %vm460, %v447, %v459
        %v465 = vunpack.c.l.bf16 %v455
        %v466 = vunpack.c.h.bf16 %v455
        %v467 = vunpack.c.l.bf16 %v463
        %v468 = vunpack.c.h.bf16 %v463
        %vm469 = vcmp.ge.f32.partialorder %v465, 0.0
        %vm470 = vcmp.ge.f32.partialorder %v466, 0.0
        %vm471 = vcmp.ge.f32.partialorder %v467, 0.0
        %vm472 = vcmp.ge.f32.partialorder %v468, 0.0
        %v473 = vmul.f32 %v465, 0.1
        %v474 = vmul.f32 %v466, 0.1
        %v475 = vmul.f32 %v467, 0.1
        %v476 = vmul.f32 %v468, 0.1
        %v477 = vsel %vm469, %v465, %v473
        %v478 = vsel %vm470, %v466, %v474
        %v479 = vsel %vm471, %v467, %v475
        %v480 = vsel %vm472, %v468, %v476
        %v481 = vpack.c.bf16 %v478, %v477
        %v482 = vpack.c.bf16 %v480, %v479
        %v483 = vld [vmem:[#allocation7] sm:$0xf]
        %v484 = vld [vmem:[#allocation7 + $0x4] sm:$0xf]
        %v485 = vld [vmem:[#allocation7 + $0x8] sm:$0xf]
        %v486 = vld [vmem:[#allocation7 + $0xc] sm:$0xf]
        %v487 = vld [vmem:[#allocation7 + $0x10] sm:$0xf]
        %v488 = vld [vmem:[#allocation7 + $0x14] sm:$0xf]
        %v489 = vld [vmem:[#allocation7 + $0x18] sm:$0xf]
        %v490 = vld [vmem:[#allocation7 + $0x1c] sm:$0xf]
        %v491 = vld [vmem:[#allocation7 + $0x20] sm:$0xf]
        %v492 = vld [vmem:[#allocation7 + $0x24] sm:$0xf]
        %v493 = vld [vmem:[#allocation7 + $0x28] sm:$0xf]
        %v494 = vld [vmem:[#allocation7 + $0x2c] sm:$0xf]
        %v495 = vld [vmem:[#allocation7 + $0x30] sm:$0xf]
        %v496 = vld [vmem:[#allocation7 + $0x34] sm:$0xf]
        %v497 = vld [vmem:[#allocation7 + $0x38] sm:$0xf]
        %v498 = vld [vmem:[#allocation7 + $0x3c] sm:$0xf]
        %vm501 = vcmask 1040384
        %v502 = vrot.slane %v481, 7
        %v503 = vrot.slane %v482, 7
        %v504 = vsel %vm501, %v502, %v503
        %v513 = vunpack.c.l.b16 %v491
        %v514 = vunpack.c.l.b16 %v492
        %v515 = vunpack.c.l.b16 %v493
        %v516 = vunpack.c.l.b16 %v494
        %v517 = vunpack.c.l.b16 %v495
        %v518 = vunpack.c.l.b16 %v496
        %v519 = vunpack.c.l.b16 %v497
        %v520 = vunpack.c.l.b16 %v498
        %v521 = vpack.c.b16 %v514, %v513
        %v522 = vpack.c.b16 %v516, %v515
        %v523 = vpack.c.b16 %v518, %v517
        %v524 = vpack.c.b16 %v520, %v519
        %vm529 = vcmask 523264
        %v531 = vsel %vm529, %v504, 0
        %533 = vmatprep.subr.bf16.mxu0 0
        %534 = vmatpush1.bf16.msra.mxu0 %v521
        %535 = vmatprep.subr.bf16.mxu0 0
        %536 = vmatpush1.bf16.msra.mxu0 %v522
        %537 = vmatprep.subr.bf16.mxu0 0
        %538 = vmatpush1.bf16.msra.mxu0 %v523
        %539 = vmatprep.subr.bf16.mxu0 0
        %540 = vmatpush1.bf16.msra.mxu0 %v524
        %541 = vmatprep.subr.bf16.mxu0 0
        %542 = vmatpush1.bf16.msra.mxu0 0
        %543 = vmatprep.subr.bf16.mxu0 0
        %544 = vmatpush1.bf16.msra.mxu0 0
        %545 = vmatprep.subr.bf16.mxu0 0
        %546 = vmatpush1.bf16.msra.mxu0 0
        %547 = vmatprep.subr.bf16.mxu0 0
        %548 = vmatpush1.bf16.msra.mxu0 0
        %549 = vmatprep.subr.bf16.mxu0 0
        %550 = vmatpush1.bf16.msra.mxu0 0
        %551 = vmatprep.subr.bf16.mxu0 0
        %552 = vmatpush1.bf16.msra.mxu0 0
        %553 = vmatprep.subr.bf16.mxu0 0
        %554 = vmatpush1.bf16.msra.mxu0 0
        %555 = vmatprep.subr.bf16.mxu0 0
        %556 = vmatpush1.bf16.msra.mxu0 0
        %557 = vmatprep.subr.bf16.mxu0 0
        %558 = vmatpush1.bf16.msra.mxu0 0
        %559 = vmatprep.subr.bf16.mxu0 0
        %560 = vmatpush1.bf16.msra.mxu0 0
        %561 = vmatprep.subr.bf16.mxu0 0
        %562 = vmatpush1.bf16.msra.mxu0 0
        %563 = vmatprep.subr.bf16.mxu0 0
        %564 = vmatpush1.bf16.msra.mxu0 0
        %565 = vmatprep.mubr.bf16.mxu0 0
        %566 = vmatmul.mubr.bf16.gmra.mrb[0].mxu0 %v531
        %v567 = vpop.f32.mrb[0].mxu0
        %v568 = vadd.f32 0.0, %v567
        %v569 = vpop.f32.mrb[0].mxu0
        %v570 = vpop.f32.mrb[0].mxu0
        %v571 = vadd.f32 0.0, %v570
        %v572 = vpop.f32.mrb[0].mxu0
        %573 = vdwg.mxu0
        %vm574 = vsmask.f32 1280
        %v576 = vshrl.u32 %v481, 16
        %v578 = vrot.slane %v576, 6
        %v579 = vshll.u32 %v481, 16
        %v581 = vrot.slane %v579, 7
        %v582 = vor.u32 %v578, %v581
        %v584 = vshrl.u32 %v482, 16
        %v586 = vrot.slane %v584, 6
        %v587 = vshll.u32 %v482, 16
        %v589 = vrot.slane %v587, 7
        %v590 = vor.u32 %v586, %v589
        %v591 = vsel %vm574, %v582, %v590
        %v600 = vunpack.c.l.b16 %v483
        %v601 = vunpack.c.l.b16 %v484
        %v602 = vunpack.c.l.b16 %v485
        %v603 = vunpack.c.l.b16 %v486
        %v604 = vunpack.c.l.b16 %v487
        %v605 = vunpack.c.l.b16 %v488
        %v606 = vunpack.c.l.b16 %v489
        %v607 = vunpack.c.l.b16 %v490
        %v608 = vpack.c.b16 %v601, %v600
        %v609 = vpack.c.b16 %v603, %v602
        %v610 = vpack.c.b16 %v605, %v604
        %v611 = vpack.c.b16 %v607, %v606
        %v617 = vsel %vm529, %v591, 0
        %619 = vmatprep.subr.bf16.mxu0 0
        %620 = vmatpush1.bf16.msra.mxu0 %v608
        %621 = vmatprep.subr.bf16.mxu0 0
        %622 = vmatpush1.bf16.msra.mxu0 %v609
        %623 = vmatprep.subr.bf16.mxu0 0
        %624 = vmatpush1.bf16.msra.mxu0 %v610
        %625 = vmatprep.subr.bf16.mxu0 0
        %626 = vmatpush1.bf16.msra.mxu0 %v611
        %627 = vmatprep.subr.bf16.mxu0 0
        %628 = vmatpush1.bf16.msra.mxu0 0
        %629 = vmatprep.subr.bf16.mxu0 0
        %630 = vmatpush1.bf16.msra.mxu0 0
        %631 = vmatprep.subr.bf16.mxu0 0
        %632 = vmatpush1.bf16.msra.mxu0 0
        %633 = vmatprep.subr.bf16.mxu0 0
        %634 = vmatpush1.bf16.msra.mxu0 0
        %635 = vmatprep.subr.bf16.mxu0 0
        %636 = vmatpush1.bf16.msra.mxu0 0
        %637 = vmatprep.subr.bf16.mxu0 0
        %638 = vmatpush1.bf16.msra.mxu0 0
        %639 = vmatprep.subr.bf16.mxu0 0
        %640 = vmatpush1.bf16.msra.mxu0 0
        %641 = vmatprep.subr.bf16.mxu0 0
        %642 = vmatpush1.bf16.msra.mxu0 0
        %643 = vmatprep.subr.bf16.mxu0 0
        %644 = vmatpush1.bf16.msra.mxu0 0
        %645 = vmatprep.subr.bf16.mxu0 0
        %646 = vmatpush1.bf16.msra.mxu0 0
        %647 = vmatprep.subr.bf16.mxu0 0
        %648 = vmatpush1.bf16.msra.mxu0 0
        %649 = vmatprep.subr.bf16.mxu0 0
        %650 = vmatpush1.bf16.msra.mxu0 0
        %651 = vmatprep.mubr.bf16.mxu0 0
        %652 = vmatmul.mubr.bf16.gmra.mrb[0].mxu0 %v617
        %v653 = vpop.f32.mrb[0].mxu0
        %v654 = vadd.f32 %v568, %v653
        %v655 = vpop.f32.mrb[0].mxu0
        %v656 = vpop.f32.mrb[0].mxu0
        %v657 = vadd.f32 %v571, %v656
        %v658 = vpop.f32.mrb[0].mxu0
        %659 = vdwg.mxu0
        %v660 = vld [vmem:[#allocation7 + $0x40] sm:$0xf]
        %v661 = vld [vmem:[#allocation7 + $0x44] sm:$0xf]
        %v662 = vld [vmem:[#allocation7 + $0x48] sm:$0xf]
        %v663 = vld [vmem:[#allocation7 + $0x4c] sm:$0xf]
        %v664 = vld [vmem:[#allocation7 + $0x50] sm:$0xf]
        %v665 = vld [vmem:[#allocation7 + $0x54] sm:$0xf]
        %v666 = vld [vmem:[#allocation7 + $0x58] sm:$0xf]
        %v667 = vld [vmem:[#allocation7 + $0x5c] sm:$0xf]
        %vm668 = vsmask.f32 256
        %v669 = vrot.slane %v576, 7
        %v670 = vrot.slane %v584, 7
        %v671 = vor.u32 %v670, %v587
        %v672 = vsel %vm668, %v669, %v671
        %v681 = vunpack.c.l.b16 %v660
        %v682 = vunpack.c.l.b16 %v661
        %v683 = vunpack.c.l.b16 %v662
        %v684 = vunpack.c.l.b16 %v663
        %v685 = vunpack.c.l.b16 %v664
        %v686 = vunpack.c.l.b16 %v665
        %v687 = vunpack.c.l.b16 %v666
        %v688 = vunpack.c.l.b16 %v667
        %v689 = vpack.c.b16 %v682, %v681
        %v690 = vpack.c.b16 %v684, %v683
        %v691 = vpack.c.b16 %v686, %v685
        %v692 = vpack.c.b16 %v688, %v687
        %v698 = vsel %vm529, %v672, 0
        %700 = vmatprep.subr.bf16.mxu0 0
        %701 = vmatpush1.bf16.msra.mxu0 %v689
        %702 = vmatprep.subr.bf16.mxu0 0
        %703 = vmatpush1.bf16.msra.mxu0 %v690
        %704 = vmatprep.subr.bf16.mxu0 0
        %705 = vmatpush1.bf16.msra.mxu0 %v691
        %706 = vmatprep.subr.bf16.mxu0 0
        %707 = vmatpush1.bf16.msra.mxu0 %v692
        %708 = vmatprep.subr.bf16.mxu0 0
        %709 = vmatpush1.bf16.msra.mxu0 0
        %710 = vmatprep.subr.bf16.mxu0 0
        %711 = vmatpush1.bf16.msra.mxu0 0
        %712 = vmatprep.subr.bf16.mxu0 0
        %713 = vmatpush1.bf16.msra.mxu0 0
        %714 = vmatprep.subr.bf16.mxu0 0
        %715 = vmatpush1.bf16.msra.mxu0 0
        %716 = vmatprep.subr.bf16.mxu0 0
        %717 = vmatpush1.bf16.msra.mxu0 0
        %718 = vmatprep.subr.bf16.mxu0 0
        %719 = vmatpush1.bf16.msra.mxu0 0
        %720 = vmatprep.subr.bf16.mxu0 0
        %721 = vmatpush1.bf16.msra.mxu0 0
        %722 = vmatprep.subr.bf16.mxu0 0
        %723 = vmatpush1.bf16.msra.mxu0 0
        %724 = vmatprep.subr.bf16.mxu0 0
        %725 = vmatpush1.bf16.msra.mxu0 0
        %726 = vmatprep.subr.bf16.mxu0 0
        %727 = vmatpush1.bf16.msra.mxu0 0
        %728 = vmatprep.subr.bf16.mxu0 0
        %729 = vmatpush1.bf16.msra.mxu0 0
        %730 = vmatprep.subr.bf16.mxu0 0
        %731 = vmatpush1.bf16.msra.mxu0 0
        %732 = vmatprep.mubr.bf16.mxu0 0
        %733 = vmatmul.mubr.bf16.gmra.mrb[0].mxu0 %v698
        %v734 = vpop.f32.mrb[0].mxu0
        %v735 = vadd.f32 0.0, %v734
        %v736 = vpop.f32.mrb[0].mxu0
        %v737 = vpop.f32.mrb[0].mxu0
        %v738 = vadd.f32 0.0, %v737
        %v739 = vpop.f32.mrb[0].mxu0
        %740 = vdwg.mxu0
        %v741 = vadd.f32 %v654, %v735
        %v742 = vadd.f32 %v657, %v738
        %v743 = vld [vmem:[#allocation7 + $0x60] sm:$0xf]
        %v744 = vld [vmem:[#allocation7 + $0x64] sm:$0xf]
        %v745 = vld [vmem:[#allocation7 + $0x68] sm:$0xf]
        %v746 = vld [vmem:[#allocation7 + $0x6c] sm:$0xf]
        %v747 = vld [vmem:[#allocation7 + $0x70] sm:$0xf]
        %v748 = vld [vmem:[#allocation7 + $0x74] sm:$0xf]
        %v749 = vld [vmem:[#allocation7 + $0x78] sm:$0xf]
        %v750 = vld [vmem:[#allocation7 + $0x7c] sm:$0xf]
        %v759 = vunpack.c.l.b16 %v743
        %v760 = vunpack.c.l.b16 %v744
        %v761 = vunpack.c.l.b16 %v745
        %v762 = vunpack.c.l.b16 %v746
        %v763 = vunpack.c.l.b16 %v747
        %v764 = vunpack.c.l.b16 %v748
        %v765 = vunpack.c.l.b16 %v749
        %v766 = vunpack.c.l.b16 %v750
        %v767 = vpack.c.b16 %v760, %v759
        %v768 = vpack.c.b16 %v762, %v761
        %v769 = vpack.c.b16 %v764, %v763
        %v770 = vpack.c.b16 %v766, %v765
        %v775 = vsel %vm529, %v482, 0
        %777 = vmatprep.subr.bf16.mxu0 0
        %778 = vmatpush1.bf16.msra.mxu0 %v767
        %779 = vmatprep.subr.bf16.mxu0 0
        %780 = vmatpush1.bf16.msra.mxu0 %v768
        %781 = vmatprep.subr.bf16.mxu0 0
        %782 = vmatpush1.bf16.msra.mxu0 %v769
        %783 = vmatprep.subr.bf16.mxu0 0
        %784 = vmatpush1.bf16.msra.mxu0 %v770
        %785 = vmatprep.subr.bf16.mxu0 0
        %786 = vmatpush1.bf16.msra.mxu0 0
        %787 = vmatprep.subr.bf16.mxu0 0
        %788 = vmatpush1.bf16.msra.mxu0 0
        %789 = vmatprep.subr.bf16.mxu0 0
        %790 = vmatpush1.bf16.msra.mxu0 0
        %791 = vmatprep.subr.bf16.mxu0 0
        %792 = vmatpush1.bf16.msra.mxu0 0
        %793 = vmatprep.subr.bf16.mxu0 0
        %794 = vmatpush1.bf16.msra.mxu0 0
        %795 = vmatprep.subr.bf16.mxu0 0
        %796 = vmatpush1.bf16.msra.mxu0 0
        %797 = vmatprep.subr.bf16.mxu0 0
        %798 = vmatpush1.bf16.msra.mxu0 0
        %799 = vmatprep.subr.bf16.mxu0 0
        %800 = vmatpush1.bf16.msra.mxu0 0
        %801 = vmatprep.subr.bf16.mxu0 0
        %802 = vmatpush1.bf16.msra.mxu0 0
        %803 = vmatprep.subr.bf16.mxu0 0
        %804 = vmatpush1.bf16.msra.mxu0 0
        %805 = vmatprep.subr.bf16.mxu0 0
        %806 = vmatpush1.bf16.msra.mxu0 0
        %807 = vmatprep.subr.bf16.mxu0 0
        %808 = vmatpush1.bf16.msra.mxu0 0
        %809 = vmatprep.mubr.bf16.mxu0 0
        %810 = vmatmul.mubr.bf16.gmra.mrb[0].mxu0 %v775
        %v811 = vpop.f32.mrb[0].mxu0
        %v812 = vadd.f32 0.0, %v811
        %v813 = vpop.f32.mrb[0].mxu0
        %v814 = vpop.f32.mrb[0].mxu0
        %v815 = vadd.f32 0.0, %v814
        %v816 = vpop.f32.mrb[0].mxu0
        %817 = vdwg.mxu0
        %v818 = vadd.f32 %v741, %v812
        %v819 = vadd.f32 %v742, %v815
        %v820 = vld [vmem:[#allocation7 + $0x80] sm:$0xf]
        %v821 = vld [vmem:[#allocation7 + $0x84] sm:$0xf]
        %v822 = vld [vmem:[#allocation7 + $0x88] sm:$0xf]
        %v823 = vld [vmem:[#allocation7 + $0x8c] sm:$0xf]
        %v824 = vld [vmem:[#allocation7 + $0x90] sm:$0xf]
        %v825 = vld [vmem:[#allocation7 + $0x94] sm:$0xf]
        %v826 = vld [vmem:[#allocation7 + $0x98] sm:$0xf]
        %v827 = vld [vmem:[#allocation7 + $0x9c] sm:$0xf]
        %v828 = vrot.slane %v587, 1
        %v829 = vor.u32 %v584, %v828
        %v838 = vunpack.c.l.b16 %v820
        %v839 = vunpack.c.l.b16 %v821
        %v840 = vunpack.c.l.b16 %v822
        %v841 = vunpack.c.l.b16 %v823
        %v842 = vunpack.c.l.b16 %v824
        %v843 = vunpack.c.l.b16 %v825
        %v844 = vunpack.c.l.b16 %v826
        %v845 = vunpack.c.l.b16 %v827
        %v846 = vpack.c.b16 %v839, %v838
        %v847 = vpack.c.b16 %v841, %v840
        %v848 = vpack.c.b16 %v843, %v842
        %v849 = vpack.c.b16 %v845, %v844
        %v855 = vsel %vm529, %v829, 0
        %857 = vmatprep.subr.bf16.mxu0 0
        %858 = vmatpush1.bf16.msra.mxu0 %v846
        %859 = vmatprep.subr.bf16.mxu0 0
        %860 = vmatpush1.bf16.msra.mxu0 %v847
        %861 = vmatprep.subr.bf16.mxu0 0
        %862 = vmatpush1.bf16.msra.mxu0 %v848
        %863 = vmatprep.subr.bf16.mxu0 0
        %864 = vmatpush1.bf16.msra.mxu0 %v849
        %865 = vmatprep.subr.bf16.mxu0 0
        %866 = vmatpush1.bf16.msra.mxu0 0
        %867 = vmatprep.subr.bf16.mxu0 0
        %868 = vmatpush1.bf16.msra.mxu0 0
        %869 = vmatprep.subr.bf16.mxu0 0
        %870 = vmatpush1.bf16.msra.mxu0 0
        %871 = vmatprep.subr.bf16.mxu0 0
        %872 = vmatpush1.bf16.msra.mxu0 0
        %873 = vmatprep.subr.bf16.mxu0 0
        %874 = vmatpush1.bf16.msra.mxu0 0
        %875 = vmatprep.subr.bf16.mxu0 0
        %876 = vmatpush1.bf16.msra.mxu0 0
        %877 = vmatprep.subr.bf16.mxu0 0
        %878 = vmatpush1.bf16.msra.mxu0 0
        %879 = vmatprep.subr.bf16.mxu0 0
        %880 = vmatpush1.bf16.msra.mxu0 0
        %881 = vmatprep.subr.bf16.mxu0 0
        %882 = vmatpush1.bf16.msra.mxu0 0
        %883 = vmatprep.subr.bf16.mxu0 0
        %884 = vmatpush1.bf16.msra.mxu0 0
        %885 = vmatprep.subr.bf16.mxu0 0
        %886 = vmatpush1.bf16.msra.mxu0 0
        %887 = vmatprep.subr.bf16.mxu0 0
        %888 = vmatpush1.bf16.msra.mxu0 0
        %889 = vmatprep.mubr.bf16.mxu0 0
        %890 = vmatmul.mubr.bf16.gmra.mrb[0].mxu0 %v855
        %v891 = vpop.f32.mrb[0].mxu0
        %v892 = vadd.f32 0.0, %v891
        %v893 = vpop.f32.mrb[0].mxu0
        %v894 = vpop.f32.mrb[0].mxu0
        %v895 = vadd.f32 0.0, %v894
        %v896 = vpop.f32.mrb[0].mxu0
        %897 = vdwg.mxu0
        %v898 = vadd.f32 %v818, %v892
        %v899 = vadd.f32 %v819, %v895
        %v900 = vld [vmem:[#allocation8] sm:$0x1]
        %v902 = vlaneseq
        %v903 = vshrl.u32 %v902, 7
        %v904 = vsub.s32 0, %v903
        %v905 = vrot.slane %v900, %v904
        %v907 = vadd.f32 %v898, %v905
        %v908 = vadd.f32 %v899, %v905
        %s909 = smul.u32 %s34, 8
        %s910 = ssub.s32 %s909, 1
        %v911 = vlaneseq
        %v912 = vshrl.u32 %v911, 7
        %v913 = vadd.s32 %v912, 8
        %v914 = vstv %s910
        %v915 = vadd.s32 %v914, %v912
        %v916 = vadd.s32 %v914, %v913
        %vm917 = vcmp.ge.s32.totalorder %v915, 0
        %vm918 = vcmp.ge.s32.totalorder %v916, 0
        %vm919 = vcmp.lt.s32.totalorder %v915, 8
        %vm920 = vcmp.lt.s32.totalorder %v916, 8
        %vm921 = vmand %vm917, %vm919
        %vm922 = vmand %vm918, %vm920
        %v923 = vsel %vm921, 1, 0
        %v924 = vsel %vm922, 1, 0
        %vm925 = vcmp.eq.s32.totalorder %v923, 1
        %vm926 = vcmp.eq.s32.totalorder %v924, 1
        %v927 = vsel %vm925, %v907, 0.0
        %v928 = vsel %vm926, %v908, 0.0
        %v929 = vpack.c.bf16 %v928, %v927
        %v930 = vunpack.c.l.bf16 %v929
        %v931 = vunpack.c.h.bf16 %v929
        %vm932 = vcmp.ge.f32.partialorder %v930, 0.0
        %vm933 = vcmp.ge.f32.partialorder %v931, 0.0
        %v934 = vmul.f32 %v930, 0.1
        %v935 = vmul.f32 %v931, 0.1
        %v936 = vsel %vm932, %v930, %v934
        %v937 = vsel %vm933, %v931, %v935
        %v938 = vpack.c.bf16 %v937, %v936
        %v939 = vld [vmem:[#allocation10] sm:$0xf]
        %v940 = vld [vmem:[#allocation10 + $0x4] sm:$0xf]
        %v941 = vld [vmem:[#allocation10 + $0x8] sm:$0xf]
        %v942 = vld [vmem:[#allocation10 + $0xc] sm:$0xf]
        %v943 = vld [vmem:[#allocation10 + $0x10] sm:$0xf]
        %v944 = vld [vmem:[#allocation10 + $0x14] sm:$0xf]
        %v945 = vld [vmem:[#allocation10 + $0x18] sm:$0xf]
        %v946 = vld [vmem:[#allocation10 + $0x1c] sm:$0xf]
        %v947 = vld [vmem:[#allocation10 + $0x20] sm:$0xf]
        %v948 = vld [vmem:[#allocation10 + $0x24] sm:$0xf]
        %v949 = vld [vmem:[#allocation10 + $0x28] sm:$0xf]
        %v950 = vld [vmem:[#allocation10 + $0x2c] sm:$0xf]
        %v951 = vld [vmem:[#allocation10 + $0x30] sm:$0xf]
        %v952 = vld [vmem:[#allocation10 + $0x34] sm:$0xf]
        %v953 = vld [vmem:[#allocation10 + $0x38] sm:$0xf]
        %v954 = vld [vmem:[#allocation10 + $0x3c] sm:$0xf]
        %v956 = vshrl.u32 %v938, 16
        %v958 = vshll.u32 %v938, 16
        %v960 = vrot.slane %v958, 1
        %v961 = vor.u32 %v956, %v960
        %v970 = vunpack.c.l.b16 %v947
        %v971 = vunpack.c.l.b16 %v948
        %v972 = vunpack.c.l.b16 %v949
        %v973 = vunpack.c.l.b16 %v950
        %v974 = vunpack.c.l.b16 %v951
        %v975 = vunpack.c.l.b16 %v952
        %v976 = vunpack.c.l.b16 %v953
        %v977 = vunpack.c.l.b16 %v954
        %v978 = vpack.c.b16 %v971, %v970
        %v979 = vpack.c.b16 %v973, %v972
        %v980 = vpack.c.b16 %v975, %v974
        %v981 = vpack.c.b16 %v977, %v976
        %v987 = vsel %vm529, %v961, 0
        %989 = vmatprep.subr.bf16.mxu0 0
        %990 = vmatpush1.bf16.msra.mxu0 %v978
        %991 = vmatprep.subr.bf16.mxu0 0
        %992 = vmatpush1.bf16.msra.mxu0 %v979
        %993 = vmatprep.subr.bf16.mxu0 0
        %994 = vmatpush1.bf16.msra.mxu0 %v980
        %995 = vmatprep.subr.bf16.mxu0 0
        %996 = vmatpush1.bf16.msra.mxu0 %v981
        %997 = vmatprep.subr.bf16.mxu0 0
        %998 = vmatpush1.bf16.msra.mxu0 0
        %999 = vmatprep.subr.bf16.mxu0 0
        %1000 = vmatpush1.bf16.msra.mxu0 0
        %1001 = vmatprep.subr.bf16.mxu0 0
        %1002 = vmatpush1.bf16.msra.mxu0 0
        %1003 = vmatprep.subr.bf16.mxu0 0
        %1004 = vmatpush1.bf16.msra.mxu0 0
        %1005 = vmatprep.subr.bf16.mxu0 0
        %1006 = vmatpush1.bf16.msra.mxu0 0
        %1007 = vmatprep.subr.bf16.mxu0 0
        %1008 = vmatpush1.bf16.msra.mxu0 0
        %1009 = vmatprep.subr.bf16.mxu0 0
        %1010 = vmatpush1.bf16.msra.mxu0 0
        %1011 = vmatprep.subr.bf16.mxu0 0
        %1012 = vmatpush1.bf16.msra.mxu0 0
        %1013 = vmatprep.subr.bf16.mxu0 0
        %1014 = vmatpush1.bf16.msra.mxu0 0
        %1015 = vmatprep.subr.bf16.mxu0 0
        %1016 = vmatpush1.bf16.msra.mxu0 0
        %1017 = vmatprep.subr.bf16.mxu0 0
        %1018 = vmatpush1.bf16.msra.mxu0 0
        %1019 = vmatprep.subr.bf16.mxu0 0
        %1020 = vmatpush1.bf16.msra.mxu0 0
        %1021 = vmatprep.mubr.bf16.mxu0 0
        %1022 = vmatmul.mubr.bf16.gmra.mrb[0].mxu0 %v987
        %v1023 = vpop.f32.mrb[0].mxu0
        %v1024 = vadd.f32 0.0, %v1023
        %v1025 = vpop.f32.mrb[0].mxu0
        %v1026 = vpop.f32.mrb[0].mxu0
        %v1027 = vpop.f32.mrb[0].mxu0
        %1028 = vdwg.mxu0
        %v1037 = vunpack.c.l.b16 %v939
        %v1038 = vunpack.c.l.b16 %v940
        %v1039 = vunpack.c.l.b16 %v941
        %v1040 = vunpack.c.l.b16 %v942
        %v1041 = vunpack.c.l.b16 %v943
        %v1042 = vunpack.c.l.b16 %v944
        %v1043 = vunpack.c.l.b16 %v945
        %v1044 = vunpack.c.l.b16 %v946
        %v1045 = vpack.c.b16 %v1038, %v1037
        %v1046 = vpack.c.b16 %v1040, %v1039
        %v1047 = vpack.c.b16 %v1042, %v1041
        %v1048 = vpack.c.b16 %v1044, %v1043
        %v1053 = vsel %vm529, %v938, 0
        %1055 = vmatprep.subr.bf16.mxu0 0
        %1056 = vmatpush1.bf16.msra.mxu0 %v1045
        %1057 = vmatprep.subr.bf16.mxu0 0
        %1058 = vmatpush1.bf16.msra.mxu0 %v1046
        %1059 = vmatprep.subr.bf16.mxu0 0
        %1060 = vmatpush1.bf16.msra.mxu0 %v1047
        %1061 = vmatprep.subr.bf16.mxu0 0
        %1062 = vmatpush1.bf16.msra.mxu0 %v1048
        %1063 = vmatprep.subr.bf16.mxu0 0
        %1064 = vmatpush1.bf16.msra.mxu0 0
        %1065 = vmatprep.subr.bf16.mxu0 0
        %1066 = vmatpush1.bf16.msra.mxu0 0
        %1067 = vmatprep.subr.bf16.mxu0 0
        %1068 = vmatpush1.bf16.msra.mxu0 0
        %1069 = vmatprep.subr.bf16.mxu0 0
        %1070 = vmatpush1.bf16.msra.mxu0 0
        %1071 = vmatprep.subr.bf16.mxu0 0
        %1072 = vmatpush1.bf16.msra.mxu0 0
        %1073 = vmatprep.subr.bf16.mxu0 0
        %1074 = vmatpush1.bf16.msra.mxu0 0
        %1075 = vmatprep.subr.bf16.mxu0 0
        %1076 = vmatpush1.bf16.msra.mxu0 0
        %1077 = vmatprep.subr.bf16.mxu0 0
        %1078 = vmatpush1.bf16.msra.mxu0 0
        %1079 = vmatprep.subr.bf16.mxu0 0
        %1080 = vmatpush1.bf16.msra.mxu0 0
        %1081 = vmatprep.subr.bf16.mxu0 0
        %1082 = vmatpush1.bf16.msra.mxu0 0
        %1083 = vmatprep.subr.bf16.mxu0 0
        %1084 = vmatpush1.bf16.msra.mxu0 0
        %1085 = vmatprep.subr.bf16.mxu0 0
        %1086 = vmatpush1.bf16.msra.mxu0 0
        %1087 = vmatprep.mubr.bf16.mxu0 0
        %1088 = vmatmul.mubr.bf16.gmra.mrb[0].mxu0 %v1053
        %v1089 = vpop.f32.mrb[0].mxu0
        %v1090 = vadd.f32 %v1024, %v1089
        %v1091 = vpop.f32.mrb[0].mxu0
        %v1092 = vpop.f32.mrb[0].mxu0
        %v1093 = vpop.f32.mrb[0].mxu0
        %1094 = vdwg.mxu0
        %v1095 = vld [vmem:[#allocation10 + $0x40] sm:$0xf]
        %v1096 = vld [vmem:[#allocation10 + $0x44] sm:$0xf]
        %v1097 = vld [vmem:[#allocation10 + $0x48] sm:$0xf]
        %v1098 = vld [vmem:[#allocation10 + $0x4c] sm:$0xf]
        %v1099 = vld [vmem:[#allocation10 + $0x50] sm:$0xf]
        %v1100 = vld [vmem:[#allocation10 + $0x54] sm:$0xf]
        %v1101 = vld [vmem:[#allocation10 + $0x58] sm:$0xf]
        %v1102 = vld [vmem:[#allocation10 + $0x5c] sm:$0xf]
        %v1104 = vrot.slane %v938, 1
        %v1113 = vunpack.c.l.b16 %v1095
        %v1114 = vunpack.c.l.b16 %v1096
        %v1115 = vunpack.c.l.b16 %v1097
        %v1116 = vunpack.c.l.b16 %v1098
        %v1117 = vunpack.c.l.b16 %v1099
        %v1118 = vunpack.c.l.b16 %v1100
        %v1119 = vunpack.c.l.b16 %v1101
        %v1120 = vunpack.c.l.b16 %v1102
        %v1121 = vpack.c.b16 %v1114, %v1113
        %v1122 = vpack.c.b16 %v1116, %v1115
        %v1123 = vpack.c.b16 %v1118, %v1117
        %v1124 = vpack.c.b16 %v1120, %v1119
        %v1130 = vsel %vm529, %v1104, 0
        %1132 = vmatprep.subr.bf16.mxu0 0
        %1133 = vmatpush1.bf16.msra.mxu0 %v1121
        %1134 = vmatprep.subr.bf16.mxu0 0
        %1135 = vmatpush1.bf16.msra.mxu0 %v1122
        %1136 = vmatprep.subr.bf16.mxu0 0
        %1137 = vmatpush1.bf16.msra.mxu0 %v1123
        %1138 = vmatprep.subr.bf16.mxu0 0
        %1139 = vmatpush1.bf16.msra.mxu0 %v1124
        %1140 = vmatprep.subr.bf16.mxu0 0
        %1141 = vmatpush1.bf16.msra.mxu0 0
        %1142 = vmatprep.subr.bf16.mxu0 0
        %1143 = vmatpush1.bf16.msra.mxu0 0
        %1144 = vmatprep.subr.bf16.mxu0 0
        %1145 = vmatpush1.bf16.msra.mxu0 0
        %1146 = vmatprep.subr.bf16.mxu0 0
        %1147 = vmatpush1.bf16.msra.mxu0 0
        %1148 = vmatprep.subr.bf16.mxu0 0
        %1149 = vmatpush1.bf16.msra.mxu0 0
        %1150 = vmatprep.subr.bf16.mxu0 0
        %1151 = vmatpush1.bf16.msra.mxu0 0
        %1152 = vmatprep.subr.bf16.mxu0 0
        %1153 = vmatpush1.bf16.msra.mxu0 0
        %1154 = vmatprep.subr.bf16.mxu0 0
        %1155 = vmatpush1.bf16.msra.mxu0 0
        %1156 = vmatprep.subr.bf16.mxu0 0
        %1157 = vmatpush1.bf16.msra.mxu0 0
        %1158 = vmatprep.subr.bf16.mxu0 0
        %1159 = vmatpush1.bf16.msra.mxu0 0
        %1160 = vmatprep.subr.bf16.mxu0 0
        %1161 = vmatpush1.bf16.msra.mxu0 0
        %1162 = vmatprep.subr.bf16.mxu0 0
        %1163 = vmatpush1.bf16.msra.mxu0 0
        %1164 = vmatprep.mubr.bf16.mxu0 0
        %1165 = vmatmul.mubr.bf16.gmra.mrb[0].mxu0 %v1130
        %v1166 = vpop.f32.mrb[0].mxu0
        %v1167 = vadd.f32 0.0, %v1166
        %v1168 = vpop.f32.mrb[0].mxu0
        %v1169 = vpop.f32.mrb[0].mxu0
        %v1170 = vpop.f32.mrb[0].mxu0
        %1171 = vdwg.mxu0
        %v1172 = vadd.f32 %v1090, %v1167
        %v1173 = vld [vmem:[#allocation11] sm:$0x1]
        %v1175 = vlaneseq
        %v1176 = vshrl.u32 %v1175, 7
        %v1177 = vsub.s32 0, %v1176
        %v1178 = vrot.slane %v1173, %v1177
        %v1180 = vadd.f32 %v1172, %v1178
        %v1181 = vunpack.c.l.bf16 %v447
        %v1182 = vadd.f32 %v1180, %v1181
        %v1183 = vld [vmem:[%s405] sm:$0xf]
        %v1184 = vunpack.c.l.bf16 %v1183
        %v1185 = vadd.f32 %v1182, %v1184
        %v1186 = vmul.f32 %v1185, 0.5
        %v1187 = vpack.c.bf16 %v1186, %v1186
        %vm1188 = vcmask 519168
        %1189 = vst.msk [vmem:[%s445] sm:$0xf] %vm1188, %v1187
        %s1190 = sand.u32 %s219, 1
        %s1191 = scalar_lea.sflag [#allocation4], %s1190
        %s1192 = sand.u32 %s219, 1
        %s1193 = smul.addr %s1192, 4
        %s1194 = scalar_lea.vmem [#allocation14], %s1193
        // Predicated region
        $region77: #{_lambda_.22} parent=47 // pred_check
          %p1195 = pneg %p229
        $region78: #{_lambda_.22} parent=47 // pred_check_branch
          %1197 = sbr.rel (%p1195) target = $region80
        $region79: #{_lambda_.22} parent=47 // pred_region
          %s1199 = ssub.s32 64, 64
          %1200 = vsyncadd %s1191, %s1199
          %s1201 = sadd.s32 %s34, %s33
          %s1202 = smul.addr %s1201, 64
          %s1203 = scalar_lea.hbm %s7, %s1202
          %s1205 = sshll.u32 %s1194, 4
          %s1206 = int_to_ptr.vmem [resolvable:$true] %s1205
          %1208 = dma.vmem_to_hbm [thread:$0]  %s1206, 64, %s1203, %s1191
        $region80: #{_lambda_.22} parent=47 // pred_fallthru
          _
      $region48: #{_lambda_.22} parent=5 // pred_fallthru
        _
      %p1209 = scmp.le.s32.totalorder 2, %s24
      // Predicated region
      $region81: #{_lambda_.22} parent=5 // pred_check
        %p1210 = pneg %p1209
      $region82: #{_lambda_.22} parent=5 // pred_check_branch
        %1212 = sbr.rel (%p1210) target = $region84
      $region83: #{_lambda_.22} parent=5 // pred_region
        %s1213 = ssub.s32 %s24, 2
        // Predicated region
        $region85: #{_lambda_.22} parent=83 // pred_check
          %p1214 = pneg %p235
        $region86: #{_lambda_.22} parent=83 // pred_check_branch
          %1216 = sbr.rel (%p1214) target = $region88
        $region87: #{_lambda_.22} parent=83 // pred_region
          %s1217 = sand.u32 %s220, 1
          %s1218 = scalar_lea.sflag [#allocation4], %s1217
          %s1219 = sand.u32 %s220, 1
          %s1220 = smul.addr %s1219, 4
          %s1221 = scalar_lea.vmem [#allocation14], %s1220
          %1222 = dma.done %s1218, 64
        $region88: #{_lambda_.22} parent=83 // pred_fallthru
          _
      $region84: #{_lambda_.22} parent=5 // pred_fallthru
        _
    $region6: #{_lambda_.22} parent=1 // loop_footer
      %s28 = sadd.s32 1, %s24
    $region7: #{_lambda_.22} parent=1 // loop_footer_branch
      %23 = sbr.rel target = $region3
    $region8: #{_lambda_.22} parent=1 // loop_exit
      _
    %1223 = vsyncpa [#allocation3], 1
    %s1224 = scalar_lea.sflag [#allocation3], 1
    %1225 = vsyncpa %s1224, 1
    %1226 = vsyncpa [#allocation6], 1
    %s1227 = scalar_lea.sflag [#allocation6], 1
    %1228 = vsyncpa %s1227, 1
    %1229 = vsyncpa [#allocation9], 1
    %1230 = vsyncpa [#allocation12], 1
    %1231 = vsyncpa [#allocation4], 1
    %s1232 = scalar_lea.sflag [#allocation4], 1
    %1233 = vsyncpa %s1232, 1

// kernel: _lambda_.24
$region0: #{_lambda_.24}
  #allocation0 [shape = 'u32[]', space=smem, size = 0x4, offset = 0x4, fixed_abs, tag = 'smem constant byte address 0x4 - core index']
  #allocation1 [shape = 'u32[144,128]{1,0:T(1,128)}', space=vmem, size = 0x12000, scoped, tag = 'internal scratch']
  %s0 = inlined_call_operand.hbm [shape: bf16[2,8,16], index: 0, kind: input, shape index: {}]
  %s1 = inlined_call_operand.hbm [shape: bf16[16,128], index: 1, kind: input, shape index: {}]
  %s2 = inlined_call_operand.hbm [shape: f32[1,128], index: 2, kind: input, shape index: {}]
  %s3 = inlined_call_operand.hbm [shape: bf16[2,8,128], index: 3, kind: input, shape index: {}]
  %s4 = inlined_call_operand.hbm [shape: bf16[2,8,128], index: 4, kind: output, shape index: {}]
  %s5 = sld [smem:[#allocation0]]
  $region65: #{_lambda_.24} parent=0
    _
  %s7 = ssub.s32 1, %s5
  %s8 = scalar_select 0, %s7, %s5
  $region1: #{_lambda_.24} parent=0
    #allocation2 [shape = 'u8[4096]{0}', space=vmem, size = 0x1000, scoped, tag = 'input window, operand 0']
    #allocation3 [shape = 's32[2]{0}', space=sflag, size = 0x8, scoped, tag = 'scoped memory for _lambda_.24']
    #allocation4 [shape = 's32[2]{0}', space=sflag, size = 0x8, scoped, tag = 'scoped memory for _lambda_.24']
    #allocation5 [shape = 'u8[4096]{0}', space=vmem, size = 0x1000, scoped, tag = 'input window, operand 1, single buffered']
    #allocation6 [shape = 's32[1]{0}', space=sflag, size = 0x4, scoped, tag = 'scoped memory for _lambda_.24']
    #allocation7 [shape = 'u8[512]{0}', space=vmem, size = 0x400, scoped, tag = 'input window, operand 2, single buffered']
    #allocation8 [shape = 'u8[4096]{0}', space=vmem, size = 0x1000, scoped, tag = 'input window, operand 3']
    #allocation9 [shape = 's32[2]{0}', space=sflag, size = 0x8, scoped, tag = 'scoped memory for _lambda_.24']
    #allocation10 [shape = 'u8[4096]{0}', space=vmem, size = 0x1000, scoped, tag = 'output window, operand 0']
    %9 = vsyncpa [#allocation3], 0
    %s10 = scalar_lea.sflag [#allocation3], 1
    %11 = vsyncpa %s10, 0
    %12 = vsyncpa [#allocation6], 0
    %13 = vsyncpa [#allocation9], 0
    %s14 = scalar_lea.sflag [#allocation9], 1
    %15 = vsyncpa %s14, 0
    %16 = vsyncpa [#allocation4], 0
    %s17 = scalar_lea.sflag [#allocation4], 1
    %18 = vsyncpa %s17, 0
    loop: start=0, step=1, limit=4
    $region2: #{_lambda_.24} parent=1 // loop_pre_header
      _
    $region3: #{_lambda_.24} parent=1 // loop_header
      %s20 = sphi 0, %s24
      %p21 = scmp.ge.s32.totalorder %s20, 4
      %s27 = sphi 0, %s39
      %s28 = sphi 0, %s35
      %s29 = sphi 0, %s27
      %s30 = sphi 0, %s28
      %s31 = sphi 0, %s29
      %s32 = sphi 0, %s30
      %s44 = sphi 0, %s46
      %s47 = sphi 0, %s44
      %s48 = sphi 0, %s47
      %s64 = sphi 0, %s48
      %s68 = sphi 0, %s68
      %s70 = sphi 0, %s68
      %s71 = sphi 0, %s70
      %s85 = sphi 0, %s71
      %s89 = sphi 0, %s89
      %s91 = sphi 0, %s89
      %s92 = sphi 0, %s91
      %s106 = sphi 0, %s92
      %s114 = sphi 0, %s116
      %s117 = sphi 0, %s114
      %s118 = sphi 0, %s117
      %s134 = sphi 0, %s118
      %s142 = sphi 0, %s144
      %s145 = sphi 0, %s142
      %s146 = sphi 0, %s145
      %s162 = sphi 0, %s146
    $region4: #{_lambda_.24} parent=1 // loop_header_branch
      %23 = sbr.rel (%p21) target = $region8
    $region5: #{_lambda_.24} parent=1 // loop_body
      %s25 = ssub.s32 %s20, 1
      %s26 = ssub.s32 %s20, 2
      %s33 = sadd.s32 1, %s28
      %p34 = scmp.ge.s32.totalorder %s33, 1
      %s35 = scalar_select %p34, 0, %s33
      %s36 = sadd.s32 1, %s27
      %s37 = scalar_select %p34, %s36, %s27
      %p38 = scmp.ge.s32.totalorder %s37, 2
      %s39 = scalar_select %p38, 0, %s37
      %s40 = ssub.s32 %s27, %s39
      %s41 = ssub.s32 %s28, %s35
      %s42 = sor.u32 %s40, %s41
      %p43 = scmp.eq.s32.totalorder %s42, 0
      %s45 = sadd.s32 %s44, 1
      %s46 = scalar_select %p43, %s44, %s45
      %p49 = pneg %p43
      %p50 = scmp.eq.s32.totalorder %s20, 1
      %p51 = por %p49, %p50
      %p52 = scmp.ne.s32.totalorder %s44, %s47
      %p53 = scmp.eq.s32.totalorder %s20, 0
      %p54 = por %p52, %p53
      %p55 = scmp.ne.s32.totalorder %s44, %s47
      %p56 = scmp.eq.s32.totalorder %s25, 1
      %p57 = por %p55, %p56
      %p58 = scmp.ne.s32.totalorder %s47, %s48
      %p59 = scmp.eq.s32.totalorder %s25, 0
      %p60 = por %p58, %p59
      %p61 = scmp.ne.s32.totalorder %s47, %s48
      %p62 = scmp.eq.s32.totalorder %s26, 1
      %p63 = por %p61, %p62
      %p65 = scmp.ne.s32.totalorder %s48, %s64
      %p66 = scmp.eq.s32.totalorder %s26, 0
      %p67 = por %p65, %p66
      %s69 = sadd.s32 %s68, 1
      %p72 = scmp.eq.s32.totalorder %s20, 1
      %p73 = scmp.ne.s32.totalorder %s68, %s70
      %p74 = scmp.eq.s32.totalorder %s20, 0
      %p75 = por %p73, %p74
      %p76 = scmp.ne.s32.totalorder %s68, %s70
      %p77 = scmp.eq.s32.totalorder %s25, 1
      %p78 = por %p76, %p77
      %p79 = scmp.ne.s32.totalorder %s70, %s71
      %p80 = scmp.eq.s32.totalorder %s25, 0
      %p81 = por %p79, %p80
      %p82 = scmp.ne.s32.totalorder %s70, %s71
      %p83 = scmp.eq.s32.totalorder %s26, 1
      %p84 = por %p82, %p83
      %p86 = scmp.ne.s32.totalorder %s71, %s85
      %p87 = scmp.eq.s32.totalorder %s26, 0
      %p88 = por %p86, %p87
      %s90 = sadd.s32 %s89, 1
      %p93 = scmp.eq.s32.totalorder %s20, 1
      %p94 = scmp.ne.s32.totalorder %s89, %s91
      %p95 = scmp.eq.s32.totalorder %s20, 0
      %p96 = por %p94, %p95
      %p97 = scmp.ne.s32.totalorder %s89, %s91
      %p98 = scmp.eq.s32.totalorder %s25, 1
      %p99 = por %p97, %p98
      %p100 = scmp.ne.s32.totalorder %s91, %s92
      %p101 = scmp.eq.s32.totalorder %s25, 0
      %p102 = por %p100, %p101
      %p103 = scmp.ne.s32.totalorder %s91, %s92
      %p104 = scmp.eq.s32.totalorder %s26, 1
      %p105 = por %p103, %p104
      %p107 = scmp.ne.s32.totalorder %s92, %s106
      %p108 = scmp.eq.s32.totalorder %s26, 0
      %p109 = por %p107, %p108
      %s110 = ssub.s32 %s27, %s39
      %s111 = ssub.s32 %s28, %s35
      %s112 = sor.u32 %s110, %s111
      %p113 = scmp.eq.s32.totalorder %s112, 0
      %s115 = sadd.s32 %s114, 1
      %s116 = scalar_select %p113, %s114, %s115
      %p119 = pneg %p113
      %p120 = scmp.eq.s32.totalorder %s20, 1
      %p121 = por %p119, %p120
      %p122 = scmp.ne.s32.totalorder %s114, %s117
      %p123 = scmp.eq.s32.totalorder %s20, 0
      %p124 = por %p122, %p123
      %p125 = scmp.ne.s32.totalorder %s114, %s117
      %p126 = scmp.eq.s32.totalorder %s25, 1
      %p127 = por %p125, %p126
      %p128 = scmp.ne.s32.totalorder %s117, %s118
      %p129 = scmp.eq.s32.totalorder %s25, 0
      %p130 = por %p128, %p129
      %p131 = scmp.ne.s32.totalorder %s117, %s118
      %p132 = scmp.eq.s32.totalorder %s26, 1
      %p133 = por %p131, %p132
      %p135 = scmp.ne.s32.totalorder %s118, %s134
      %p136 = scmp.eq.s32.totalorder %s26, 0
      %p137 = por %p135, %p136
      %s138 = ssub.s32 %s27, %s39
      %s139 = ssub.s32 %s28, %s35
      %s140 = sor.u32 %s138, %s139
      %p141 = scmp.eq.s32.totalorder %s140, 0
      %s143 = sadd.s32 %s142, 1
      %s144 = scalar_select %p141, %s142, %s143
      %p147 = pneg %p141
      %p148 = scmp.eq.s32.totalorder %s20, 1
      %p149 = por %p147, %p148
      %p150 = scmp.ne.s32.totalorder %s142, %s145
      %p151 = scmp.eq.s32.totalorder %s20, 0
      %p152 = por %p150, %p151
      %p153 = scmp.ne.s32.totalorder %s142, %s145
      %p154 = scmp.eq.s32.totalorder %s25, 1
      %p155 = por %p153, %p154
      %p156 = scmp.ne.s32.totalorder %s145, %s146
      %p157 = scmp.eq.s32.totalorder %s25, 0
      %p158 = por %p156, %p157
      %p159 = scmp.ne.s32.totalorder %s145, %s146
      %p160 = scmp.eq.s32.totalorder %s26, 1
      %p161 = por %p159, %p160
      %p163 = scmp.ne.s32.totalorder %s146, %s162
      %p164 = scmp.eq.s32.totalorder %s26, 0
      %p165 = por %p163, %p164
      %p166 = scmp.le.s32.totalorder 1, %s20
      %p167 = scmp.lt.s32.totalorder %s20, 3
      %p168 = pnand %p166, %p167
      %p169 = pneg %p168
      // Predicated region
      $region9: #{_lambda_.24} parent=5 // pred_check
        _
      $region10: #{_lambda_.24} parent=5 // pred_check_branch
        %171 = sbr.rel (%p168) target = $region12
      $region11: #{_lambda_.24} parent=5 // pred_region
        %s172 = ssub.s32 %s20, 1
        // Predicated region
        $region13: #{_lambda_.24} parent=11 // pred_check
          %p173 = pneg %p81
        $region14: #{_lambda_.24} parent=11 // pred_check_branch
          %175 = sbr.rel (%p173) target = $region16
        $region15: #{_lambda_.24} parent=11 // pred_region
          %s177 = ssub.s32 128, 128
          %178 = vsyncadd [#allocation6], %s177
          %s179 = sshll.u32 [#allocation5], 4
          %s180 = int_to_ptr.vmem [resolvable:$true] %s179
          %185 = dma.hbm_to_vmem [thread:$0]  %s1, 128, %s180, [#allocation6], 64, 64, 4
        $region16: #{_lambda_.24} parent=11 // pred_fallthru
          _
        // Predicated region
        $region17: #{_lambda_.24} parent=11 // pred_check
          %p186 = pneg %p102
        $region18: #{_lambda_.24} parent=11 // pred_check_branch
          %188 = sbr.rel (%p186) target = $region20
        $region19: #{_lambda_.24} parent=11 // pred_region
          %s190 = ssub.s32 16, 16
          %191 = vsyncadd [#allocation6], %s190
          %s193 = sshll.u32 [#allocation7], 4
          %s194 = int_to_ptr.vmem [resolvable:$true] %s193
          %196 = dma.hbm_to_vmem [thread:$0]  %s2, 16, %s194, [#allocation6]
        $region20: #{_lambda_.24} parent=11 // pred_fallthru
          _
      $region12: #{_lambda_.24} parent=5 // pred_fallthru
        _
      %p197 = scmp.lt.s32.totalorder %s20, 2
      // Predicated region
      $region21: #{_lambda_.24} parent=5 // pred_check
        %p198 = pneg %p197
      $region22: #{_lambda_.24} parent=5 // pred_check_branch
        %200 = sbr.rel (%p198) target = $region24
      $region23: #{_lambda_.24} parent=5 // pred_region
        // Predicated region
        $region25: #{_lambda_.24} parent=23 // pred_check
          %p201 = pneg %p54
        $region26: #{_lambda_.24} parent=23 // pred_check_branch
          %203 = sbr.rel (%p201) target = $region28
        $region27: #{_lambda_.24} parent=23 // pred_region
          %s204 = sand.u32 %s44, 1
          %s205 = scalar_lea.sflag [#allocation3], %s204
          %s206 = sand.u32 %s44, 1
          %s207 = smul.addr %s206, 4
          %s208 = scalar_lea.vmem [#allocation2], %s207
          %s210 = ssub.s32 64, 64
          %211 = vsyncadd %s205, %s210
          %s212 = sadd.s32 %s28, %s27
          %s213 = smul.addr %s212, 64
          %s214 = scalar_lea.hbm %s0, %s213
          %s216 = sshll.u32 %s208, 4
          %s217 = int_to_ptr.vmem [resolvable:$true] %s216
          %219 = dma.hbm_to_vmem [thread:$0]  %s214, 64, %s217, %s205
        $region28: #{_lambda_.24} parent=23 // pred_fallthru
          _
        // Predicated region
        $region29: #{_lambda_.24} parent=23 // pred_check
          %p220 = pneg %p124
        $region30: #{_lambda_.24} parent=23 // pred_check_branch
          %222 = sbr.rel (%p220) target = $region32
        $region31: #{_lambda_.24} parent=23 // pred_region
          %s223 = sand.u32 %s114, 1
          %s224 = scalar_lea.sflag [#allocation9], %s223
          %s225 = sand.u32 %s114, 1
          %s226 = smul.addr %s225, 4
          %s227 = scalar_lea.vmem [#allocation8], %s226
          %s229 = ssub.s32 64, 64
          %230 = vsyncadd %s224, %s229
          %s231 = sadd.s32 %s28, %s27
          %s232 = smul.addr %s231, 64
          %s233 = scalar_lea.hbm %s3, %s232
          %s235 = sshll.u32 %s227, 4
          %s236 = int_to_ptr.vmem [resolvable:$true] %s235
          %238 = dma.hbm_to_vmem [thread:$0]  %s233, 64, %s236, %s224
        $region32: #{_lambda_.24} parent=23 // pred_fallthru
          _
      $region24: #{_lambda_.24} parent=5 // pred_fallthru
        _
      %p239 = scmp.le.s32.totalorder 1, %s20
      %p240 = scmp.lt.s32.totalorder %s20, 3
      %p241 = pnand %p239, %p240
      %p242 = pneg %p241
      // Predicated region
      $region33: #{_lambda_.24} parent=5 // pred_check
        _
      $region34: #{_lambda_.24} parent=5 // pred_check_branch
        %244 = sbr.rel (%p241) target = $region36
      $region35: #{_lambda_.24} parent=5 // pred_region
        %s245 = ssub.s32 %s20, 1
        %s246 = sand.u32 %s47, 1
        %s247 = scalar_lea.sflag [#allocation3], %s246
        %s248 = sand.u32 %s47, 1
        %s249 = smul.addr %s248, 4
        %s250 = scalar_lea.vmem [#allocation2], %s249
        // Predicated region
        $region37: #{_lambda_.24} parent=35 // pred_check
          %p251 = pneg %p60
        $region38: #{_lambda_.24} parent=35 // pred_check_branch
          %253 = sbr.rel (%p251) target = $region40
        $region39: #{_lambda_.24} parent=35 // pred_region
          %254 = dma.done %s247, 64
        $region40: #{_lambda_.24} parent=35 // pred_fallthru
          _
        // Predicated region
        $region41: #{_lambda_.24} parent=35 // pred_check
          %p255 = pneg %p81
        $region42: #{_lambda_.24} parent=35 // pred_check_branch
          %257 = sbr.rel (%p255) target = $region44
        $region43: #{_lambda_.24} parent=35 // pred_region
          %258 = dma.done [#allocation6], 128
        $region44: #{_lambda_.24} parent=35 // pred_fallthru
          _
        // Predicated region
        $region45: #{_lambda_.24} parent=35 // pred_check
          %p259 = pneg %p102
        $region46: #{_lambda_.24} parent=35 // pred_check_branch
          %261 = sbr.rel (%p259) target = $region48
        $region47: #{_lambda_.24} parent=35 // pred_region
          %262 = dma.done [#allocation6], 16
        $region48: #{_lambda_.24} parent=35 // pred_fallthru
          _
        %s263 = sand.u32 %s117, 1
        %s264 = scalar_lea.sflag [#allocation9], %s263
        %s265 = sand.u32 %s117, 1
        %s266 = smul.addr %s265, 4
        %s267 = scalar_lea.vmem [#allocation8], %s266
        // Predicated region
        $region49: #{_lambda_.24} parent=35 // pred_check
          %p268 = pneg %p130
        $region50: #{_lambda_.24} parent=35 // pred_check_branch
          %270 = sbr.rel (%p268) target = $region52
        $region51: #{_lambda_.24} parent=35 // pred_region
          %271 = dma.done %s264, 64
        $region52: #{_lambda_.24} parent=35 // pred_fallthru
          _
        %s272 = sand.u32 %s47, 1
        %s273 = scalar_lea.sflag [#allocation3], %s272
        %s274 = sand.u32 %s47, 1
        %s275 = smul.addr %s274, 4
        %s276 = scalar_lea.vmem [#allocation2], %s275
        %p277 = pneg %p60
        %p278 = pneg %p57
        %p279 = pneg %p81
        %p280 = pneg %p78
        %p281 = pneg %p102
        %p282 = pneg %p99
        %s283 = sand.u32 %s117, 1
        %s284 = scalar_lea.sflag [#allocation9], %s283
        %s285 = sand.u32 %s117, 1
        %s286 = smul.addr %s285, 4
        %s287 = scalar_lea.vmem [#allocation8], %s286
        %p288 = pneg %p130
        %p289 = pneg %p127
        %p290 = pneg %p158
        %p291 = pneg %p155
        %s292 = sand.u32 %s145, 1
        %s293 = scalar_lea.sflag [#allocation4], %s292
        %s294 = sand.u32 %s145, 1
        %s295 = smul.addr %s294, 4
        %s296 = scalar_lea.vmem [#allocation10], %s295
        %v298 = vld [vmem:[%s250] sm:$0xf]
        %v299 = vld [vmem:[#allocation5] sm:$0xf]
        %v300 = vld [vmem:[#allocation5 + $0x4] sm:$0xf]
        %v301 = vld [vmem:[#allocation7] sm:$0x1]
        %v303 = vlaneseq
        %v304 = vshrl.u32 %v303, 7
        %v305 = vsub.s32 0, %v304
        %v306 = vrot.slane %v301, %v305
        %v310 = vunpack.c.l.b16 %v299
        %v311 = vunpack.c.l.b16 %v300
        %v312 = vpack.c.b16 %v311, %v310
        %vm314 = vcmask 130048
        %v316 = vsel %vm314, %v298, 0
        %318 = vmatprep.subr.bf16.mxu0 0
        %319 = vmatpush1.bf16.msra.mxu0 %v312
        %320 = vmatprep.subr.bf16.mxu0 0
        %321 = vmatpush1.bf16.msra.mxu0 0
        %322 = vmatprep.subr.bf16.mxu0 0
        %323 = vmatpush1.bf16.msra.mxu0 0
        %324 = vmatprep.subr.bf16.mxu0 0
        %325 = vmatpush1.bf16.msra.mxu0 0
        %326 = vmatprep.subr.bf16.mxu0 0
        %327 = vmatpush1.bf16.msra.mxu0 0
        %328 = vmatprep.subr.bf16.mxu0 0
        %329 = vmatpush1.bf16.msra.mxu0 0
        %330 = vmatprep.subr.bf16.mxu0 0
        %331 = vmatpush1.bf16.msra.mxu0 0
        %332 = vmatprep.subr.bf16.mxu0 0
        %333 = vmatpush1.bf16.msra.mxu0 0
        %334 = vmatprep.subr.bf16.mxu0 0
        %335 = vmatpush1.bf16.msra.mxu0 0
        %336 = vmatprep.subr.bf16.mxu0 0
        %337 = vmatpush1.bf16.msra.mxu0 0
        %338 = vmatprep.subr.bf16.mxu0 0
        %339 = vmatpush1.bf16.msra.mxu0 0
        %340 = vmatprep.subr.bf16.mxu0 0
        %341 = vmatpush1.bf16.msra.mxu0 0
        %342 = vmatprep.subr.bf16.mxu0 0
        %343 = vmatpush1.bf16.msra.mxu0 0
        %344 = vmatprep.subr.bf16.mxu0 0
        %345 = vmatpush1.bf16.msra.mxu0 0
        %346 = vmatprep.subr.bf16.mxu0 0
        %347 = vmatpush1.bf16.msra.mxu0 0
        %348 = vmatprep.subr.bf16.mxu0 0
        %349 = vmatpush1.bf16.msra.mxu0 0
        %350 = vmatprep.mubr.bf16.mxu0 0
        %351 = vmatmul.mubr.bf16.gmra.mrb[0].mxu0 %v316
        %v352 = vpop.f32.mrb[0].mxu0
        %v353 = vadd.f32 %v306, %v352
        %v354 = vpop.f32.mrb[0].mxu0
        %v355 = vpop.f32.mrb[0].mxu0
        %v356 = vpop.f32.mrb[0].mxu0
        %357 = vdwg.mxu0
        %v358 = vld [vmem:[%s267] sm:$0xf]
        %v359 = vunpack.c.l.bf16 %v358
        %v360 = vadd.f32 %v353, %v359
        %v361 = vpack.c.bf16 %v360, %v360
        %362 = vst [vmem:[%s296] sm:$0xf] %v361
        %s363 = sand.u32 %s145, 1
        %s364 = scalar_lea.sflag [#allocation4], %s363
        %s365 = sand.u32 %s145, 1
        %s366 = smul.addr %s365, 4
        %s367 = scalar_lea.vmem [#allocation10], %s366
        // Predicated region
        $region53: #{_lambda_.24} parent=35 // pred_check
          %p368 = pneg %p155
        $region54: #{_lambda_.24} parent=35 // pred_check_branch
          %370 = sbr.rel (%p368) target = $region56
        $region55: #{_lambda_.24} parent=35 // pred_region
          %s372 = ssub.s32 64, 64
          %373 = vsyncadd %s364, %s372
          %s374 = sadd.s32 %s30, %s29
          %s375 = smul.addr %s374, 64
          %s376 = scalar_lea.hbm %s4, %s375
          %s378 = sshll.u32 %s367, 4
          %s379 = int_to_ptr.vmem [resolvable:$true] %s378
          %381 = dma.vmem_to_hbm [thread:$0]  %s379, 64, %s376, %s364
        $region56: #{_lambda_.24} parent=35 // pred_fallthru
          _
      $region36: #{_lambda_.24} parent=5 // pred_fallthru
        _
      %p382 = scmp.le.s32.totalorder 2, %s20
      // Predicated region
      $region57: #{_lambda_.24} parent=5 // pred_check
        %p383 = pneg %p382
      $region58: #{_lambda_.24} parent=5 // pred_check_branch
        %385 = sbr.rel (%p383) target = $region60
      $region59: #{_lambda_.24} parent=5 // pred_region
        %s386 = ssub.s32 %s20, 2
        // Predicated region
        $region61: #{_lambda_.24} parent=59 // pred_check
          %p387 = pneg %p161
        $region62: #{_lambda_.24} parent=59 // pred_check_branch
          %389 = sbr.rel (%p387) target = $region64
        $region63: #{_lambda_.24} parent=59 // pred_region
          %s390 = sand.u32 %s146, 1
          %s391 = scalar_lea.sflag [#allocation4], %s390
          %s392 = sand.u32 %s146, 1
          %s393 = smul.addr %s392, 4
          %s394 = scalar_lea.vmem [#allocation10], %s393
          %395 = dma.done %s391, 64
        $region64: #{_lambda_.24} parent=59 // pred_fallthru
          _
      $region60: #{_lambda_.24} parent=5 // pred_fallthru
        _
    $region6: #{_lambda_.24} parent=1 // loop_footer
      %s24 = sadd.s32 1, %s20
    $region7: #{_lambda_.24} parent=1 // loop_footer_branch
      %19 = sbr.rel target = $region3
    $region8: #{_lambda_.24} parent=1 // loop_exit
      _
    %396 = vsyncpa [#allocation3], 1
    %s397 = scalar_lea.sflag [#allocation3], 1
    %398 = vsyncpa %s397, 1
    %399 = vsyncpa [#allocation6], 1
    %400 = vsyncpa [#allocation9], 1
    %s401 = scalar_lea.sflag [#allocation9], 1
    %402 = vsyncpa %s401, 1
    %403 = vsyncpa [#allocation4], 1
    %s404 = scalar_lea.sflag [#allocation4], 1
    %405 = vsyncpa %s404, 1

// kernel: _lambda_.26
$region0: #{_lambda_.26}
  #allocation0 [shape = 'u32[]', space=smem, size = 0x4, offset = 0x4, fixed_abs, tag = 'smem constant byte address 0x4 - core index']
  #allocation1 [shape = 'u32[144,128]{1,0:T(1,128)}', space=vmem, size = 0x12000, scoped, tag = 'internal scratch']
  %s0 = inlined_call_operand.hbm [shape: bf16[2,8,128], index: 0, kind: input, shape index: {}]
  %s1 = inlined_call_operand.hbm [shape: bf16[2,1,18,128], index: 1, kind: input, shape index: {}]
  %s2 = inlined_call_operand.hbm [shape: bf16[384,128], index: 2, kind: input, shape index: {}]
  %s3 = inlined_call_operand.hbm [shape: f32[1,128], index: 3, kind: input, shape index: {}, may-alias: {3,5}]
  %s4 = inlined_call_operand.hbm [shape: bf16[384,128], index: 4, kind: input, shape index: {}]
  %s5 = inlined_call_operand.hbm [shape: f32[1,128], index: 5, kind: input, shape index: {}, may-alias: {3,5}]
  %s6 = inlined_call_operand.hbm [shape: bf16[2,8,128], index: 6, kind: output, shape index: {}]
  %s7 = sld [smem:[#allocation0]]
  $region81: #{_lambda_.26} parent=0
    _
  %s9 = ssub.s32 1, %s7
  %s10 = scalar_select 0, %s9, %s7
  $region1: #{_lambda_.26} parent=0
    #allocation2 [shape = 'u8[4096]{0}', space=vmem, size = 0x1000, scoped, tag = 'input window, operand 0']
    #allocation3 [shape = 's32[2]{0}', space=sflag, size = 0x8, scoped, tag = 'scoped memory for _lambda_.26']
    #allocation4 [shape = 's32[2]{0}', space=sflag, size = 0x8, scoped, tag = 'scoped memory for _lambda_.26']
    #allocation5 [shape = 'u8[12288]{0}', space=vmem, size = 0x3000, scoped, tag = 'input window, operand 1']
    #allocation6 [shape = 's32[2]{0}', space=sflag, size = 0x8, scoped, tag = 'scoped memory for _lambda_.26']
    #allocation7 [shape = 'u8[98304]{0}', space=vmem, size = 0x18000, scoped, tag = 'input window, operand 2, single buffered']
    #allocation8 [shape = 'u8[512]{0}', space=vmem, size = 0x400, scoped, tag = 'input window, operand 3, single buffered']
    #allocation9 [shape = 's32[1]{0}', space=sflag, size = 0x4, scoped, tag = 'scoped memory for _lambda_.26']
    #allocation10 [shape = 'u8[98304]{0}', space=vmem, size = 0x18000, scoped, tag = 'input window, operand 4, single buffered']
    #allocation11 [shape = 'u8[512]{0}', space=vmem, size = 0x400, scoped, tag = 'input window, operand 5, single buffered']
    #allocation12 [shape = 's32[1]{0}', space=sflag, size = 0x4, scoped, tag = 'scoped memory for _lambda_.26']
    #allocation13 [shape = 'u8[4096]{0}', space=vmem, size = 0x1000, scoped, tag = 'output window, operand 0']
    %11 = vsyncpa [#allocation3], 0
    %s12 = scalar_lea.sflag [#allocation3], 1
    %13 = vsyncpa %s12, 0
    %14 = vsyncpa [#allocation6], 0
    %s15 = scalar_lea.sflag [#allocation6], 1
    %16 = vsyncpa %s15, 0
    %17 = vsyncpa [#allocation9], 0
    %18 = vsyncpa [#allocation12], 0
    %19 = vsyncpa [#allocation4], 0
    %s20 = scalar_lea.sflag [#allocation4], 1
    %21 = vsyncpa %s20, 0
    loop: start=0, step=1, limit=4
    $region2: #{_lambda_.26} parent=1 // loop_pre_header
      _
    $region3: #{_lambda_.26} parent=1 // loop_header
      %s23 = sphi 0, %s27
      %p24 = scmp.ge.s32.totalorder %s23, 4
      %s30 = sphi 0, %s42
      %s31 = sphi 0, %s38
      %s32 = sphi 0, %s30
      %s33 = sphi 0, %s31
      %s34 = sphi 0, %s32
      %s35 = sphi 0, %s33
      %s47 = sphi 0, %s49
      %s50 = sphi 0, %s47
      %s51 = sphi 0, %s50
      %s67 = sphi 0, %s51
      %s75 = sphi 0, %s77
      %s78 = sphi 0, %s75
      %s79 = sphi 0, %s78
      %s95 = sphi 0, %s79
      %s99 = sphi 0, %s99
      %s101 = sphi 0, %s99
      %s102 = sphi 0, %s101
      %s116 = sphi 0, %s102
      %s120 = sphi 0, %s120
      %s122 = sphi 0, %s120
      %s123 = sphi 0, %s122
      %s137 = sphi 0, %s123
      %s141 = sphi 0, %s141
      %s143 = sphi 0, %s141
      %s144 = sphi 0, %s143
      %s158 = sphi 0, %s144
      %s162 = sphi 0, %s162
      %s164 = sphi 0, %s162
      %s165 = sphi 0, %s164
      %s179 = sphi 0, %s165
      %s187 = sphi 0, %s189
      %s190 = sphi 0, %s187
      %s191 = sphi 0, %s190
      %s207 = sphi 0, %s191
    $region4: #{_lambda_.26} parent=1 // loop_header_branch
      %26 = sbr.rel (%p24) target = $region8
    $region5: #{_lambda_.26} parent=1 // loop_body
      %s28 = ssub.s32 %s23, 1
      %s29 = ssub.s32 %s23, 2
      %s36 = sadd.s32 1, %s31
      %p37 = scmp.ge.s32.totalorder %s36, 1
      %s38 = scalar_select %p37, 0, %s36
      %s39 = sadd.s32 1, %s30
      %s40 = scalar_select %p37, %s39, %s30
      %p41 = scmp.ge.s32.totalorder %s40, 2
      %s42 = scalar_select %p41, 0, %s40
      %s43 = ssub.s32 %s30, %s42
      %s44 = ssub.s32 %s31, %s38
      %s45 = sor.u32 %s43, %s44
      %p46 = scmp.eq.s32.totalorder %s45, 0
      %s48 = sadd.s32 %s47, 1
      %s49 = scalar_select %p46, %s47, %s48
      %p52 = pneg %p46
      %p53 = scmp.eq.s32.totalorder %s23, 1
      %p54 = por %p52, %p53
      %p55 = scmp.ne.s32.totalorder %s47, %s50
      %p56 = scmp.eq.s32.totalorder %s23, 0
      %p57 = por %p55, %p56
      %p58 = scmp.ne.s32.totalorder %s47, %s50
      %p59 = scmp.eq.s32.totalorder %s28, 1
      %p60 = por %p58, %p59
      %p61 = scmp.ne.s32.totalorder %s50, %s51
      %p62 = scmp.eq.s32.totalorder %s28, 0
      %p63 = por %p61, %p62
      %p64 = scmp.ne.s32.totalorder %s50, %s51
      %p65 = scmp.eq.s32.totalorder %s29, 1
      %p66 = por %p64, %p65
      %p68 = scmp.ne.s32.totalorder %s51, %s67
      %p69 = scmp.eq.s32.totalorder %s29, 0
      %p70 = por %p68, %p69
      %s71 = ssub.s32 %s30, %s42
      %s72 = ssub.s32 %s31, %s38
      %s73 = sor.u32 %s71, %s72
      %p74 = scmp.eq.s32.totalorder %s73, 0
      %s76 = sadd.s32 %s75, 1
      %s77 = scalar_select %p74, %s75, %s76
      %p80 = pneg %p74
      %p81 = scmp.eq.s32.totalorder %s23, 1
      %p82 = por %p80, %p81
      %p83 = scmp.ne.s32.totalorder %s75, %s78
      %p84 = scmp.eq.s32.totalorder %s23, 0
      %p85 = por %p83, %p84
      %p86 = scmp.ne.s32.totalorder %s75, %s78
      %p87 = scmp.eq.s32.totalorder %s28, 1
      %p88 = por %p86, %p87
      %p89 = scmp.ne.s32.totalorder %s78, %s79
      %p90 = scmp.eq.s32.totalorder %s28, 0
      %p91 = por %p89, %p90
      %p92 = scmp.ne.s32.totalorder %s78, %s79
      %p93 = scmp.eq.s32.totalorder %s29, 1
      %p94 = por %p92, %p93
      %p96 = scmp.ne.s32.totalorder %s79, %s95
      %p97 = scmp.eq.s32.totalorder %s29, 0
      %p98 = por %p96, %p97
      %s100 = sadd.s32 %s99, 1
      %p103 = scmp.eq.s32.totalorder %s23, 1
      %p104 = scmp.ne.s32.totalorder %s99, %s101
      %p105 = scmp.eq.s32.totalorder %s23, 0
      %p106 = por %p104, %p105
      %p107 = scmp.ne.s32.totalorder %s99, %s101
      %p108 = scmp.eq.s32.totalorder %s28, 1
      %p109 = por %p107, %p108
      %p110 = scmp.ne.s32.totalorder %s101, %s102
      %p111 = scmp.eq.s32.totalorder %s28, 0
      %p112 = por %p110, %p111
      %p113 = scmp.ne.s32.totalorder %s101, %s102
      %p114 = scmp.eq.s32.totalorder %s29, 1
      %p115 = por %p113, %p114
      %p117 = scmp.ne.s32.totalorder %s102, %s116
      %p118 = scmp.eq.s32.totalorder %s29, 0
      %p119 = por %p117, %p118
      %s121 = sadd.s32 %s120, 1
      %p124 = scmp.eq.s32.totalorder %s23, 1
      %p125 = scmp.ne.s32.totalorder %s120, %s122
      %p126 = scmp.eq.s32.totalorder %s23, 0
      %p127 = por %p125, %p126
      %p128 = scmp.ne.s32.totalorder %s120, %s122
      %p129 = scmp.eq.s32.totalorder %s28, 1
      %p130 = por %p128, %p129
      %p131 = scmp.ne.s32.totalorder %s122, %s123
      %p132 = scmp.eq.s32.totalorder %s28, 0
      %p133 = por %p131, %p132
      %p134 = scmp.ne.s32.totalorder %s122, %s123
      %p135 = scmp.eq.s32.totalorder %s29, 1
      %p136 = por %p134, %p135
      %p138 = scmp.ne.s32.totalorder %s123, %s137
      %p139 = scmp.eq.s32.totalorder %s29, 0
      %p140 = por %p138, %p139
      %s142 = sadd.s32 %s141, 1
      %p145 = scmp.eq.s32.totalorder %s23, 1
      %p146 = scmp.ne.s32.totalorder %s141, %s143
      %p147 = scmp.eq.s32.totalorder %s23, 0
      %p148 = por %p146, %p147
      %p149 = scmp.ne.s32.totalorder %s141, %s143
      %p150 = scmp.eq.s32.totalorder %s28, 1
      %p151 = por %p149, %p150
      %p152 = scmp.ne.s32.totalorder %s143, %s144
      %p153 = scmp.eq.s32.totalorder %s28, 0
      %p154 = por %p152, %p153
      %p155 = scmp.ne.s32.totalorder %s143, %s144
      %p156 = scmp.eq.s32.totalorder %s29, 1
      %p157 = por %p155, %p156
      %p159 = scmp.ne.s32.totalorder %s144, %s158
      %p160 = scmp.eq.s32.totalorder %s29, 0
      %p161 = por %p159, %p160
      %s163 = sadd.s32 %s162, 1
      %p166 = scmp.eq.s32.totalorder %s23, 1
      %p167 = scmp.ne.s32.totalorder %s162, %s164
      %p168 = scmp.eq.s32.totalorder %s23, 0
      %p169 = por %p167, %p168
      %p170 = scmp.ne.s32.totalorder %s162, %s164
      %p171 = scmp.eq.s32.totalorder %s28, 1
      %p172 = por %p170, %p171
      %p173 = scmp.ne.s32.totalorder %s164, %s165
      %p174 = scmp.eq.s32.totalorder %s28, 0
      %p175 = por %p173, %p174
      %p176 = scmp.ne.s32.totalorder %s164, %s165
      %p177 = scmp.eq.s32.totalorder %s29, 1
      %p178 = por %p176, %p177
      %p180 = scmp.ne.s32.totalorder %s165, %s179
      %p181 = scmp.eq.s32.totalorder %s29, 0
      %p182 = por %p180, %p181
      %s183 = ssub.s32 %s30, %s42
      %s184 = ssub.s32 %s31, %s38
      %s185 = sor.u32 %s183, %s184
      %p186 = scmp.eq.s32.totalorder %s185, 0
      %s188 = sadd.s32 %s187, 1
      %s189 = scalar_select %p186, %s187, %s188
      %p192 = pneg %p186
      %p193 = scmp.eq.s32.totalorder %s23, 1
      %p194 = por %p192, %p193
      %p195 = scmp.ne.s32.totalorder %s187, %s190
      %p196 = scmp.eq.s32.totalorder %s23, 0
      %p197 = por %p195, %p196
      %p198 = scmp.ne.s32.totalorder %s187, %s190
      %p199 = scmp.eq.s32.totalorder %s28, 1
      %p200 = por %p198, %p199
      %p201 = scmp.ne.s32.totalorder %s190, %s191
      %p202 = scmp.eq.s32.totalorder %s28, 0
      %p203 = por %p201, %p202
      %p204 = scmp.ne.s32.totalorder %s190, %s191
      %p205 = scmp.eq.s32.totalorder %s29, 1
      %p206 = por %p204, %p205
      %p208 = scmp.ne.s32.totalorder %s191, %s207
      %p209 = scmp.eq.s32.totalorder %s29, 0
      %p210 = por %p208, %p209
      %p211 = scmp.le.s32.totalorder 1, %s23
      %p212 = scmp.lt.s32.totalorder %s23, 3
      %p213 = pnand %p211, %p212
      %p214 = pneg %p213
      // Predicated region
      $region9: #{_lambda_.26} parent=5 // pred_check
        _
      $region10: #{_lambda_.26} parent=5 // pred_check_branch
        %216 = sbr.rel (%p213) target = $region12
      $region11: #{_lambda_.26} parent=5 // pred_region
        %s217 = ssub.s32 %s23, 1
        // Predicated region
        $region13: #{_lambda_.26} parent=11 // pred_check
          %p218 = pneg %p112
        $region14: #{_lambda_.26} parent=11 // pred_check_branch
          %220 = sbr.rel (%p218) target = $region16
        $region15: #{_lambda_.26} parent=11 // pred_region
          %s222 = ssub.s32 3072, 3072
          %223 = vsyncadd [#allocation6], %s222
          %s224 = sshll.u32 [#allocation7], 4
          %s225 = int_to_ptr.vmem [resolvable:$true] %s224
          %230 = dma.hbm_to_vmem [thread:$0]  %s2, 3072, %s225, [#allocation6], 64, 64, 4
        $region16: #{_lambda_.26} parent=11 // pred_fallthru
          _
        // Predicated region
        $region17: #{_lambda_.26} parent=11 // pred_check
          %p231 = pneg %p133
        $region18: #{_lambda_.26} parent=11 // pred_check_branch
          %233 = sbr.rel (%p231) target = $region20
        $region19: #{_lambda_.26} parent=11 // pred_region
          %s235 = ssub.s32 16, 16
          %236 = vsyncadd [#allocation9], %s235
          %s238 = sshll.u32 [#allocation8], 4
          %s239 = int_to_ptr.vmem [resolvable:$true] %s238
          %241 = dma.hbm_to_vmem [thread:$0]  %s3, 16, %s239, [#allocation9]
        $region20: #{_lambda_.26} parent=11 // pred_fallthru
          _
        // Predicated region
        $region21: #{_lambda_.26} parent=11 // pred_check
          %p242 = pneg %p154
        $region22: #{_lambda_.26} parent=11 // pred_check_branch
          %244 = sbr.rel (%p242) target = $region24
        $region23: #{_lambda_.26} parent=11 // pred_region
          %s246 = ssub.s32 3072, 3072
          %247 = vsyncadd [#allocation9], %s246
          %s248 = sshll.u32 [#allocation10], 4
          %s249 = int_to_ptr.vmem [resolvable:$true] %s248
          %254 = dma.hbm_to_vmem [thread:$0]  %s4, 3072, %s249, [#allocation9], 64, 64, 4
        $region24: #{_lambda_.26} parent=11 // pred_fallthru
          _
        // Predicated region
        $region25: #{_lambda_.26} parent=11 // pred_check
          %p255 = pneg %p175
        $region26: #{_lambda_.26} parent=11 // pred_check_branch
          %257 = sbr.rel (%p255) target = $region28
        $region27: #{_lambda_.26} parent=11 // pred_region
          %s259 = ssub.s32 16, 16
          %260 = vsyncadd [#allocation12], %s259
          %s262 = sshll.u32 [#allocation11], 4
          %s263 = int_to_ptr.vmem [resolvable:$true] %s262
          %265 = dma.hbm_to_vmem [thread:$0]  %s5, 16, %s263, [#allocation12]
        $region28: #{_lambda_.26} parent=11 // pred_fallthru
          _
      $region12: #{_lambda_.26} parent=5 // pred_fallthru
        _
      %p266 = scmp.lt.s32.totalorder %s23, 2
      // Predicated region
      $region29: #{_lambda_.26} parent=5 // pred_check
        %p267 = pneg %p266
      $region30: #{_lambda_.26} parent=5 // pred_check_branch
        %269 = sbr.rel (%p267) target = $region32
      $region31: #{_lambda_.26} parent=5 // pred_region
        // Predicated region
        $region33: #{_lambda_.26} parent=31 // pred_check
          %p270 = pneg %p57
        $region34: #{_lambda_.26} parent=31 // pred_check_branch
          %272 = sbr.rel (%p270) target = $region36
        $region35: #{_lambda_.26} parent=31 // pred_region
          %s273 = sand.u32 %s47, 1
          %s274 = scalar_lea.sflag [#allocation3], %s273
          %s275 = sand.u32 %s47, 1
          %s276 = smul.addr %s275, 4
          %s277 = scalar_lea.vmem [#allocation2], %s276
          %s279 = ssub.s32 64, 64
          %280 = vsyncadd %s274, %s279
          %s281 = sadd.s32 %s31, %s30
          %s282 = smul.addr %s281, 64
          %s283 = scalar_lea.hbm %s0, %s282
          %s285 = sshll.u32 %s277, 4
          %s286 = int_to_ptr.vmem [resolvable:$true] %s285
          %288 = dma.hbm_to_vmem [thread:$0]  %s283, 64, %s286, %s274
        $region36: #{_lambda_.26} parent=31 // pred_fallthru
          _
        // Predicated region
        $region37: #{_lambda_.26} parent=31 // pred_check
          %p289 = pneg %p85
        $region38: #{_lambda_.26} parent=31 // pred_check_branch
          %291 = sbr.rel (%p289) target = $region40
        $region39: #{_lambda_.26} parent=31 // pred_region
          %s292 = sand.u32 %s23, 1
          %s293 = scalar_lea.sflag [#allocation6], %s292
          %s294 = sand.u32 %s75, 1
          %s295 = smul.addr %s294, 12
          %s296 = scalar_lea.vmem [#allocation5], %s295
          %s298 = ssub.s32 192, 192
          %299 = vsyncadd %s293, %s298
          %s300 = smul.addr %s31, 3
          %s301 = smul.addr %s30, 3
          %s302 = sadd.s32 %s300, %s301
          %s303 = smul.addr %s302, 64
          %s304 = scalar_lea.hbm %s1, %s303
          %s305 = sshll.u32 %s296, 4
          %s306 = int_to_ptr.vmem [resolvable:$true] %s305
          %311 = dma.hbm_to_vmem [thread:$0]  %s304, 192, %s306, %s293, 64, 64, 4
        $region40: #{_lambda_.26} parent=31 // pred_fallthru
          _
      $region32: #{_lambda_.26} parent=5 // pred_fallthru
        _
      %p312 = scmp.le.s32.totalorder 1, %s23
      %p313 = scmp.lt.s32.totalorder %s23, 3
      %p314 = pnand %p312, %p313
      %p315 = pneg %p314
      // Predicated region
      $region41: #{_lambda_.26} parent=5 // pred_check
        _
      $region42: #{_lambda_.26} parent=5 // pred_check_branch
        %317 = sbr.rel (%p314) target = $region44
      $region43: #{_lambda_.26} parent=5 // pred_region
        %s318 = ssub.s32 %s23, 1
        %s319 = sand.u32 %s50, 1
        %s320 = scalar_lea.sflag [#allocation3], %s319
        %s321 = sand.u32 %s50, 1
        %s322 = smul.addr %s321, 4
        %s323 = scalar_lea.vmem [#allocation2], %s322
        // Predicated region
        $region45: #{_lambda_.26} parent=43 // pred_check
          %p324 = pneg %p63
        $region46: #{_lambda_.26} parent=43 // pred_check_branch
          %326 = sbr.rel (%p324) target = $region48
        $region47: #{_lambda_.26} parent=43 // pred_region
          %327 = dma.done %s320, 64
        $region48: #{_lambda_.26} parent=43 // pred_fallthru
          _
        %s328 = sand.u32 %s28, 1
        %s329 = scalar_lea.sflag [#allocation6], %s328
        %s330 = sand.u32 %s78, 1
        %s331 = smul.addr %s330, 12
        %s332 = scalar_lea.vmem [#allocation5], %s331
        // Predicated region
        $region49: #{_lambda_.26} parent=43 // pred_check
          %p333 = pneg %p91
        $region50: #{_lambda_.26} parent=43 // pred_check_branch
          %335 = sbr.rel (%p333) target = $region52
        $region51: #{_lambda_.26} parent=43 // pred_region
          %336 = dma.done %s329, 192
        $region52: #{_lambda_.26} parent=43 // pred_fallthru
          _
        // Predicated region
        $region53: #{_lambda_.26} parent=43 // pred_check
          %p337 = pneg %p112
        $region54: #{_lambda_.26} parent=43 // pred_check_branch
          %339 = sbr.rel (%p337) target = $region56
        $region55: #{_lambda_.26} parent=43 // pred_region
          %340 = dma.done [#allocation6], 3072
        $region56: #{_lambda_.26} parent=43 // pred_fallthru
          _
        // Predicated region
        $region57: #{_lambda_.26} parent=43 // pred_check
          %p341 = pneg %p133
        $region58: #{_lambda_.26} parent=43 // pred_check_branch
          %343 = sbr.rel (%p341) target = $region60
        $region59: #{_lambda_.26} parent=43 // pred_region
          %344 = dma.done [#allocation9], 16
        $region60: #{_lambda_.26} parent=43 // pred_fallthru
          _
        // Predicated region
        $region61: #{_lambda_.26} parent=43 // pred_check
          %p345 = pneg %p154
        $region62: #{_lambda_.26} parent=43 // pred_check_branch
          %347 = sbr.rel (%p345) target = $region64
        $region63: #{_lambda_.26} parent=43 // pred_region
          %348 = dma.done [#allocation9], 3072
        $region64: #{_lambda_.26} parent=43 // pred_fallthru
          _
        // Predicated region
        $region65: #{_lambda_.26} parent=43 // pred_check
          %p349 = pneg %p175
        $region66: #{_lambda_.26} parent=43 // pred_check_branch
          %351 = sbr.rel (%p349) target = $region68
        $region67: #{_lambda_.26} parent=43 // pred_region
          %352 = dma.done [#allocation12], 16
        $region68: #{_lambda_.26} parent=43 // pred_fallthru
          _
        %s353 = sand.u32 %s50, 1
        %s354 = scalar_lea.sflag [#allocation3], %s353
        %s355 = sand.u32 %s50, 1
        %s356 = smul.addr %s355, 4
        %s357 = scalar_lea.vmem [#allocation2], %s356
        %p358 = pneg %p63
        %p359 = pneg %p60
        %s360 = sand.u32 %s28, 1
        %s361 = scalar_lea.sflag [#allocation6], %s360
        %s362 = sand.u32 %s78, 1
        %s363 = smul.addr %s362, 12
        %s364 = scalar_lea.vmem [#allocation5], %s363
        %p365 = pneg %p91
        %p366 = pneg %p88
        %p367 = pneg %p112
        %p368 = pneg %p109
        %p369 = pneg %p133
        %p370 = pneg %p130
        %p371 = pneg %p154
        %p372 = pneg %p151
        %p373 = pneg %p175
        %p374 = pneg %p172
        %p375 = pneg %p203
        %p376 = pneg %p200
        %s377 = sand.u32 %s190, 1
        %s378 = scalar_lea.sflag [#allocation4], %s377
        %s379 = sand.u32 %s190, 1
        %s380 = smul.addr %s379, 4
        %s381 = scalar_lea.vmem [#allocation13], %s380
        %v383 = vld [vmem:[%s323] sm:$0xf]
        %v384 = vld [vmem:[%s332] sm:$0xf]
        %v385 = vld [vmem:[%s332 + $0x4] sm:$0xf]
        %v386 = vld [vmem:[%s332 + $0x8] sm:$0x1]
        %v389 = vunpack.c.l.b16 %v384
        %v390 = vunpack.c.l.b16 %v385
        %v391 = vpack.c.b16 %v390, %v389
        %v394 = vunpack.c.l.b16 %v386
        %v395 = vpack.c.b16 %v394, %v394
        %vm396 = vcmask 1043456
        %v399 = vsel %vm396, %v383, %v395
        %v401 = vunpack.c.l.bf16 %v391
        %v402 = vunpack.c.h.bf16 %v391
        %v403 = vunpack.c.l.bf16 %v399
        %v404 = vunpack.c.h.bf16 %v399
        %vm405 = vcmp.ge.f32.partialorder %v401, 0.0
        %vm406 = vcmp.ge.f32.partialorder %v402, 0.0
        %vm407 = vcmp.ge.f32.partialorder %v403, 0.0
        %vm408 = vcmp.ge.f32.partialorder %v404, 0.0
        %v409 = vmul.f32 %v401, 0.1
        %v410 = vmul.f32 %v402, 0.1
        %v411 = vmul.f32 %v403, 0.1
        %v412 = vmul.f32 %v404, 0.1
        %v413 = vsel %vm405, %v401, %v409
        %v414 = vsel %vm406, %v402, %v410
        %v415 = vsel %vm407, %v403, %v411
        %v416 = vsel %vm408, %v404, %v412
        %v417 = vpack.c.bf16 %v414, %v413
        %v418 = vpack.c.bf16 %v416, %v415
        %vm419 = vsmask.f32 7424
        %v421 = vshrl.u32 %v417, 16
        %v424 = vshll.u32 %v418, 16
        %v426 = vrot.slane %v424, 1
        %v427 = vsel %vm419, %v421, %v426
        %v428 = vshrl.u32 %v418, 16
        %v430 = vor.u32 %v428, %v426
        %v432 = vrot.slane %v418, 1
        %v433 = vld [vmem:[#allocation7] sm:$0xf]
        %v434 = vld [vmem:[#allocation7 + $0x4] sm:$0xf]
        %v435 = vld [vmem:[#allocation7 + $0x8] sm:$0xf]
        %v436 = vld [vmem:[#allocation7 + $0xc] sm:$0xf]
        %v437 = vld [vmem:[#allocation7 + $0x10] sm:$0xf]
        %v438 = vld [vmem:[#allocation7 + $0x14] sm:$0xf]
        %v439 = vld [vmem:[#allocation7 + $0x18] sm:$0xf]
        %v440 = vld [vmem:[#allocation7 + $0x1c] sm:$0xf]
        %v441 = vld [vmem:[#allocation7 + $0x20] sm:$0xf]
        %v442 = vld [vmem:[#allocation7 + $0x24] sm:$0xf]
        %v443 = vld [vmem:[#allocation7 + $0x28] sm:$0xf]
        %v444 = vld [vmem:[#allocation7 + $0x2c] sm:$0xf]
        %v445 = vld [vmem:[#allocation7 + $0x30] sm:$0xf]
        %v446 = vld [vmem:[#allocation7 + $0x34] sm:$0xf]
        %v447 = vld [vmem:[#allocation7 + $0x38] sm:$0xf]
        %v448 = vld [vmem:[#allocation7 + $0x3c] sm:$0xf]
        %v449 = vld [vmem:[#allocation7 + $0x40] sm:$0xf]
        %v450 = vld [vmem:[#allocation7 + $0x44] sm:$0xf]
        %v451 = vld [vmem:[#allocation7 + $0x48] sm:$0xf]
        %v452 = vld [vmem:[#allocation7 + $0x4c] sm:$0xf]
        %v453 = vld [vmem:[#allocation7 + $0x50] sm:$0xf]
        %v454 = vld [vmem:[#allocation7 + $0x54] sm:$0xf]
        %v455 = vld [vmem:[#allocation7 + $0x58] sm:$0xf]
        %v456 = vld [vmem:[#allocation7 + $0x5c] sm:$0xf]
        %v457 = vld [vmem:[#allocation7 + $0x60] sm:$0xf]
        %v458 = vld [vmem:[#allocation7 + $0x64] sm:$0xf]
        %v459 = vld [vmem:[#allocation7 + $0x68] sm:$0xf]
        %v460 = vld [vmem:[#allocation7 + $0x6c] sm:$0xf]
        %v461 = vld [vmem:[#allocation7 + $0x70] sm:$0xf]
        %v462 = vld [vmem:[#allocation7 + $0x74] sm:$0xf]
        %v463 = vld [vmem:[#allocation7 + $0x78] sm:$0xf]
        %v464 = vld [vmem:[#allocation7 + $0x7c] sm:$0xf]
        %v465 = vld [vmem:[#allocation7 + $0x80] sm:$0xf]
        %v466 = vld [vmem:[#allocation7 + $0x84] sm:$0xf]
        %v467 = vld [vmem:[#allocation7 + $0x88] sm:$0xf]
        %v468 = vld [vmem:[#allocation7 + $0x8c] sm:$0xf]
        %v469 = vld [vmem:[#allocation7 + $0x90] sm:$0xf]
        %v470 = vld [vmem:[#allocation7 + $0x94] sm:$0xf]
        %v471 = vld [vmem:[#allocation7 + $0x98] sm:$0xf]
        %v472 = vld [vmem:[#allocation7 + $0x9c] sm:$0xf]
        %v473 = vld [vmem:[#allocation7 + $0xa0] sm:$0xf]
        %v474 = vld [vmem:[#allocation7 + $0xa4] sm:$0xf]
        %v475 = vld [vmem:[#allocation7 + $0xa8] sm:$0xf]
        %v476 = vld [vmem:[#allocation7 + $0xac] sm:$0xf]
        %v477 = vld [vmem:[#allocation7 + $0xb0] sm:$0xf]
        %v478 = vld [vmem:[#allocation7 + $0xb4] sm:$0xf]
        %v479 = vld [vmem:[#allocation7 + $0xb8] sm:$0xf]
        %v480 = vld [vmem:[#allocation7 + $0xbc] sm:$0xf]
        %v481 = vld [vmem:[#allocation8] sm:$0x1]
        %v483 = vlaneseq
        %v484 = vshrl.u32 %v483, 7
        %v485 = vsub.s32 0, %v484
        %v486 = vrot.slane %v481, %v485
        %vm489 = vcmask 1040384
        %v490 = vrot.slane %v417, 7
        %v491 = vrot.slane %v418, 7
        %v492 = vsel %vm489, %v490, %v491
        %v493 = vrot.slane %v427, 7
        %v494 = vrot.slane %v430, 7
        %v495 = vsel %vm489, %v493, %v494
        %v496 = vrot.slane %v432, 7
        %v497 = vsel %vm489, %v496, %v496
        %v549 = vunpack.c.l.b16 %v433
        %v550 = vunpack.c.l.b16 %v434
        %v551 = vunpack.c.l.b16 %v435
        %v552 = vunpack.c.l.b16 %v436
        %v553 = vunpack.c.l.b16 %v437
        %v554 = vunpack.c.l.b16 %v438
        %v555 = vunpack.c.l.b16 %v439
        %v556 = vunpack.c.l.b16 %v440
        %v557 = vunpack.c.l.b16 %v441
        %v558 = vunpack.c.l.b16 %v442
        %v559 = vunpack.c.l.b16 %v443
        %v560 = vunpack.c.l.b16 %v444
        %v561 = vunpack.c.l.b16 %v445
        %v562 = vunpack.c.l.b16 %v446
        %v563 = vunpack.c.l.b16 %v447
        %v564 = vunpack.c.l.b16 %v448
        %v565 = vunpack.c.l.b16 %v449
        %v566 = vunpack.c.l.b16 %v450
        %v567 = vunpack.c.l.b16 %v451
        %v568 = vunpack.c.l.b16 %v452
        %v569 = vunpack.c.l.b16 %v453
        %v570 = vunpack.c.l.b16 %v454
        %v571 = vunpack.c.l.b16 %v455
        %v572 = vunpack.c.l.b16 %v456
        %v573 = vunpack.c.l.b16 %v457
        %v574 = vunpack.c.l.b16 %v458
        %v575 = vunpack.c.l.b16 %v459
        %v576 = vunpack.c.l.b16 %v460
        %v577 = vunpack.c.l.b16 %v461
        %v578 = vunpack.c.l.b16 %v462
        %v579 = vunpack.c.l.b16 %v463
        %v580 = vunpack.c.l.b16 %v464
        %v581 = vunpack.c.l.b16 %v465
        %v582 = vunpack.c.l.b16 %v466
        %v583 = vunpack.c.l.b16 %v467
        %v584 = vunpack.c.l.b16 %v468
        %v585 = vunpack.c.l.b16 %v469
        %v586 = vunpack.c.l.b16 %v470
        %v587 = vunpack.c.l.b16 %v471
        %v588 = vunpack.c.l.b16 %v472
        %v589 = vunpack.c.l.b16 %v473
        %v590 = vunpack.c.l.b16 %v474
        %v591 = vunpack.c.l.b16 %v475
        %v592 = vunpack.c.l.b16 %v476
        %v593 = vunpack.c.l.b16 %v477
        %v594 = vunpack.c.l.b16 %v478
        %v595 = vunpack.c.l.b16 %v479
        %v596 = vunpack.c.l.b16 %v480
        %v597 = vpack.c.b16 %v550, %v549
        %v598 = vpack.c.b16 %v552, %v551
        %v599 = vpack.c.b16 %v554, %v553
        %v600 = vpack.c.b16 %v556, %v555
        %v601 = vpack.c.b16 %v558, %v557
        %v602 = vpack.c.b16 %v560, %v559
        %v603 = vpack.c.b16 %v562, %v561
        %v604 = vpack.c.b16 %v564, %v563
        %v605 = vpack.c.b16 %v566, %v565
        %v606 = vpack.c.b16 %v568, %v567
        %v607 = vpack.c.b16 %v570, %v569
        %v608 = vpack.c.b16 %v572, %v571
        %v609 = vpack.c.b16 %v574, %v573
        %v610 = vpack.c.b16 %v576, %v575
        %v611 = vpack.c.b16 %v578, %v577
        %v612 = vpack.c.b16 %v580, %v579
        %v613 = vpack.c.b16 %v582, %v581
        %v614 = vpack.c.b16 %v584, %v583
        %v615 = vpack.c.b16 %v586, %v585
        %v616 = vpack.c.b16 %v588, %v587
        %v617 = vpack.c.b16 %v590, %v589
        %v618 = vpack.c.b16 %v592, %v591
        %v619 = vpack.c.b16 %v594, %v593
        %v620 = vpack.c.b16 %v596, %v595
        %645 = vmatprep.subr.bf16.mxu0 0
        %646 = vmatpush1.bf16.msra.mxu0 %v597
        %647 = vmatprep.subr.bf16.mxu0 0
        %648 = vmatpush1.bf16.msra.mxu0 %v598
        %649 = vmatprep.subr.bf16.mxu0 0
        %650 = vmatpush1.bf16.msra.mxu0 %v599
        %651 = vmatprep.subr.bf16.mxu0 0
        %652 = vmatpush1.bf16.msra.mxu0 %v600
        %653 = vmatprep.subr.bf16.mxu0 0
        %654 = vmatpush1.bf16.msra.mxu0 %v601
        %655 = vmatprep.subr.bf16.mxu0 0
        %656 = vmatpush1.bf16.msra.mxu0 %v602
        %657 = vmatprep.subr.bf16.mxu0 0
        %658 = vmatpush1.bf16.msra.mxu0 %v603
        %659 = vmatprep.subr.bf16.mxu0 0
        %660 = vmatpush1.bf16.msra.mxu0 %v604
        %661 = vmatprep.subr.bf16.mxu0 0
        %662 = vmatpush1.bf16.msra.mxu0 %v605
        %663 = vmatprep.subr.bf16.mxu0 0
        %664 = vmatpush1.bf16.msra.mxu0 %v606
        %665 = vmatprep.subr.bf16.mxu0 0
        %666 = vmatpush1.bf16.msra.mxu0 %v607
        %667 = vmatprep.subr.bf16.mxu0 0
        %668 = vmatpush1.bf16.msra.mxu0 %v608
        %669 = vmatprep.subr.bf16.mxu0 0
        %670 = vmatpush1.bf16.msra.mxu0 %v609
        %671 = vmatprep.subr.bf16.mxu0 0
        %672 = vmatpush1.bf16.msra.mxu0 %v610
        %673 = vmatprep.subr.bf16.mxu0 0
        %674 = vmatpush1.bf16.msra.mxu0 %v611
        %675 = vmatprep.subr.bf16.mxu0 0
        %676 = vmatpush1.bf16.msra.mxu0 %v612
        %677 = vmatprep.mubr.bf16.mxu0 %v495
        %678 = vmatmul.mubr.bf16.gmra.mrb[0].mxu0 %v492
        %v679 = vpop.f32.mrb[0].mxu0
        %v680 = vadd.f32 %v486, %v679
        %v681 = vpop.f32.mrb[0].mxu0
        %v682 = vpop.f32.mrb[0].mxu0
        %v683 = vadd.f32 %v486, %v682
        %v684 = vpop.f32.mrb[0].mxu0
        %685 = vdwg.mxu0
        %686 = vmatprep.subr.bf16.mxu0 0
        %687 = vmatpush1.bf16.msra.mxu0 %v613
        %688 = vmatprep.subr.bf16.mxu0 0
        %689 = vmatpush1.bf16.msra.mxu0 %v614
        %690 = vmatprep.subr.bf16.mxu0 0
        %691 = vmatpush1.bf16.msra.mxu0 %v615
        %692 = vmatprep.subr.bf16.mxu0 0
        %693 = vmatpush1.bf16.msra.mxu0 %v616
        %694 = vmatprep.subr.bf16.mxu0 0
        %695 = vmatpush1.bf16.msra.mxu0 %v617
        %696 = vmatprep.subr.bf16.mxu0 0
        %697 = vmatpush1.bf16.msra.mxu0 %v618
        %698 = vmatprep.subr.bf16.mxu0 0
        %699 = vmatpush1.bf16.msra.mxu0 %v619
        %700 = vmatprep.subr.bf16.mxu0 0
        %701 = vmatpush1.bf16.msra.mxu0 %v620
        %702 = vmatprep.subr.bf16.mxu0 0
        %703 = vmatpush1.bf16.msra.mxu0 0
        %704 = vmatprep.subr.bf16.mxu0 0
        %705 = vmatpush1.bf16.msra.mxu0 0
        %706 = vmatprep.subr.bf16.mxu0 0
        %707 = vmatpush1.bf16.msra.mxu0 0
        %708 = vmatprep.subr.bf16.mxu0 0
        %709 = vmatpush1.bf16.msra.mxu0 0
        %710 = vmatprep.subr.bf16.mxu0 0
        %711 = vmatpush1.bf16.msra.mxu0 0
        %712 = vmatprep.subr.bf16.mxu0 0
        %713 = vmatpush1.bf16.msra.mxu0 0
        %714 = vmatprep.subr.bf16.mxu0 0
        %715 = vmatpush1.bf16.msra.mxu0 0
        %716 = vmatprep.subr.bf16.mxu0 0
        %717 = vmatpush1.bf16.msra.mxu0 0
        %718 = vmatprep.mubr.bf16.mxu0 0
        %719 = vmatmul.mubr.bf16.gmra.mrb[0].mxu0 %v497
        %v720 = vpop.f32.mrb[0].mxu0
        %v721 = vadd.f32 %v680, %v720
        %v722 = vpop.f32.mrb[0].mxu0
        %v723 = vpop.f32.mrb[0].mxu0
        %v724 = vadd.f32 %v683, %v723
        %v725 = vpop.f32.mrb[0].mxu0
        %726 = vdwg.mxu0
        %s727 = smul.u32 %s33, 8
        %s728 = ssub.s32 %s727, 1
        %v729 = vlaneseq
        %v730 = vshrl.u32 %v729, 7
        %v731 = vadd.s32 %v730, 8
        %v732 = vstv %s728
        %v733 = vadd.s32 %v732, %v730
        %v734 = vadd.s32 %v732, %v731
        %vm735 = vcmp.ge.s32.totalorder %v733, 0
        %vm736 = vcmp.ge.s32.totalorder %v734, 0
        %vm737 = vcmp.lt.s32.totalorder %v733, 8
        %vm738 = vcmp.lt.s32.totalorder %v734, 8
        %vm739 = vmand %vm735, %vm737
        %vm740 = vmand %vm736, %vm738
        %v741 = vsel %vm739, 1, 0
        %v742 = vsel %vm740, 1, 0
        %vm743 = vcmp.eq.s32.totalorder %v741, 1
        %vm744 = vcmp.eq.s32.totalorder %v742, 1
        %v745 = vsel %vm743, %v721, 0.0
        %v746 = vsel %vm744, %v724, 0.0
        %v747 = vpack.c.bf16 %v746, %v745
        %v748 = vunpack.c.l.bf16 %v747
        %v749 = vunpack.c.h.bf16 %v747
        %vm750 = vcmp.ge.f32.partialorder %v748, 0.0
        %vm751 = vcmp.ge.f32.partialorder %v749, 0.0
        %v752 = vmul.f32 %v748, 0.1
        %v753 = vmul.f32 %v749, 0.1
        %v754 = vsel %vm750, %v748, %v752
        %v755 = vsel %vm751, %v749, %v753
        %v756 = vpack.c.bf16 %v755, %v754
        %v758 = vshrl.u32 %v756, 16
        %v760 = vshll.u32 %v756, 16
        %v762 = vrot.slane %v760, 1
        %v763 = vor.u32 %v758, %v762
        %v766 = vrot.slane %v756, 1
        %v768 = vld [vmem:[#allocation10] sm:$0xf]
        %v769 = vld [vmem:[#allocation10 + $0x4] sm:$0xf]
        %v770 = vld [vmem:[#allocation10 + $0x8] sm:$0xf]
        %v771 = vld [vmem:[#allocation10 + $0xc] sm:$0xf]
        %v772 = vld [vmem:[#allocation10 + $0x10] sm:$0xf]
        %v773 = vld [vmem:[#allocation10 + $0x14] sm:$0xf]
        %v774 = vld [vmem:[#allocation10 + $0x18] sm:$0xf]
        %v775 = vld [vmem:[#allocation10 + $0x1c] sm:$0xf]
        %v776 = vld [vmem:[#allocation10 + $0x20] sm:$0xf]
        %v777 = vld [vmem:[#allocation10 + $0x24] sm:$0xf]
        %v778 = vld [vmem:[#allocation10 + $0x28] sm:$0xf]
        %v779 = vld [vmem:[#allocation10 + $0x2c] sm:$0xf]
        %v780 = vld [vmem:[#allocation10 + $0x30] sm:$0xf]
        %v781 = vld [vmem:[#allocation10 + $0x34] sm:$0xf]
        %v782 = vld [vmem:[#allocation10 + $0x38] sm:$0xf]
        %v783 = vld [vmem:[#allocation10 + $0x3c] sm:$0xf]
        %v784 = vld [vmem:[#allocation10 + $0x40] sm:$0xf]
        %v785 = vld [vmem:[#allocation10 + $0x44] sm:$0xf]
        %v786 = vld [vmem:[#allocation10 + $0x48] sm:$0xf]
        %v787 = vld [vmem:[#allocation10 + $0x4c] sm:$0xf]
        %v788 = vld [vmem:[#allocation10 + $0x50] sm:$0xf]
        %v789 = vld [vmem:[#allocation10 + $0x54] sm:$0xf]
        %v790 = vld [vmem:[#allocation10 + $0x58] sm:$0xf]
        %v791 = vld [vmem:[#allocation10 + $0x5c] sm:$0xf]
        %v792 = vld [vmem:[#allocation10 + $0x60] sm:$0xf]
        %v793 = vld [vmem:[#allocation10 + $0x64] sm:$0xf]
        %v794 = vld [vmem:[#allocation10 + $0x68] sm:$0xf]
        %v795 = vld [vmem:[#allocation10 + $0x6c] sm:$0xf]
        %v796 = vld [vmem:[#allocation10 + $0x70] sm:$0xf]
        %v797 = vld [vmem:[#allocation10 + $0x74] sm:$0xf]
        %v798 = vld [vmem:[#allocation10 + $0x78] sm:$0xf]
        %v799 = vld [vmem:[#allocation10 + $0x7c] sm:$0xf]
        %v800 = vld [vmem:[#allocation10 + $0x80] sm:$0xf]
        %v801 = vld [vmem:[#allocation10 + $0x84] sm:$0xf]
        %v802 = vld [vmem:[#allocation10 + $0x88] sm:$0xf]
        %v803 = vld [vmem:[#allocation10 + $0x8c] sm:$0xf]
        %v804 = vld [vmem:[#allocation10 + $0x90] sm:$0xf]
        %v805 = vld [vmem:[#allocation10 + $0x94] sm:$0xf]
        %v806 = vld [vmem:[#allocation10 + $0x98] sm:$0xf]
        %v807 = vld [vmem:[#allocation10 + $0x9c] sm:$0xf]
        %v808 = vld [vmem:[#allocation10 + $0xa0] sm:$0xf]
        %v809 = vld [vmem:[#allocation10 + $0xa4] sm:$0xf]
        %v810 = vld [vmem:[#allocation10 + $0xa8] sm:$0xf]
        %v811 = vld [vmem:[#allocation10 + $0xac] sm:$0xf]
        %v812 = vld [vmem:[#allocation10 + $0xb0] sm:$0xf]
        %v813 = vld [vmem:[#allocation10 + $0xb4] sm:$0xf]
        %v814 = vld [vmem:[#allocation10 + $0xb8] sm:$0xf]
        %v815 = vld [vmem:[#allocation10 + $0xbc] sm:$0xf]
        %v816 = vld [vmem:[#allocation11] sm:$0x1]
        %v818 = vlaneseq
        %v819 = vshrl.u32 %v818, 7
        %v820 = vsub.s32 0, %v819
        %v821 = vrot.slane %v816, %v820
        %v871 = vunpack.c.l.b16 %v768
        %v872 = vunpack.c.l.b16 %v769
        %v873 = vunpack.c.l.b16 %v770
        %v874 = vunpack.c.l.b16 %v771
        %v875 = vunpack.c.l.b16 %v772
        %v876 = vunpack.c.l.b16 %v773
        %v877 = vunpack.c.l.b16 %v774
        %v878 = vunpack.c.l.b16 %v775
        %v879 = vunpack.c.l.b16 %v776
        %v880 = vunpack.c.l.b16 %v777
        %v881 = vunpack.c.l.b16 %v778
        %v882 = vunpack.c.l.b16 %v779
        %v883 = vunpack.c.l.b16 %v780
        %v884 = vunpack.c.l.b16 %v781
        %v885 = vunpack.c.l.b16 %v782
        %v886 = vunpack.c.l.b16 %v783
        %v887 = vunpack.c.l.b16 %v784
        %v888 = vunpack.c.l.b16 %v785
        %v889 = vunpack.c.l.b16 %v786
        %v890 = vunpack.c.l.b16 %v787
        %v891 = vunpack.c.l.b16 %v788
        %v892 = vunpack.c.l.b16 %v789
        %v893 = vunpack.c.l.b16 %v790
        %v894 = vunpack.c.l.b16 %v791
        %v895 = vunpack.c.l.b16 %v792
        %v896 = vunpack.c.l.b16 %v793
        %v897 = vunpack.c.l.b16 %v794
        %v898 = vunpack.c.l.b16 %v795
        %v899 = vunpack.c.l.b16 %v796
        %v900 = vunpack.c.l.b16 %v797
        %v901 = vunpack.c.l.b16 %v798
        %v902 = vunpack.c.l.b16 %v799
        %v903 = vunpack.c.l.b16 %v800
        %v904 = vunpack.c.l.b16 %v801
        %v905 = vunpack.c.l.b16 %v802
        %v906 = vunpack.c.l.b16 %v803
        %v907 = vunpack.c.l.b16 %v804
        %v908 = vunpack.c.l.b16 %v805
        %v909 = vunpack.c.l.b16 %v806
        %v910 = vunpack.c.l.b16 %v807
        %v911 = vunpack.c.l.b16 %v808
        %v912 = vunpack.c.l.b16 %v809
        %v913 = vunpack.c.l.b16 %v810
        %v914 = vunpack.c.l.b16 %v811
        %v915 = vunpack.c.l.b16 %v812
        %v916 = vunpack.c.l.b16 %v813
        %v917 = vunpack.c.l.b16 %v814
        %v918 = vunpack.c.l.b16 %v815
        %v919 = vpack.c.b16 %v872, %v871
        %v920 = vpack.c.b16 %v874, %v873
        %v921 = vpack.c.b16 %v876, %v875
        %v922 = vpack.c.b16 %v878, %v877
        %v923 = vpack.c.b16 %v880, %v879
        %v924 = vpack.c.b16 %v882, %v881
        %v925 = vpack.c.b16 %v884, %v883
        %v926 = vpack.c.b16 %v886, %v885
        %v927 = vpack.c.b16 %v888, %v887
        %v928 = vpack.c.b16 %v890, %v889
        %v929 = vpack.c.b16 %v892, %v891
        %v930 = vpack.c.b16 %v894, %v893
        %v931 = vpack.c.b16 %v896, %v895
        %v932 = vpack.c.b16 %v898, %v897
        %v933 = vpack.c.b16 %v900, %v899
        %v934 = vpack.c.b16 %v902, %v901
        %v935 = vpack.c.b16 %v904, %v903
        %v936 = vpack.c.b16 %v906, %v905
        %v937 = vpack.c.b16 %v908, %v907
        %v938 = vpack.c.b16 %v910, %v909
        %v939 = vpack.c.b16 %v912, %v911
        %v940 = vpack.c.b16 %v914, %v913
        %v941 = vpack.c.b16 %v916, %v915
        %v942 = vpack.c.b16 %v918, %v917
        %967 = vmatprep.subr.bf16.mxu0 0
        %968 = vmatpush1.bf16.msra.mxu0 %v919
        %969 = vmatprep.subr.bf16.mxu0 0
        %970 = vmatpush1.bf16.msra.mxu0 %v920
        %971 = vmatprep.subr.bf16.mxu0 0
        %972 = vmatpush1.bf16.msra.mxu0 %v921
        %973 = vmatprep.subr.bf16.mxu0 0
        %974 = vmatpush1.bf16.msra.mxu0 %v922
        %975 = vmatprep.subr.bf16.mxu0 0
        %976 = vmatpush1.bf16.msra.mxu0 %v923
        %977 = vmatprep.subr.bf16.mxu0 0
        %978 = vmatpush1.bf16.msra.mxu0 %v924
        %979 = vmatprep.subr.bf16.mxu0 0
        %980 = vmatpush1.bf16.msra.mxu0 %v925
        %981 = vmatprep.subr.bf16.mxu0 0
        %982 = vmatpush1.bf16.msra.mxu0 %v926
        %983 = vmatprep.subr.bf16.mxu0 0
        %984 = vmatpush1.bf16.msra.mxu0 %v927
        %985 = vmatprep.subr.bf16.mxu0 0
        %986 = vmatpush1.bf16.msra.mxu0 %v928
        %987 = vmatprep.subr.bf16.mxu0 0
        %988 = vmatpush1.bf16.msra.mxu0 %v929
        %989 = vmatprep.subr.bf16.mxu0 0
        %990 = vmatpush1.bf16.msra.mxu0 %v930
        %991 = vmatprep.subr.bf16.mxu0 0
        %992 = vmatpush1.bf16.msra.mxu0 %v931
        %993 = vmatprep.subr.bf16.mxu0 0
        %994 = vmatpush1.bf16.msra.mxu0 %v932
        %995 = vmatprep.subr.bf16.mxu0 0
        %996 = vmatpush1.bf16.msra.mxu0 %v933
        %997 = vmatprep.subr.bf16.mxu0 0
        %998 = vmatpush1.bf16.msra.mxu0 %v934
        %999 = vmatprep.mubr.bf16.mxu0 %v763
        %1000 = vmatmul.mubr.bf16.gmra.mrb[0].mxu0 %v756
        %v1001 = vpop.f32.mrb[0].mxu0
        %v1002 = vadd.f32 %v821, %v1001
        %v1003 = vpop.f32.mrb[0].mxu0
        %v1004 = vpop.f32.mrb[0].mxu0
        %v1005 = vpop.f32.mrb[0].mxu0
        %1006 = vdwg.mxu0
        %1007 = vmatprep.subr.bf16.mxu0 0
        %1008 = vmatpush1.bf16.msra.mxu0 %v935
        %1009 = vmatprep.subr.bf16.mxu0 0
        %1010 = vmatpush1.bf16.msra.mxu0 %v936
        %1011 = vmatprep.subr.bf16.mxu0 0
        %1012 = vmatpush1.bf16.msra.mxu0 %v937
        %1013 = vmatprep.subr.bf16.mxu0 0
        %1014 = vmatpush1.bf16.msra.mxu0 %v938
        %1015 = vmatprep.subr.bf16.mxu0 0
        %1016 = vmatpush1.bf16.msra.mxu0 %v939
        %1017 = vmatprep.subr.bf16.mxu0 0
        %1018 = vmatpush1.bf16.msra.mxu0 %v940
        %1019 = vmatprep.subr.bf16.mxu0 0
        %1020 = vmatpush1.bf16.msra.mxu0 %v941
        %1021 = vmatprep.subr.bf16.mxu0 0
        %1022 = vmatpush1.bf16.msra.mxu0 %v942
        %1023 = vmatprep.subr.bf16.mxu0 0
        %1024 = vmatpush1.bf16.msra.mxu0 0
        %1025 = vmatprep.subr.bf16.mxu0 0
        %1026 = vmatpush1.bf16.msra.mxu0 0
        %1027 = vmatprep.subr.bf16.mxu0 0
        %1028 = vmatpush1.bf16.msra.mxu0 0
        %1029 = vmatprep.subr.bf16.mxu0 0
        %1030 = vmatpush1.bf16.msra.mxu0 0
        %1031 = vmatprep.subr.bf16.mxu0 0
        %1032 = vmatpush1.bf16.msra.mxu0 0
        %1033 = vmatprep.subr.bf16.mxu0 0
        %1034 = vmatpush1.bf16.msra.mxu0 0
        %1035 = vmatprep.subr.bf16.mxu0 0
        %1036 = vmatpush1.bf16.msra.mxu0 0
        %1037 = vmatprep.subr.bf16.mxu0 0
        %1038 = vmatpush1.bf16.msra.mxu0 0
        %1039 = vmatprep.mubr.bf16.mxu0 0
        %1040 = vmatmul.mubr.bf16.gmra.mrb[0].mxu0 %v766
        %v1041 = vpop.f32.mrb[0].mxu0
        %v1042 = vadd.f32 %v1002, %v1041
        %v1043 = vpop.f32.mrb[0].mxu0
        %v1044 = vpop.f32.mrb[0].mxu0
        %v1045 = vpop.f32.mrb[0].mxu0
        %1046 = vdwg.mxu0
        %v1047 = vunpack.c.l.bf16 %v383
        %v1048 = vadd.f32 %v1042, %v1047
        %v1049 = vpack.c.bf16 %v1048, %v1048
        %1050 = vst [vmem:[%s381] sm:$0xf] %v1049
        %s1051 = sand.u32 %s190, 1
        %s1052 = scalar_lea.sflag [#allocation4], %s1051
        %s1053 = sand.u32 %s190, 1
        %s1054 = smul.addr %s1053, 4
        %s1055 = scalar_lea.vmem [#allocation13], %s1054
        // Predicated region
        $region69: #{_lambda_.26} parent=43 // pred_check
          %p1056 = pneg %p200
        $region70: #{_lambda_.26} parent=43 // pred_check_branch
          %1058 = sbr.rel (%p1056) target = $region72
        $region71: #{_lambda_.26} parent=43 // pred_region
          %s1060 = ssub.s32 64, 64
          %1061 = vsyncadd %s1052, %s1060
          %s1062 = sadd.s32 %s33, %s32
          %s1063 = smul.addr %s1062, 64
          %s1064 = scalar_lea.hbm %s6, %s1063
          %s1066 = sshll.u32 %s1055, 4
          %s1067 = int_to_ptr.vmem [resolvable:$true] %s1066
          %1069 = dma.vmem_to_hbm [thread:$0]  %s1067, 64, %s1064, %s1052
        $region72: #{_lambda_.26} parent=43 // pred_fallthru
          _
      $region44: #{_lambda_.26} parent=5 // pred_fallthru
        _
      %p1070 = scmp.le.s32.totalorder 2, %s23
      // Predicated region
      $region73: #{_lambda_.26} parent=5 // pred_check
        %p1071 = pneg %p1070
      $region74: #{_lambda_.26} parent=5 // pred_check_branch
        %1073 = sbr.rel (%p1071) target = $region76
      $region75: #{_lambda_.26} parent=5 // pred_region
        %s1074 = ssub.s32 %s23, 2
        // Predicated region
        $region77: #{_lambda_.26} parent=75 // pred_check
          %p1075 = pneg %p206
        $region78: #{_lambda_.26} parent=75 // pred_check_branch
          %1077 = sbr.rel (%p1075) target = $region80
        $region79: #{_lambda_.26} parent=75 // pred_region
          %s1078 = sand.u32 %s191, 1
          %s1079 = scalar_lea.sflag [#allocation4], %s1078
          %s1080 = sand.u32 %s191, 1
          %s1081 = smul.addr %s1080, 4
          %s1082 = scalar_lea.vmem [#allocation13], %s1081
          %1083 = dma.done %s1079, 64
        $region80: #{_lambda_.26} parent=75 // pred_fallthru
          _
      $region76: #{_lambda_.26} parent=5 // pred_fallthru
        _
    $region6: #{_lambda_.26} parent=1 // loop_footer
      %s27 = sadd.s32 1, %s23
    $region7: #{_lambda_.26} parent=1 // loop_footer_branch
      %22 = sbr.rel target = $region3
    $region8: #{_lambda_.26} parent=1 // loop_exit
      _
    %1084 = vsyncpa [#allocation3], 1
    %s1085 = scalar_lea.sflag [#allocation3], 1
    %1086 = vsyncpa %s1085, 1
    %1087 = vsyncpa [#allocation6], 1
    %s1088 = scalar_lea.sflag [#allocation6], 1
    %1089 = vsyncpa %s1088, 1
    %1090 = vsyncpa [#allocation9], 1
    %1091 = vsyncpa [#allocation12], 1
    %1092 = vsyncpa [#allocation4], 1
    %s1093 = scalar_lea.sflag [#allocation4], 1
    %1094 = vsyncpa %s1093, 1

// kernel: _lambda_.29
$region0: #{_lambda_.29}
  #allocation0 [shape = 'u32[]', space=smem, size = 0x4, offset = 0x4, fixed_abs, tag = 'smem constant byte address 0x4 - core index']
  #allocation1 [shape = 'u32[144,128]{1,0:T(1,128)}', space=vmem, size = 0x12000, scoped, tag = 'internal scratch']
  %s0 = inlined_call_operand.hbm [shape: bf16[2,8,128], index: 0, kind: input, shape index: {}]
  %s1 = inlined_call_operand.hbm [shape: bf16[2,1,17,128], index: 1, kind: input, shape index: {}]
  %s2 = inlined_call_operand.hbm [shape: bf16[384,16], index: 2, kind: input, shape index: {}]
  %s3 = inlined_call_operand.hbm [shape: f32[1,16], index: 3, kind: input, shape index: {}]
  %s4 = inlined_call_operand.hbm [shape: bf16[2,8,16], index: 4, kind: output, shape index: {}]
  %s5 = sld [smem:[#allocation0]]
  $region65: #{_lambda_.29} parent=0
    _
  %s7 = ssub.s32 1, %s5
  %s8 = scalar_select 0, %s7, %s5
  $region1: #{_lambda_.29} parent=0
    #allocation2 [shape = 'u8[4096]{0}', space=vmem, size = 0x1000, scoped, tag = 'input window, operand 0']
    #allocation3 [shape = 's32[2]{0}', space=sflag, size = 0x8, scoped, tag = 'scoped memory for _lambda_.29']
    #allocation4 [shape = 's32[2]{0}', space=sflag, size = 0x8, scoped, tag = 'scoped memory for _lambda_.29']
    #allocation5 [shape = 'u8[12288]{0}', space=vmem, size = 0x3000, scoped, tag = 'input window, operand 1']
    #allocation6 [shape = 's32[2]{0}', space=sflag, size = 0x8, scoped, tag = 'scoped memory for _lambda_.29']
    #allocation7 [shape = 'u8[98304]{0}', space=vmem, size = 0x18000, scoped, tag = 'input window, operand 2, single buffered']
    #allocation8 [shape = 'u8[512]{0}', space=vmem, size = 0x400, scoped, tag = 'input window, operand 3, single buffered']
    #allocation9 [shape = 's32[1]{0}', space=sflag, size = 0x4, scoped, tag = 'scoped memory for _lambda_.29']
    #allocation10 [shape = 'u8[4096]{0}', space=vmem, size = 0x1000, scoped, tag = 'output window, operand 0']
    %9 = vsyncpa [#allocation3], 0
    %s10 = scalar_lea.sflag [#allocation3], 1
    %11 = vsyncpa %s10, 0
    %12 = vsyncpa [#allocation6], 0
    %s13 = scalar_lea.sflag [#allocation6], 1
    %14 = vsyncpa %s13, 0
    %15 = vsyncpa [#allocation9], 0
    %16 = vsyncpa [#allocation4], 0
    %s17 = scalar_lea.sflag [#allocation4], 1
    %18 = vsyncpa %s17, 0
    loop: start=0, step=1, limit=4
    $region2: #{_lambda_.29} parent=1 // loop_pre_header
      _
    $region3: #{_lambda_.29} parent=1 // loop_header
      %s20 = sphi 0, %s24
      %p21 = scmp.ge.s32.totalorder %s20, 4
      %s27 = sphi 0, %s39
      %s28 = sphi 0, %s35
      %s29 = sphi 0, %s27
      %s30 = sphi 0, %s28
      %s31 = sphi 0, %s29
      %s32 = sphi 0, %s30
      %s44 = sphi 0, %s46
      %s47 = sphi 0, %s44
      %s48 = sphi 0, %s47
      %s64 = sphi 0, %s48
      %s72 = sphi 0, %s74
      %s75 = sphi 0, %s72
      %s76 = sphi 0, %s75
      %s92 = sphi 0, %s76
      %s96 = sphi 0, %s96
      %s98 = sphi 0, %s96
      %s99 = sphi 0, %s98
      %s113 = sphi 0, %s99
      %s117 = sphi 0, %s117
      %s119 = sphi 0, %s117
      %s120 = sphi 0, %s119
      %s134 = sphi 0, %s120
      %s142 = sphi 0, %s144
      %s145 = sphi 0, %s142
      %s146 = sphi 0, %s145
      %s162 = sphi 0, %s146
    $region4: #{_lambda_.29} parent=1 // loop_header_branch
      %23 = sbr.rel (%p21) target = $region8
    $region5: #{_lambda_.29} parent=1 // loop_body
      %s25 = ssub.s32 %s20, 1
      %s26 = ssub.s32 %s20, 2
      %s33 = sadd.s32 1, %s28
      %p34 = scmp.ge.s32.totalorder %s33, 1
      %s35 = scalar_select %p34, 0, %s33
      %s36 = sadd.s32 1, %s27
      %s37 = scalar_select %p34, %s36, %s27
      %p38 = scmp.ge.s32.totalorder %s37, 2
      %s39 = scalar_select %p38, 0, %s37
      %s40 = ssub.s32 %s27, %s39
      %s41 = ssub.s32 %s28, %s35
      %s42 = sor.u32 %s40, %s41
      %p43 = scmp.eq.s32.totalorder %s42, 0
      %s45 = sadd.s32 %s44, 1
      %s46 = scalar_select %p43, %s44, %s45
      %p49 = pneg %p43
      %p50 = scmp.eq.s32.totalorder %s20, 1
      %p51 = por %p49, %p50
      %p52 = scmp.ne.s32.totalorder %s44, %s47
      %p53 = scmp.eq.s32.totalorder %s20, 0
      %p54 = por %p52, %p53
      %p55 = scmp.ne.s32.totalorder %s44, %s47
      %p56 = scmp.eq.s32.totalorder %s25, 1
      %p57 = por %p55, %p56
      %p58 = scmp.ne.s32.totalorder %s47, %s48
      %p59 = scmp.eq.s32.totalorder %s25, 0
      %p60 = por %p58, %p59
      %p61 = scmp.ne.s32.totalorder %s47, %s48
      %p62 = scmp.eq.s32.totalorder %s26, 1
      %p63 = por %p61, %p62
      %p65 = scmp.ne.s32.totalorder %s48, %s64
      %p66 = scmp.eq.s32.totalorder %s26, 0
      %p67 = por %p65, %p66
      %s68 = ssub.s32 %s27, %s39
      %s69 = ssub.s32 %s28, %s35
      %s70 = sor.u32 %s68, %s69
      %p71 = scmp.eq.s32.totalorder %s70, 0
      %s73 = sadd.s32 %s72, 1
      %s74 = scalar_select %p71, %s72, %s73
      %p77 = pneg %p71
      %p78 = scmp.eq.s32.totalorder %s20, 1
      %p79 = por %p77, %p78
      %p80 = scmp.ne.s32.totalorder %s72, %s75
      %p81 = scmp.eq.s32.totalorder %s20, 0
      %p82 = por %p80, %p81
      %p83 = scmp.ne.s32.totalorder %s72, %s75
      %p84 = scmp.eq.s32.totalorder %s25, 1
      %p85 = por %p83, %p84
      %p86 = scmp.ne.s32.totalorder %s75, %s76
      %p87 = scmp.eq.s32.totalorder %s25, 0
      %p88 = por %p86, %p87
      %p89 = scmp.ne.s32.totalorder %s75, %s76
      %p90 = scmp.eq.s32.totalorder %s26, 1
      %p91 = por %p89, %p90
      %p93 = scmp.ne.s32.totalorder %s76, %s92
      %p94 = scmp.eq.s32.totalorder %s26, 0
      %p95 = por %p93, %p94
      %s97 = sadd.s32 %s96, 1
      %p100 = scmp.eq.s32.totalorder %s20, 1
      %p101 = scmp.ne.s32.totalorder %s96, %s98
      %p102 = scmp.eq.s32.totalorder %s20, 0
      %p103 = por %p101, %p102
      %p104 = scmp.ne.s32.totalorder %s96, %s98
      %p105 = scmp.eq.s32.totalorder %s25, 1
      %p106 = por %p104, %p105
      %p107 = scmp.ne.s32.totalorder %s98, %s99
      %p108 = scmp.eq.s32.totalorder %s25, 0
      %p109 = por %p107, %p108
      %p110 = scmp.ne.s32.totalorder %s98, %s99
      %p111 = scmp.eq.s32.totalorder %s26, 1
      %p112 = por %p110, %p111
      %p114 = scmp.ne.s32.totalorder %s99, %s113
      %p115 = scmp.eq.s32.totalorder %s26, 0
      %p116 = por %p114, %p115
      %s118 = sadd.s32 %s117, 1
      %p121 = scmp.eq.s32.totalorder %s20, 1
      %p122 = scmp.ne.s32.totalorder %s117, %s119
      %p123 = scmp.eq.s32.totalorder %s20, 0
      %p124 = por %p122, %p123
      %p125 = scmp.ne.s32.totalorder %s117, %s119
      %p126 = scmp.eq.s32.totalorder %s25, 1
      %p127 = por %p125, %p126
      %p128 = scmp.ne.s32.totalorder %s119, %s120
      %p129 = scmp.eq.s32.totalorder %s25, 0
      %p130 = por %p128, %p129
      %p131 = scmp.ne.s32.totalorder %s119, %s120
      %p132 = scmp.eq.s32.totalorder %s26, 1
      %p133 = por %p131, %p132
      %p135 = scmp.ne.s32.totalorder %s120, %s134
      %p136 = scmp.eq.s32.totalorder %s26, 0
      %p137 = por %p135, %p136
      %s138 = ssub.s32 %s27, %s39
      %s139 = ssub.s32 %s28, %s35
      %s140 = sor.u32 %s138, %s139
      %p141 = scmp.eq.s32.totalorder %s140, 0
      %s143 = sadd.s32 %s142, 1
      %s144 = scalar_select %p141, %s142, %s143
      %p147 = pneg %p141
      %p148 = scmp.eq.s32.totalorder %s20, 1
      %p149 = por %p147, %p148
      %p150 = scmp.ne.s32.totalorder %s142, %s145
      %p151 = scmp.eq.s32.totalorder %s20, 0
      %p152 = por %p150, %p151
      %p153 = scmp.ne.s32.totalorder %s142, %s145
      %p154 = scmp.eq.s32.totalorder %s25, 1
      %p155 = por %p153, %p154
      %p156 = scmp.ne.s32.totalorder %s145, %s146
      %p157 = scmp.eq.s32.totalorder %s25, 0
      %p158 = por %p156, %p157
      %p159 = scmp.ne.s32.totalorder %s145, %s146
      %p160 = scmp.eq.s32.totalorder %s26, 1
      %p161 = por %p159, %p160
      %p163 = scmp.ne.s32.totalorder %s146, %s162
      %p164 = scmp.eq.s32.totalorder %s26, 0
      %p165 = por %p163, %p164
      %p166 = scmp.le.s32.totalorder 1, %s20
      %p167 = scmp.lt.s32.totalorder %s20, 3
      %p168 = pnand %p166, %p167
      %p169 = pneg %p168
      // Predicated region
      $region9: #{_lambda_.29} parent=5 // pred_check
        _
      $region10: #{_lambda_.29} parent=5 // pred_check_branch
        %171 = sbr.rel (%p168) target = $region12
      $region11: #{_lambda_.29} parent=5 // pred_region
        %s172 = ssub.s32 %s20, 1
        // Predicated region
        $region13: #{_lambda_.29} parent=11 // pred_check
          %p173 = pneg %p109
        $region14: #{_lambda_.29} parent=11 // pred_check_branch
          %175 = sbr.rel (%p173) target = $region16
        $region15: #{_lambda_.29} parent=11 // pred_region
          %s177 = ssub.s32 3072, 3072
          %178 = vsyncadd [#allocation6], %s177
          %s179 = sshll.u32 [#allocation7], 4
          %s180 = int_to_ptr.vmem [resolvable:$true] %s179
          %185 = dma.hbm_to_vmem [thread:$0]  %s2, 3072, %s180, [#allocation6], 64, 64, 4
        $region16: #{_lambda_.29} parent=11 // pred_fallthru
          _
        // Predicated region
        $region17: #{_lambda_.29} parent=11 // pred_check
          %p186 = pneg %p130
        $region18: #{_lambda_.29} parent=11 // pred_check_branch
          %188 = sbr.rel (%p186) target = $region20
        $region19: #{_lambda_.29} parent=11 // pred_region
          %s190 = ssub.s32 16, 16
          %191 = vsyncadd [#allocation9], %s190
          %s193 = sshll.u32 [#allocation8], 4
          %s194 = int_to_ptr.vmem [resolvable:$true] %s193
          %196 = dma.hbm_to_vmem [thread:$0]  %s3, 16, %s194, [#allocation9]
        $region20: #{_lambda_.29} parent=11 // pred_fallthru
          _
      $region12: #{_lambda_.29} parent=5 // pred_fallthru
        _
      %p197 = scmp.lt.s32.totalorder %s20, 2
      // Predicated region
      $region21: #{_lambda_.29} parent=5 // pred_check
        %p198 = pneg %p197
      $region22: #{_lambda_.29} parent=5 // pred_check_branch
        %200 = sbr.rel (%p198) target = $region24
      $region23: #{_lambda_.29} parent=5 // pred_region
        // Predicated region
        $region25: #{_lambda_.29} parent=23 // pred_check
          %p201 = pneg %p54
        $region26: #{_lambda_.29} parent=23 // pred_check_branch
          %203 = sbr.rel (%p201) target = $region28
        $region27: #{_lambda_.29} parent=23 // pred_region
          %s204 = sand.u32 %s44, 1
          %s205 = scalar_lea.sflag [#allocation3], %s204
          %s206 = sand.u32 %s44, 1
          %s207 = smul.addr %s206, 4
          %s208 = scalar_lea.vmem [#allocation2], %s207
          %s210 = ssub.s32 64, 64
          %211 = vsyncadd %s205, %s210
          %s212 = sadd.s32 %s28, %s27
          %s213 = smul.addr %s212, 64
          %s214 = scalar_lea.hbm %s0, %s213
          %s216 = sshll.u32 %s208, 4
          %s217 = int_to_ptr.vmem [resolvable:$true] %s216
          %219 = dma.hbm_to_vmem [thread:$0]  %s214, 64, %s217, %s205
        $region28: #{_lambda_.29} parent=23 // pred_fallthru
          _
        // Predicated region
        $region29: #{_lambda_.29} parent=23 // pred_check
          %p220 = pneg %p82
        $region30: #{_lambda_.29} parent=23 // pred_check_branch
          %222 = sbr.rel (%p220) target = $region32
        $region31: #{_lambda_.29} parent=23 // pred_region
          %s223 = sand.u32 %s20, 1
          %s224 = scalar_lea.sflag [#allocation6], %s223
          %s225 = sand.u32 %s72, 1
          %s226 = smul.addr %s225, 12
          %s227 = scalar_lea.vmem [#allocation5], %s226
          %s229 = ssub.s32 192, 192
          %230 = vsyncadd %s224, %s229
          %s231 = smul.addr %s28, 3
          %s232 = smul.addr %s27, 3
          %s233 = sadd.s32 %s231, %s232
          %s234 = smul.addr %s233, 64
          %s235 = scalar_lea.hbm %s1, %s234
          %s236 = sshll.u32 %s227, 4
          %s237 = int_to_ptr.vmem [resolvable:$true] %s236
          %242 = dma.hbm_to_vmem [thread:$0]  %s235, 192, %s237, %s224, 64, 64, 4
        $region32: #{_lambda_.29} parent=23 // pred_fallthru
          _
      $region24: #{_lambda_.29} parent=5 // pred_fallthru
        _
      %p243 = scmp.le.s32.totalorder 1, %s20
      %p244 = scmp.lt.s32.totalorder %s20, 3
      %p245 = pnand %p243, %p244
      %p246 = pneg %p245
      // Predicated region
      $region33: #{_lambda_.29} parent=5 // pred_check
        _
      $region34: #{_lambda_.29} parent=5 // pred_check_branch
        %248 = sbr.rel (%p245) target = $region36
      $region35: #{_lambda_.29} parent=5 // pred_region
        %s249 = ssub.s32 %s20, 1
        %s250 = sand.u32 %s47, 1
        %s251 = scalar_lea.sflag [#allocation3], %s250
        %s252 = sand.u32 %s47, 1
        %s253 = smul.addr %s252, 4
        %s254 = scalar_lea.vmem [#allocation2], %s253
        // Predicated region
        $region37: #{_lambda_.29} parent=35 // pred_check
          %p255 = pneg %p60
        $region38: #{_lambda_.29} parent=35 // pred_check_branch
          %257 = sbr.rel (%p255) target = $region40
        $region39: #{_lambda_.29} parent=35 // pred_region
          %258 = dma.done %s251, 64
        $region40: #{_lambda_.29} parent=35 // pred_fallthru
          _
        %s259 = sand.u32 %s25, 1
        %s260 = scalar_lea.sflag [#allocation6], %s259
        %s261 = sand.u32 %s75, 1
        %s262 = smul.addr %s261, 12
        %s263 = scalar_lea.vmem [#allocation5], %s262
        // Predicated region
        $region41: #{_lambda_.29} parent=35 // pred_check
          %p264 = pneg %p88
        $region42: #{_lambda_.29} parent=35 // pred_check_branch
          %266 = sbr.rel (%p264) target = $region44
        $region43: #{_lambda_.29} parent=35 // pred_region
          %267 = dma.done %s260, 192
        $region44: #{_lambda_.29} parent=35 // pred_fallthru
          _
        // Predicated region
        $region45: #{_lambda_.29} parent=35 // pred_check
          %p268 = pneg %p109
        $region46: #{_lambda_.29} parent=35 // pred_check_branch
          %270 = sbr.rel (%p268) target = $region48
        $region47: #{_lambda_.29} parent=35 // pred_region
          %271 = dma.done [#allocation6], 3072
        $region48: #{_lambda_.29} parent=35 // pred_fallthru
          _
        // Predicated region
        $region49: #{_lambda_.29} parent=35 // pred_check
          %p272 = pneg %p130
        $region50: #{_lambda_.29} parent=35 // pred_check_branch
          %274 = sbr.rel (%p272) target = $region52
        $region51: #{_lambda_.29} parent=35 // pred_region
          %275 = dma.done [#allocation9], 16
        $region52: #{_lambda_.29} parent=35 // pred_fallthru
          _
        %s276 = sand.u32 %s47, 1
        %s277 = scalar_lea.sflag [#allocation3], %s276
        %s278 = sand.u32 %s47, 1
        %s279 = smul.addr %s278, 4
        %s280 = scalar_lea.vmem [#allocation2], %s279
        %p281 = pneg %p60
        %p282 = pneg %p57
        %s283 = sand.u32 %s25, 1
        %s284 = scalar_lea.sflag [#allocation6], %s283
        %s285 = sand.u32 %s75, 1
        %s286 = smul.addr %s285, 12
        %s287 = scalar_lea.vmem [#allocation5], %s286
        %p288 = pneg %p88
        %p289 = pneg %p85
        %p290 = pneg %p109
        %p291 = pneg %p106
        %p292 = pneg %p130
        %p293 = pneg %p127
        %p294 = pneg %p158
        %p295 = pneg %p155
        %s296 = sand.u32 %s145, 1
        %s297 = scalar_lea.sflag [#allocation4], %s296
        %s298 = sand.u32 %s145, 1
        %s299 = smul.addr %s298, 4
        %s300 = scalar_lea.vmem [#allocation10], %s299
        %v302 = vld [vmem:[%s254] sm:$0xf]
        %v303 = vld [vmem:[%s263] sm:$0xf]
        %v304 = vld [vmem:[%s263 + $0x4] sm:$0xf]
        %v305 = vld [vmem:[%s263 + $0x8] sm:$0x1]
        %v308 = vunpack.c.l.b16 %v303
        %v309 = vunpack.c.l.b16 %v304
        %v310 = vpack.c.b16 %v309, %v308
        %v313 = vunpack.c.l.b16 %v305
        %v314 = vpack.c.b16 %v313, %v313
        %vm315 = vcmask 1043456
        %v318 = vsel %vm315, %v302, %v314
        %v320 = vunpack.c.l.bf16 %v310
        %v321 = vunpack.c.h.bf16 %v310
        %v322 = vunpack.c.l.bf16 %v318
        %v323 = vunpack.c.h.bf16 %v318
        %vm324 = vcmp.ge.f32.partialorder %v320, 0.0
        %vm325 = vcmp.ge.f32.partialorder %v321, 0.0
        %vm326 = vcmp.ge.f32.partialorder %v322, 0.0
        %vm327 = vcmp.ge.f32.partialorder %v323, 0.0
        %v328 = vmul.f32 %v320, 0.01
        %v329 = vmul.f32 %v321, 0.01
        %v330 = vmul.f32 %v322, 0.01
        %v331 = vmul.f32 %v323, 0.01
        %v332 = vsel %vm324, %v320, %v328
        %v333 = vsel %vm325, %v321, %v329
        %v334 = vsel %vm326, %v322, %v330
        %v335 = vsel %vm327, %v323, %v331
        %v336 = vpack.c.bf16 %v333, %v332
        %v337 = vpack.c.bf16 %v335, %v334
        %v339 = vshll.u32 %v337, 16
        %v341 = vrot.slane %v339, 1
        %v342 = vshrl.u32 %v337, 16
        %v344 = vor.u32 %v342, %v341
        %v346 = vrot.slane %v337, 1
        %v347 = vld [vmem:[#allocation7] sm:$0xf]
        %v348 = vld [vmem:[#allocation7 + $0x4] sm:$0xf]
        %v349 = vld [vmem:[#allocation7 + $0x8] sm:$0xf]
        %v350 = vld [vmem:[#allocation7 + $0xc] sm:$0xf]
        %v351 = vld [vmem:[#allocation7 + $0x10] sm:$0xf]
        %v352 = vld [vmem:[#allocation7 + $0x14] sm:$0xf]
        %v353 = vld [vmem:[#allocation7 + $0x18] sm:$0xf]
        %v354 = vld [vmem:[#allocation7 + $0x1c] sm:$0xf]
        %v355 = vld [vmem:[#allocation7 + $0x20] sm:$0xf]
        %v356 = vld [vmem:[#allocation7 + $0x24] sm:$0xf]
        %v357 = vld [vmem:[#allocation7 + $0x28] sm:$0xf]
        %v358 = vld [vmem:[#allocation7 + $0x2c] sm:$0xf]
        %v359 = vld [vmem:[#allocation7 + $0x30] sm:$0xf]
        %v360 = vld [vmem:[#allocation7 + $0x34] sm:$0xf]
        %v361 = vld [vmem:[#allocation7 + $0x38] sm:$0xf]
        %v362 = vld [vmem:[#allocation7 + $0x3c] sm:$0xf]
        %v363 = vld [vmem:[#allocation7 + $0x40] sm:$0xf]
        %v364 = vld [vmem:[#allocation7 + $0x44] sm:$0xf]
        %v365 = vld [vmem:[#allocation7 + $0x48] sm:$0xf]
        %v366 = vld [vmem:[#allocation7 + $0x4c] sm:$0xf]
        %v367 = vld [vmem:[#allocation7 + $0x50] sm:$0xf]
        %v368 = vld [vmem:[#allocation7 + $0x54] sm:$0xf]
        %v369 = vld [vmem:[#allocation7 + $0x58] sm:$0xf]
        %v370 = vld [vmem:[#allocation7 + $0x5c] sm:$0xf]
        %v371 = vld [vmem:[#allocation7 + $0x60] sm:$0xf]
        %v372 = vld [vmem:[#allocation7 + $0x64] sm:$0xf]
        %v373 = vld [vmem:[#allocation7 + $0x68] sm:$0xf]
        %v374 = vld [vmem:[#allocation7 + $0x6c] sm:$0xf]
        %v375 = vld [vmem:[#allocation7 + $0x70] sm:$0xf]
        %v376 = vld [vmem:[#allocation7 + $0x74] sm:$0xf]
        %v377 = vld [vmem:[#allocation7 + $0x78] sm:$0xf]
        %v378 = vld [vmem:[#allocation7 + $0x7c] sm:$0xf]
        %v379 = vld [vmem:[#allocation7 + $0x80] sm:$0xf]
        %v380 = vld [vmem:[#allocation7 + $0x84] sm:$0xf]
        %v381 = vld [vmem:[#allocation7 + $0x88] sm:$0xf]
        %v382 = vld [vmem:[#allocation7 + $0x8c] sm:$0xf]
        %v383 = vld [vmem:[#allocation7 + $0x90] sm:$0xf]
        %v384 = vld [vmem:[#allocation7 + $0x94] sm:$0xf]
        %v385 = vld [vmem:[#allocation7 + $0x98] sm:$0xf]
        %v386 = vld [vmem:[#allocation7 + $0x9c] sm:$0xf]
        %v387 = vld [vmem:[#allocation7 + $0xa0] sm:$0xf]
        %v388 = vld [vmem:[#allocation7 + $0xa4] sm:$0xf]
        %v389 = vld [vmem:[#allocation7 + $0xa8] sm:$0xf]
        %v390 = vld [vmem:[#allocation7 + $0xac] sm:$0xf]
        %v391 = vld [vmem:[#allocation7 + $0xb0] sm:$0xf]
        %v392 = vld [vmem:[#allocation7 + $0xb4] sm:$0xf]
        %v393 = vld [vmem:[#allocation7 + $0xb8] sm:$0xf]
        %v394 = vld [vmem:[#allocation7 + $0xbc] sm:$0xf]
        %v395 = vld [vmem:[#allocation8] sm:$0x1]
        %v397 = vlaneseq
        %v398 = vshrl.u32 %v397, 7
        %v399 = vsub.s32 0, %v398
        %v400 = vrot.slane %v395, %v399
        %vm402 = vsmask.f32 256
        %v404 = vshrl.u32 %v336, 16
        %v406 = vrot.slane %v404, 7
        %v407 = vrot.slane %v342, 7
        %v408 = vor.u32 %v407, %v339
        %v409 = vsel %vm402, %v406, %v408
        %v411 = vshrl.u32 %v341, 16
        %v413 = vrot.slane %v411, 7
        %v415 = vshrl.u32 %v344, 16
        %v417 = vrot.slane %v415, 7
        %v418 = vshll.u32 %v344, 16
        %v420 = vor.u32 %v417, %v418
        %v421 = vsel %vm402, %v413, %v420
        %v423 = vshrl.u32 %v346, 16
        %v425 = vrot.slane %v423, 7
        %v426 = vshll.u32 %v346, 16
        %v428 = vor.u32 %v425, %v426
        %v429 = vsel %vm402, %v425, %v428
        %v481 = vunpack.c.l.b16 %v347
        %v482 = vunpack.c.l.b16 %v348
        %v483 = vunpack.c.l.b16 %v349
        %v484 = vunpack.c.l.b16 %v350
        %v485 = vunpack.c.l.b16 %v351
        %v486 = vunpack.c.l.b16 %v352
        %v487 = vunpack.c.l.b16 %v353
        %v488 = vunpack.c.l.b16 %v354
        %v489 = vunpack.c.l.b16 %v355
        %v490 = vunpack.c.l.b16 %v356
        %v491 = vunpack.c.l.b16 %v357
        %v492 = vunpack.c.l.b16 %v358
        %v493 = vunpack.c.l.b16 %v359
        %v494 = vunpack.c.l.b16 %v360
        %v495 = vunpack.c.l.b16 %v361
        %v496 = vunpack.c.l.b16 %v362
        %v497 = vunpack.c.l.b16 %v363
        %v498 = vunpack.c.l.b16 %v364
        %v499 = vunpack.c.l.b16 %v365
        %v500 = vunpack.c.l.b16 %v366
        %v501 = vunpack.c.l.b16 %v367
        %v502 = vunpack.c.l.b16 %v368
        %v503 = vunpack.c.l.b16 %v369
        %v504 = vunpack.c.l.b16 %v370
        %v505 = vunpack.c.l.b16 %v371
        %v506 = vunpack.c.l.b16 %v372
        %v507 = vunpack.c.l.b16 %v373
        %v508 = vunpack.c.l.b16 %v374
        %v509 = vunpack.c.l.b16 %v375
        %v510 = vunpack.c.l.b16 %v376
        %v511 = vunpack.c.l.b16 %v377
        %v512 = vunpack.c.l.b16 %v378
        %v513 = vunpack.c.l.b16 %v379
        %v514 = vunpack.c.l.b16 %v380
        %v515 = vunpack.c.l.b16 %v381
        %v516 = vunpack.c.l.b16 %v382
        %v517 = vunpack.c.l.b16 %v383
        %v518 = vunpack.c.l.b16 %v384
        %v519 = vunpack.c.l.b16 %v385
        %v520 = vunpack.c.l.b16 %v386
        %v521 = vunpack.c.l.b16 %v387
        %v522 = vunpack.c.l.b16 %v388
        %v523 = vunpack.c.l.b16 %v389
        %v524 = vunpack.c.l.b16 %v390
        %v525 = vunpack.c.l.b16 %v391
        %v526 = vunpack.c.l.b16 %v392
        %v527 = vunpack.c.l.b16 %v393
        %v528 = vunpack.c.l.b16 %v394
        %v529 = vpack.c.b16 %v482, %v481
        %v530 = vpack.c.b16 %v484, %v483
        %v531 = vpack.c.b16 %v486, %v485
        %v532 = vpack.c.b16 %v488, %v487
        %v533 = vpack.c.b16 %v490, %v489
        %v534 = vpack.c.b16 %v492, %v491
        %v535 = vpack.c.b16 %v494, %v493
        %v536 = vpack.c.b16 %v496, %v495
        %v537 = vpack.c.b16 %v498, %v497
        %v538 = vpack.c.b16 %v500, %v499
        %v539 = vpack.c.b16 %v502, %v501
        %v540 = vpack.c.b16 %v504, %v503
        %v541 = vpack.c.b16 %v506, %v505
        %v542 = vpack.c.b16 %v508, %v507
        %v543 = vpack.c.b16 %v510, %v509
        %v544 = vpack.c.b16 %v512, %v511
        %v545 = vpack.c.b16 %v514, %v513
        %v546 = vpack.c.b16 %v516, %v515
        %v547 = vpack.c.b16 %v518, %v517
        %v548 = vpack.c.b16 %v520, %v519
        %v549 = vpack.c.b16 %v522, %v521
        %v550 = vpack.c.b16 %v524, %v523
        %v551 = vpack.c.b16 %v526, %v525
        %v552 = vpack.c.b16 %v528, %v527
        %577 = vmatprep.subr.bf16.mxu0 0
        %578 = vmatpush1.bf16.msra.mxu0 %v529
        %579 = vmatprep.subr.bf16.mxu0 0
        %580 = vmatpush1.bf16.msra.mxu0 %v530
        %581 = vmatprep.subr.bf16.mxu0 0
        %582 = vmatpush1.bf16.msra.mxu0 %v531
        %583 = vmatprep.subr.bf16.mxu0 0
        %584 = vmatpush1.bf16.msra.mxu0 %v532
        %585 = vmatprep.subr.bf16.mxu0 0
        %586 = vmatpush1.bf16.msra.mxu0 %v533
        %587 = vmatprep.subr.bf16.mxu0 0
        %588 = vmatpush1.bf16.msra.mxu0 %v534
        %589 = vmatprep.subr.bf16.mxu0 0
        %590 = vmatpush1.bf16.msra.mxu0 %v535
        %591 = vmatprep.subr.bf16.mxu0 0
        %592 = vmatpush1.bf16.msra.mxu0 %v536
        %593 = vmatprep.subr.bf16.mxu0 0
        %594 = vmatpush1.bf16.msra.mxu0 %v537
        %595 = vmatprep.subr.bf16.mxu0 0
        %596 = vmatpush1.bf16.msra.mxu0 %v538
        %597 = vmatprep.subr.bf16.mxu0 0
        %598 = vmatpush1.bf16.msra.mxu0 %v539
        %599 = vmatprep.subr.bf16.mxu0 0
        %600 = vmatpush1.bf16.msra.mxu0 %v540
        %601 = vmatprep.subr.bf16.mxu0 0
        %602 = vmatpush1.bf16.msra.mxu0 %v541
        %603 = vmatprep.subr.bf16.mxu0 0
        %604 = vmatpush1.bf16.msra.mxu0 %v542
        %605 = vmatprep.subr.bf16.mxu0 0
        %606 = vmatpush1.bf16.msra.mxu0 %v543
        %607 = vmatprep.subr.bf16.mxu0 0
        %608 = vmatpush1.bf16.msra.mxu0 %v544
        %609 = vmatprep.mubr.bf16.mxu0 %v421
        %610 = vmatmul.mubr.bf16.gmra.mrb[0].mxu0 %v409
        %v611 = vpop.f32.mrb[0].mxu0
        %v612 = vadd.f32 %v400, %v611
        %v613 = vpop.f32.mrb[0].mxu0
        %v614 = vpop.f32.mrb[0].mxu0
        %v615 = vpop.f32.mrb[0].mxu0
        %616 = vdwg.mxu0
        %617 = vmatprep.subr.bf16.mxu0 0
        %618 = vmatpush1.bf16.msra.mxu0 %v545
        %619 = vmatprep.subr.bf16.mxu0 0
        %620 = vmatpush1.bf16.msra.mxu0 %v546
        %621 = vmatprep.subr.bf16.mxu0 0
        %622 = vmatpush1.bf16.msra.mxu0 %v547
        %623 = vmatprep.subr.bf16.mxu0 0
        %624 = vmatpush1.bf16.msra.mxu0 %v548
        %625 = vmatprep.subr.bf16.mxu0 0
        %626 = vmatpush1.bf16.msra.mxu0 %v549
        %627 = vmatprep.subr.bf16.mxu0 0
        %628 = vmatpush1.bf16.msra.mxu0 %v550
        %629 = vmatprep.subr.bf16.mxu0 0
        %630 = vmatpush1.bf16.msra.mxu0 %v551
        %631 = vmatprep.subr.bf16.mxu0 0
        %632 = vmatpush1.bf16.msra.mxu0 %v552
        %633 = vmatprep.subr.bf16.mxu0 0
        %634 = vmatpush1.bf16.msra.mxu0 0
        %635 = vmatprep.subr.bf16.mxu0 0
        %636 = vmatpush1.bf16.msra.mxu0 0
        %637 = vmatprep.subr.bf16.mxu0 0
        %638 = vmatpush1.bf16.msra.mxu0 0
        %639 = vmatprep.subr.bf16.mxu0 0
        %640 = vmatpush1.bf16.msra.mxu0 0
        %641 = vmatprep.subr.bf16.mxu0 0
        %642 = vmatpush1.bf16.msra.mxu0 0
        %643 = vmatprep.subr.bf16.mxu0 0
        %644 = vmatpush1.bf16.msra.mxu0 0
        %645 = vmatprep.subr.bf16.mxu0 0
        %646 = vmatpush1.bf16.msra.mxu0 0
        %647 = vmatprep.subr.bf16.mxu0 0
        %648 = vmatpush1.bf16.msra.mxu0 0
        %649 = vmatprep.mubr.bf16.mxu0 0
        %650 = vmatmul.mubr.bf16.gmra.mrb[0].mxu0 %v429
        %v651 = vpop.f32.mrb[0].mxu0
        %v652 = vadd.f32 %v612, %v651
        %v653 = vpop.f32.mrb[0].mxu0
        %v654 = vpop.f32.mrb[0].mxu0
        %v655 = vpop.f32.mrb[0].mxu0
        %656 = vdwg.mxu0
        %v657 = vtanh.pop %v652
        %v658 = vpack.c.bf16 %v657, %v657
        %vm659 = vcmask 125952
        %660 = vst.msk [vmem:[%s300] sm:$0xf] %vm659, %v658
        %s661 = sand.u32 %s145, 1
        %s662 = scalar_lea.sflag [#allocation4], %s661
        %s663 = sand.u32 %s145, 1
        %s664 = smul.addr %s663, 4
        %s665 = scalar_lea.vmem [#allocation10], %s664
        // Predicated region
        $region53: #{_lambda_.29} parent=35 // pred_check
          %p666 = pneg %p155
        $region54: #{_lambda_.29} parent=35 // pred_check_branch
          %668 = sbr.rel (%p666) target = $region56
        $region55: #{_lambda_.29} parent=35 // pred_region
          %s670 = ssub.s32 64, 64
          %671 = vsyncadd %s662, %s670
          %s672 = sadd.s32 %s30, %s29
          %s673 = smul.addr %s672, 64
          %s674 = scalar_lea.hbm %s4, %s673
          %s676 = sshll.u32 %s665, 4
          %s677 = int_to_ptr.vmem [resolvable:$true] %s676
          %679 = dma.vmem_to_hbm [thread:$0]  %s677, 64, %s674, %s662
        $region56: #{_lambda_.29} parent=35 // pred_fallthru
          _
      $region36: #{_lambda_.29} parent=5 // pred_fallthru
        _
      %p680 = scmp.le.s32.totalorder 2, %s20
      // Predicated region
      $region57: #{_lambda_.29} parent=5 // pred_check
        %p681 = pneg %p680
      $region58: #{_lambda_.29} parent=5 // pred_check_branch
        %683 = sbr.rel (%p681) target = $region60
      $region59: #{_lambda_.29} parent=5 // pred_region
        %s684 = ssub.s32 %s20, 2
        // Predicated region
        $region61: #{_lambda_.29} parent=59 // pred_check
          %p685 = pneg %p161
        $region62: #{_lambda_.29} parent=59 // pred_check_branch
          %687 = sbr.rel (%p685) target = $region64
        $region63: #{_lambda_.29} parent=59 // pred_region
          %s688 = sand.u32 %s146, 1
          %s689 = scalar_lea.sflag [#allocation4], %s688
          %s690 = sand.u32 %s146, 1
          %s691 = smul.addr %s690, 4
          %s692 = scalar_lea.vmem [#allocation10], %s691
          %693 = dma.done %s689, 64
        $region64: #{_lambda_.29} parent=59 // pred_fallthru
          _
      $region60: #{_lambda_.29} parent=5 // pred_fallthru
        _
    $region6: #{_lambda_.29} parent=1 // loop_footer
      %s24 = sadd.s32 1, %s20
    $region7: #{_lambda_.29} parent=1 // loop_footer_branch
      %19 = sbr.rel target = $region3
    $region8: #{_lambda_.29} parent=1 // loop_exit
      _
    %694 = vsyncpa [#allocation3], 1
    %s695 = scalar_lea.sflag [#allocation3], 1
    %696 = vsyncpa %s695, 1
    %697 = vsyncpa [#allocation6], 1
    %s698 = scalar_lea.sflag [#allocation6], 1
    %699 = vsyncpa %s698, 1
    %700 = vsyncpa [#allocation9], 1
    %701 = vsyncpa [#allocation4], 1
    %s702 = scalar_lea.sflag [#allocation4], 1
    %703 = vsyncpa %s702, 1

// kernel: _lambda_.28
$region0: #{_lambda_.28}
  #allocation0 [shape = 'u32[]', space=smem, size = 0x4, offset = 0x4, fixed_abs, tag = 'smem constant byte address 0x4 - core index']
  #allocation1 [shape = 'u32[144,128]{1,0:T(1,128)}', space=vmem, size = 0x12000, scoped, tag = 'internal scratch']
  %s0 = inlined_call_operand.hbm [shape: bf16[2,8,128], index: 0, kind: input, shape index: {}]
  %s1 = inlined_call_operand.hbm [shape: bf16[2,1,18,128], index: 1, kind: input, shape index: {}]
  %s2 = inlined_call_operand.hbm [shape: bf16[384,128], index: 2, kind: input, shape index: {}]
  %s3 = inlined_call_operand.hbm [shape: f32[1,128], index: 3, kind: input, shape index: {}, may-alias: {3,5}]
  %s4 = inlined_call_operand.hbm [shape: bf16[384,128], index: 4, kind: input, shape index: {}]
  %s5 = inlined_call_operand.hbm [shape: f32[1,128], index: 5, kind: input, shape index: {}, may-alias: {3,5}]
  %s6 = inlined_call_operand.hbm [shape: bf16[2,8,128], index: 6, kind: input, shape index: {}]
  %s7 = inlined_call_operand.hbm [shape: bf16[2,8,128], index: 7, kind: output, shape index: {}]
  %s8 = sld [smem:[#allocation0]]
  $region89: #{_lambda_.28} parent=0
    _
  %s10 = ssub.s32 1, %s8
  %s11 = scalar_select 0, %s10, %s8
  $region1: #{_lambda_.28} parent=0
    #allocation2 [shape = 'u8[4096]{0}', space=vmem, size = 0x1000, scoped, tag = 'input window, operand 0']
    #allocation3 [shape = 's32[2]{0}', space=sflag, size = 0x8, scoped, tag = 'scoped memory for _lambda_.28']
    #allocation4 [shape = 's32[2]{0}', space=sflag, size = 0x8, scoped, tag = 'scoped memory for _lambda_.28']
    #allocation5 [shape = 'u8[12288]{0}', space=vmem, size = 0x3000, scoped, tag = 'input window, operand 1']
    #allocation6 [shape = 's32[2]{0}', space=sflag, size = 0x8, scoped, tag = 'scoped memory for _lambda_.28']
    #allocation7 [shape = 'u8[98304]{0}', space=vmem, size = 0x18000, scoped, tag = 'input window, operand 2, single buffered']
    #allocation8 [shape = 'u8[512]{0}', space=vmem, size = 0x400, scoped, tag = 'input window, operand 3, single buffered']
    #allocation9 [shape = 's32[1]{0}', space=sflag, size = 0x4, scoped, tag = 'scoped memory for _lambda_.28']
    #allocation10 [shape = 'u8[98304]{0}', space=vmem, size = 0x18000, scoped, tag = 'input window, operand 4, single buffered']
    #allocation11 [shape = 'u8[512]{0}', space=vmem, size = 0x400, scoped, tag = 'input window, operand 5, single buffered']
    #allocation12 [shape = 's32[1]{0}', space=sflag, size = 0x4, scoped, tag = 'scoped memory for _lambda_.28']
    #allocation13 [shape = 'u8[4096]{0}', space=vmem, size = 0x1000, scoped, tag = 'input window, operand 6']
    #allocation14 [shape = 'u8[4096]{0}', space=vmem, size = 0x1000, scoped, tag = 'output window, operand 0']
    %12 = vsyncpa [#allocation3], 0
    %s13 = scalar_lea.sflag [#allocation3], 1
    %14 = vsyncpa %s13, 0
    %15 = vsyncpa [#allocation6], 0
    %s16 = scalar_lea.sflag [#allocation6], 1
    %17 = vsyncpa %s16, 0
    %18 = vsyncpa [#allocation9], 0
    %19 = vsyncpa [#allocation12], 0
    %20 = vsyncpa [#allocation4], 0
    %s21 = scalar_lea.sflag [#allocation4], 1
    %22 = vsyncpa %s21, 0
    loop: start=0, step=1, limit=4
    $region2: #{_lambda_.28} parent=1 // loop_pre_header
      _
    $region3: #{_lambda_.28} parent=1 // loop_header
      %s24 = sphi 0, %s28
      %p25 = scmp.ge.s32.totalorder %s24, 4
      %s31 = sphi 0, %s43
      %s32 = sphi 0, %s39
      %s33 = sphi 0, %s31
      %s34 = sphi 0, %s32
      %s35 = sphi 0, %s33
      %s36 = sphi 0, %s34
      %s48 = sphi 0, %s50
      %s51 = sphi 0, %s48
      %s52 = sphi 0, %s51
      %s68 = sphi 0, %s52
      %s76 = sphi 0, %s78
      %s79 = sphi 0, %s76
      %s80 = sphi 0, %s79
      %s96 = sphi 0, %s80
      %s100 = sphi 0, %s100
      %s102 = sphi 0, %s100
      %s103 = sphi 0, %s102
      %s117 = sphi 0, %s103
      %s121 = sphi 0, %s121
      %s123 = sphi 0, %s121
      %s124 = sphi 0, %s123
      %s138 = sphi 0, %s124
      %s142 = sphi 0, %s142
      %s144 = sphi 0, %s142
      %s145 = sphi 0, %s144
      %s159 = sphi 0, %s145
      %s163 = sphi 0, %s163
      %s165 = sphi 0, %s163
      %s166 = sphi 0, %s165
      %s180 = sphi 0, %s166
      %s188 = sphi 0, %s190
      %s191 = sphi 0, %s188
      %s192 = sphi 0, %s191
      %s208 = sphi 0, %s192
      %s216 = sphi 0, %s218
      %s219 = sphi 0, %s216
      %s220 = sphi 0, %s219
      %s236 = sphi 0, %s220
    $region4: #{_lambda_.28} parent=1 // loop_header_branch
      %27 = sbr.rel (%p25) target = $region8
    $region5: #{_lambda_.28} parent=1 // loop_body
      %s29 = ssub.s32 %s24, 1
      %s30 = ssub.s32 %s24, 2
      %s37 = sadd.s32 1, %s32
      %p38 = scmp.ge.s32.totalorder %s37, 1
      %s39 = scalar_select %p38, 0, %s37
      %s40 = sadd.s32 1, %s31
      %s41 = scalar_select %p38, %s40, %s31
      %p42 = scmp.ge.s32.totalorder %s41, 2
      %s43 = scalar_select %p42, 0, %s41
      %s44 = ssub.s32 %s31, %s43
      %s45 = ssub.s32 %s32, %s39
      %s46 = sor.u32 %s44, %s45
      %p47 = scmp.eq.s32.totalorder %s46, 0
      %s49 = sadd.s32 %s48, 1
      %s50 = scalar_select %p47, %s48, %s49
      %p53 = pneg %p47
      %p54 = scmp.eq.s32.totalorder %s24, 1
      %p55 = por %p53, %p54
      %p56 = scmp.ne.s32.totalorder %s48, %s51
      %p57 = scmp.eq.s32.totalorder %s24, 0
      %p58 = por %p56, %p57
      %p59 = scmp.ne.s32.totalorder %s48, %s51
      %p60 = scmp.eq.s32.totalorder %s29, 1
      %p61 = por %p59, %p60
      %p62 = scmp.ne.s32.totalorder %s51, %s52
      %p63 = scmp.eq.s32.totalorder %s29, 0
      %p64 = por %p62, %p63
      %p65 = scmp.ne.s32.totalorder %s51, %s52
      %p66 = scmp.eq.s32.totalorder %s30, 1
      %p67 = por %p65, %p66
      %p69 = scmp.ne.s32.totalorder %s52, %s68
      %p70 = scmp.eq.s32.totalorder %s30, 0
      %p71 = por %p69, %p70
      %s72 = ssub.s32 %s31, %s43
      %s73 = ssub.s32 %s32, %s39
      %s74 = sor.u32 %s72, %s73
      %p75 = scmp.eq.s32.totalorder %s74, 0
      %s77 = sadd.s32 %s76, 1
      %s78 = scalar_select %p75, %s76, %s77
      %p81 = pneg %p75
      %p82 = scmp.eq.s32.totalorder %s24, 1
      %p83 = por %p81, %p82
      %p84 = scmp.ne.s32.totalorder %s76, %s79
      %p85 = scmp.eq.s32.totalorder %s24, 0
      %p86 = por %p84, %p85
      %p87 = scmp.ne.s32.totalorder %s76, %s79
      %p88 = scmp.eq.s32.totalorder %s29, 1
      %p89 = por %p87, %p88
      %p90 = scmp.ne.s32.totalorder %s79, %s80
      %p91 = scmp.eq.s32.totalorder %s29, 0
      %p92 = por %p90, %p91
      %p93 = scmp.ne.s32.totalorder %s79, %s80
      %p94 = scmp.eq.s32.totalorder %s30, 1
      %p95 = por %p93, %p94
      %p97 = scmp.ne.s32.totalorder %s80, %s96
      %p98 = scmp.eq.s32.totalorder %s30, 0
      %p99 = por %p97, %p98
      %s101 = sadd.s32 %s100, 1
      %p104 = scmp.eq.s32.totalorder %s24, 1
      %p105 = scmp.ne.s32.totalorder %s100, %s102
      %p106 = scmp.eq.s32.totalorder %s24, 0
      %p107 = por %p105, %p106
      %p108 = scmp.ne.s32.totalorder %s100, %s102
      %p109 = scmp.eq.s32.totalorder %s29, 1
      %p110 = por %p108, %p109
      %p111 = scmp.ne.s32.totalorder %s102, %s103
      %p112 = scmp.eq.s32.totalorder %s29, 0
      %p113 = por %p111, %p112
      %p114 = scmp.ne.s32.totalorder %s102, %s103
      %p115 = scmp.eq.s32.totalorder %s30, 1
      %p116 = por %p114, %p115
      %p118 = scmp.ne.s32.totalorder %s103, %s117
      %p119 = scmp.eq.s32.totalorder %s30, 0
      %p120 = por %p118, %p119
      %s122 = sadd.s32 %s121, 1
      %p125 = scmp.eq.s32.totalorder %s24, 1
      %p126 = scmp.ne.s32.totalorder %s121, %s123
      %p127 = scmp.eq.s32.totalorder %s24, 0
      %p128 = por %p126, %p127
      %p129 = scmp.ne.s32.totalorder %s121, %s123
      %p130 = scmp.eq.s32.totalorder %s29, 1
      %p131 = por %p129, %p130
      %p132 = scmp.ne.s32.totalorder %s123, %s124
      %p133 = scmp.eq.s32.totalorder %s29, 0
      %p134 = por %p132, %p133
      %p135 = scmp.ne.s32.totalorder %s123, %s124
      %p136 = scmp.eq.s32.totalorder %s30, 1
      %p137 = por %p135, %p136
      %p139 = scmp.ne.s32.totalorder %s124, %s138
      %p140 = scmp.eq.s32.totalorder %s30, 0
      %p141 = por %p139, %p140
      %s143 = sadd.s32 %s142, 1
      %p146 = scmp.eq.s32.totalorder %s24, 1
      %p147 = scmp.ne.s32.totalorder %s142, %s144
      %p148 = scmp.eq.s32.totalorder %s24, 0
      %p149 = por %p147, %p148
      %p150 = scmp.ne.s32.totalorder %s142, %s144
      %p151 = scmp.eq.s32.totalorder %s29, 1
      %p152 = por %p150, %p151
      %p153 = scmp.ne.s32.totalorder %s144, %s145
      %p154 = scmp.eq.s32.totalorder %s29, 0
      %p155 = por %p153, %p154
      %p156 = scmp.ne.s32.totalorder %s144, %s145
      %p157 = scmp.eq.s32.totalorder %s30, 1
      %p158 = por %p156, %p157
      %p160 = scmp.ne.s32.totalorder %s145, %s159
      %p161 = scmp.eq.s32.totalorder %s30, 0
      %p162 = por %p160, %p161
      %s164 = sadd.s32 %s163, 1
      %p167 = scmp.eq.s32.totalorder %s24, 1
      %p168 = scmp.ne.s32.totalorder %s163, %s165
      %p169 = scmp.eq.s32.totalorder %s24, 0
      %p170 = por %p168, %p169
      %p171 = scmp.ne.s32.totalorder %s163, %s165
      %p172 = scmp.eq.s32.totalorder %s29, 1
      %p173 = por %p171, %p172
      %p174 = scmp.ne.s32.totalorder %s165, %s166
      %p175 = scmp.eq.s32.totalorder %s29, 0
      %p176 = por %p174, %p175
      %p177 = scmp.ne.s32.totalorder %s165, %s166
      %p178 = scmp.eq.s32.totalorder %s30, 1
      %p179 = por %p177, %p178
      %p181 = scmp.ne.s32.totalorder %s166, %s180
      %p182 = scmp.eq.s32.totalorder %s30, 0
      %p183 = por %p181, %p182
      %s184 = ssub.s32 %s31, %s43
      %s185 = ssub.s32 %s32, %s39
      %s186 = sor.u32 %s184, %s185
      %p187 = scmp.eq.s32.totalorder %s186, 0
      %s189 = sadd.s32 %s188, 1
      %s190 = scalar_select %p187, %s188, %s189
      %p193 = pneg %p187
      %p194 = scmp.eq.s32.totalorder %s24, 1
      %p195 = por %p193, %p194
      %p196 = scmp.ne.s32.totalorder %s188, %s191
      %p197 = scmp.eq.s32.totalorder %s24, 0
      %p198 = por %p196, %p197
      %p199 = scmp.ne.s32.totalorder %s188, %s191
      %p200 = scmp.eq.s32.totalorder %s29, 1
      %p201 = por %p199, %p200
      %p202 = scmp.ne.s32.totalorder %s191, %s192
      %p203 = scmp.eq.s32.totalorder %s29, 0
      %p204 = por %p202, %p203
      %p205 = scmp.ne.s32.totalorder %s191, %s192
      %p206 = scmp.eq.s32.totalorder %s30, 1
      %p207 = por %p205, %p206
      %p209 = scmp.ne.s32.totalorder %s192, %s208
      %p210 = scmp.eq.s32.totalorder %s30, 0
      %p211 = por %p209, %p210
      %s212 = ssub.s32 %s31, %s43
      %s213 = ssub.s32 %s32, %s39
      %s214 = sor.u32 %s212, %s213
      %p215 = scmp.eq.s32.totalorder %s214, 0
      %s217 = sadd.s32 %s216, 1
      %s218 = scalar_select %p215, %s216, %s217
      %p221 = pneg %p215
      %p222 = scmp.eq.s32.totalorder %s24, 1
      %p223 = por %p221, %p222
      %p224 = scmp.ne.s32.totalorder %s216, %s219
      %p225 = scmp.eq.s32.totalorder %s24, 0
      %p226 = por %p224, %p225
      %p227 = scmp.ne.s32.totalorder %s216, %s219
      %p228 = scmp.eq.s32.totalorder %s29, 1
      %p229 = por %p227, %p228
      %p230 = scmp.ne.s32.totalorder %s219, %s220
      %p231 = scmp.eq.s32.totalorder %s29, 0
      %p232 = por %p230, %p231
      %p233 = scmp.ne.s32.totalorder %s219, %s220
      %p234 = scmp.eq.s32.totalorder %s30, 1
      %p235 = por %p233, %p234
      %p237 = scmp.ne.s32.totalorder %s220, %s236
      %p238 = scmp.eq.s32.totalorder %s30, 0
      %p239 = por %p237, %p238
      %p240 = scmp.le.s32.totalorder 1, %s24
      %p241 = scmp.lt.s32.totalorder %s24, 3
      %p242 = pnand %p240, %p241
      %p243 = pneg %p242
      // Predicated region
      $region9: #{_lambda_.28} parent=5 // pred_check
        _
      $region10: #{_lambda_.28} parent=5 // pred_check_branch
        %245 = sbr.rel (%p242) target = $region12
      $region11: #{_lambda_.28} parent=5 // pred_region
        %s246 = ssub.s32 %s24, 1
        // Predicated region
        $region13: #{_lambda_.28} parent=11 // pred_check
          %p247 = pneg %p113
        $region14: #{_lambda_.28} parent=11 // pred_check_branch
          %249 = sbr.rel (%p247) target = $region16
        $region15: #{_lambda_.28} parent=11 // pred_region
          %s251 = ssub.s32 3072, 3072
          %252 = vsyncadd [#allocation6], %s251
          %s253 = sshll.u32 [#allocation7], 4
          %s254 = int_to_ptr.vmem [resolvable:$true] %s253
          %259 = dma.hbm_to_vmem [thread:$0]  %s2, 3072, %s254, [#allocation6], 64, 64, 4
        $region16: #{_lambda_.28} parent=11 // pred_fallthru
          _
        // Predicated region
        $region17: #{_lambda_.28} parent=11 // pred_check
          %p260 = pneg %p134
        $region18: #{_lambda_.28} parent=11 // pred_check_branch
          %262 = sbr.rel (%p260) target = $region20
        $region19: #{_lambda_.28} parent=11 // pred_region
          %s264 = ssub.s32 16, 16
          %265 = vsyncadd [#allocation9], %s264
          %s267 = sshll.u32 [#allocation8], 4
          %s268 = int_to_ptr.vmem [resolvable:$true] %s267
          %270 = dma.hbm_to_vmem [thread:$0]  %s3, 16, %s268, [#allocation9]
        $region20: #{_lambda_.28} parent=11 // pred_fallthru
          _
        // Predicated region
        $region21: #{_lambda_.28} parent=11 // pred_check
          %p271 = pneg %p155
        $region22: #{_lambda_.28} parent=11 // pred_check_branch
          %273 = sbr.rel (%p271) target = $region24
        $region23: #{_lambda_.28} parent=11 // pred_region
          %s275 = ssub.s32 3072, 3072
          %276 = vsyncadd [#allocation9], %s275
          %s277 = sshll.u32 [#allocation10], 4
          %s278 = int_to_ptr.vmem [resolvable:$true] %s277
          %283 = dma.hbm_to_vmem [thread:$0]  %s4, 3072, %s278, [#allocation9], 64, 64, 4
        $region24: #{_lambda_.28} parent=11 // pred_fallthru
          _
        // Predicated region
        $region25: #{_lambda_.28} parent=11 // pred_check
          %p284 = pneg %p176
        $region26: #{_lambda_.28} parent=11 // pred_check_branch
          %286 = sbr.rel (%p284) target = $region28
        $region27: #{_lambda_.28} parent=11 // pred_region
          %s288 = ssub.s32 16, 16
          %289 = vsyncadd [#allocation12], %s288
          %s291 = sshll.u32 [#allocation11], 4
          %s292 = int_to_ptr.vmem [resolvable:$true] %s291
          %294 = dma.hbm_to_vmem [thread:$0]  %s5, 16, %s292, [#allocation12]
        $region28: #{_lambda_.28} parent=11 // pred_fallthru
          _
      $region12: #{_lambda_.28} parent=5 // pred_fallthru
        _
      %p295 = scmp.lt.s32.totalorder %s24, 2
      // Predicated region
      $region29: #{_lambda_.28} parent=5 // pred_check
        %p296 = pneg %p295
      $region30: #{_lambda_.28} parent=5 // pred_check_branch
        %298 = sbr.rel (%p296) target = $region32
      $region31: #{_lambda_.28} parent=5 // pred_region
        // Predicated region
        $region33: #{_lambda_.28} parent=31 // pred_check
          %p299 = pneg %p58
        $region34: #{_lambda_.28} parent=31 // pred_check_branch
          %301 = sbr.rel (%p299) target = $region36
        $region35: #{_lambda_.28} parent=31 // pred_region
          %s302 = sand.u32 %s24, 1
          %s303 = scalar_lea.sflag [#allocation3], %s302
          %s304 = sand.u32 %s48, 1
          %s305 = smul.addr %s304, 4
          %s306 = scalar_lea.vmem [#allocation2], %s305
          %s308 = ssub.s32 64, 64
          %309 = vsyncadd %s303, %s308
          %s310 = sadd.s32 %s32, %s31
          %s311 = smul.addr %s310, 64
          %s312 = scalar_lea.hbm %s0, %s311
          %s314 = sshll.u32 %s306, 4
          %s315 = int_to_ptr.vmem [resolvable:$true] %s314
          %317 = dma.hbm_to_vmem [thread:$0]  %s312, 64, %s315, %s303
        $region36: #{_lambda_.28} parent=31 // pred_fallthru
          _
        // Predicated region
        $region37: #{_lambda_.28} parent=31 // pred_check
          %p318 = pneg %p86
        $region38: #{_lambda_.28} parent=31 // pred_check_branch
          %320 = sbr.rel (%p318) target = $region40
        $region39: #{_lambda_.28} parent=31 // pred_region
          %s321 = sand.u32 %s24, 1
          %s322 = scalar_lea.sflag [#allocation6], %s321
          %s323 = sand.u32 %s76, 1
          %s324 = smul.addr %s323, 12
          %s325 = scalar_lea.vmem [#allocation5], %s324
          %s327 = ssub.s32 192, 192
          %328 = vsyncadd %s322, %s327
          %s329 = smul.addr %s32, 3
          %s330 = smul.addr %s31, 3
          %s331 = sadd.s32 %s329, %s330
          %s332 = smul.addr %s331, 64
          %s333 = scalar_lea.hbm %s1, %s332
          %s334 = sshll.u32 %s325, 4
          %s335 = int_to_ptr.vmem [resolvable:$true] %s334
          %340 = dma.hbm_to_vmem [thread:$0]  %s333, 192, %s335, %s322, 64, 64, 4
        $region40: #{_lambda_.28} parent=31 // pred_fallthru
          _
        // Predicated region
        $region41: #{_lambda_.28} parent=31 // pred_check
          %p341 = pneg %p198
        $region42: #{_lambda_.28} parent=31 // pred_check_branch
          %343 = sbr.rel (%p341) target = $region44
        $region43: #{_lambda_.28} parent=31 // pred_region
          %s344 = sand.u32 %s24, 1
          %s345 = scalar_lea.sflag [#allocation3], %s344
          %s346 = sand.u32 %s188, 1
          %s347 = smul.addr %s346, 4
          %s348 = scalar_lea.vmem [#allocation13], %s347
          %s350 = ssub.s32 64, 64
          %351 = vsyncadd %s345, %s350
          %s352 = sadd.s32 %s32, %s31
          %s353 = smul.addr %s352, 64
          %s354 = scalar_lea.hbm %s6, %s353
          %s356 = sshll.u32 %s348, 4
          %s357 = int_to_ptr.vmem [resolvable:$true] %s356
          %359 = dma.hbm_to_vmem [thread:$0]  %s354, 64, %s357, %s345
        $region44: #{_lambda_.28} parent=31 // pred_fallthru
          _
      $region32: #{_lambda_.28} parent=5 // pred_fallthru
        _
      %p360 = scmp.le.s32.totalorder 1, %s24
      %p361 = scmp.lt.s32.totalorder %s24, 3
      %p362 = pnand %p360, %p361
      %p363 = pneg %p362
      // Predicated region
      $region45: #{_lambda_.28} parent=5 // pred_check
        _
      $region46: #{_lambda_.28} parent=5 // pred_check_branch
        %365 = sbr.rel (%p362) target = $region48
      $region47: #{_lambda_.28} parent=5 // pred_region
        %s366 = ssub.s32 %s24, 1
        %s367 = sand.u32 %s29, 1
        %s368 = scalar_lea.sflag [#allocation3], %s367
        %s369 = sand.u32 %s51, 1
        %s370 = smul.addr %s369, 4
        %s371 = scalar_lea.vmem [#allocation2], %s370
        // Predicated region
        $region49: #{_lambda_.28} parent=47 // pred_check
          %p372 = pneg %p64
        $region50: #{_lambda_.28} parent=47 // pred_check_branch
          %374 = sbr.rel (%p372) target = $region52
        $region51: #{_lambda_.28} parent=47 // pred_region
          %375 = dma.done %s368, 64
        $region52: #{_lambda_.28} parent=47 // pred_fallthru
          _
        %s376 = sand.u32 %s29, 1
        %s377 = scalar_lea.sflag [#allocation6], %s376
        %s378 = sand.u32 %s79, 1
        %s379 = smul.addr %s378, 12
        %s380 = scalar_lea.vmem [#allocation5], %s379
        // Predicated region
        $region53: #{_lambda_.28} parent=47 // pred_check
          %p381 = pneg %p92
        $region54: #{_lambda_.28} parent=47 // pred_check_branch
          %383 = sbr.rel (%p381) target = $region56
        $region55: #{_lambda_.28} parent=47 // pred_region
          %384 = dma.done %s377, 192
        $region56: #{_lambda_.28} parent=47 // pred_fallthru
          _
        // Predicated region
        $region57: #{_lambda_.28} parent=47 // pred_check
          %p385 = pneg %p113
        $region58: #{_lambda_.28} parent=47 // pred_check_branch
          %387 = sbr.rel (%p385) target = $region60
        $region59: #{_lambda_.28} parent=47 // pred_region
          %388 = dma.done [#allocation6], 3072
        $region60: #{_lambda_.28} parent=47 // pred_fallthru
          _
        // Predicated region
        $region61: #{_lambda_.28} parent=47 // pred_check
          %p389 = pneg %p134
        $region62: #{_lambda_.28} parent=47 // pred_check_branch
          %391 = sbr.rel (%p389) target = $region64
        $region63: #{_lambda_.28} parent=47 // pred_region
          %392 = dma.done [#allocation9], 16
        $region64: #{_lambda_.28} parent=47 // pred_fallthru
          _
        // Predicated region
        $region65: #{_lambda_.28} parent=47 // pred_check
          %p393 = pneg %p155
        $region66: #{_lambda_.28} parent=47 // pred_check_branch
          %395 = sbr.rel (%p393) target = $region68
        $region67: #{_lambda_.28} parent=47 // pred_region
          %396 = dma.done [#allocation9], 3072
        $region68: #{_lambda_.28} parent=47 // pred_fallthru
          _
        // Predicated region
        $region69: #{_lambda_.28} parent=47 // pred_check
          %p397 = pneg %p176
        $region70: #{_lambda_.28} parent=47 // pred_check_branch
          %399 = sbr.rel (%p397) target = $region72
        $region71: #{_lambda_.28} parent=47 // pred_region
          %400 = dma.done [#allocation12], 16
        $region72: #{_lambda_.28} parent=47 // pred_fallthru
          _
        %s401 = sand.u32 %s29, 1
        %s402 = scalar_lea.sflag [#allocation3], %s401
        %s403 = sand.u32 %s191, 1
        %s404 = smul.addr %s403, 4
        %s405 = scalar_lea.vmem [#allocation13], %s404
        // Predicated region
        $region73: #{_lambda_.28} parent=47 // pred_check
          %p406 = pneg %p204
        $region74: #{_lambda_.28} parent=47 // pred_check_branch
          %408 = sbr.rel (%p406) target = $region76
        $region75: #{_lambda_.28} parent=47 // pred_region
          %409 = dma.done %s402, 64
        $region76: #{_lambda_.28} parent=47 // pred_fallthru
          _
        %s410 = sand.u32 %s29, 1
        %s411 = scalar_lea.sflag [#allocation3], %s410
        %s412 = sand.u32 %s51, 1
        %s413 = smul.addr %s412, 4
        %s414 = scalar_lea.vmem [#allocation2], %s413
        %p415 = pneg %p64
        %p416 = pneg %p61
        %s417 = sand.u32 %s29, 1
        %s418 = scalar_lea.sflag [#allocation6], %s417
        %s419 = sand.u32 %s79, 1
        %s420 = smul.addr %s419, 12
        %s421 = scalar_lea.vmem [#allocation5], %s420
        %p422 = pneg %p92
        %p423 = pneg %p89
        %p424 = pneg %p113
        %p425 = pneg %p110
        %p426 = pneg %p134
        %p427 = pneg %p131
        %p428 = pneg %p155
        %p429 = pneg %p152
        %p430 = pneg %p176
        %p431 = pneg %p173
        %s432 = sand.u32 %s29, 1
        %s433 = scalar_lea.sflag [#allocation3], %s432
        %s434 = sand.u32 %s191, 1
        %s435 = smul.addr %s434, 4
        %s436 = scalar_lea.vmem [#allocation13], %s435
        %p437 = pneg %p204
        %p438 = pneg %p201
        %p439 = pneg %p232
        %p440 = pneg %p229
        %s441 = sand.u32 %s219, 1
        %s442 = scalar_lea.sflag [#allocation4], %s441
        %s443 = sand.u32 %s219, 1
        %s444 = smul.addr %s443, 4
        %s445 = scalar_lea.vmem [#allocation14], %s444
        %v447 = vld [vmem:[%s371] sm:$0xf]
        %v448 = vld [vmem:[%s380] sm:$0xf]
        %v449 = vld [vmem:[%s380 + $0x4] sm:$0xf]
        %v450 = vld [vmem:[%s380 + $0x8] sm:$0x1]
        %v453 = vunpack.c.l.b16 %v448
        %v454 = vunpack.c.l.b16 %v449
        %v455 = vpack.c.b16 %v454, %v453
        %v458 = vunpack.c.l.b16 %v450
        %v459 = vpack.c.b16 %v458, %v458
        %vm460 = vcmask 1043456
        %v463 = vsel %vm460, %v447, %v459
        %v465 = vunpack.c.l.bf16 %v455
        %v466 = vunpack.c.h.bf16 %v455
        %v467 = vunpack.c.l.bf16 %v463
        %v468 = vunpack.c.h.bf16 %v463
        %vm469 = vcmp.ge.f32.partialorder %v465, 0.0
        %vm470 = vcmp.ge.f32.partialorder %v466, 0.0
        %vm471 = vcmp.ge.f32.partialorder %v467, 0.0
        %vm472 = vcmp.ge.f32.partialorder %v468, 0.0
        %v473 = vmul.f32 %v465, 0.1
        %v474 = vmul.f32 %v466, 0.1
        %v475 = vmul.f32 %v467, 0.1
        %v476 = vmul.f32 %v468, 0.1
        %v477 = vsel %vm469, %v465, %v473
        %v478 = vsel %vm470, %v466, %v474
        %v479 = vsel %vm471, %v467, %v475
        %v480 = vsel %vm472, %v468, %v476
        %v481 = vpack.c.bf16 %v478, %v477
        %v482 = vpack.c.bf16 %v480, %v479
        %vm483 = vsmask.f32 7424
        %v485 = vshrl.u32 %v481, 16
        %v488 = vshll.u32 %v482, 16
        %v490 = vrot.slane %v488, 1
        %v491 = vsel %vm483, %v485, %v490
        %v492 = vshrl.u32 %v482, 16
        %v494 = vor.u32 %v492, %v490
        %v496 = vrot.slane %v482, 1
        %v497 = vld [vmem:[#allocation7] sm:$0xf]
        %v498 = vld [vmem:[#allocation7 + $0x4] sm:$0xf]
        %v499 = vld [vmem:[#allocation7 + $0x8] sm:$0xf]
        %v500 = vld [vmem:[#allocation7 + $0xc] sm:$0xf]
        %v501 = vld [vmem:[#allocation7 + $0x10] sm:$0xf]
        %v502 = vld [vmem:[#allocation7 + $0x14] sm:$0xf]
        %v503 = vld [vmem:[#allocation7 + $0x18] sm:$0xf]
        %v504 = vld [vmem:[#allocation7 + $0x1c] sm:$0xf]
        %v505 = vld [vmem:[#allocation7 + $0x20] sm:$0xf]
        %v506 = vld [vmem:[#allocation7 + $0x24] sm:$0xf]
        %v507 = vld [vmem:[#allocation7 + $0x28] sm:$0xf]
        %v508 = vld [vmem:[#allocation7 + $0x2c] sm:$0xf]
        %v509 = vld [vmem:[#allocation7 + $0x30] sm:$0xf]
        %v510 = vld [vmem:[#allocation7 + $0x34] sm:$0xf]
        %v511 = vld [vmem:[#allocation7 + $0x38] sm:$0xf]
        %v512 = vld [vmem:[#allocation7 + $0x3c] sm:$0xf]
        %v513 = vld [vmem:[#allocation7 + $0x40] sm:$0xf]
        %v514 = vld [vmem:[#allocation7 + $0x44] sm:$0xf]
        %v515 = vld [vmem:[#allocation7 + $0x48] sm:$0xf]
        %v516 = vld [vmem:[#allocation7 + $0x4c] sm:$0xf]
        %v517 = vld [vmem:[#allocation7 + $0x50] sm:$0xf]
        %v518 = vld [vmem:[#allocation7 + $0x54] sm:$0xf]
        %v519 = vld [vmem:[#allocation7 + $0x58] sm:$0xf]
        %v520 = vld [vmem:[#allocation7 + $0x5c] sm:$0xf]
        %v521 = vld [vmem:[#allocation7 + $0x60] sm:$0xf]
        %v522 = vld [vmem:[#allocation7 + $0x64] sm:$0xf]
        %v523 = vld [vmem:[#allocation7 + $0x68] sm:$0xf]
        %v524 = vld [vmem:[#allocation7 + $0x6c] sm:$0xf]
        %v525 = vld [vmem:[#allocation7 + $0x70] sm:$0xf]
        %v526 = vld [vmem:[#allocation7 + $0x74] sm:$0xf]
        %v527 = vld [vmem:[#allocation7 + $0x78] sm:$0xf]
        %v528 = vld [vmem:[#allocation7 + $0x7c] sm:$0xf]
        %v529 = vld [vmem:[#allocation7 + $0x80] sm:$0xf]
        %v530 = vld [vmem:[#allocation7 + $0x84] sm:$0xf]
        %v531 = vld [vmem:[#allocation7 + $0x88] sm:$0xf]
        %v532 = vld [vmem:[#allocation7 + $0x8c] sm:$0xf]
        %v533 = vld [vmem:[#allocation7 + $0x90] sm:$0xf]
        %v534 = vld [vmem:[#allocation7 + $0x94] sm:$0xf]
        %v535 = vld [vmem:[#allocation7 + $0x98] sm:$0xf]
        %v536 = vld [vmem:[#allocation7 + $0x9c] sm:$0xf]
        %v537 = vld [vmem:[#allocation7 + $0xa0] sm:$0xf]
        %v538 = vld [vmem:[#allocation7 + $0xa4] sm:$0xf]
        %v539 = vld [vmem:[#allocation7 + $0xa8] sm:$0xf]
        %v540 = vld [vmem:[#allocation7 + $0xac] sm:$0xf]
        %v541 = vld [vmem:[#allocation7 + $0xb0] sm:$0xf]
        %v542 = vld [vmem:[#allocation7 + $0xb4] sm:$0xf]
        %v543 = vld [vmem:[#allocation7 + $0xb8] sm:$0xf]
        %v544 = vld [vmem:[#allocation7 + $0xbc] sm:$0xf]
        %v545 = vld [vmem:[#allocation8] sm:$0x1]
        %v547 = vlaneseq
        %v548 = vshrl.u32 %v547, 7
        %v549 = vsub.s32 0, %v548
        %v550 = vrot.slane %v545, %v549
        %vm553 = vcmask 1040384
        %v554 = vrot.slane %v481, 7
        %v555 = vrot.slane %v482, 7
        %v556 = vsel %vm553, %v554, %v555
        %v557 = vrot.slane %v491, 7
        %v558 = vrot.slane %v494, 7
        %v559 = vsel %vm553, %v557, %v558
        %v560 = vrot.slane %v496, 7
        %v561 = vsel %vm553, %v560, %v560
        %v613 = vunpack.c.l.b16 %v497
        %v614 = vunpack.c.l.b16 %v498
        %v615 = vunpack.c.l.b16 %v499
        %v616 = vunpack.c.l.b16 %v500
        %v617 = vunpack.c.l.b16 %v501
        %v618 = vunpack.c.l.b16 %v502
        %v619 = vunpack.c.l.b16 %v503
        %v620 = vunpack.c.l.b16 %v504
        %v621 = vunpack.c.l.b16 %v505
        %v622 = vunpack.c.l.b16 %v506
        %v623 = vunpack.c.l.b16 %v507
        %v624 = vunpack.c.l.b16 %v508
        %v625 = vunpack.c.l.b16 %v509
        %v626 = vunpack.c.l.b16 %v510
        %v627 = vunpack.c.l.b16 %v511
        %v628 = vunpack.c.l.b16 %v512
        %v629 = vunpack.c.l.b16 %v513
        %v630 = vunpack.c.l.b16 %v514
        %v631 = vunpack.c.l.b16 %v515
        %v632 = vunpack.c.l.b16 %v516
        %v633 = vunpack.c.l.b16 %v517
        %v634 = vunpack.c.l.b16 %v518
        %v635 = vunpack.c.l.b16 %v519
        %v636 = vunpack.c.l.b16 %v520
        %v637 = vunpack.c.l.b16 %v521
        %v638 = vunpack.c.l.b16 %v522
        %v639 = vunpack.c.l.b16 %v523
        %v640 = vunpack.c.l.b16 %v524
        %v641 = vunpack.c.l.b16 %v525
        %v642 = vunpack.c.l.b16 %v526
        %v643 = vunpack.c.l.b16 %v527
        %v644 = vunpack.c.l.b16 %v528
        %v645 = vunpack.c.l.b16 %v529
        %v646 = vunpack.c.l.b16 %v530
        %v647 = vunpack.c.l.b16 %v531
        %v648 = vunpack.c.l.b16 %v532
        %v649 = vunpack.c.l.b16 %v533
        %v650 = vunpack.c.l.b16 %v534
        %v651 = vunpack.c.l.b16 %v535
        %v652 = vunpack.c.l.b16 %v536
        %v653 = vunpack.c.l.b16 %v537
        %v654 = vunpack.c.l.b16 %v538
        %v655 = vunpack.c.l.b16 %v539
        %v656 = vunpack.c.l.b16 %v540
        %v657 = vunpack.c.l.b16 %v541
        %v658 = vunpack.c.l.b16 %v542
        %v659 = vunpack.c.l.b16 %v543
        %v660 = vunpack.c.l.b16 %v544
        %v661 = vpack.c.b16 %v614, %v613
        %v662 = vpack.c.b16 %v616, %v615
        %v663 = vpack.c.b16 %v618, %v617
        %v664 = vpack.c.b16 %v620, %v619
        %v665 = vpack.c.b16 %v622, %v621
        %v666 = vpack.c.b16 %v624, %v623
        %v667 = vpack.c.b16 %v626, %v625
        %v668 = vpack.c.b16 %v628, %v627
        %v669 = vpack.c.b16 %v630, %v629
        %v670 = vpack.c.b16 %v632, %v631
        %v671 = vpack.c.b16 %v634, %v633
        %v672 = vpack.c.b16 %v636, %v635
        %v673 = vpack.c.b16 %v638, %v637
        %v674 = vpack.c.b16 %v640, %v639
        %v675 = vpack.c.b16 %v642, %v641
        %v676 = vpack.c.b16 %v644, %v643
        %v677 = vpack.c.b16 %v646, %v645
        %v678 = vpack.c.b16 %v648, %v647
        %v679 = vpack.c.b16 %v650, %v649
        %v680 = vpack.c.b16 %v652, %v651
        %v681 = vpack.c.b16 %v654, %v653
        %v682 = vpack.c.b16 %v656, %v655
        %v683 = vpack.c.b16 %v658, %v657
        %v684 = vpack.c.b16 %v660, %v659
        %709 = vmatprep.subr.bf16.mxu0 0
        %710 = vmatpush1.bf16.msra.mxu0 %v661
        %711 = vmatprep.subr.bf16.mxu0 0
        %712 = vmatpush1.bf16.msra.mxu0 %v662
        %713 = vmatprep.subr.bf16.mxu0 0
        %714 = vmatpush1.bf16.msra.mxu0 %v663
        %715 = vmatprep.subr.bf16.mxu0 0
        %716 = vmatpush1.bf16.msra.mxu0 %v664
        %717 = vmatprep.subr.bf16.mxu0 0
        %718 = vmatpush1.bf16.msra.mxu0 %v665
        %719 = vmatprep.subr.bf16.mxu0 0
        %720 = vmatpush1.bf16.msra.mxu0 %v666
        %721 = vmatprep.subr.bf16.mxu0 0
        %722 = vmatpush1.bf16.msra.mxu0 %v667
        %723 = vmatprep.subr.bf16.mxu0 0
        %724 = vmatpush1.bf16.msra.mxu0 %v668
        %725 = vmatprep.subr.bf16.mxu0 0
        %726 = vmatpush1.bf16.msra.mxu0 %v669
        %727 = vmatprep.subr.bf16.mxu0 0
        %728 = vmatpush1.bf16.msra.mxu0 %v670
        %729 = vmatprep.subr.bf16.mxu0 0
        %730 = vmatpush1.bf16.msra.mxu0 %v671
        %731 = vmatprep.subr.bf16.mxu0 0
        %732 = vmatpush1.bf16.msra.mxu0 %v672
        %733 = vmatprep.subr.bf16.mxu0 0
        %734 = vmatpush1.bf16.msra.mxu0 %v673
        %735 = vmatprep.subr.bf16.mxu0 0
        %736 = vmatpush1.bf16.msra.mxu0 %v674
        %737 = vmatprep.subr.bf16.mxu0 0
        %738 = vmatpush1.bf16.msra.mxu0 %v675
        %739 = vmatprep.subr.bf16.mxu0 0
        %740 = vmatpush1.bf16.msra.mxu0 %v676
        %741 = vmatprep.mubr.bf16.mxu0 %v559
        %742 = vmatmul.mubr.bf16.gmra.mrb[0].mxu0 %v556
        %v743 = vpop.f32.mrb[0].mxu0
        %v744 = vadd.f32 %v550, %v743
        %v745 = vpop.f32.mrb[0].mxu0
        %v746 = vpop.f32.mrb[0].mxu0
        %v747 = vadd.f32 %v550, %v746
        %v748 = vpop.f32.mrb[0].mxu0
        %749 = vdwg.mxu0
        %750 = vmatprep.subr.bf16.mxu0 0
        %751 = vmatpush1.bf16.msra.mxu0 %v677
        %752 = vmatprep.subr.bf16.mxu0 0
        %753 = vmatpush1.bf16.msra.mxu0 %v678
        %754 = vmatprep.subr.bf16.mxu0 0
        %755 = vmatpush1.bf16.msra.mxu0 %v679
        %756 = vmatprep.subr.bf16.mxu0 0
        %757 = vmatpush1.bf16.msra.mxu0 %v680
        %758 = vmatprep.subr.bf16.mxu0 0
        %759 = vmatpush1.bf16.msra.mxu0 %v681
        %760 = vmatprep.subr.bf16.mxu0 0
        %761 = vmatpush1.bf16.msra.mxu0 %v682
        %762 = vmatprep.subr.bf16.mxu0 0
        %763 = vmatpush1.bf16.msra.mxu0 %v683
        %764 = vmatprep.subr.bf16.mxu0 0
        %765 = vmatpush1.bf16.msra.mxu0 %v684
        %766 = vmatprep.subr.bf16.mxu0 0
        %767 = vmatpush1.bf16.msra.mxu0 0
        %768 = vmatprep.subr.bf16.mxu0 0
        %769 = vmatpush1.bf16.msra.mxu0 0
        %770 = vmatprep.subr.bf16.mxu0 0
        %771 = vmatpush1.bf16.msra.mxu0 0
        %772 = vmatprep.subr.bf16.mxu0 0
        %773 = vmatpush1.bf16.msra.mxu0 0
        %774 = vmatprep.subr.bf16.mxu0 0
        %775 = vmatpush1.bf16.msra.mxu0 0
        %776 = vmatprep.subr.bf16.mxu0 0
        %777 = vmatpush1.bf16.msra.mxu0 0
        %778 = vmatprep.subr.bf16.mxu0 0
        %779 = vmatpush1.bf16.msra.mxu0 0
        %780 = vmatprep.subr.bf16.mxu0 0
        %781 = vmatpush1.bf16.msra.mxu0 0
        %782 = vmatprep.mubr.bf16.mxu0 0
        %783 = vmatmul.mubr.bf16.gmra.mrb[0].mxu0 %v561
        %v784 = vpop.f32.mrb[0].mxu0
        %v785 = vadd.f32 %v744, %v784
        %v786 = vpop.f32.mrb[0].mxu0
        %v787 = vpop.f32.mrb[0].mxu0
        %v788 = vadd.f32 %v747, %v787
        %v789 = vpop.f32.mrb[0].mxu0
        %790 = vdwg.mxu0
        %s791 = smul.u32 %s34, 8
        %s792 = ssub.s32 %s791, 1
        %v793 = vlaneseq
        %v794 = vshrl.u32 %v793, 7
        %v795 = vadd.s32 %v794, 8
        %v796 = vstv %s792
        %v797 = vadd.s32 %v796, %v794
        %v798 = vadd.s32 %v796, %v795
        %vm799 = vcmp.ge.s32.totalorder %v797, 0
        %vm800 = vcmp.ge.s32.totalorder %v798, 0
        %vm801 = vcmp.lt.s32.totalorder %v797, 8
        %vm802 = vcmp.lt.s32.totalorder %v798, 8
        %vm803 = vmand %vm799, %vm801
        %vm804 = vmand %vm800, %vm802
        %v805 = vsel %vm803, 1, 0
        %v806 = vsel %vm804, 1, 0
        %vm807 = vcmp.eq.s32.totalorder %v805, 1
        %vm808 = vcmp.eq.s32.totalorder %v806, 1
        %v809 = vsel %vm807, %v785, 0.0
        %v810 = vsel %vm808, %v788, 0.0
        %v811 = vpack.c.bf16 %v810, %v809
        %v812 = vunpack.c.l.bf16 %v811
        %v813 = vunpack.c.h.bf16 %v811
        %vm814 = vcmp.ge.f32.partialorder %v812, 0.0
        %vm815 = vcmp.ge.f32.partialorder %v813, 0.0
        %v816 = vmul.f32 %v812, 0.1
        %v817 = vmul.f32 %v813, 0.1
        %v818 = vsel %vm814, %v812, %v816
        %v819 = vsel %vm815, %v813, %v817
        %v820 = vpack.c.bf16 %v819, %v818
        %v822 = vshrl.u32 %v820, 16
        %v824 = vshll.u32 %v820, 16
        %v826 = vrot.slane %v824, 1
        %v827 = vor.u32 %v822, %v826
        %v830 = vrot.slane %v820, 1
        %v832 = vld [vmem:[#allocation10] sm:$0xf]
        %v833 = vld [vmem:[#allocation10 + $0x4] sm:$0xf]
        %v834 = vld [vmem:[#allocation10 + $0x8] sm:$0xf]
        %v835 = vld [vmem:[#allocation10 + $0xc] sm:$0xf]
        %v836 = vld [vmem:[#allocation10 + $0x10] sm:$0xf]
        %v837 = vld [vmem:[#allocation10 + $0x14] sm:$0xf]
        %v838 = vld [vmem:[#allocation10 + $0x18] sm:$0xf]
        %v839 = vld [vmem:[#allocation10 + $0x1c] sm:$0xf]
        %v840 = vld [vmem:[#allocation10 + $0x20] sm:$0xf]
        %v841 = vld [vmem:[#allocation10 + $0x24] sm:$0xf]
        %v842 = vld [vmem:[#allocation10 + $0x28] sm:$0xf]
        %v843 = vld [vmem:[#allocation10 + $0x2c] sm:$0xf]
        %v844 = vld [vmem:[#allocation10 + $0x30] sm:$0xf]
        %v845 = vld [vmem:[#allocation10 + $0x34] sm:$0xf]
        %v846 = vld [vmem:[#allocation10 + $0x38] sm:$0xf]
        %v847 = vld [vmem:[#allocation10 + $0x3c] sm:$0xf]
        %v848 = vld [vmem:[#allocation10 + $0x40] sm:$0xf]
        %v849 = vld [vmem:[#allocation10 + $0x44] sm:$0xf]
        %v850 = vld [vmem:[#allocation10 + $0x48] sm:$0xf]
        %v851 = vld [vmem:[#allocation10 + $0x4c] sm:$0xf]
        %v852 = vld [vmem:[#allocation10 + $0x50] sm:$0xf]
        %v853 = vld [vmem:[#allocation10 + $0x54] sm:$0xf]
        %v854 = vld [vmem:[#allocation10 + $0x58] sm:$0xf]
        %v855 = vld [vmem:[#allocation10 + $0x5c] sm:$0xf]
        %v856 = vld [vmem:[#allocation10 + $0x60] sm:$0xf]
        %v857 = vld [vmem:[#allocation10 + $0x64] sm:$0xf]
        %v858 = vld [vmem:[#allocation10 + $0x68] sm:$0xf]
        %v859 = vld [vmem:[#allocation10 + $0x6c] sm:$0xf]
        %v860 = vld [vmem:[#allocation10 + $0x70] sm:$0xf]
        %v861 = vld [vmem:[#allocation10 + $0x74] sm:$0xf]
        %v862 = vld [vmem:[#allocation10 + $0x78] sm:$0xf]
        %v863 = vld [vmem:[#allocation10 + $0x7c] sm:$0xf]
        %v864 = vld [vmem:[#allocation10 + $0x80] sm:$0xf]
        %v865 = vld [vmem:[#allocation10 + $0x84] sm:$0xf]
        %v866 = vld [vmem:[#allocation10 + $0x88] sm:$0xf]
        %v867 = vld [vmem:[#allocation10 + $0x8c] sm:$0xf]
        %v868 = vld [vmem:[#allocation10 + $0x90] sm:$0xf]
        %v869 = vld [vmem:[#allocation10 + $0x94] sm:$0xf]
        %v870 = vld [vmem:[#allocation10 + $0x98] sm:$0xf]
        %v871 = vld [vmem:[#allocation10 + $0x9c] sm:$0xf]
        %v872 = vld [vmem:[#allocation10 + $0xa0] sm:$0xf]
        %v873 = vld [vmem:[#allocation10 + $0xa4] sm:$0xf]
        %v874 = vld [vmem:[#allocation10 + $0xa8] sm:$0xf]
        %v875 = vld [vmem:[#allocation10 + $0xac] sm:$0xf]
        %v876 = vld [vmem:[#allocation10 + $0xb0] sm:$0xf]
        %v877 = vld [vmem:[#allocation10 + $0xb4] sm:$0xf]
        %v878 = vld [vmem:[#allocation10 + $0xb8] sm:$0xf]
        %v879 = vld [vmem:[#allocation10 + $0xbc] sm:$0xf]
        %v880 = vld [vmem:[#allocation11] sm:$0x1]
        %v882 = vlaneseq
        %v883 = vshrl.u32 %v882, 7
        %v884 = vsub.s32 0, %v883
        %v885 = vrot.slane %v880, %v884
        %v935 = vunpack.c.l.b16 %v832
        %v936 = vunpack.c.l.b16 %v833
        %v937 = vunpack.c.l.b16 %v834
        %v938 = vunpack.c.l.b16 %v835
        %v939 = vunpack.c.l.b16 %v836
        %v940 = vunpack.c.l.b16 %v837
        %v941 = vunpack.c.l.b16 %v838
        %v942 = vunpack.c.l.b16 %v839
        %v943 = vunpack.c.l.b16 %v840
        %v944 = vunpack.c.l.b16 %v841
        %v945 = vunpack.c.l.b16 %v842
        %v946 = vunpack.c.l.b16 %v843
        %v947 = vunpack.c.l.b16 %v844
        %v948 = vunpack.c.l.b16 %v845
        %v949 = vunpack.c.l.b16 %v846
        %v950 = vunpack.c.l.b16 %v847
        %v951 = vunpack.c.l.b16 %v848
        %v952 = vunpack.c.l.b16 %v849
        %v953 = vunpack.c.l.b16 %v850
        %v954 = vunpack.c.l.b16 %v851
        %v955 = vunpack.c.l.b16 %v852
        %v956 = vunpack.c.l.b16 %v853
        %v957 = vunpack.c.l.b16 %v854
        %v958 = vunpack.c.l.b16 %v855
        %v959 = vunpack.c.l.b16 %v856
        %v960 = vunpack.c.l.b16 %v857
        %v961 = vunpack.c.l.b16 %v858
        %v962 = vunpack.c.l.b16 %v859
        %v963 = vunpack.c.l.b16 %v860
        %v964 = vunpack.c.l.b16 %v861
        %v965 = vunpack.c.l.b16 %v862
        %v966 = vunpack.c.l.b16 %v863
        %v967 = vunpack.c.l.b16 %v864
        %v968 = vunpack.c.l.b16 %v865
        %v969 = vunpack.c.l.b16 %v866
        %v970 = vunpack.c.l.b16 %v867
        %v971 = vunpack.c.l.b16 %v868
        %v972 = vunpack.c.l.b16 %v869
        %v973 = vunpack.c.l.b16 %v870
        %v974 = vunpack.c.l.b16 %v871
        %v975 = vunpack.c.l.b16 %v872
        %v976 = vunpack.c.l.b16 %v873
        %v977 = vunpack.c.l.b16 %v874
        %v978 = vunpack.c.l.b16 %v875
        %v979 = vunpack.c.l.b16 %v876
        %v980 = vunpack.c.l.b16 %v877
        %v981 = vunpack.c.l.b16 %v878
        %v982 = vunpack.c.l.b16 %v879
        %v983 = vpack.c.b16 %v936, %v935
        %v984 = vpack.c.b16 %v938, %v937
        %v985 = vpack.c.b16 %v940, %v939
        %v986 = vpack.c.b16 %v942, %v941
        %v987 = vpack.c.b16 %v944, %v943
        %v988 = vpack.c.b16 %v946, %v945
        %v989 = vpack.c.b16 %v948, %v947
        %v990 = vpack.c.b16 %v950, %v949
        %v991 = vpack.c.b16 %v952, %v951
        %v992 = vpack.c.b16 %v954, %v953
        %v993 = vpack.c.b16 %v956, %v955
        %v994 = vpack.c.b16 %v958, %v957
        %v995 = vpack.c.b16 %v960, %v959
        %v996 = vpack.c.b16 %v962, %v961
        %v997 = vpack.c.b16 %v964, %v963
        %v998 = vpack.c.b16 %v966, %v965
        %v999 = vpack.c.b16 %v968, %v967
        %v1000 = vpack.c.b16 %v970, %v969
        %v1001 = vpack.c.b16 %v972, %v971
        %v1002 = vpack.c.b16 %v974, %v973
        %v1003 = vpack.c.b16 %v976, %v975
        %v1004 = vpack.c.b16 %v978, %v977
        %v1005 = vpack.c.b16 %v980, %v979
        %v1006 = vpack.c.b16 %v982, %v981
        %1031 = vmatprep.subr.bf16.mxu0 0
        %1032 = vmatpush1.bf16.msra.mxu0 %v983
        %1033 = vmatprep.subr.bf16.mxu0 0
        %1034 = vmatpush1.bf16.msra.mxu0 %v984
        %1035 = vmatprep.subr.bf16.mxu0 0
        %1036 = vmatpush1.bf16.msra.mxu0 %v985
        %1037 = vmatprep.subr.bf16.mxu0 0
        %1038 = vmatpush1.bf16.msra.mxu0 %v986
        %1039 = vmatprep.subr.bf16.mxu0 0
        %1040 = vmatpush1.bf16.msra.mxu0 %v987
        %1041 = vmatprep.subr.bf16.mxu0 0
        %1042 = vmatpush1.bf16.msra.mxu0 %v988
        %1043 = vmatprep.subr.bf16.mxu0 0
        %1044 = vmatpush1.bf16.msra.mxu0 %v989
        %1045 = vmatprep.subr.bf16.mxu0 0
        %1046 = vmatpush1.bf16.msra.mxu0 %v990
        %1047 = vmatprep.subr.bf16.mxu0 0
        %1048 = vmatpush1.bf16.msra.mxu0 %v991
        %1049 = vmatprep.subr.bf16.mxu0 0
        %1050 = vmatpush1.bf16.msra.mxu0 %v992
        %1051 = vmatprep.subr.bf16.mxu0 0
        %1052 = vmatpush1.bf16.msra.mxu0 %v993
        %1053 = vmatprep.subr.bf16.mxu0 0
        %1054 = vmatpush1.bf16.msra.mxu0 %v994
        %1055 = vmatprep.subr.bf16.mxu0 0
        %1056 = vmatpush1.bf16.msra.mxu0 %v995
        %1057 = vmatprep.subr.bf16.mxu0 0
        %1058 = vmatpush1.bf16.msra.mxu0 %v996
        %1059 = vmatprep.subr.bf16.mxu0 0
        %1060 = vmatpush1.bf16.msra.mxu0 %v997
        %1061 = vmatprep.subr.bf16.mxu0 0
        %1062 = vmatpush1.bf16.msra.mxu0 %v998
        %1063 = vmatprep.mubr.bf16.mxu0 %v827
        %1064 = vmatmul.mubr.bf16.gmra.mrb[0].mxu0 %v820
        %v1065 = vpop.f32.mrb[0].mxu0
        %v1066 = vadd.f32 %v885, %v1065
        %v1067 = vpop.f32.mrb[0].mxu0
        %v1068 = vpop.f32.mrb[0].mxu0
        %v1069 = vpop.f32.mrb[0].mxu0
        %1070 = vdwg.mxu0
        %1071 = vmatprep.subr.bf16.mxu0 0
        %1072 = vmatpush1.bf16.msra.mxu0 %v999
        %1073 = vmatprep.subr.bf16.mxu0 0
        %1074 = vmatpush1.bf16.msra.mxu0 %v1000
        %1075 = vmatprep.subr.bf16.mxu0 0
        %1076 = vmatpush1.bf16.msra.mxu0 %v1001
        %1077 = vmatprep.subr.bf16.mxu0 0
        %1078 = vmatpush1.bf16.msra.mxu0 %v1002
        %1079 = vmatprep.subr.bf16.mxu0 0
        %1080 = vmatpush1.bf16.msra.mxu0 %v1003
        %1081 = vmatprep.subr.bf16.mxu0 0
        %1082 = vmatpush1.bf16.msra.mxu0 %v1004
        %1083 = vmatprep.subr.bf16.mxu0 0
        %1084 = vmatpush1.bf16.msra.mxu0 %v1005
        %1085 = vmatprep.subr.bf16.mxu0 0
        %1086 = vmatpush1.bf16.msra.mxu0 %v1006
        %1087 = vmatprep.subr.bf16.mxu0 0
        %1088 = vmatpush1.bf16.msra.mxu0 0
        %1089 = vmatprep.subr.bf16.mxu0 0
        %1090 = vmatpush1.bf16.msra.mxu0 0
        %1091 = vmatprep.subr.bf16.mxu0 0
        %1092 = vmatpush1.bf16.msra.mxu0 0
        %1093 = vmatprep.subr.bf16.mxu0 0
        %1094 = vmatpush1.bf16.msra.mxu0 0
        %1095 = vmatprep.subr.bf16.mxu0 0
        %1096 = vmatpush1.bf16.msra.mxu0 0
        %1097 = vmatprep.subr.bf16.mxu0 0
        %1098 = vmatpush1.bf16.msra.mxu0 0
        %1099 = vmatprep.subr.bf16.mxu0 0
        %1100 = vmatpush1.bf16.msra.mxu0 0
        %1101 = vmatprep.subr.bf16.mxu0 0
        %1102 = vmatpush1.bf16.msra.mxu0 0
        %1103 = vmatprep.mubr.bf16.mxu0 0
        %1104 = vmatmul.mubr.bf16.gmra.mrb[0].mxu0 %v830
        %v1105 = vpop.f32.mrb[0].mxu0
        %v1106 = vadd.f32 %v1066, %v1105
        %v1107 = vpop.f32.mrb[0].mxu0
        %v1108 = vpop.f32.mrb[0].mxu0
        %v1109 = vpop.f32.mrb[0].mxu0
        %1110 = vdwg.mxu0
        %v1111 = vunpack.c.l.bf16 %v447
        %v1112 = vadd.f32 %v1106, %v1111
        %v1113 = vld [vmem:[%s405] sm:$0xf]
        %v1114 = vunpack.c.l.bf16 %v1113
        %v1115 = vadd.f32 %v1112, %v1114
        %v1116 = vmul.f32 %v1115, 0.5
        %v1117 = vpack.c.bf16 %v1116, %v1116
        %1118 = vst [vmem:[%s445] sm:$0xf] %v1117
        %s1119 = sand.u32 %s219, 1
        %s1120 = scalar_lea.sflag [#allocation4], %s1119
        %s1121 = sand.u32 %s219, 1
        %s1122 = smul.addr %s1121, 4
        %s1123 = scalar_lea.vmem [#allocation14], %s1122
        // Predicated region
        $region77: #{_lambda_.28} parent=47 // pred_check
          %p1124 = pneg %p229
        $region78: #{_lambda_.28} parent=47 // pred_check_branch
          %1126 = sbr.rel (%p1124) target = $region80
        $region79: #{_lambda_.28} parent=47 // pred_region
          %s1128 = ssub.s32 64, 64
          %1129 = vsyncadd %s1120, %s1128
          %s1130 = sadd.s32 %s34, %s33
          %s1131 = smul.addr %s1130, 64
          %s1132 = scalar_lea.hbm %s7, %s1131
          %s1134 = sshll.u32 %s1123, 4
          %s1135 = int_to_ptr.vmem [resolvable:$true] %s1134
          %1137 = dma.vmem_to_hbm [thread:$0]  %s1135, 64, %s1132, %s1120
        $region80: #{_lambda_.28} parent=47 // pred_fallthru
          _
      $region48: #{_lambda_.28} parent=5 // pred_fallthru
        _
      %p1138 = scmp.le.s32.totalorder 2, %s24
      // Predicated region
      $region81: #{_lambda_.28} parent=5 // pred_check
        %p1139 = pneg %p1138
      $region82: #{_lambda_.28} parent=5 // pred_check_branch
        %1141 = sbr.rel (%p1139) target = $region84
      $region83: #{_lambda_.28} parent=5 // pred_region
        %s1142 = ssub.s32 %s24, 2
        // Predicated region
        $region85: #{_lambda_.28} parent=83 // pred_check
          %p1143 = pneg %p235
        $region86: #{_lambda_.28} parent=83 // pred_check_branch
          %1145 = sbr.rel (%p1143) target = $region88
        $region87: #{_lambda_.28} parent=83 // pred_region
          %s1146 = sand.u32 %s220, 1
          %s1147 = scalar_lea.sflag [#allocation4], %s1146
          %s1148 = sand.u32 %s220, 1
          %s1149 = smul.addr %s1148, 4
          %s1150 = scalar_lea.vmem [#allocation14], %s1149
          %1151 = dma.done %s1147, 64
        $region88: #{_lambda_.28} parent=83 // pred_fallthru
          _
      $region84: #{_lambda_.28} parent=5 // pred_fallthru
        _
    $region6: #{_lambda_.28} parent=1 // loop_footer
      %s28 = sadd.s32 1, %s24
    $region7: #{_lambda_.28} parent=1 // loop_footer_branch
      %23 = sbr.rel target = $region3
    $region8: #{_lambda_.28} parent=1 // loop_exit
      _
    %1152 = vsyncpa [#allocation3], 1
    %s1153 = scalar_lea.sflag [#allocation3], 1
    %1154 = vsyncpa %s1153, 1
    %1155 = vsyncpa [#allocation6], 1
    %s1156 = scalar_lea.sflag [#allocation6], 1
    %1157 = vsyncpa %s1156, 1
    %1158 = vsyncpa [#allocation9], 1
    %1159 = vsyncpa [#allocation12], 1
    %1160 = vsyncpa [#allocation4], 1
    %s1161 = scalar_lea.sflag [#allocation4], 1
    %1162 = vsyncpa %s1161, 1

</llo_original>
